<compile_context>
chip_gen: v7x
topology: tpu7x:2x2x1
jax: 0.10.0
libtpu: 0.0.40
codegen_flags: <defaults>
</compile_context>

<pallas_src>
import functools

import numpy as np

import jax
import jax.numpy as jnp
from jax.experimental import pallas as pl
from jax.experimental.pallas import tpu as pltpu

BN_EPS = 1e-5
_VMEM_LIMIT = 32 * 1024 * 1024  # conservative budget (fits v5e/v6e/v7x)


# ----------------------------------------------------------------------------
# Helpers
# ----------------------------------------------------------------------------
def _pick_tile(dim, candidates):
    for c in candidates:
        if dim % c == 0:
            return c
    return dim


def _round_up(v, m):
    return ((v + m - 1) // m) * m


def _cp(c):
    # storage channel count: keep the lane dimension >= 128 (lane-dense)
    return c if c >= 128 else 128


def _flat(x):
    N, H, W, C = x.shape
    return x.reshape(N * H * W, C)


# ----------------------------------------------------------------------------
# Pallas kernel 1: single-shot matmul (1x1 convs, stem im2col, transpose-conv,
# head).  out = relu?( bn_relu?(x) @ w + b (+ res) ); optional per-channel
# sum/sumsq outputs for the *next* BatchNorm (fused stats).
# The whole K contraction and (for M<=512) the whole M live in one tile, so
# there is no K grid axis and no accumulator scratch.
# ----------------------------------------------------------------------------
def _mm_call(x, w, b2, bnv, inv_cnt, res, relu, want_stats):
    M, K = x.shape
    Np = w.shape[1]
    tn = _pick_tile(Np, (256, 128))
    tm = M if (M <= 512 or want_stats) else _pick_tile(M, (512, 256, 128))
    ni, nj = M // tm, Np // tn
    has_pro = bnv is not None
    has_res = res is not None

    def kernel(*refs):
        p_ = 0
        x_ref = refs[p_]; p_ += 1
        w_ref = refs[p_]; p_ += 1
        b_ref = refs[p_]; p_ += 1
        if has_pro:
            s_ref, q_ref, g_ref, be_ref = refs[p_:p_ + 4]
            p_ += 4
        if has_res:
            r_ref = refs[p_]; p_ += 1
        o_ref = refs[p_]; p_ += 1
        if want_stats:
            so_ref, qo_ref = refs[p_], refs[p_ + 1]

        xv = x_ref[...]
        if has_pro:
            # BatchNorm (batch stats) + ReLU fused as prologue, scale/shift
            # derived in-kernel from the producer's fused sum/sumsq.
            mean = s_ref[...] * inv_cnt
            var = jnp.maximum(q_ref[...] * inv_cnt - mean * mean, 0.0)
            scl = g_ref[...] * jax.lax.rsqrt(var + BN_EPS)
            sft = be_ref[...] - mean * scl
            xv = jnp.maximum(xv.astype(jnp.float32) * scl + sft,
                             0.0).astype(jnp.bfloat16)
        y = jnp.dot(xv, w_ref[...], preferred_element_type=jnp.float32)
        y = y + b_ref[...]
        if has_res:
            y = y + r_ref[...].astype(jnp.float32)
        if relu:
            y = jnp.maximum(y, 0.0)
        yb = y.astype(jnp.bfloat16)
        o_ref[...] = yb
        if want_stats:
            yf = yb.astype(jnp.float32)
            so_ref[...] = jnp.sum(yf, axis=0, keepdims=True)
            qo_ref[...] = jnp.sum(yf * yf, axis=0, keepdims=True)

    in_specs = [pl.BlockSpec((tm, K), lambda i, j: (i, 0)),
                pl.BlockSpec((K, tn), lambda i, j: (0, j)),
                pl.BlockSpec((1, tn), lambda i, j: (0, j))]
    args = [x, w, b2]
    if has_pro:
        in_specs += [pl.BlockSpec((1, K), lambda i, j: (0, 0))] * 4
        args += list(bnv)
    if has_res:
        in_specs.append(pl.BlockSpec((tm, tn), lambda i, j: (i, j)))
        args.append(res)

    if want_stats:
        out_shape = (jax.ShapeDtypeStruct((M, Np), jnp.bfloat16),
                     jax.ShapeDtypeStruct((ni, Np), jnp.float32),
                     jax.ShapeDtypeStruct((ni, Np), jnp.float32))
        out_specs = (pl.BlockSpec((tm, tn), lambda i, j: (i, j)),
                     pl.BlockSpec((1, tn), lambda i, j: (i, j)),
                     pl.BlockSpec((1, tn), lambda i, j: (i, j)))
    else:
        out_shape = jax.ShapeDtypeStruct((M, Np), jnp.bfloat16)
        out_specs = pl.BlockSpec((tm, tn), lambda i, j: (i, j))

    return pl.pallas_call(
        kernel,
        out_shape=out_shape,
        grid_spec=pltpu.PrefetchScalarGridSpec(
            num_scalar_prefetch=0,
            grid=(ni, nj),
            in_specs=in_specs,
            out_specs=out_specs),
        compiler_params=pltpu.CompilerParams(
            dimension_semantics=("parallel", "parallel"),
            vmem_limit_bytes=_VMEM_LIMIT),
    )(*args)


def matmul_op(x, w, b, *, bn=None, res=None, relu=False, want_stats=False):
    """x:(M,K) bf16, w:(K,Np) bf16, b:(Np,) f32.

    bn = (sum, sumsq, gamma, beta, inv_count) fuses BN(batch stats)+ReLU on x.
    want_stats additionally returns per-channel (sum, sumsq) of the output."""
    M, K = x.shape
    Np = w.shape[1]
    b2 = b.reshape(1, Np).astype(jnp.float32)
    bnv, inv_cnt = None, 1.0
    if bn is not None:
        s, q, gamma, beta, inv_cnt = bn
        bnv = (s.reshape(1, K).astype(jnp.float32),
               q.reshape(1, K).astype(jnp.float32),
               gamma.reshape(1, K).astype(jnp.float32),
               beta.reshape(1, K).astype(jnp.float32))
    out = _mm_call(x, w, b2, bnv, inv_cnt, res, relu, want_stats)
    if want_stats:
        y, so, qo = out
        if so.shape[0] > 1:
            so = jnp.sum(so, axis=0, keepdims=True)
            qo = jnp.sum(qo, axis=0, keepdims=True)
        return y, so, qo
    return out


# ----------------------------------------------------------------------------
# Pallas kernel 2: fused 3x3 / stride-1 / pad-1 convolution with the batch
# folded into the flattened row axis.  Each of the 9 taps is a row-offset
# slice of the guarded per-image slab, accumulated into one f32 scratch.
# Weights are streamed from HBM exactly once (grid = (Cout tiles, Cin tiles)).
# Optionally emits masked per-channel sum/sumsq of the (valid) output rows.
# ----------------------------------------------------------------------------
def _conv_taps_call(xe, w, b2, mask, N, Mp, Wp, relu, want_stats):
    R, Cin = xe.shape
    Lseg = R // N
    KK, _, Coutp = w.shape
    tc = _pick_tile(Cin, (512, 256, 128))
    tn = _pick_tile(Coutp, (256, 128))
    nj, nk = Coutp // tn, Cin // tc
    offs = [di * Wp + dj for di in range(3) for dj in range(3)]
    Mrows = N * Mp

    def kernel(*refs):
        p_ = 0
        x_ref = refs[p_]; p_ += 1
        w_ref = refs[p_]; p_ += 1
        b_ref = refs[p_]; p_ += 1
        if want_stats:
            m_ref = refs[p_]; p_ += 1
        o_ref = refs[p_]; p_ += 1
        if want_stats:
            so_ref = refs[p_]; p_ += 1
            qo_ref = refs[p_]; p_ += 1
        acc_ref = refs[p_]

        @pl.when(pl.program_id(1) == 0)
        def _():
            acc_ref[...] = jnp.zeros_like(acc_ref)

        # TODO(synk): tap row offsets are not sublane-aligned for bf16 so each
        # slice costs a VMEM relayout copy; a roll-based dj-band would cut 9->3.
        for n in range(N):
            base = n * Lseg
            for t, off in enumerate(offs):
                xs = x_ref[base + off: base + off + Mp, :]
                acc_ref[n * Mp:(n + 1) * Mp, :] += jnp.dot(
                    xs, w_ref[t], preferred_element_type=jnp.float32)

        @pl.when(pl.program_id(1) == pl.num_programs(1) - 1)
        def _():
            y = acc_ref[...] + b_ref[...]
            if relu:
                y = jnp.maximum(y, 0.0)
            yb = y.astype(jnp.bfloat16)
            o_ref[...] = yb
            if want_stats:
                yf = yb.astype(jnp.float32) * m_ref[...]
                so_ref[...] = jnp.sum(yf, axis=0, keepdims=True)
                qo_ref[...] = jnp.sum(yf * yf, axis=0, keepdims=True)

    in_specs = [pl.BlockSpec((R, tc), lambda j, kb: (0, kb)),
                pl.BlockSpec((KK, tc, tn), lambda j, kb: (0, kb, j)),
                pl.BlockSpec((1, tn), lambda j, kb: (0, j))]
    args = [xe, w, b2]
    if want_stats:
        in_specs.append(pl.BlockSpec((Mrows, 1), lambda j, kb: (0, 0)))
        args.append(mask)

    if want_stats:
        out_shape = (jax.ShapeDtypeStruct((Mrows, Coutp), jnp.bfloat16),
                     jax.ShapeDtypeStruct((1, Coutp), jnp.float32),
                     jax.ShapeDtypeStruct((1, Coutp), jnp.float32))
        out_specs = (pl.BlockSpec((Mrows, tn), lambda j, kb: (0, j)),
                     pl.BlockSpec((1, tn), lambda j, kb: (0, j)),
                     pl.BlockSpec((1, tn), lambda j, kb: (0, j)))
    else:
        out_shape = jax.ShapeDtypeStruct((Mrows, Coutp), jnp.bfloat16)
        out_specs = pl.BlockSpec((Mrows, tn), lambda j, kb: (0, j))

    return pl.pallas_call(
        kernel,
        out_shape=out_shape,
        grid_spec=pltpu.PrefetchScalarGridSpec(
            num_scalar_prefetch=0,
            grid=(nj, nk),
            in_specs=in_specs,
            out_specs=out_specs,
            scratch_shapes=[pltpu.VMEM((Mrows, tn), jnp.float32)]),
        compiler_params=pltpu.CompilerParams(
            dimension_semantics=("parallel", "arbitrary"),
            vmem_limit_bytes=_VMEM_LIMIT),
    )(*args)


def conv3x3_op(x, w, b, scale, shift, *, relu, want_stats):
    """3x3 / pad=1 / stride=1 conv; optional BN(scale,shift)+ReLU on the input
    (folded into the single bf16 pad/flatten feed), optional fused output
    BatchNorm statistics (masked to valid spatial positions)."""
    N, H, W, Cin = x.shape
    _, _, Coutp = w.shape
    Hp, Wp = H + 2, W + 2
    Mp = _round_up(Hp * Wp, 8)
    Lseg = _round_up(Mp + 2 * Wp + 2, 8)

    if scale is not None:
        xn = jnp.maximum(
            x.astype(jnp.float32) * scale.reshape(1, 1, 1, Cin)
            + shift.reshape(1, 1, 1, Cin), 0.0).astype(jnp.bfloat16)
    else:
        xn = x.astype(jnp.bfloat16)
    xp = jnp.pad(xn, ((0, 0), (1, 1), (1, 1), (0, 0)))
    xe = xp.reshape(N, Hp * Wp, Cin)
    xe = jnp.pad(xe, ((0, 0), (Wp + 1, Lseg - Hp * Wp - (Wp + 1)), (0, 0)))
    xe = xe.reshape(N * Lseg, Cin)

    mask = None
    if want_stats:
        r = np.arange(Hp * Wp)
        hp, wp = r // Wp, r % Wp
        valid = ((hp >= 1) & (hp <= H) & (wp >= 1) & (wp <= W)).astype(np.float32)
        seg = np.zeros((Mp,), np.float32)
        seg[:Hp * Wp] = valid
        mask = jnp.asarray(np.tile(seg, N).reshape(N * Mp, 1))

    outs = _conv_taps_call(xe, w, b.reshape(1, Coutp).astype(jnp.float32),
                           mask, N, Mp, Wp, relu, want_stats)
    y = outs[0] if want_stats else outs
    y = y.reshape(N, Mp, Coutp)[:, :Hp * Wp, :].reshape(N, Hp, Wp, Coutp)
    y = y[:, 1:1 + H, 1:1 + W, :]
    if want_stats:
        return y, outs[1], outs[2]
    return y


# ----------------------------------------------------------------------------
# Pallas kernel 3: tiled per-channel BatchNorm statistics (sum / sum-of-sq).
# Only used for the stem output and the pooled tensor; everywhere else stats
# are fused into the producing conv kernels.
# ----------------------------------------------------------------------------
def _bn_stats_call(x2d):
    M, C = x2d.shape
    bm = _pick_tile(M, (1024, 512, 256, 128, 64, 32, 16, 8))

    def kernel(x_ref, s_ref, q_ref):
        @pl.when(pl.program_id(0) == 0)
        def _():
            s_ref[...] = jnp.zeros_like(s_ref)
            q_ref[...] = jnp.zeros_like(q_ref)

        xv = x_ref[...].astype(jnp.float32)
        s_ref[...] += jnp.sum(xv, axis=0, keepdims=True)
        q_ref[...] += jnp.sum(xv * xv, axis=0, keepdims=True)

    return pl.pallas_call(
        kernel,
        out_shape=(jax.ShapeDtypeStruct((1, C), jnp.float32),
                   jax.ShapeDtypeStruct((1, C), jnp.float32)),
        grid_spec=pltpu.PrefetchScalarGridSpec(
            num_scalar_prefetch=0,
            grid=(M // bm,),
            in_specs=[pl.BlockSpec((bm, C), lambda i: (i, 0))],
            out_specs=(pl.BlockSpec((1, C), lambda i: (0, 0)),
                       pl.BlockSpec((1, C), lambda i: (0, 0)))),
        compiler_params=pltpu.CompilerParams(
            dimension_semantics=("arbitrary",)),
    )(x2d)


# ----------------------------------------------------------------------------
# Pallas kernel 4: stem BN+ReLU fused into MaxPool2d(3, stride=2, ceil_mode).
# ----------------------------------------------------------------------------
def _pool_call(y, scale2, shift2):
    N, H, W, C = y.shape
    Hs, Ws = H + 2, W + 2

    def kernel(x_ref, sc_ref, sh_ref, o_ref, pad_ref):
        # zero padding is valid only because the data is post-ReLU (>= 0).
        pad_ref[...] = jnp.zeros_like(pad_ref)
        for h0 in range(0, H, 8):
            hh = min(8, H - h0)
            xv = x_ref[0, h0:h0 + hh, :, :].astype(jnp.float32)
            xv = jnp.maximum(xv * sc_ref[0] + sh_ref[0], 0.0)
            pad_ref[h0:h0 + hh, 0:W, :] = xv
        for h0 in range(0, H, 8):
            hh = min(8, H - h0)
            m = pad_ref[h0:h0 + hh, 0:W, :]
            for di in range(3):
                for dj in range(3):
                    if di == 0 and dj == 0:
                        continue
                    m = jnp.maximum(
                        m, pad_ref[h0 + di:h0 + di + hh, dj:dj + W, :])
            o_ref[0, h0:h0 + hh, :, :] = m.astype(o_ref.dtype)

    return pl.pallas_call(
        kernel,
        out_shape=jax.ShapeDtypeStruct((N, H, W, C), jnp.bfloat16),
        grid_spec=pltpu.PrefetchScalarGridSpec(
            num_scalar_prefetch=0,
            grid=(N,),
            in_specs=[pl.BlockSpec((1, H, W, C), lambda n: (n, 0, 0, 0)),
                      pl.BlockSpec((1, C), lambda n: (0, 0)),
                      pl.BlockSpec((1, C), lambda n: (0, 0))],
            out_specs=pl.BlockSpec((1, H, W, C), lambda n: (n, 0, 0, 0)),
            scratch_shapes=[pltpu.VMEM((Hs, Ws, C), jnp.float32)]),
        compiler_params=pltpu.CompilerParams(
            dimension_semantics=("parallel",),
            vmem_limit_bytes=_VMEM_LIMIT),
    )(y, scale2, shift2)


# ----------------------------------------------------------------------------
# Stem 7x7 / stride-2 conv via im2col (3-channel input -> tiny patch tensor).
# ----------------------------------------------------------------------------
def _im2col(x, k, stride, pad):
    # TODO(synk): the strided 7x7 stem still uses im2col (3 input channels, so
    # the inflated patch tensor is negligible at this size).
    N, H, W, C = x.shape
    if pad:
        x = jnp.pad(x, ((0, 0), (pad, pad), (pad, pad), (0, 0)))
    Ho = (H + 2 * pad - k) // stride + 1
    Wo = (W + 2 * pad - k) // stride + 1
    cols = []
    for di in range(k):
        for dj in range(k):
            cols.append(x[:, di:di + stride * (Ho - 1) + 1:stride,
                          dj:dj + stride * (Wo - 1) + 1:stride, :])
    patches = jnp.concatenate(cols, axis=-1)
    return patches.reshape(N * Ho * Wo, k * k * C), (N, Ho, Wo)


# ----------------------------------------------------------------------------
# ConvTranspose2d(k=2, s=2) -> matmul to (M, 4*Cout) + spatial interleave.
# ----------------------------------------------------------------------------
def conv_transpose_op(x, w, b):
    N, H, W, Cin = x.shape
    Cout = w.shape[1] // 4
    y = matmul_op(x.reshape(N * H * W, Cin), w, jnp.tile(b, 4), relu=False)
    # TODO(synk): the (di,dj) interleave + downstream concat are XLA relayouts,
    # not fused into the matmul out_spec (small tensors at this problem size).
    y = y.reshape(N, H, W, 2, 2, Cout).transpose(0, 1, 3, 2, 4, 5)
    return y.reshape(N, 2 * H, 2 * W, Cout)


# ----------------------------------------------------------------------------
# Model blocks (functional mirror of the PyTorch modules), NHWC / bf16.
# Channel counts < 128 are stored zero-padded to 128 end-to-end.
# ----------------------------------------------------------------------------
def resblock1x1(p, x, s, q, *, stride=1, residual=None):
    """ResBlock (bn -> relu -> 1x1 conv); BN+ReLU fused as kernel prologue,
    output BN statistics fused as kernel epilogue."""
    N, H, W, _ = x.shape
    inv_cnt = 1.0 / float(N * H * W)
    xs = x[:, ::stride, ::stride, :] if stride > 1 else x
    Ns, Hs, Ws, _ = xs.shape
    res = _flat(residual) if residual is not None else None
    y, so, qo = matmul_op(
        _flat(xs), p["conv"]["w"], p["conv"]["b"],
        bn=(s, q, p["bn"]["gamma"], p["bn"]["beta"], inv_cnt),
        res=res, relu=False, want_stats=True)
    Coutp = p["conv"]["w"].shape[1]
    return y.reshape(Ns, Hs, Ws, Coutp), so, qo


def resblock3x3(p, x, s, q):
    """ResBlock (bn -> relu -> 3x3 conv); BN+ReLU folded into the bf16 conv
    feed, output BN statistics fused into the conv kernel."""
    N, H, W, _ = x.shape
    inv_cnt = 1.0 / float(N * H * W)
    mean = s[0] * inv_cnt
    var = jnp.maximum(q[0] * inv_cnt - mean * mean, 0.0)
    scale = p["bn"]["gamma"] * jax.lax.rsqrt(var + BN_EPS)
    shift = p["bn"]["beta"] - mean * scale
    return conv3x3_op(x, p["conv"]["w"], p["conv"]["b"], scale, shift,
                      relu=False, want_stats=True)


def plain_conv1x1(p, x, *, stride=1, relu=False):
    xs = x[:, ::stride, ::stride, :] if stride > 1 else x
    Ns, Hs, Ws, _ = xs.shape
    y = matmul_op(_flat(xs), p["w"], p["b"], relu=relu)
    return y.reshape(Ns, Hs, Ws, p["w"].shape[1])


@jax.jit
def bottleneck_fwd(p, x, s, q):
    out1, s1, q1 = resblock1x1(p["b1"], x, s, q)
    out2, s2, q2 = resblock3x3(p["b2"], out1, s1, q1)
    out3, s3, q3 = resblock1x1(p["b3"], out2, s2, q2, residual=x)
    return out3, s3, q3


@functools.partial(jax.jit, static_argnames=("stride",))
def downbottleneck_fwd(p, x, s, q, *, stride):
    idt = plain_conv1x1(p["conv1"], x, stride=stride)
    out1, s1, q1 = resblock1x1(p["b1"], x, s, q, stride=stride)
    out2, s2, q2 = resblock3x3(p["b2"], out1, s1, q1)
    out3, s3, q3 = resblock1x1(p["b3"], out2, s2, q2, residual=idt)
    return out3, s3, q3


def layer_fwd(p_list, x, s, q):
    x, s, q = downbottleneck_fwd(p_list[0], x, s, q, stride=2)
    for bp in p_list[1:]:
        x, s, q = bottleneck_fwd(bp, x, s, q)
    return x, s, q


@jax.jit
def stem_fwd(p, x_nchw):
    """conv7x7/s2 -> BN -> ReLU -> MaxPool(3, s=2, ceil).  Returns the pooled
    tensor plus its BatchNorm statistics for the first bottleneck."""
    x = jnp.transpose(x_nchw, (0, 2, 3, 1))            # NCHW -> NHWC
    patches, (N, Ho, Wo) = _im2col(x.astype(jnp.float32), 7, 2, 3)
    Kp = p["conv"]["w"].shape[0]
    patches = jnp.pad(patches, ((0, 0), (0, Kp - patches.shape[1])))
    patches = patches.astype(jnp.bfloat16)
    y2 = matmul_op(patches, p["conv"]["w"], p["conv"]["b"], relu=False)
    Coutp = p["conv"]["w"].shape[1]

    s, q = _bn_stats_call(y2)
    cnt = float(N * Ho * Wo)
    mean = s[0] / cnt
    var = jnp.maximum(q[0] / cnt - mean * mean, 0.0)
    scale = p["bn"]["gamma"] * jax.lax.rsqrt(var + BN_EPS)
    shift = p["bn"]["beta"] - mean * scale

    y4 = y2.reshape(N, Ho, Wo, Coutp)
    full = _pool_call(y4, scale.reshape(1, Coutp), shift.reshape(1, Coutp))
    # TODO(synk): the pool computes the stride-1 max and decimates here in XLA.
    Hp2 = -(-(Ho - 3) // 2) + 1
    Wp2 = -(-(Wo - 3) // 2) + 1
    pooled = full[:, 0:2 * (Hp2 - 1) + 1:2, 0:2 * (Wp2 - 1) + 1:2, :]
    ps, pq = _bn_stats_call(_flat(pooled))
    return pooled, ps, pq


@jax.jit
def upblock_fwd(p, x, bridge):
    up = conv_transpose_op(x, p["up"]["w"], p["up"]["b"])
    _, uh, uw, _ = up.shape
    _, bh, bw, _ = bridge.shape
    dy, dx = (bh - uh) // 2, (bw - uw) // 2
    crop = bridge[:, dy:dy + uh, dx:dx + uw, :]
    cat = jnp.concatenate([up, crop], axis=-1)
    out = conv3x3_op(cat, p["conv1"]["w"], p["conv1"]["b"], None, None,
                     relu=True, want_stats=False)
    out = conv3x3_op(out, p["conv2"]["w"], p["conv2"]["b"], None, None,
                     relu=True, want_stats=False)
    return out


@functools.partial(jax.jit, static_argnames=("n_classes",))
def last_fwd(p, x, *, n_classes):
    N, H, W, _ = x.shape
    y = matmul_op(_flat(x), p["w"], p["b"], relu=False)
    y = y.reshape(N, H, W, -1)[..., :n_classes].astype(jnp.float32)
    return jnp.transpose(y, (0, 3, 1, 2))               # NHWC -> NCHW


def resnet_unet_fwd(params, x_nchw, n_classes=2):
    enc = params["encode"]
    pooled, s, q = stem_fwd(enc["conv1"], x_nchw)
    f2, s, q = downbottleneck_fwd(enc["conv2_1"], pooled, s, q, stride=1)
    f2, s, q = bottleneck_fwd(enc["conv2_2"], f2, s, q)
    f2, s, q = bottleneck_fwd(enc["conv2_3"], f2, s, q)
    f3, s3, q3 = layer_fwd(enc["layer3"], f2, s, q)
    f4, s4, q4 = layer_fwd(enc["layer4"], f3, s3, q3)
    f5, _, _ = layer_fwd(enc["layer5"], f4, s4, q4)
    blocks = [f2, f3, f4, f5]
    y = f5
    for i, up_p in enumerate(params["up_path"]):
        y = upblock_fwd(up_p, y, blocks[-i - 2])
    return last_fwd(params["last"], y, n_classes=n_classes)


# ----------------------------------------------------------------------------
# Deterministic parameter init (shapes from the PyTorch __init__).
# Weights bf16, biases/BN params f32.  Channels < 128 zero-padded to 128.
# ----------------------------------------------------------------------------
class KeyGen:
    def __init__(self, seed):
        self.key = jax.random.PRNGKey(seed)

    def __call__(self):
        self.key, sub = jax.random.split(self.key)
        return sub


def init_conv1x1(kg, cin, cout):
    cinp, coutp = _cp(cin), _cp(cout)
    w = jax.random.normal(kg(), (cinp, coutp), jnp.float32) * (2.0 / cin) ** 0.5
    keep = (jnp.arange(cinp)[:, None] < cin) & (jnp.arange(coutp)[None, :] < cout)
    w = jnp.where(keep, w, 0.0)
    return {"w": w.astype(jnp.bfloat16), "b": jnp.zeros((coutp,), jnp.float32)}


def init_conv3x3(kg, cin, cout):
    cinp, coutp = _cp(cin), _cp(cout)
    w = jax.random.normal(kg(), (9, cinp, coutp), jnp.float32) * (2.0 / (9 * cin)) ** 0.5
    keep = (jnp.arange(cinp)[None, :, None] < cin) & (jnp.arange(coutp)[None, None, :] < cout)
    w = jnp.where(keep, w, 0.0)
    return {"w": w.astype(jnp.bfloat16), "b": jnp.zeros((coutp,), jnp.float32)}


def init_stem_conv(kg, cin=3, cout=64, k=7, kpad=256):
    coutp = _cp(cout)
    kk = k * k * cin
    w = jax.random.normal(kg(), (kpad, coutp), jnp.float32) * (2.0 / kk) ** 0.5
    keep = (jnp.arange(kpad)[:, None] < kk) & (jnp.arange(coutp)[None, :] < cout)
    w = jnp.where(keep, w, 0.0)
    return {"w": w.astype(jnp.bfloat16), "b": jnp.zeros((coutp,), jnp.float32)}


def init_bn(c):
    cs = _cp(c)
    return {"gamma": jnp.ones((cs,), jnp.float32),
            "beta": jnp.zeros((cs,), jnp.float32)}


def init_resblock(kg, cin, cout, k):
    conv = init_conv1x1(kg, cin, cout) if k == 1 else init_conv3x3(kg, cin, cout)
    return {"bn": init_bn(cin), "conv": conv}


def init_bottleneck(kg, cin, cout):
    m = cout // 4
    return {"b1": init_resblock(kg, cin, m, 1),
            "b2": init_resblock(kg, m, m, 3),
            "b3": init_resblock(kg, m, cout, 1)}


def init_downbottleneck(kg, cin, cout):
    m = cout // 4
    return {"conv1": init_conv1x1(kg, cin, cout),
            "b1": init_resblock(kg, cin, m, 1),
            "b2": init_resblock(kg, m, m, 3),
            "b3": init_resblock(kg, m, cout, 1)}


def init_layer(kg, cin, layer_list):
    blocks = [init_downbottleneck(kg, cin, layer_list[0])]
    cin = layer_list[0]
    for v in layer_list[1:]:
        blocks.append(init_bottleneck(kg, cin, v))
        cin = v
    return blocks


def init_resnet101(kg):
    return {"conv1": {"conv": init_stem_conv(kg), "bn": init_bn(64)},
            "conv2_1": init_downbottleneck(kg, 64, 256),
            "conv2_2": init_bottleneck(kg, 256, 256),
            "conv2_3": init_bottleneck(kg, 256, 256),
            "layer3": init_layer(kg, 256, [512] * 2),
            "layer4": init_layer(kg, 512, [1024] * 23),
            "layer5": init_layer(kg, 1024, [2048] * 3)}


def init_upblock(kg, cin, cout):
    wt = jax.random.normal(kg(), (cin, 4 * cout), jnp.float32) * (1.0 / cin) ** 0.5
    return {"up": {"w": wt.astype(jnp.bfloat16),
                   "b": jnp.zeros((cout,), jnp.float32)},
            "conv1": init_conv3x3(kg, cin, cout),
            "conv2": init_conv3x3(kg, cout, cout)}


def init_resnet_unet(seed=0, n_classes=2, depth=5, wf=6):
    kg = KeyGen(seed)
    encode = init_resnet101(kg)
    prev = 2 ** (wf + depth)
    up_path = []
    for i in reversed(range(2, depth)):
        up_path.append(init_upblock(kg, prev, 2 ** (wf + i)))
        prev = 2 ** (wf + i)
    return {"encode": encode,
            "up_path": up_path,
            "last": init_conv1x1(kg, prev, n_classes)}


# ----------------------------------------------------------------------------
if __name__ == "__main__":
    params = init_resnet_unet(seed=0)
    x = jax.random.normal(jax.random.PRNGKey(0), (2, 3, 64, 64), jnp.float32)  # NCHW

    out = resnet_unet_fwd(params, x)
    out = jax.block_until_ready(out)

    assert out.shape == (2, 2, 16, 16), f"unexpected output shape {out.shape}"
    assert bool(jnp.all(jnp.isfinite(out))), "non-finite values in output"
    print("KERNEL_OK")
</pallas_src>

<mosaic_0001>
module attributes {stable_mosaic.version = 11 : i64} {
  func.func @kernel(%arg0: i32, %arg1: i32, %arg2: memref<512x256xbf16, #tpu.memory_space<vmem>>, %arg3: memref<256x128xbf16, #tpu.memory_space<vmem>>, %arg4: memref<1x128xf32, #tpu.memory_space<vmem>>, %arg5: memref<512x128xbf16, #tpu.memory_space<vmem>>) attributes {dimension_semantics = [#tpu.dimension_semantics<parallel>, #tpu.dimension_semantics<parallel>], iteration_bounds = array<i64: 4, 1>, scalar_prefetch = 0 : i64, scratch_operands = 0 : i64, tpu.core_type = #tpu.core_type<tc>, window_params = [{transform_indices = @transform_0, window_bounds = array<i64: 512, 256>}, {transform_indices = @transform_1, window_bounds = array<i64: 256, 128>}, {transform_indices = @transform_2, window_bounds = array<i64: 1, 128>}, {transform_indices = @transform_3, window_bounds = array<i64: 512, 128>}]} {
    %c0 = arith.constant 0 : index
    %c0_0 = arith.constant 0 : index
    %0 = vector.load %arg2[%c0, %c0_0] : memref<512x256xbf16, #tpu.memory_space<vmem>>, vector<512x256xbf16>
    %c0_1 = arith.constant 0 : index
    %c0_2 = arith.constant 0 : index
    %1 = vector.load %arg3[%c0_1, %c0_2] : memref<256x128xbf16, #tpu.memory_space<vmem>>, vector<256x128xbf16>
    %cst = arith.constant dense<0.000000e+00> : vector<512x128xf32>
    %2 = tpu.matmul %0, %1, %cst {dimension_numbers = #tpu.dot_dimension_numbers<[1], [0], [0], [1], [0, 0, 1, 1], [], []>} : vector<512x256xbf16>, vector<256x128xbf16>, vector<512x128xf32> -> vector<512x128xf32>
    %c0_3 = arith.constant 0 : index
    %c0_4 = arith.constant 0 : index
    %3 = vector.load %arg4[%c0_3, %c0_4] : memref<1x128xf32, #tpu.memory_space<vmem>>, vector<1x128xf32>
    %4 = vector.broadcast %3 : vector<1x128xf32> to vector<512x128xf32>
    %5 = arith.addf %2, %4 : vector<512x128xf32>
    %6 = arith.truncf %5 : vector<512x128xf32> to vector<512x128xbf16>
    %c0_5 = arith.constant 0 : index
    %c0_6 = arith.constant 0 : index
    %7 = vector.load %arg5[%c0_5, %c0_6] : memref<512x128xbf16, #tpu.memory_space<vmem>>, vector<512x128xbf16>
    tpu.vector_store %arg5[%c0_5, %c0_6], %6 {strides = array<i32>} : memref<512x128xbf16, #tpu.memory_space<vmem>>, vector<512x128xbf16>,
    return
  }
  func.func @transform_0(%arg0: i32, %arg1: i32) -> (i32, i32) {
    %c0_i32 = arith.constant 0 : i32
    %c0_i32_0 = arith.constant 0 : i32
    return %arg0, %c0_i32 : i32, i32
  }
  func.func @transform_1(%arg0: i32, %arg1: i32) -> (i32, i32) {
    %c0_i32 = arith.constant 0 : i32
    %c0_i32_0 = arith.constant 0 : i32
    return %c0_i32, %arg1 : i32, i32
  }
  func.func @transform_2(%arg0: i32, %arg1: i32) -> (i32, i32) {
    %c0_i32 = arith.constant 0 : i32
    %c0_i32_0 = arith.constant 0 : i32
    return %c0_i32, %arg1 : i32, i32
  }
  func.func @transform_3(%arg0: i32, %arg1: i32) -> (i32, i32) {
    %c0_i32 = arith.constant 0 : i32
    return %arg0, %arg1 : i32, i32
  }
}

module attributes {stable_mosaic.version = 11 : i64} {
  func.func @kernel(%arg0: i32, %arg1: memref<1024x128xbf16, #tpu.memory_space<vmem>>, %arg2: memref<1x128xf32, #tpu.memory_space<vmem>>, %arg3: memref<1x128xf32, #tpu.memory_space<vmem>>) attributes {dimension_semantics = [#tpu.dimension_semantics<arbitrary>], iteration_bounds = array<i64: 2>, scalar_prefetch = 0 : i64, scratch_operands = 0 : i64, tpu.core_type = #tpu.core_type<tc>, window_params = [{transform_indices = @transform_0, window_bounds = array<i64: 1024, 128>}, {pipeline_mode = #tpu.pipeline_mode<synchronous>, transform_indices = @transform_1, window_bounds = array<i64: 1, 128>}, {pipeline_mode = #tpu.pipeline_mode<synchronous>, transform_indices = @transform_2, window_bounds = array<i64: 1, 128>}]} {
    %c0_i32 = arith.constant 0 : i32
    %0 = arith.cmpi eq, %arg0, %c0_i32 : i32
    %1 = arith.extui %0 : i1 to i32
    %c0_i32_0 = arith.constant 0 : i32
    %2 = arith.cmpi ne, %1, %c0_i32_0 : i32
    scf.if %2 {
      %cst_11 = arith.constant 0.000000e+00 : f32
      %16 = vector.broadcast %cst_11 : f32 to vector<1x128xf32>
      %c0_12 = arith.constant 0 : index
      %c0_13 = arith.constant 0 : index
      %17 = vector.load %arg2[%c0_12, %c0_13] : memref<1x128xf32, #tpu.memory_space<vmem>>, vector<1x128xf32>
      tpu.vector_store %arg2[%c0_12, %c0_13], %16 {strides = array<i32>} : memref<1x128xf32, #tpu.memory_space<vmem>>, vector<1x128xf32>,
      %cst_14 = arith.constant 0.000000e+00 : f32
      %18 = vector.broadcast %cst_14 : f32 to vector<1x128xf32>
      %c0_15 = arith.constant 0 : index
      %c0_16 = arith.constant 0 : index
      %19 = vector.load %arg3[%c0_15, %c0_16] : memref<1x128xf32, #tpu.memory_space<vmem>>, vector<1x128xf32>
      tpu.vector_store %arg3[%c0_15, %c0_16], %18 {strides = array<i32>} : memref<1x128xf32, #tpu.memory_space<vmem>>, vector<1x128xf32>,
    } else {
    }
    %c0 = arith.constant 0 : index
    %c0_1 = arith.constant 0 : index
    %3 = vector.load %arg1[%c0, %c0_1] : memref<1024x128xbf16, #tpu.memory_space<vmem>>, vector<1024x128xbf16>
    %4 = arith.extf %3 : vector<1024x128xbf16> to vector<1024x128xf32>
    %c0_2 = arith.constant 0 : index
    %c0_3 = arith.constant 0 : index
    %5 = vector.load %arg2[%c0_2, %c0_3] : memref<1x128xf32, #tpu.memory_space<vmem>>, vector<1x128xf32>
    %cst = arith.constant dense<0.000000e+00> : vector<128xf32>
    %6 = vector.multi_reduction <add>, %4, %cst [0] : vector<1024x128xf32> to vector<128xf32>
    %7 = vector.shape_cast %6 : vector<128xf32> to vector<1x128xf32>
    %8 = arith.addf %5, %7 : vector<1x128xf32>
    %c0_4 = arith.constant 0 : index
    %c0_5 = arith.constant 0 : index
    %9 = vector.load %arg2[%c0_4, %c0_5] : memref<1x128xf32, #tpu.memory_space<vmem>>, vector<1x128xf32>
    tpu.vector_store %arg2[%c0_4, %c0_5], %8 {strides = array<i32>} : memref<1x128xf32, #tpu.memory_space<vmem>>, vector<1x128xf32>,
    %c0_6 = arith.constant 0 : index
    %c0_7 = arith.constant 0 : index
    %10 = vector.load %arg3[%c0_6, %c0_7] : memref<1x128xf32, #tpu.memory_space<vmem>>, vector<1x128xf32>
    %11 = arith.mulf %4, %4 : vector<1024x128xf32>
    %cst_8 = arith.constant dense<0.000000e+00> : vector<128xf32>
    %12 = vector.multi_reduction <add>, %11, %cst_8 [0] : vector<1024x128xf32> to vector<128xf32>
    %13 = vector.shape_cast %12 : vector<128xf32> to vector<1x128xf32>
    %14 = arith.addf %10, %13 : vector<1x128xf32>
    %c0_9 = arith.constant 0 : index
    %c0_10 = arith.constant 0 : index
    %15 = vector.load %arg3[%c0_9, %c0_10] : memref<1x128xf32, #tpu.memory_space<vmem>>, vector<1x128xf32>
    tpu.vector_store %arg3[%c0_9, %c0_10], %14 {strides = array<i32>} : memref<1x128xf32, #tpu.memory_space<vmem>>, vector<1x128xf32>,
    return
  }
  func.func @transform_0(%arg0: i32) -> (i32, i32) {
    %c0_i32 = arith.constant 0 : i32
    %c0_i32_0 = arith.constant 0 : i32
    return %arg0, %c0_i32 : i32, i32
  }
  func.func @transform_1(%arg0: i32) -> (i32, i32) {
    %c0_i32 = arith.constant 0 : i32
    %c0_i32_0 = arith.constant 0 : i32
    %c0_i32_1 = arith.constant 0 : i32
    return %c0_i32, %c0_i32_0 : i32, i32
  }
  func.func @transform_2(%arg0: i32) -> (i32, i32) {
    %c0_i32 = arith.constant 0 : i32
    %c0_i32_0 = arith.constant 0 : i32
    %c0_i32_1 = arith.constant 0 : i32
    return %c0_i32, %c0_i32_0 : i32, i32
  }
}

module attributes {stable_mosaic.version = 11 : i64} {
  func.func @kernel(%arg0: i32, %arg1: memref<1x32x32x128xbf16, #tpu.memory_space<vmem>>, %arg2: memref<1x128xf32, #tpu.memory_space<vmem>>, %arg3: memref<1x128xf32, #tpu.memory_space<vmem>>, %arg4: memref<1x32x32x128xbf16, #tpu.memory_space<vmem>>, %arg5: memref<34x34x128xf32, #tpu.memory_space<vmem>>) attributes {dimension_semantics = [#tpu.dimension_semantics<parallel>], iteration_bounds = array<i64: 2>, scalar_prefetch = 0 : i64, scratch_operands = 1 : i64, tpu.core_type = #tpu.core_type<tc>, window_params = [{transform_indices = @transform_0, window_bounds = array<i64: 1, 32, 32, 128>}, {pipeline_mode = #tpu.pipeline_mode<synchronous>, transform_indices = @transform_1, window_bounds = array<i64: 1, 128>}, {pipeline_mode = #tpu.pipeline_mode<synchronous>, transform_indices = @transform_2, window_bounds = array<i64: 1, 128>}, {transform_indices = @transform_3, window_bounds = array<i64: 1, 32, 32, 128>}]} {
    %cst = arith.constant 0.000000e+00 : f32
    %0 = vector.broadcast %cst : f32 to vector<34x34x128xf32>
    %c0 = arith.constant 0 : index
    %c0_0 = arith.constant 0 : index
    %c0_1 = arith.constant 0 : index
    %1 = vector.load %arg5[%c0, %c0_0, %c0_1] : memref<34x34x128xf32, #tpu.memory_space<vmem>>, vector<34x34x128xf32>
    tpu.vector_store %arg5[%c0, %c0_0, %c0_1], %0 {strides = array<i32>} : memref<34x34x128xf32, #tpu.memory_space<vmem>>, vector<34x34x128xf32>,
    %c0_2 = arith.constant 0 : index
    %c0_3 = arith.constant 0 : index
    %c0_4 = arith.constant 0 : index
    %c0_5 = arith.constant 0 : index
    %2 = vector.load %arg1[%c0_2, %c0_3, %c0_4, %c0_5] : memref<1x32x32x128xbf16, #tpu.memory_space<vmem>>, vector<1x8x32x128xbf16>
    %3 = vector.shape_cast %2 : vector<1x8x32x128xbf16> to vector<8x32x128xbf16>
    %4 = arith.extf %3 : vector<8x32x128xbf16> to vector<8x32x128xf32>
    %c0_6 = arith.constant 0 : index
    %c0_7 = arith.constant 0 : index
    %5 = vector.load %arg2[%c0_6, %c0_7] : memref<1x128xf32, #tpu.memory_space<vmem>>, vector<1x128xf32>
    %6 = vector.shape_cast %5 : vector<1x128xf32> to vector<128xf32>
    %7 = vector.shape_cast %6 : vector<128xf32> to vector<1x1x128xf32>
    %8 = vector.broadcast %7 : vector<1x1x128xf32> to vector<8x32x128xf32>
    %9 = arith.mulf %4, %8 : vector<8x32x128xf32>
    %c0_8 = arith.constant 0 : index
    %c0_9 = arith.constant 0 : index
    %10 = vector.load %arg3[%c0_8, %c0_9] : memref<1x128xf32, #tpu.memory_space<vmem>>, vector<1x128xf32>
    %11 = vector.shape_cast %10 : vector<1x128xf32> to vector<128xf32>
    %12 = vector.shape_cast %11 : vector<128xf32> to vector<1x1x128xf32>
    %13 = vector.broadcast %12 : vector<1x1x128xf32> to vector<8x32x128xf32>
    %14 = arith.addf %9, %13 : vector<8x32x128xf32>
    %cst_10 = arith.constant 0.000000e+00 : f32
    %15 = vector.broadcast %cst_10 : f32 to vector<8x32x128xf32>
    %16 = arith.maximumf %14, %15 : vector<8x32x128xf32>
    %c0_11 = arith.constant 0 : index
    %c0_12 = arith.constant 0 : index
    %c0_13 = arith.constant 0 : index
    %17 = vector.load %arg5[%c0_11, %c0_12, %c0_13] : memref<34x34x128xf32, #tpu.memory_space<vmem>>, vector<8x32x128xf32>
    tpu.vector_store %arg5[%c0_11, %c0_12, %c0_13], %16 {strides = array<i32>} : memref<34x34x128xf32, #tpu.memory_space<vmem>>, vector<8x32x128xf32>,
    %c0_14 = arith.constant 0 : index
    %c8 = arith.constant 8 : index
    %c0_15 = arith.constant 0 : index
    %c0_16 = arith.constant 0 : index
    %18 = vector.load %arg1[%c0_14, %c8, %c0_15, %c0_16] : memref<1x32x32x128xbf16, #tpu.memory_space<vmem>>, vector<1x8x32x128xbf16>
    %19 = vector.shape_cast %18 : vector<1x8x32x128xbf16> to vector<8x32x128xbf16>
    %20 = arith.extf %19 : vector<8x32x128xbf16> to vector<8x32x128xf32>
    %c0_17 = arith.constant 0 : index
    %c0_18 = arith.constant 0 : index
    %21 = vector.load %arg2[%c0_17, %c0_18] : memref<1x128xf32, #tpu.memory_space<vmem>>, vector<1x128xf32>
    %22 = vector.shape_cast %21 : vector<1x128xf32> to vector<128xf32>
    %23 = vector.shape_cast %22 : vector<128xf32> to vector<1x1x128xf32>
    %24 = vector.broadcast %23 : vector<1x1x128xf32> to vector<8x32x128xf32>
    %25 = arith.mulf %20, %24 : vector<8x32x128xf32>
    %c0_19 = arith.constant 0 : index
    %c0_20 = arith.constant 0 : index
    %26 = vector.load %arg3[%c0_19, %c0_20] : memref<1x128xf32, #tpu.memory_space<vmem>>, vector<1x128xf32>
    %27 = vector.shape_cast %26 : vector<1x128xf32> to vector<128xf32>
    %28 = vector.shape_cast %27 : vector<128xf32> to vector<1x1x128xf32>
    %29 = vector.broadcast %28 : vector<1x1x128xf32> to vector<8x32x128xf32>
    %30 = arith.addf %25, %29 : vector<8x32x128xf32>
    %cst_21 = arith.constant 0.000000e+00 : f32
    %31 = vector.broadcast %cst_21 : f32 to vector<8x32x128xf32>
    %32 = arith.maximumf %30, %31 : vector<8x32x128xf32>
    %c8_22 = arith.constant 8 : index
    %c0_23 = arith.constant 0 : index
    %c0_24 = arith.constant 0 : index
    %33 = vector.load %arg5[%c8_22, %c0_23, %c0_24] : memref<34x34x128xf32, #tpu.memory_space<vmem>>, vector<8x32x128xf32>
    tpu.vector_store %arg5[%c8_22, %c0_23, %c0_24], %32 {strides = array<i32>} : memref<34x34x128xf32, #tpu.memory_space<vmem>>, vector<8x32x128xf32>,
    %c0_25 = arith.constant 0 : index
    %c16 = arith.constant 16 : index
    %c0_26 = arith.constant 0 : index
    %c0_27 = arith.constant 0 : index
    %34 = vector.load %arg1[%c0_25, %c16, %c0_26, %c0_27] : memref<1x32x32x128xbf16, #tpu.memory_space<vmem>>, vector<1x8x32x128xbf16>
    %35 = vector.shape_cast %34 : vector<1x8x32x128xbf16> to vector<8x32x128xbf16>
    %36 = arith.extf %35 : vector<8x32x128xbf16> to vector<8x32x128xf32>
    %c0_28 = arith.constant 0 : index
    %c0_29 = arith.constant 0 : index
    %37 = vector.load %arg2[%c0_28, %c0_29] : memref<1x128xf32, #tpu.memory_space<vmem>>, vector<1x128xf32>
    %38 = vector.shape_cast %37 : vector<1x128xf32> to vector<128xf32>
    %39 = vector.shape_cast %38 : vector<128xf32> to vector<1x1x128xf32>
    %40 = vector.broadcast %39 : vector<1x1x128xf32> to vector<8x32x128xf32>
    %41 = arith.mulf %36, %40 : vector<8x32x128xf32>
    %c0_30 = arith.constant 0 : index
    %c0_31 = arith.constant 0 : index
    %42 = vector.load %arg3[%c0_30, %c0_31] : memref<1x128xf32, #tpu.memory_space<vmem>>, vector<1x128xf32>
    %43 = vector.shape_cast %42 : vector<1x128xf32> to vector<128xf32>
    %44 = vector.shape_cast %43 : vector<128xf32> to vector<1x1x128xf32>
    %45 = vector.broadcast %44 : vector<1x1x128xf32> to vector<8x32x128xf32>
    %46 = arith.addf %41, %45 : vector<8x32x128xf32>
    %cst_32 = arith.constant 0.000000e+00 : f32
    %47 = vector.broadcast %cst_32 : f32 to vector<8x32x128xf32>
    %48 = arith.maximumf %46, %47 : vector<8x32x128xf32>
    %c16_33 = arith.constant 16 : index
    %c0_34 = arith.constant 0 : index
    %c0_35 = arith.constant 0 : index
    %49 = vector.load %arg5[%c16_33, %c0_34, %c0_35] : memref<34x34x128xf32, #tpu.memory_space<vmem>>, vector<8x32x128xf32>
    tpu.vector_store %arg5[%c16_33, %c0_34, %c0_35], %48 {strides = array<i32>} : memref<34x34x128xf32, #tpu.memory_space<vmem>>, vector<8x32x128xf32>,
    %c0_36 = arith.constant 0 : index
    %c24 = arith.constant 24 : index
    %c0_37 = arith.constant 0 : index
    %c0_38 = arith.constant 0 : index
    %50 = vector.load %arg1[%c0_36, %c24, %c0_37, %c0_38] : memref<1x32x32x128xbf16, #tpu.memory_space<vmem>>, vector<1x8x32x128xbf16>
    %51 = vector.shape_cast %50 : vector<1x8x32x128xbf16> to vector<8x32x128xbf16>
    %52 = arith.extf %51 : vector<8x32x128xbf16> to vector<8x32x128xf32>
    %c0_39 = arith.constant 0 : index
    %c0_40 = arith.constant 0 : index
    %53 = vector.load %arg2[%c0_39, %c0_40] : memref<1x128xf32, #tpu.memory_space<vmem>>, vector<1x128xf32>
    %54 = vector.shape_cast %53 : vector<1x128xf32> to vector<128xf32>
    %55 = vector.shape_cast %54 : vector<128xf32> to vector<1x1x128xf32>
    %56 = vector.broadcast %55 : vector<1x1x128xf32> to vector<8x32x128xf32>
    %57 = arith.mulf %52, %56 : vector<8x32x128xf32>
    %c0_41 = arith.constant 0 : index
    %c0_42 = arith.constant 0 : index
    %58 = vector.load %arg3[%c0_41, %c0_42] : memref<1x128xf32, #tpu.memory_space<vmem>>, vector<1x128xf32>
    %59 = vector.shape_cast %58 : vector<1x128xf32> to vector<128xf32>
    %60 = vector.shape_cast %59 : vector<128xf32> to vector<1x1x128xf32>
    %61 = vector.broadcast %60 : vector<1x1x128xf32> to vector<8x32x128xf32>
    %62 = arith.addf %57, %61 : vector<8x32x128xf32>
    %cst_43 = arith.constant 0.000000e+00 : f32
    %63 = vector.broadcast %cst_43 : f32 to vector<8x32x128xf32>
    %64 = arith.maximumf %62, %63 : vector<8x32x128xf32>
    %c24_44 = arith.constant 24 : index
    %c0_45 = arith.constant 0 : index
    %c0_46 = arith.constant 0 : index
    %65 = vector.load %arg5[%c24_44, %c0_45, %c0_46] : memref<34x34x128xf32, #tpu.memory_space<vmem>>, vector<8x32x128xf32>
    tpu.vector_store %arg5[%c24_44, %c0_45, %c0_46], %64 {strides = array<i32>} : memref<34x34x128xf32, #tpu.memory_space<vmem>>, vector<8x32x128xf32>,
    %c0_47 = arith.constant 0 : index
    %c0_48 = arith.constant 0 : index
    %c0_49 = arith.constant 0 : index
    %66 = vector.load %arg5[%c0_47, %c0_48, %c0_49] : memref<34x34x128xf32, #tpu.memory_space<vmem>>, vector<8x32x128xf32>
    %c0_50 = arith.constant 0 : index
    %c1 = arith.constant 1 : index
    %c0_51 = arith.constant 0 : index
    %67 = vector.load %arg5[%c0_50, %c1, %c0_51] : memref<34x34x128xf32, #tpu.memory_space<vmem>>, vector<8x32x128xf32>
    %68 = arith.maximumf %66, %67 : vector<8x32x128xf32>
    %c0_52 = arith.constant 0 : index
    %c2 = arith.constant 2 : index
    %c0_53 = arith.constant 0 : index
    %69 = vector.load %arg5[%c0_52, %c2, %c0_53] : memref<34x34x128xf32, #tpu.memory_space<vmem>>, vector<8x32x128xf32>
    %70 = arith.maximumf %68, %69 : vector<8x32x128xf32>
    %c1_54 = arith.constant 1 : index
    %c0_55 = arith.constant 0 : index
    %c0_56 = arith.constant 0 : index
    %71 = vector.load %arg5[%c1_54, %c0_55, %c0_56] : memref<34x34x128xf32, #tpu.memory_space<vmem>>, vector<8x32x128xf32>
    %72 = arith.maximumf %70, %71 : vector<8x32x128xf32>
    %c1_57 = arith.constant 1 : index
    %c1_58 = arith.constant 1 : index
    %c0_59 = arith.constant 0 : index
    %73 = vector.load %arg5[%c1_57, %c1_58, %c0_59] : memref<34x34x128xf32, #tpu.memory_space<vmem>>, vector<8x32x128xf32>
    %74 = arith.maximumf %72, %73 : vector<8x32x128xf32>
    %c1_60 = arith.constant 1 : index
    %c2_61 = arith.constant 2 : index
    %c0_62 = arith.constant 0 : index
    %75 = vector.load %arg5[%c1_60, %c2_61, %c0_62] : memref<34x34x128xf32, #tpu.memory_space<vmem>>, vector<8x32x128xf32>
    %76 = arith.maximumf %74, %75 : vector<8x32x128xf32>
    %c2_63 = arith.constant 2 : index
    %c0_64 = arith.constant 0 : index
    %c0_65 = arith.constant 0 : index
    %77 = vector.load %arg5[%c2_63, %c0_64, %c0_65] : memref<34x34x128xf32, #tpu.memory_space<vmem>>, vector<8x32x128xf32>
    %78 = arith.maximumf %76, %77 : vector<8x32x128xf32>
    %c2_66 = arith.constant 2 : index
    %c1_67 = arith.constant 1 : index
    %c0_68 = arith.constant 0 : index
    %79 = vector.load %arg5[%c2_66, %c1_67, %c0_68] : memref<34x34x128xf32, #tpu.memory_space<vmem>>, vector<8x32x128xf32>
    %80 = arith.maximumf %78, %79 : vector<8x32x128xf32>
    %c2_69 = arith.constant 2 : index
    %c2_70 = arith.constant 2 : index
    %c0_71 = arith.constant 0 : index
    %81 = vector.load %arg5[%c2_69, %c2_70, %c0_71] : memref<34x34x128xf32, #tpu.memory_space<vmem>>, vector<8x32x128xf32>
    %82 = arith.maximumf %80, %81 : vector<8x32x128xf32>
    %83 = arith.truncf %82 : vector<8x32x128xf32> to vector<8x32x128xbf16>
    %c0_72 = arith.constant 0 : index
    %c0_73 = arith.constant 0 : index
    %c0_74 = arith.constant 0 : index
    %c0_75 = arith.constant 0 : index
    %84 = vector.load %arg4[%c0_72, %c0_73, %c0_74, %c0_75] : memref<1x32x32x128xbf16, #tpu.memory_space<vmem>>, vector<1x8x32x128xbf16>
    %85 = vector.shape_cast %84 : vector<1x8x32x128xbf16> to vector<8x32x128xbf16>
    %86 = vector.shape_cast %83 : vector<8x32x128xbf16> to vector<1x8x32x128xbf16>
    tpu.vector_store %arg4[%c0_72, %c0_73, %c0_74, %c0_75], %86 {strides = array<i32>} : memref<1x32x32x128xbf16, #tpu.memory_space<vmem>>, vector<1x8x32x128xbf16>,
    %c8_76 = arith.constant 8 : index
    %c0_77 = arith.constant 0 : index
    %c0_78 = arith.constant 0 : index
    %87 = vector.load %arg5[%c8_76, %c0_77, %c0_78] : memref<34x34x128xf32, #tpu.memory_space<vmem>>, vector<8x32x128xf32>
    %c8_79 = arith.constant 8 : index
    %c1_80 = arith.constant 1 : index
    %c0_81 = arith.constant 0 : index
    %88 = vector.load %arg5[%c8_79, %c1_80, %c0_81] : memref<34x34x128xf32, #tpu.memory_space<vmem>>, vector<8x32x128xf32>
    %89 = arith.maximumf %87, %88 : vector<8x32x128xf32>
    %c8_82 = arith.constant 8 : index
    %c2_83 = arith.constant 2 : index
    %c0_84 = arith.constant 0 : index
    %90 = vector.load %arg5[%c8_82, %c2_83, %c0_84] : memref<34x34x128xf32, #tpu.memory_space<vmem>>, vector<8x32x128xf32>
    %91 = arith.maximumf %89, %90 : vector<8x32x128xf32>
    %c9 = arith.constant 9 : index
    %c0_85 = arith.constant 0 : index
    %c0_86 = arith.constant 0 : index
    %92 = vector.load %arg5[%c9, %c0_85, %c0_86] : memref<34x34x128xf32, #tpu.memory_space<vmem>>, vector<8x32x128xf32>
    %93 = arith.maximumf %91, %92 : vector<8x32x128xf32>
    %c9_87 = arith.constant 9 : index
    %c1_88 = arith.constant 1 : index
    %c0_89 = arith.constant 0 : index
    %94 = vector.load %arg5[%c9_87, %c1_88, %c0_89] : memref<34x34x128xf32, #tpu.memory_space<vmem>>, vector<8x32x128xf32>
    %95 = arith.maximumf %93, %94 : vector<8x32x128xf32>
    %c9_90 = arith.constant 9 : index
    %c2_91 = arith.constant 2 : index
    %c0_92 = arith.constant 0 : index
    %96 = vector.load %arg5[%c9_90, %c2_91, %c0_92] : memref<34x34x128xf32, #tpu.memory_space<vmem>>, vector<8x32x128xf32>
    %97 = arith.maximumf %95, %96 : vector<8x32x128xf32>
    %c10 = arith.constant 10 : index
    %c0_93 = arith.constant 0 : index
    %c0_94 = arith.constant 0 : index
    %98 = vector.load %arg5[%c10, %c0_93, %c0_94] : memref<34x34x128xf32, #tpu.memory_space<vmem>>, vector<8x32x128xf32>
    %99 = arith.maximumf %97, %98 : vector<8x32x128xf32>
    %c10_95 = arith.constant 10 : index
    %c1_96 = arith.constant 1 : index
    %c0_97 = arith.constant 0 : index
    %100 = vector.load %arg5[%c10_95, %c1_96, %c0_97] : memref<34x34x128xf32, #tpu.memory_space<vmem>>, vector<8x32x128xf32>
    %101 = arith.maximumf %99, %100 : vector<8x32x128xf32>
    %c10_98 = arith.constant 10 : index
    %c2_99 = arith.constant 2 : index
    %c0_100 = arith.constant 0 : index
    %102 = vector.load %arg5[%c10_98, %c2_99, %c0_100] : memref<34x34x128xf32, #tpu.memory_space<vmem>>, vector<8x32x128xf32>
    %103 = arith.maximumf %101, %102 : vector<8x32x128xf32>
    %104 = arith.truncf %103 : vector<8x32x128xf32> to vector<8x32x128xbf16>
    %c0_101 = arith.constant 0 : index
    %c8_102 = arith.constant 8 : index
    %c0_103 = arith.constant 0 : index
    %c0_104 = arith.constant 0 : index
    %105 = vector.load %arg4[%c0_101, %c8_102, %c0_103, %c0_104] : memref<1x32x32x128xbf16, #tpu.memory_space<vmem>>, vector<1x8x32x128xbf16>
    %106 = vector.shape_cast %105 : vector<1x8x32x128xbf16> to vector<8x32x128xbf16>
    %107 = vector.shape_cast %104 : vector<8x32x128xbf16> to vector<1x8x32x128xbf16>
    tpu.vector_store %arg4[%c0_101, %c8_102, %c0_103, %c0_104], %107 {strides = array<i32>} : memref<1x32x32x128xbf16, #tpu.memory_space<vmem>>, vector<1x8x32x128xbf16>,
    %c16_105 = arith.constant 16 : index
    %c0_106 = arith.constant 0 : index
    %c0_107 = arith.constant 0 : index
    %108 = vector.load %arg5[%c16_105, %c0_106, %c0_107] : memref<34x34x128xf32, #tpu.memory_space<vmem>>, vector<8x32x128xf32>
    %c16_108 = arith.constant 16 : index
    %c1_109 = arith.constant 1 : index
    %c0_110 = arith.constant 0 : index
    %109 = vector.load %arg5[%c16_108, %c1_109, %c0_110] : memref<34x34x128xf32, #tpu.memory_space<vmem>>, vector<8x32x128xf32>
    %110 = arith.maximumf %108, %109 : vector<8x32x128xf32>
    %c16_111 = arith.constant 16 : index
    %c2_112 = arith.constant 2 : index
    %c0_113 = arith.constant 0 : index
    %111 = vector.load %arg5[%c16_111, %c2_112, %c0_113] : memref<34x34x128xf32, #tpu.memory_space<vmem>>, vector<8x32x128xf32>
    %112 = arith.maximumf %110, %111 : vector<8x32x128xf32>
    %c17 = arith.constant 17 : index
    %c0_114 = arith.constant 0 : index
    %c0_115 = arith.constant 0 : index
    %113 = vector.load %arg5[%c17, %c0_114, %c0_115] : memref<34x34x128xf32, #tpu.memory_space<vmem>>, vector<8x32x128xf32>
    %114 = arith.maximumf %112, %113 : vector<8x32x128xf32>
    %c17_116 = arith.constant 17 : index
    %c1_117 = arith.constant 1 : index
    %c0_118 = arith.constant 0 : index
    %115 = vector.load %arg5[%c17_116, %c1_117, %c0_118] : memref<34x34x128xf32, #tpu.memory_space<vmem>>, vector<8x32x128xf32>
    %116 = arith.maximumf %114, %115 : vector<8x32x128xf32>
    %c17_119 = arith.constant 17 : index
    %c2_120 = arith.constant 2 : index
    %c0_121 = arith.constant 0 : index
    %117 = vector.load %arg5[%c17_119, %c2_120, %c0_121] : memref<34x34x128xf32, #tpu.memory_space<vmem>>, vector<8x32x128xf32>
    %118 = arith.maximumf %116, %117 : vector<8x32x128xf32>
    %c18 = arith.constant 18 : index
    %c0_122 = arith.constant 0 : index
    %c0_123 = arith.constant 0 : index
    %119 = vector.load %arg5[%c18, %c0_122, %c0_123] : memref<34x34x128xf32, #tpu.memory_space<vmem>>, vector<8x32x128xf32>
    %120 = arith.maximumf %118, %119 : vector<8x32x128xf32>
    %c18_124 = arith.constant 18 : index
    %c1_125 = arith.constant 1 : index
    %c0_126 = arith.constant 0 : index
    %121 = vector.load %arg5[%c18_124, %c1_125, %c0_126] : memref<34x34x128xf32, #tpu.memory_space<vmem>>, vector<8x32x128xf32>
    %122 = arith.maximumf %120, %121 : vector<8x32x128xf32>
    %c18_127 = arith.constant 18 : index
    %c2_128 = arith.constant 2 : index
    %c0_129 = arith.constant 0 : index
    %123 = vector.load %arg5[%c18_127, %c2_128, %c0_129] : memref<34x34x128xf32, #tpu.memory_space<vmem>>, vector<8x32x128xf32>
    %124 = arith.maximumf %122, %123 : vector<8x32x128xf32>
    %125 = arith.truncf %124 : vector<8x32x128xf32> to vector<8x32x128xbf16>
    %c0_130 = arith.constant 0 : index
    %c16_131 = arith.constant 16 : index
    %c0_132 = arith.constant 0 : index
    %c0_133 = arith.constant 0 : index
    %126 = vector.load %arg4[%c0_130, %c16_131, %c0_132, %c0_133] : memref<1x32x32x128xbf16, #tpu.memory_space<vmem>>, vector<1x8x32x128xbf16>
    %127 = vector.shape_cast %126 : vector<1x8x32x128xbf16> to vector<8x32x128xbf16>
    %128 = vector.shape_cast %125 : vector<8x32x128xbf16> to vector<1x8x32x128xbf16>
    tpu.vector_store %arg4[%c0_130, %c16_131, %c0_132, %c0_133], %128 {strides = array<i32>} : memref<1x32x32x128xbf16, #tpu.memory_space<vmem>>, vector<1x8x32x128xbf16>,
    %c24_134 = arith.constant 24 : index
    %c0_135 = arith.constant 0 : index
    %c0_136 = arith.constant 0 : index
    %129 = vector.load %arg5[%c24_134, %c0_135, %c0_136] : memref<34x34x128xf32, #tpu.memory_space<vmem>>, vector<8x32x128xf32>
    %c24_137 = arith.constant 24 : index
    %c1_138 = arith.constant 1 : index
    %c0_139 = arith.constant 0 : index
    %130 = vector.load %arg5[%c24_137, %c1_138, %c0_139] : memref<34x34x128xf32, #tpu.memory_space<vmem>>, vector<8x32x128xf32>
    %131 = arith.maximumf %129, %130 : vector<8x32x128xf32>
    %c24_140 = arith.constant 24 : index
    %c2_141 = arith.constant 2 : index
    %c0_142 = arith.constant 0 : index
    %132 = vector.load %arg5[%c24_140, %c2_141, %c0_142] : memref<34x34x128xf32, #tpu.memory_space<vmem>>, vector<8x32x128xf32>
    %133 = arith.maximumf %131, %132 : vector<8x32x128xf32>
    %c25 = arith.constant 25 : index
    %c0_143 = arith.constant 0 : index
    %c0_144 = arith.constant 0 : index
    %134 = vector.load %arg5[%c25, %c0_143, %c0_144] : memref<34x34x128xf32, #tpu.memory_space<vmem>>, vector<8x32x128xf32>
    %135 = arith.maximumf %133, %134 : vector<8x32x128xf32>
    %c25_145 = arith.constant 25 : index
    %c1_146 = arith.constant 1 : index
    %c0_147 = arith.constant 0 : index
    %136 = vector.load %arg5[%c25_145, %c1_146, %c0_147] : memref<34x34x128xf32, #tpu.memory_space<vmem>>, vector<8x32x128xf32>
    %137 = arith.maximumf %135, %136 : vector<8x32x128xf32>
    %c25_148 = arith.constant 25 : index
    %c2_149 = arith.constant 2 : index
    %c0_150 = arith.constant 0 : index
    %138 = vector.load %arg5[%c25_148, %c2_149, %c0_150] : memref<34x34x128xf32, #tpu.memory_space<vmem>>, vector<8x32x128xf32>
    %139 = arith.maximumf %137, %138 : vector<8x32x128xf32>
    %c26 = arith.constant 26 : index
    %c0_151 = arith.constant 0 : index
    %c0_152 = arith.constant 0 : index
    %140 = vector.load %arg5[%c26, %c0_151, %c0_152] : memref<34x34x128xf32, #tpu.memory_space<vmem>>, vector<8x32x128xf32>
    %141 = arith.maximumf %139, %140 : vector<8x32x128xf32>
    %c26_153 = arith.constant 26 : index
    %c1_154 = arith.constant 1 : index
    %c0_155 = arith.constant 0 : index
    %142 = vector.load %arg5[%c26_153, %c1_154, %c0_155] : memref<34x34x128xf32, #tpu.memory_space<vmem>>, vector<8x32x128xf32>
    %143 = arith.maximumf %141, %142 : vector<8x32x128xf32>
    %c26_156 = arith.constant 26 : index
    %c2_157 = arith.constant 2 : index
    %c0_158 = arith.constant 0 : index
    %144 = vector.load %arg5[%c26_156, %c2_157, %c0_158] : memref<34x34x128xf32, #tpu.memory_space<vmem>>, vector<8x32x128xf32>
    %145 = arith.maximumf %143, %144 : vector<8x32x128xf32>
    %146 = arith.truncf %145 : vector<8x32x128xf32> to vector<8x32x128xbf16>
    %c0_159 = arith.constant 0 : index
    %c24_160 = arith.constant 24 : index
    %c0_161 = arith.constant 0 : index
    %c0_162 = arith.constant 0 : index
    %147 = vector.load %arg4[%c0_159, %c24_160, %c0_161, %c0_162] : memref<1x32x32x128xbf16, #tpu.memory_space<vmem>>, vector<1x8x32x128xbf16>
    %148 = vector.shape_cast %147 : vector<1x8x32x128xbf16> to vector<8x32x128xbf16>
    %149 = vector.shape_cast %146 : vector<8x32x128xbf16> to vector<1x8x32x128xbf16>
    tpu.vector_store %arg4[%c0_159, %c24_160, %c0_161, %c0_162], %149 {strides = array<i32>} : memref<1x32x32x128xbf16, #tpu.memory_space<vmem>>, vector<1x8x32x128xbf16>,
    return
  }
  func.func @transform_0(%arg0: i32) -> (i32, i32, i32, i32) {
    %c0_i32 = arith.constant 0 : i32
    %c0_i32_0 = arith.constant 0 : i32
    %c0_i32_1 = arith.constant 0 : i32
    %c0_i32_2 = arith.constant 0 : i32
    return %arg0, %c0_i32, %c0_i32_0, %c0_i32_1 : i32, i32, i32, i32
  }
  func.func @transform_1(%arg0: i32) -> (i32, i32) {
    %c0_i32 = arith.constant 0 : i32
    %c0_i32_0 = arith.constant 0 : i32
    %c0_i32_1 = arith.constant 0 : i32
    return %c0_i32, %c0_i32_0 : i32, i32
  }
  func.func @transform_2(%arg0: i32) -> (i32, i32) {
    %c0_i32 = arith.constant 0 : i32
    %c0_i32_0 = arith.constant 0 : i32
    %c0_i32_1 = arith.constant 0 : i32
    return %c0_i32, %c0_i32_0 : i32, i32
  }
  func.func @transform_3(%arg0: i32) -> (i32, i32, i32, i32) {
    %c0_i32 = arith.constant 0 : i32
    %c0_i32_0 = arith.constant 0 : i32
    %c0_i32_1 = arith.constant 0 : i32
    %c0_i32_2 = arith.constant 0 : i32
    return %arg0, %c0_i32, %c0_i32_0, %c0_i32_1 : i32, i32, i32, i32
  }
}

module attributes {stable_mosaic.version = 11 : i64} {
  func.func @kernel(%arg0: i32, %arg1: memref<512x128xbf16, #tpu.memory_space<vmem>>, %arg2: memref<1x128xf32, #tpu.memory_space<vmem>>, %arg3: memref<1x128xf32, #tpu.memory_space<vmem>>) attributes {dimension_semantics = [#tpu.dimension_semantics<arbitrary>], iteration_bounds = array<i64: 1>, scalar_prefetch = 0 : i64, scratch_operands = 0 : i64, tpu.core_type = #tpu.core_type<tc>, window_params = [{transform_indices = @transform_0, window_bounds = array<i64: 512, 128>}, {pipeline_mode = #tpu.pipeline_mode<synchronous>, transform_indices = @transform_1, window_bounds = array<i64: 1, 128>}, {pipeline_mode = #tpu.pipeline_mode<synchronous>, transform_indices = @transform_2, window_bounds = array<i64: 1, 128>}]} {
    %c0_i32 = arith.constant 0 : i32
    %0 = arith.cmpi eq, %arg0, %c0_i32 : i32
    %1 = arith.extui %0 : i1 to i32
    %c0_i32_0 = arith.constant 0 : i32
    %2 = arith.cmpi ne, %1, %c0_i32_0 : i32
    scf.if %2 {
      %cst_11 = arith.constant 0.000000e+00 : f32
      %16 = vector.broadcast %cst_11 : f32 to vector<1x128xf32>
      %c0_12 = arith.constant 0 : index
      %c0_13 = arith.constant 0 : index
      %17 = vector.load %arg2[%c0_12, %c0_13] : memref<1x128xf32, #tpu.memory_space<vmem>>, vector<1x128xf32>
      tpu.vector_store %arg2[%c0_12, %c0_13], %16 {strides = array<i32>} : memref<1x128xf32, #tpu.memory_space<vmem>>, vector<1x128xf32>,
      %cst_14 = arith.constant 0.000000e+00 : f32
      %18 = vector.broadcast %cst_14 : f32 to vector<1x128xf32>
      %c0_15 = arith.constant 0 : index
      %c0_16 = arith.constant 0 : index
      %19 = vector.load %arg3[%c0_15, %c0_16] : memref<1x128xf32, #tpu.memory_space<vmem>>, vector<1x128xf32>
      tpu.vector_store %arg3[%c0_15, %c0_16], %18 {strides = array<i32>} : memref<1x128xf32, #tpu.memory_space<vmem>>, vector<1x128xf32>,
    } else {
    }
    %c0 = arith.constant 0 : index
    %c0_1 = arith.constant 0 : index
    %3 = vector.load %arg1[%c0, %c0_1] : memref<512x128xbf16, #tpu.memory_space<vmem>>, vector<512x128xbf16>
    %4 = arith.extf %3 : vector<512x128xbf16> to vector<512x128xf32>
    %c0_2 = arith.constant 0 : index
    %c0_3 = arith.constant 0 : index
    %5 = vector.load %arg2[%c0_2, %c0_3] : memref<1x128xf32, #tpu.memory_space<vmem>>, vector<1x128xf32>
    %cst = arith.constant dense<0.000000e+00> : vector<128xf32>
    %6 = vector.multi_reduction <add>, %4, %cst [0] : vector<512x128xf32> to vector<128xf32>
    %7 = vector.shape_cast %6 : vector<128xf32> to vector<1x128xf32>
    %8 = arith.addf %5, %7 : vector<1x128xf32>
    %c0_4 = arith.constant 0 : index
    %c0_5 = arith.constant 0 : index
    %9 = vector.load %arg2[%c0_4, %c0_5] : memref<1x128xf32, #tpu.memory_space<vmem>>, vector<1x128xf32>
    tpu.vector_store %arg2[%c0_4, %c0_5], %8 {strides = array<i32>} : memref<1x128xf32, #tpu.memory_space<vmem>>, vector<1x128xf32>,
    %c0_6 = arith.constant 0 : index
    %c0_7 = arith.constant 0 : index
    %10 = vector.load %arg3[%c0_6, %c0_7] : memref<1x128xf32, #tpu.memory_space<vmem>>, vector<1x128xf32>
    %11 = arith.mulf %4, %4 : vector<512x128xf32>
    %cst_8 = arith.constant dense<0.000000e+00> : vector<128xf32>
    %12 = vector.multi_reduction <add>, %11, %cst_8 [0] : vector<512x128xf32> to vector<128xf32>
    %13 = vector.shape_cast %12 : vector<128xf32> to vector<1x128xf32>
    %14 = arith.addf %10, %13 : vector<1x128xf32>
    %c0_9 = arith.constant 0 : index
    %c0_10 = arith.constant 0 : index
    %15 = vector.load %arg3[%c0_9, %c0_10] : memref<1x128xf32, #tpu.memory_space<vmem>>, vector<1x128xf32>
    tpu.vector_store %arg3[%c0_9, %c0_10], %14 {strides = array<i32>} : memref<1x128xf32, #tpu.memory_space<vmem>>, vector<1x128xf32>,
    return
  }
  func.func @transform_0(%arg0: i32) -> (i32, i32) {
    %c0_i32 = arith.constant 0 : i32
    %c0_i32_0 = arith.constant 0 : i32
    return %arg0, %c0_i32 : i32, i32
  }
  func.func @transform_1(%arg0: i32) -> (i32, i32) {
    %c0_i32 = arith.constant 0 : i32
    %c0_i32_0 = arith.constant 0 : i32
    %c0_i32_1 = arith.constant 0 : i32
    return %c0_i32, %c0_i32_0 : i32, i32
  }
  func.func @transform_2(%arg0: i32) -> (i32, i32) {
    %c0_i32 = arith.constant 0 : i32
    %c0_i32_0 = arith.constant 0 : i32
    %c0_i32_1 = arith.constant 0 : i32
    return %c0_i32, %c0_i32_0 : i32, i32
  }
}

</mosaic_0001>

<llo_original>
// kernel: stem_fwd.5
$region0: #{stem_fwd.5}
  #allocation0 [shape = 'u32[]', space=smem, size = 0x4, offset = 0x4, fixed_abs, tag = 'smem constant byte address 0x4 - core index']
  #allocation1 [shape = 'u32[144,128]{1,0:T(1,128)}', space=vmem, size = 0x12000, scoped, tag = 'internal scratch']
  %s0 = inlined_call_operand.vmem [shape: bf16[2048,128], index: 0, kind: input, shape index: {}]
  %s1 = inlined_call_operand.vmem [shape: f32[1,128], index: 1, kind: output, shape index: {0}]
  %s2 = inlined_call_operand.vmem [shape: f32[1,128], index: 2, kind: output, shape index: {1}]
  %3 = xla_tuple %s1, %s2
  %s4 = sld [smem:[#allocation0]]
  $region49: #{stem_fwd.5} parent=0
    _
  %s6 = ssub.s32 1, %s4
  %s7 = scalar_select 0, %s6, %s4
  loop: start=0, step=1, limit=4
  $region2: #{stem_fwd.5} parent=0 // loop_pre_header
    _
  $region3: #{stem_fwd.5} parent=0 // loop_header
    %s9 = sphi 0, %s13
    %p10 = scmp.ge.s32.totalorder %s9, 4
    %s19 = sphi 0, %s21
    %s22 = sphi 0, %s19
    %s23 = sphi 0, %s22
    %s39 = sphi 0, %s23
    %s43 = sphi 0, %s43
    %s45 = sphi 0, %s43
    %s46 = sphi 0, %s45
    %s60 = sphi 0, %s46
    %s64 = sphi 0, %s64
    %s66 = sphi 0, %s64
    %s67 = sphi 0, %s66
    %s81 = sphi 0, %s67
  $region4: #{stem_fwd.5} parent=0 // loop_header_branch
    %12 = sbr.rel (%p10) target = $region8
  $region5: #{stem_fwd.5} parent=0 // loop_body
    %s14 = ssub.s32 %s9, 1
    %s15 = ssub.s32 %s9, 2
    %s16 = sadd.s32 %s9, 1
    %s17 = ssub.s32 %s9, %s16
    %p18 = scmp.eq.s32.totalorder %s17, 0
    %s20 = sadd.s32 %s19, 1
    %s21 = scalar_select %p18, %s19, %s20
    %p24 = pneg %p18
    %p25 = scmp.eq.s32.totalorder %s9, 1
    %p26 = por %p24, %p25
    %p27 = scmp.ne.s32.totalorder %s19, %s22
    %p28 = scmp.eq.s32.totalorder %s9, 0
    %p29 = por %p27, %p28
    %p30 = scmp.ne.s32.totalorder %s19, %s22
    %p31 = scmp.eq.s32.totalorder %s14, 1
    %p32 = por %p30, %p31
    %p33 = scmp.ne.s32.totalorder %s22, %s23
    %p34 = scmp.eq.s32.totalorder %s14, 0
    %p35 = por %p33, %p34
    %p36 = scmp.ne.s32.totalorder %s22, %s23
    %p37 = scmp.eq.s32.totalorder %s15, 1
    %p38 = por %p36, %p37
    %p40 = scmp.ne.s32.totalorder %s23, %s39
    %p41 = scmp.eq.s32.totalorder %s15, 0
    %p42 = por %p40, %p41
    %s44 = sadd.s32 %s43, 1
    %p47 = scmp.eq.s32.totalorder %s9, 1
    %p48 = scmp.ne.s32.totalorder %s43, %s45
    %p49 = scmp.eq.s32.totalorder %s9, 0
    %p50 = por %p48, %p49
    %p51 = scmp.ne.s32.totalorder %s43, %s45
    %p52 = scmp.eq.s32.totalorder %s14, 1
    %p53 = por %p51, %p52
    %p54 = scmp.ne.s32.totalorder %s45, %s46
    %p55 = scmp.eq.s32.totalorder %s14, 0
    %p56 = por %p54, %p55
    %p57 = scmp.ne.s32.totalorder %s45, %s46
    %p58 = scmp.eq.s32.totalorder %s15, 1
    %p59 = por %p57, %p58
    %p61 = scmp.ne.s32.totalorder %s46, %s60
    %p62 = scmp.eq.s32.totalorder %s15, 0
    %p63 = por %p61, %p62
    %s65 = sadd.s32 %s64, 1
    %p68 = scmp.eq.s32.totalorder %s9, 1
    %p69 = scmp.ne.s32.totalorder %s64, %s66
    %p70 = scmp.eq.s32.totalorder %s9, 0
    %p71 = por %p69, %p70
    %p72 = scmp.ne.s32.totalorder %s64, %s66
    %p73 = scmp.eq.s32.totalorder %s14, 1
    %p74 = por %p72, %p73
    %p75 = scmp.ne.s32.totalorder %s66, %s67
    %p76 = scmp.eq.s32.totalorder %s14, 0
    %p77 = por %p75, %p76
    %p78 = scmp.ne.s32.totalorder %s66, %s67
    %p79 = scmp.eq.s32.totalorder %s15, 1
    %p80 = por %p78, %p79
    %p82 = scmp.ne.s32.totalorder %s67, %s81
    %p83 = scmp.eq.s32.totalorder %s15, 0
    %p84 = por %p82, %p83
    %p85 = scmp.le.s32.totalorder 1, %s9
    %p86 = scmp.lt.s32.totalorder %s9, 3
    %p87 = pnand %p85, %p86
    %p88 = pneg %p87
    // Predicated region
    $region9: #{stem_fwd.5} parent=5 // pred_check
      _
    $region10: #{stem_fwd.5} parent=5 // pred_check_branch
      %90 = sbr.rel (%p87) target = $region12
    $region11: #{stem_fwd.5} parent=5 // pred_region
      %s91 = ssub.s32 %s9, 1
    $region12: #{stem_fwd.5} parent=5 // pred_fallthru
      _
    %p92 = scmp.lt.s32.totalorder %s9, 2
    // Predicated region
    $region13: #{stem_fwd.5} parent=5 // pred_check
      %p93 = pneg %p92
    $region14: #{stem_fwd.5} parent=5 // pred_check_branch
      %95 = sbr.rel (%p93) target = $region16
    $region15: #{stem_fwd.5} parent=5 // pred_region
      // Predicated region
      $region17: #{stem_fwd.5} parent=15 // pred_check
        %p96 = pneg %p29
      $region18: #{stem_fwd.5} parent=15 // pred_check_branch
        %98 = sbr.rel (%p96) target = $region20
      $region19: #{stem_fwd.5} parent=15 // pred_region
        %s99 = smul.u32 128, %s9
        %p100 = scmp.lt.s32.totalorder %s99, 255
        %s101 = scalar_select %p100, %s99, 255
        %s102 = smul.addr %s101, 4
        %s103 = scalar_lea.vmem %s0, %s102
        %s104 = smul.u32 128, %s9
      $region20: #{stem_fwd.5} parent=15 // pred_fallthru
        _
    $region16: #{stem_fwd.5} parent=5 // pred_fallthru
      _
    %p105 = scmp.le.s32.totalorder 1, %s9
    %p106 = scmp.lt.s32.totalorder %s9, 3
    %p107 = pnand %p105, %p106
    %p108 = pneg %p107
    // Predicated region
    $region21: #{stem_fwd.5} parent=5 // pred_check
      _
    $region22: #{stem_fwd.5} parent=5 // pred_check_branch
      %110 = sbr.rel (%p107) target = $region24
    $region23: #{stem_fwd.5} parent=5 // pred_region
      %s111 = ssub.s32 %s9, 1
      %s112 = smul.u32 128, %s14
      %p113 = scmp.lt.s32.totalorder %s112, 255
      %s114 = scalar_select %p113, %s112, 255
      %s115 = smul.addr %s114, 4
      %s116 = scalar_lea.vmem %s0, %s115
      %p117 = pneg %p35
      %p118 = pneg %p32
      %p119 = pneg %p56
      %p120 = pneg %p53
      %p121 = pneg %p77
      %p122 = pneg %p74
      %s123 = smul.u32 128, %s14
      %p124 = scmp.lt.s32.totalorder %s123, 255
      %s125 = scalar_select %p124, %s123, 255
      %s126 = smul.addr %s125, 4
      %s127 = scalar_lea.vmem %s0, %s126
      %s128 = smul.u32 128, %s14
      %p129 = scmp.eq.s32.totalorder %s14, 0
      // Predicated region
      $region25: #{stem_fwd.5} parent=23 // pred_check
        %p130 = pneg %p129
      $region26: #{stem_fwd.5} parent=23 // pred_check_branch
        %132 = sbr.rel (%p130) target = $region28
      $region27: #{stem_fwd.5} parent=23 // pred_region
        %133 = vst [vmem:[%s1] sm:$0x1] 0.0
        %134 = vst [vmem:[%s2] sm:$0x1] 0.0
      $region28: #{stem_fwd.5} parent=23 // pred_fallthru
        _
      %v135 = vld [vmem:[%s127] sm:$0xf]
      %v136 = vld [vmem:[%s127 + $0x4] sm:$0xf]
      %v137 = vld [vmem:[%s127 + $0x8] sm:$0xf]
      %v138 = vld [vmem:[%s127 + $0xc] sm:$0xf]
      %v139 = vld [vmem:[%s127 + $0x10] sm:$0xf]
      %v140 = vld [vmem:[%s127 + $0x14] sm:$0xf]
      %v141 = vld [vmem:[%s127 + $0x18] sm:$0xf]
      %v142 = vld [vmem:[%s127 + $0x1c] sm:$0xf]
      %v143 = vld [vmem:[%s127 + $0x20] sm:$0xf]
      %v144 = vld [vmem:[%s127 + $0x24] sm:$0xf]
      %v145 = vld [vmem:[%s127 + $0x28] sm:$0xf]
      %v146 = vld [vmem:[%s127 + $0x2c] sm:$0xf]
      %v147 = vld [vmem:[%s127 + $0x30] sm:$0xf]
      %v148 = vld [vmem:[%s127 + $0x34] sm:$0xf]
      %v149 = vld [vmem:[%s127 + $0x38] sm:$0xf]
      %v150 = vld [vmem:[%s127 + $0x3c] sm:$0xf]
      %v151 = vld [vmem:[%s127 + $0x40] sm:$0xf]
      %v152 = vld [vmem:[%s127 + $0x44] sm:$0xf]
      %v153 = vld [vmem:[%s127 + $0x48] sm:$0xf]
      %v154 = vld [vmem:[%s127 + $0x4c] sm:$0xf]
      %v155 = vld [vmem:[%s127 + $0x50] sm:$0xf]
      %v156 = vld [vmem:[%s127 + $0x54] sm:$0xf]
      %v157 = vld [vmem:[%s127 + $0x58] sm:$0xf]
      %v158 = vld [vmem:[%s127 + $0x5c] sm:$0xf]
      %v159 = vld [vmem:[%s127 + $0x60] sm:$0xf]
      %v160 = vld [vmem:[%s127 + $0x64] sm:$0xf]
      %v161 = vld [vmem:[%s127 + $0x68] sm:$0xf]
      %v162 = vld [vmem:[%s127 + $0x6c] sm:$0xf]
      %v163 = vld [vmem:[%s127 + $0x70] sm:$0xf]
      %v164 = vld [vmem:[%s127 + $0x74] sm:$0xf]
      %v165 = vld [vmem:[%s127 + $0x78] sm:$0xf]
      %v166 = vld [vmem:[%s127 + $0x7c] sm:$0xf]
      %v167 = vld [vmem:[%s127 + $0x80] sm:$0xf]
      %v168 = vld [vmem:[%s127 + $0x84] sm:$0xf]
      %v169 = vld [vmem:[%s127 + $0x88] sm:$0xf]
      %v170 = vld [vmem:[%s127 + $0x8c] sm:$0xf]
      %v171 = vld [vmem:[%s127 + $0x90] sm:$0xf]
      %v172 = vld [vmem:[%s127 + $0x94] sm:$0xf]
      %v173 = vld [vmem:[%s127 + $0x98] sm:$0xf]
      %v174 = vld [vmem:[%s127 + $0x9c] sm:$0xf]
      %v175 = vld [vmem:[%s127 + $0xa0] sm:$0xf]
      %v176 = vld [vmem:[%s127 + $0xa4] sm:$0xf]
      %v177 = vld [vmem:[%s127 + $0xa8] sm:$0xf]
      %v178 = vld [vmem:[%s127 + $0xac] sm:$0xf]
      %v179 = vld [vmem:[%s127 + $0xb0] sm:$0xf]
      %v180 = vld [vmem:[%s127 + $0xb4] sm:$0xf]
      %v181 = vld [vmem:[%s127 + $0xb8] sm:$0xf]
      %v182 = vld [vmem:[%s127 + $0xbc] sm:$0xf]
      %v183 = vld [vmem:[%s127 + $0xc0] sm:$0xf]
      %v184 = vld [vmem:[%s127 + $0xc4] sm:$0xf]
      %v185 = vld [vmem:[%s127 + $0xc8] sm:$0xf]
      %v186 = vld [vmem:[%s127 + $0xcc] sm:$0xf]
      %v187 = vld [vmem:[%s127 + $0xd0] sm:$0xf]
      %v188 = vld [vmem:[%s127 + $0xd4] sm:$0xf]
      %v189 = vld [vmem:[%s127 + $0xd8] sm:$0xf]
      %v190 = vld [vmem:[%s127 + $0xdc] sm:$0xf]
      %v191 = vld [vmem:[%s127 + $0xe0] sm:$0xf]
      %v192 = vld [vmem:[%s127 + $0xe4] sm:$0xf]
      %v193 = vld [vmem:[%s127 + $0xe8] sm:$0xf]
      %v194 = vld [vmem:[%s127 + $0xec] sm:$0xf]
      %v195 = vld [vmem:[%s127 + $0xf0] sm:$0xf]
      %v196 = vld [vmem:[%s127 + $0xf4] sm:$0xf]
      %v197 = vld [vmem:[%s127 + $0xf8] sm:$0xf]
      %v198 = vld [vmem:[%s127 + $0xfc] sm:$0xf]
      %v199 = vld [vmem:[%s127 + $0x100] sm:$0xf]
      %v200 = vld [vmem:[%s127 + $0x104] sm:$0xf]
      %v201 = vld [vmem:[%s127 + $0x108] sm:$0xf]
      %v202 = vld [vmem:[%s127 + $0x10c] sm:$0xf]
      %v203 = vld [vmem:[%s127 + $0x110] sm:$0xf]
      %v204 = vld [vmem:[%s127 + $0x114] sm:$0xf]
      %v205 = vld [vmem:[%s127 + $0x118] sm:$0xf]
      %v206 = vld [vmem:[%s127 + $0x11c] sm:$0xf]
      %v207 = vld [vmem:[%s127 + $0x120] sm:$0xf]
      %v208 = vld [vmem:[%s127 + $0x124] sm:$0xf]
      %v209 = vld [vmem:[%s127 + $0x128] sm:$0xf]
      %v210 = vld [vmem:[%s127 + $0x12c] sm:$0xf]
      %v211 = vld [vmem:[%s127 + $0x130] sm:$0xf]
      %v212 = vld [vmem:[%s127 + $0x134] sm:$0xf]
      %v213 = vld [vmem:[%s127 + $0x138] sm:$0xf]
      %v214 = vld [vmem:[%s127 + $0x13c] sm:$0xf]
      %v215 = vld [vmem:[%s127 + $0x140] sm:$0xf]
      %v216 = vld [vmem:[%s127 + $0x144] sm:$0xf]
      %v217 = vld [vmem:[%s127 + $0x148] sm:$0xf]
      %v218 = vld [vmem:[%s127 + $0x14c] sm:$0xf]
      %v219 = vld [vmem:[%s127 + $0x150] sm:$0xf]
      %v220 = vld [vmem:[%s127 + $0x154] sm:$0xf]
      %v221 = vld [vmem:[%s127 + $0x158] sm:$0xf]
      %v222 = vld [vmem:[%s127 + $0x15c] sm:$0xf]
      %v223 = vld [vmem:[%s127 + $0x160] sm:$0xf]
      %v224 = vld [vmem:[%s127 + $0x164] sm:$0xf]
      %v225 = vld [vmem:[%s127 + $0x168] sm:$0xf]
      %v226 = vld [vmem:[%s127 + $0x16c] sm:$0xf]
      %v227 = vld [vmem:[%s127 + $0x170] sm:$0xf]
      %v228 = vld [vmem:[%s127 + $0x174] sm:$0xf]
      %v229 = vld [vmem:[%s127 + $0x178] sm:$0xf]
      %v230 = vld [vmem:[%s127 + $0x17c] sm:$0xf]
      %v231 = vld [vmem:[%s127 + $0x180] sm:$0xf]
      %v232 = vld [vmem:[%s127 + $0x184] sm:$0xf]
      %v233 = vld [vmem:[%s127 + $0x188] sm:$0xf]
      %v234 = vld [vmem:[%s127 + $0x18c] sm:$0xf]
      %v235 = vld [vmem:[%s127 + $0x190] sm:$0xf]
      %v236 = vld [vmem:[%s127 + $0x194] sm:$0xf]
      %v237 = vld [vmem:[%s127 + $0x198] sm:$0xf]
      %v238 = vld [vmem:[%s127 + $0x19c] sm:$0xf]
      %v239 = vld [vmem:[%s127 + $0x1a0] sm:$0xf]
      %v240 = vld [vmem:[%s127 + $0x1a4] sm:$0xf]
      %v241 = vld [vmem:[%s127 + $0x1a8] sm:$0xf]
      %v242 = vld [vmem:[%s127 + $0x1ac] sm:$0xf]
      %v243 = vld [vmem:[%s127 + $0x1b0] sm:$0xf]
      %v244 = vld [vmem:[%s127 + $0x1b4] sm:$0xf]
      %v245 = vld [vmem:[%s127 + $0x1b8] sm:$0xf]
      %v246 = vld [vmem:[%s127 + $0x1bc] sm:$0xf]
      %v247 = vld [vmem:[%s127 + $0x1c0] sm:$0xf]
      %v248 = vld [vmem:[%s127 + $0x1c4] sm:$0xf]
      %v249 = vld [vmem:[%s127 + $0x1c8] sm:$0xf]
      %v250 = vld [vmem:[%s127 + $0x1cc] sm:$0xf]
      %v251 = vld [vmem:[%s127 + $0x1d0] sm:$0xf]
      %v252 = vld [vmem:[%s127 + $0x1d4] sm:$0xf]
      %v253 = vld [vmem:[%s127 + $0x1d8] sm:$0xf]
      %v254 = vld [vmem:[%s127 + $0x1dc] sm:$0xf]
      %v255 = vld [vmem:[%s127 + $0x1e0] sm:$0xf]
      %v256 = vld [vmem:[%s127 + $0x1e4] sm:$0xf]
      %v257 = vld [vmem:[%s127 + $0x1e8] sm:$0xf]
      %v258 = vld [vmem:[%s127 + $0x1ec] sm:$0xf]
      %v259 = vld [vmem:[%s127 + $0x1f0] sm:$0xf]
      %v260 = vld [vmem:[%s127 + $0x1f4] sm:$0xf]
      %v261 = vld [vmem:[%s127 + $0x1f8] sm:$0xf]
      %v262 = vld [vmem:[%s127 + $0x1fc] sm:$0xf]
      %v263 = vunpack.c.l.bf16 %v135
      %v264 = vunpack.c.l.bf16 %v136
      %v265 = vunpack.c.l.bf16 %v137
      %v266 = vunpack.c.l.bf16 %v138
      %v267 = vunpack.c.l.bf16 %v139
      %v268 = vunpack.c.l.bf16 %v140
      %v269 = vunpack.c.l.bf16 %v141
      %v270 = vunpack.c.l.bf16 %v142
      %v271 = vunpack.c.l.bf16 %v143
      %v272 = vunpack.c.l.bf16 %v144
      %v273 = vunpack.c.l.bf16 %v145
      %v274 = vunpack.c.l.bf16 %v146
      %v275 = vunpack.c.l.bf16 %v147
      %v276 = vunpack.c.l.bf16 %v148
      %v277 = vunpack.c.l.bf16 %v149
      %v278 = vunpack.c.l.bf16 %v150
      %v279 = vunpack.c.l.bf16 %v151
      %v280 = vunpack.c.l.bf16 %v152
      %v281 = vunpack.c.l.bf16 %v153
      %v282 = vunpack.c.l.bf16 %v154
      %v283 = vunpack.c.l.bf16 %v155
      %v284 = vunpack.c.l.bf16 %v156
      %v285 = vunpack.c.l.bf16 %v157
      %v286 = vunpack.c.l.bf16 %v158
      %v287 = vunpack.c.l.bf16 %v159
      %v288 = vunpack.c.l.bf16 %v160
      %v289 = vunpack.c.l.bf16 %v161
      %v290 = vunpack.c.l.bf16 %v162
      %v291 = vunpack.c.l.bf16 %v163
      %v292 = vunpack.c.l.bf16 %v164
      %v293 = vunpack.c.l.bf16 %v165
      %v294 = vunpack.c.l.bf16 %v166
      %v295 = vunpack.c.l.bf16 %v167
      %v296 = vunpack.c.l.bf16 %v168
      %v297 = vunpack.c.l.bf16 %v169
      %v298 = vunpack.c.l.bf16 %v170
      %v299 = vunpack.c.l.bf16 %v171
      %v300 = vunpack.c.l.bf16 %v172
      %v301 = vunpack.c.l.bf16 %v173
      %v302 = vunpack.c.l.bf16 %v174
      %v303 = vunpack.c.l.bf16 %v175
      %v304 = vunpack.c.l.bf16 %v176
      %v305 = vunpack.c.l.bf16 %v177
      %v306 = vunpack.c.l.bf16 %v178
      %v307 = vunpack.c.l.bf16 %v179
      %v308 = vunpack.c.l.bf16 %v180
      %v309 = vunpack.c.l.bf16 %v181
      %v310 = vunpack.c.l.bf16 %v182
      %v311 = vunpack.c.l.bf16 %v183
      %v312 = vunpack.c.l.bf16 %v184
      %v313 = vunpack.c.l.bf16 %v185
      %v314 = vunpack.c.l.bf16 %v186
      %v315 = vunpack.c.l.bf16 %v187
      %v316 = vunpack.c.l.bf16 %v188
      %v317 = vunpack.c.l.bf16 %v189
      %v318 = vunpack.c.l.bf16 %v190
      %v319 = vunpack.c.l.bf16 %v191
      %v320 = vunpack.c.l.bf16 %v192
      %v321 = vunpack.c.l.bf16 %v193
      %v322 = vunpack.c.l.bf16 %v194
      %v323 = vunpack.c.l.bf16 %v195
      %v324 = vunpack.c.l.bf16 %v196
      %v325 = vunpack.c.l.bf16 %v197
      %v326 = vunpack.c.l.bf16 %v198
      %v327 = vunpack.c.l.bf16 %v199
      %v328 = vunpack.c.l.bf16 %v200
      %v329 = vunpack.c.l.bf16 %v201
      %v330 = vunpack.c.l.bf16 %v202
      %v331 = vunpack.c.l.bf16 %v203
      %v332 = vunpack.c.l.bf16 %v204
      %v333 = vunpack.c.l.bf16 %v205
      %v334 = vunpack.c.l.bf16 %v206
      %v335 = vunpack.c.l.bf16 %v207
      %v336 = vunpack.c.l.bf16 %v208
      %v337 = vunpack.c.l.bf16 %v209
      %v338 = vunpack.c.l.bf16 %v210
      %v339 = vunpack.c.l.bf16 %v211
      %v340 = vunpack.c.l.bf16 %v212
      %v341 = vunpack.c.l.bf16 %v213
      %v342 = vunpack.c.l.bf16 %v214
      %v343 = vunpack.c.l.bf16 %v215
      %v344 = vunpack.c.l.bf16 %v216
      %v345 = vunpack.c.l.bf16 %v217
      %v346 = vunpack.c.l.bf16 %v218
      %v347 = vunpack.c.l.bf16 %v219
      %v348 = vunpack.c.l.bf16 %v220
      %v349 = vunpack.c.l.bf16 %v221
      %v350 = vunpack.c.l.bf16 %v222
      %v351 = vunpack.c.l.bf16 %v223
      %v352 = vunpack.c.l.bf16 %v224
      %v353 = vunpack.c.l.bf16 %v225
      %v354 = vunpack.c.l.bf16 %v226
      %v355 = vunpack.c.l.bf16 %v227
      %v356 = vunpack.c.l.bf16 %v228
      %v357 = vunpack.c.l.bf16 %v229
      %v358 = vunpack.c.l.bf16 %v230
      %v359 = vunpack.c.l.bf16 %v231
      %v360 = vunpack.c.l.bf16 %v232
      %v361 = vunpack.c.l.bf16 %v233
      %v362 = vunpack.c.l.bf16 %v234
      %v363 = vunpack.c.l.bf16 %v235
      %v364 = vunpack.c.l.bf16 %v236
      %v365 = vunpack.c.l.bf16 %v237
      %v366 = vunpack.c.l.bf16 %v238
      %v367 = vunpack.c.l.bf16 %v239
      %v368 = vunpack.c.l.bf16 %v240
      %v369 = vunpack.c.l.bf16 %v241
      %v370 = vunpack.c.l.bf16 %v242
      %v371 = vunpack.c.l.bf16 %v243
      %v372 = vunpack.c.l.bf16 %v244
      %v373 = vunpack.c.l.bf16 %v245
      %v374 = vunpack.c.l.bf16 %v246
      %v375 = vunpack.c.l.bf16 %v247
      %v376 = vunpack.c.l.bf16 %v248
      %v377 = vunpack.c.l.bf16 %v249
      %v378 = vunpack.c.l.bf16 %v250
      %v379 = vunpack.c.l.bf16 %v251
      %v380 = vunpack.c.l.bf16 %v252
      %v381 = vunpack.c.l.bf16 %v253
      %v382 = vunpack.c.l.bf16 %v254
      %v383 = vunpack.c.l.bf16 %v255
      %v384 = vunpack.c.l.bf16 %v256
      %v385 = vunpack.c.l.bf16 %v257
      %v386 = vunpack.c.l.bf16 %v258
      %v387 = vunpack.c.l.bf16 %v259
      %v388 = vunpack.c.l.bf16 %v260
      %v389 = vunpack.c.l.bf16 %v261
      %v390 = vunpack.c.l.bf16 %v262
      %v391 = vld [vmem:[%s1] sm:$0x1]
      %v392 = vadd.f32 %v263, %v264
      %v393 = vadd.f32 %v392, %v265
      %v394 = vadd.f32 %v393, %v266
      %v395 = vadd.f32 %v394, %v267
      %v396 = vadd.f32 %v395, %v268
      %v397 = vadd.f32 %v396, %v269
      %v398 = vadd.f32 %v397, %v270
      %v399 = vadd.f32 %v398, %v271
      %v400 = vadd.f32 %v399, %v272
      %v401 = vadd.f32 %v400, %v273
      %v402 = vadd.f32 %v401, %v274
      %v403 = vadd.f32 %v402, %v275
      %v404 = vadd.f32 %v403, %v276
      %v405 = vadd.f32 %v404, %v277
      %v406 = vadd.f32 %v405, %v278
      %v407 = vadd.f32 %v406, %v279
      %v408 = vadd.f32 %v407, %v280
      %v409 = vadd.f32 %v408, %v281
      %v410 = vadd.f32 %v409, %v282
      %v411 = vadd.f32 %v410, %v283
      %v412 = vadd.f32 %v411, %v284
      %v413 = vadd.f32 %v412, %v285
      %v414 = vadd.f32 %v413, %v286
      %v415 = vadd.f32 %v414, %v287
      %v416 = vadd.f32 %v415, %v288
      %v417 = vadd.f32 %v416, %v289
      %v418 = vadd.f32 %v417, %v290
      %v419 = vadd.f32 %v418, %v291
      %v420 = vadd.f32 %v419, %v292
      %v421 = vadd.f32 %v420, %v293
      %v422 = vadd.f32 %v421, %v294
      %v423 = vadd.f32 %v422, %v295
      %v424 = vadd.f32 %v423, %v296
      %v425 = vadd.f32 %v424, %v297
      %v426 = vadd.f32 %v425, %v298
      %v427 = vadd.f32 %v426, %v299
      %v428 = vadd.f32 %v427, %v300
      %v429 = vadd.f32 %v428, %v301
      %v430 = vadd.f32 %v429, %v302
      %v431 = vadd.f32 %v430, %v303
      %v432 = vadd.f32 %v431, %v304
      %v433 = vadd.f32 %v432, %v305
      %v434 = vadd.f32 %v433, %v306
      %v435 = vadd.f32 %v434, %v307
      %v436 = vadd.f32 %v435, %v308
      %v437 = vadd.f32 %v436, %v309
      %v438 = vadd.f32 %v437, %v310
      %v439 = vadd.f32 %v438, %v311
      %v440 = vadd.f32 %v439, %v312
      %v441 = vadd.f32 %v440, %v313
      %v442 = vadd.f32 %v441, %v314
      %v443 = vadd.f32 %v442, %v315
      %v444 = vadd.f32 %v443, %v316
      %v445 = vadd.f32 %v444, %v317
      %v446 = vadd.f32 %v445, %v318
      %v447 = vadd.f32 %v446, %v319
      %v448 = vadd.f32 %v447, %v320
      %v449 = vadd.f32 %v448, %v321
      %v450 = vadd.f32 %v449, %v322
      %v451 = vadd.f32 %v450, %v323
      %v452 = vadd.f32 %v451, %v324
      %v453 = vadd.f32 %v452, %v325
      %v454 = vadd.f32 %v453, %v326
      %v455 = vadd.f32 %v454, %v327
      %v456 = vadd.f32 %v455, %v328
      %v457 = vadd.f32 %v456, %v329
      %v458 = vadd.f32 %v457, %v330
      %v459 = vadd.f32 %v458, %v331
      %v460 = vadd.f32 %v459, %v332
      %v461 = vadd.f32 %v460, %v333
      %v462 = vadd.f32 %v461, %v334
      %v463 = vadd.f32 %v462, %v335
      %v464 = vadd.f32 %v463, %v336
      %v465 = vadd.f32 %v464, %v337
      %v466 = vadd.f32 %v465, %v338
      %v467 = vadd.f32 %v466, %v339
      %v468 = vadd.f32 %v467, %v340
      %v469 = vadd.f32 %v468, %v341
      %v470 = vadd.f32 %v469, %v342
      %v471 = vadd.f32 %v470, %v343
      %v472 = vadd.f32 %v471, %v344
      %v473 = vadd.f32 %v472, %v345
      %v474 = vadd.f32 %v473, %v346
      %v475 = vadd.f32 %v474, %v347
      %v476 = vadd.f32 %v475, %v348
      %v477 = vadd.f32 %v476, %v349
      %v478 = vadd.f32 %v477, %v350
      %v479 = vadd.f32 %v478, %v351
      %v480 = vadd.f32 %v479, %v352
      %v481 = vadd.f32 %v480, %v353
      %v482 = vadd.f32 %v481, %v354
      %v483 = vadd.f32 %v482, %v355
      %v484 = vadd.f32 %v483, %v356
      %v485 = vadd.f32 %v484, %v357
      %v486 = vadd.f32 %v485, %v358
      %v487 = vadd.f32 %v486, %v359
      %v488 = vadd.f32 %v487, %v360
      %v489 = vadd.f32 %v488, %v361
      %v490 = vadd.f32 %v489, %v362
      %v491 = vadd.f32 %v490, %v363
      %v492 = vadd.f32 %v491, %v364
      %v493 = vadd.f32 %v492, %v365
      %v494 = vadd.f32 %v493, %v366
      %v495 = vadd.f32 %v494, %v367
      %v496 = vadd.f32 %v495, %v368
      %v497 = vadd.f32 %v496, %v369
      %v498 = vadd.f32 %v497, %v370
      %v499 = vadd.f32 %v498, %v371
      %v500 = vadd.f32 %v499, %v372
      %v501 = vadd.f32 %v500, %v373
      %v502 = vadd.f32 %v501, %v374
      %v503 = vadd.f32 %v502, %v375
      %v504 = vadd.f32 %v503, %v376
      %v505 = vadd.f32 %v504, %v377
      %v506 = vadd.f32 %v505, %v378
      %v507 = vadd.f32 %v506, %v379
      %v508 = vadd.f32 %v507, %v380
      %v509 = vadd.f32 %v508, %v381
      %v510 = vadd.f32 %v509, %v382
      %v511 = vadd.f32 %v510, %v383
      %v512 = vadd.f32 %v511, %v384
      %v513 = vadd.f32 %v512, %v385
      %v514 = vadd.f32 %v513, %v386
      %v515 = vadd.f32 %v514, %v387
      %v516 = vadd.f32 %v515, %v388
      %v517 = vadd.f32 %v516, %v389
      %v518 = vadd.f32 %v517, %v390
      %v519 = vrot.slane %v518, 4
      %v520 = vadd.f32 %v518, %v519
      %v521 = vrot.slane %v520, 2
      %v522 = vadd.f32 %v520, %v521
      %v523 = vrot.slane %v522, 1
      %v524 = vadd.f32 %v522, %v523
      %v525 = vadd.f32 %v391, %v524
      %526 = vst [vmem:[%s1] sm:$0x1] %v525
      %v527 = vld [vmem:[%s2] sm:$0x1]
      %v528 = vmul.f32 %v263, %v263
      %v529 = vmul.f32 %v264, %v264
      %v530 = vmul.f32 %v265, %v265
      %v531 = vmul.f32 %v266, %v266
      %v532 = vmul.f32 %v267, %v267
      %v533 = vmul.f32 %v268, %v268
      %v534 = vmul.f32 %v269, %v269
      %v535 = vmul.f32 %v270, %v270
      %v536 = vmul.f32 %v271, %v271
      %v537 = vmul.f32 %v272, %v272
      %v538 = vmul.f32 %v273, %v273
      %v539 = vmul.f32 %v274, %v274
      %v540 = vmul.f32 %v275, %v275
      %v541 = vmul.f32 %v276, %v276
      %v542 = vmul.f32 %v277, %v277
      %v543 = vmul.f32 %v278, %v278
      %v544 = vmul.f32 %v279, %v279
      %v545 = vmul.f32 %v280, %v280
      %v546 = vmul.f32 %v281, %v281
      %v547 = vmul.f32 %v282, %v282
      %v548 = vmul.f32 %v283, %v283
      %v549 = vmul.f32 %v284, %v284
      %v550 = vmul.f32 %v285, %v285
      %v551 = vmul.f32 %v286, %v286
      %v552 = vmul.f32 %v287, %v287
      %v553 = vmul.f32 %v288, %v288
      %v554 = vmul.f32 %v289, %v289
      %v555 = vmul.f32 %v290, %v290
      %v556 = vmul.f32 %v291, %v291
      %v557 = vmul.f32 %v292, %v292
      %v558 = vmul.f32 %v293, %v293
      %v559 = vmul.f32 %v294, %v294
      %v560 = vmul.f32 %v295, %v295
      %v561 = vmul.f32 %v296, %v296
      %v562 = vmul.f32 %v297, %v297
      %v563 = vmul.f32 %v298, %v298
      %v564 = vmul.f32 %v299, %v299
      %v565 = vmul.f32 %v300, %v300
      %v566 = vmul.f32 %v301, %v301
      %v567 = vmul.f32 %v302, %v302
      %v568 = vmul.f32 %v303, %v303
      %v569 = vmul.f32 %v304, %v304
      %v570 = vmul.f32 %v305, %v305
      %v571 = vmul.f32 %v306, %v306
      %v572 = vmul.f32 %v307, %v307
      %v573 = vmul.f32 %v308, %v308
      %v574 = vmul.f32 %v309, %v309
      %v575 = vmul.f32 %v310, %v310
      %v576 = vmul.f32 %v311, %v311
      %v577 = vmul.f32 %v312, %v312
      %v578 = vmul.f32 %v313, %v313
      %v579 = vmul.f32 %v314, %v314
      %v580 = vmul.f32 %v315, %v315
      %v581 = vmul.f32 %v316, %v316
      %v582 = vmul.f32 %v317, %v317
      %v583 = vmul.f32 %v318, %v318
      %v584 = vmul.f32 %v319, %v319
      %v585 = vmul.f32 %v320, %v320
      %v586 = vmul.f32 %v321, %v321
      %v587 = vmul.f32 %v322, %v322
      %v588 = vmul.f32 %v323, %v323
      %v589 = vmul.f32 %v324, %v324
      %v590 = vmul.f32 %v325, %v325
      %v591 = vmul.f32 %v326, %v326
      %v592 = vmul.f32 %v327, %v327
      %v593 = vmul.f32 %v328, %v328
      %v594 = vmul.f32 %v329, %v329
      %v595 = vmul.f32 %v330, %v330
      %v596 = vmul.f32 %v331, %v331
      %v597 = vmul.f32 %v332, %v332
      %v598 = vmul.f32 %v333, %v333
      %v599 = vmul.f32 %v334, %v334
      %v600 = vmul.f32 %v335, %v335
      %v601 = vmul.f32 %v336, %v336
      %v602 = vmul.f32 %v337, %v337
      %v603 = vmul.f32 %v338, %v338
      %v604 = vmul.f32 %v339, %v339
      %v605 = vmul.f32 %v340, %v340
      %v606 = vmul.f32 %v341, %v341
      %v607 = vmul.f32 %v342, %v342
      %v608 = vmul.f32 %v343, %v343
      %v609 = vmul.f32 %v344, %v344
      %v610 = vmul.f32 %v345, %v345
      %v611 = vmul.f32 %v346, %v346
      %v612 = vmul.f32 %v347, %v347
      %v613 = vmul.f32 %v348, %v348
      %v614 = vmul.f32 %v349, %v349
      %v615 = vmul.f32 %v350, %v350
      %v616 = vmul.f32 %v351, %v351
      %v617 = vmul.f32 %v352, %v352
      %v618 = vmul.f32 %v353, %v353
      %v619 = vmul.f32 %v354, %v354
      %v620 = vmul.f32 %v355, %v355
      %v621 = vmul.f32 %v356, %v356
      %v622 = vmul.f32 %v357, %v357
      %v623 = vmul.f32 %v358, %v358
      %v624 = vmul.f32 %v359, %v359
      %v625 = vmul.f32 %v360, %v360
      %v626 = vmul.f32 %v361, %v361
      %v627 = vmul.f32 %v362, %v362
      %v628 = vmul.f32 %v363, %v363
      %v629 = vmul.f32 %v364, %v364
      %v630 = vmul.f32 %v365, %v365
      %v631 = vmul.f32 %v366, %v366
      %v632 = vmul.f32 %v367, %v367
      %v633 = vmul.f32 %v368, %v368
      %v634 = vmul.f32 %v369, %v369
      %v635 = vmul.f32 %v370, %v370
      %v636 = vmul.f32 %v371, %v371
      %v637 = vmul.f32 %v372, %v372
      %v638 = vmul.f32 %v373, %v373
      %v639 = vmul.f32 %v374, %v374
      %v640 = vmul.f32 %v375, %v375
      %v641 = vmul.f32 %v376, %v376
      %v642 = vmul.f32 %v377, %v377
      %v643 = vmul.f32 %v378, %v378
      %v644 = vmul.f32 %v379, %v379
      %v645 = vmul.f32 %v380, %v380
      %v646 = vmul.f32 %v381, %v381
      %v647 = vmul.f32 %v382, %v382
      %v648 = vmul.f32 %v383, %v383
      %v649 = vmul.f32 %v384, %v384
      %v650 = vmul.f32 %v385, %v385
      %v651 = vmul.f32 %v386, %v386
      %v652 = vmul.f32 %v387, %v387
      %v653 = vmul.f32 %v388, %v388
      %v654 = vmul.f32 %v389, %v389
      %v655 = vmul.f32 %v390, %v390
      %v656 = vadd.f32 %v528, %v529
      %v657 = vadd.f32 %v656, %v530
      %v658 = vadd.f32 %v657, %v531
      %v659 = vadd.f32 %v658, %v532
      %v660 = vadd.f32 %v659, %v533
      %v661 = vadd.f32 %v660, %v534
      %v662 = vadd.f32 %v661, %v535
      %v663 = vadd.f32 %v662, %v536
      %v664 = vadd.f32 %v663, %v537
      %v665 = vadd.f32 %v664, %v538
      %v666 = vadd.f32 %v665, %v539
      %v667 = vadd.f32 %v666, %v540
      %v668 = vadd.f32 %v667, %v541
      %v669 = vadd.f32 %v668, %v542
      %v670 = vadd.f32 %v669, %v543
      %v671 = vadd.f32 %v670, %v544
      %v672 = vadd.f32 %v671, %v545
      %v673 = vadd.f32 %v672, %v546
      %v674 = vadd.f32 %v673, %v547
      %v675 = vadd.f32 %v674, %v548
      %v676 = vadd.f32 %v675, %v549
      %v677 = vadd.f32 %v676, %v550
      %v678 = vadd.f32 %v677, %v551
      %v679 = vadd.f32 %v678, %v552
      %v680 = vadd.f32 %v679, %v553
      %v681 = vadd.f32 %v680, %v554
      %v682 = vadd.f32 %v681, %v555
      %v683 = vadd.f32 %v682, %v556
      %v684 = vadd.f32 %v683, %v557
      %v685 = vadd.f32 %v684, %v558
      %v686 = vadd.f32 %v685, %v559
      %v687 = vadd.f32 %v686, %v560
      %v688 = vadd.f32 %v687, %v561
      %v689 = vadd.f32 %v688, %v562
      %v690 = vadd.f32 %v689, %v563
      %v691 = vadd.f32 %v690, %v564
      %v692 = vadd.f32 %v691, %v565
      %v693 = vadd.f32 %v692, %v566
      %v694 = vadd.f32 %v693, %v567
      %v695 = vadd.f32 %v694, %v568
      %v696 = vadd.f32 %v695, %v569
      %v697 = vadd.f32 %v696, %v570
      %v698 = vadd.f32 %v697, %v571
      %v699 = vadd.f32 %v698, %v572
      %v700 = vadd.f32 %v699, %v573
      %v701 = vadd.f32 %v700, %v574
      %v702 = vadd.f32 %v701, %v575
      %v703 = vadd.f32 %v702, %v576
      %v704 = vadd.f32 %v703, %v577
      %v705 = vadd.f32 %v704, %v578
      %v706 = vadd.f32 %v705, %v579
      %v707 = vadd.f32 %v706, %v580
      %v708 = vadd.f32 %v707, %v581
      %v709 = vadd.f32 %v708, %v582
      %v710 = vadd.f32 %v709, %v583
      %v711 = vadd.f32 %v710, %v584
      %v712 = vadd.f32 %v711, %v585
      %v713 = vadd.f32 %v712, %v586
      %v714 = vadd.f32 %v713, %v587
      %v715 = vadd.f32 %v714, %v588
      %v716 = vadd.f32 %v715, %v589
      %v717 = vadd.f32 %v716, %v590
      %v718 = vadd.f32 %v717, %v591
      %v719 = vadd.f32 %v718, %v592
      %v720 = vadd.f32 %v719, %v593
      %v721 = vadd.f32 %v720, %v594
      %v722 = vadd.f32 %v721, %v595
      %v723 = vadd.f32 %v722, %v596
      %v724 = vadd.f32 %v723, %v597
      %v725 = vadd.f32 %v724, %v598
      %v726 = vadd.f32 %v725, %v599
      %v727 = vadd.f32 %v726, %v600
      %v728 = vadd.f32 %v727, %v601
      %v729 = vadd.f32 %v728, %v602
      %v730 = vadd.f32 %v729, %v603
      %v731 = vadd.f32 %v730, %v604
      %v732 = vadd.f32 %v731, %v605
      %v733 = vadd.f32 %v732, %v606
      %v734 = vadd.f32 %v733, %v607
      %v735 = vadd.f32 %v734, %v608
      %v736 = vadd.f32 %v735, %v609
      %v737 = vadd.f32 %v736, %v610
      %v738 = vadd.f32 %v737, %v611
      %v739 = vadd.f32 %v738, %v612
      %v740 = vadd.f32 %v739, %v613
      %v741 = vadd.f32 %v740, %v614
      %v742 = vadd.f32 %v741, %v615
      %v743 = vadd.f32 %v742, %v616
      %v744 = vadd.f32 %v743, %v617
      %v745 = vadd.f32 %v744, %v618
      %v746 = vadd.f32 %v745, %v619
      %v747 = vadd.f32 %v746, %v620
      %v748 = vadd.f32 %v747, %v621
      %v749 = vadd.f32 %v748, %v622
      %v750 = vadd.f32 %v749, %v623
      %v751 = vadd.f32 %v750, %v624
      %v752 = vadd.f32 %v751, %v625
      %v753 = vadd.f32 %v752, %v626
      %v754 = vadd.f32 %v753, %v627
      %v755 = vadd.f32 %v754, %v628
      %v756 = vadd.f32 %v755, %v629
      %v757 = vadd.f32 %v756, %v630
      %v758 = vadd.f32 %v757, %v631
      %v759 = vadd.f32 %v758, %v632
      %v760 = vadd.f32 %v759, %v633
      %v761 = vadd.f32 %v760, %v634
      %v762 = vadd.f32 %v761, %v635
      %v763 = vadd.f32 %v762, %v636
      %v764 = vadd.f32 %v763, %v637
      %v765 = vadd.f32 %v764, %v638
      %v766 = vadd.f32 %v765, %v639
      %v767 = vadd.f32 %v766, %v640
      %v768 = vadd.f32 %v767, %v641
      %v769 = vadd.f32 %v768, %v642
      %v770 = vadd.f32 %v769, %v643
      %v771 = vadd.f32 %v770, %v644
      %v772 = vadd.f32 %v771, %v645
      %v773 = vadd.f32 %v772, %v646
      %v774 = vadd.f32 %v773, %v647
      %v775 = vadd.f32 %v774, %v648
      %v776 = vadd.f32 %v775, %v649
      %v777 = vadd.f32 %v776, %v650
      %v778 = vadd.f32 %v777, %v651
      %v779 = vadd.f32 %v778, %v652
      %v780 = vadd.f32 %v779, %v653
      %v781 = vadd.f32 %v780, %v654
      %v782 = vadd.f32 %v781, %v655
      %v783 = vrot.slane %v782, 4
      %v784 = vadd.f32 %v782, %v783
      %v785 = vrot.slane %v784, 2
      %v786 = vadd.f32 %v784, %v785
      %v787 = vrot.slane %v786, 1
      %v788 = vadd.f32 %v786, %v787
      %v789 = vadd.f32 %v527, %v788
      %790 = vst [vmem:[%s2] sm:$0x1] %v789
      // Predicated region
      $region29: #{stem_fwd.5} parent=23 // pred_check
        %p791 = pneg %p53
      $region30: #{stem_fwd.5} parent=23 // pred_check_branch
        %793 = sbr.rel (%p791) target = $region32
      $region31: #{stem_fwd.5} parent=23 // pred_region
        _
      $region32: #{stem_fwd.5} parent=23 // pred_fallthru
        _
      // Predicated region
      $region33: #{stem_fwd.5} parent=23 // pred_check
        %p794 = pneg %p74
      $region34: #{stem_fwd.5} parent=23 // pred_check_branch
        %796 = sbr.rel (%p794) target = $region36
      $region35: #{stem_fwd.5} parent=23 // pred_region
        _
      $region36: #{stem_fwd.5} parent=23 // pred_fallthru
        _
      // Predicated region
      $region37: #{stem_fwd.5} parent=23 // pred_check
        %p797 = pneg %p53
      $region38: #{stem_fwd.5} parent=23 // pred_check_branch
        %799 = sbr.rel (%p797) target = $region40
      $region39: #{stem_fwd.5} parent=23 // pred_region
        _
      $region40: #{stem_fwd.5} parent=23 // pred_fallthru
        _
      // Predicated region
      $region41: #{stem_fwd.5} parent=23 // pred_check
        %p800 = pneg %p74
      $region42: #{stem_fwd.5} parent=23 // pred_check_branch
        %802 = sbr.rel (%p800) target = $region44
      $region43: #{stem_fwd.5} parent=23 // pred_region
        _
      $region44: #{stem_fwd.5} parent=23 // pred_fallthru
        _
    $region24: #{stem_fwd.5} parent=5 // pred_fallthru
      _
    %p803 = scmp.le.s32.totalorder 2, %s9
    // Predicated region
    $region45: #{stem_fwd.5} parent=5 // pred_check
      %p804 = pneg %p803
    $region46: #{stem_fwd.5} parent=5 // pred_check_branch
      %806 = sbr.rel (%p804) target = $region48
    $region47: #{stem_fwd.5} parent=5 // pred_region
      %s807 = ssub.s32 %s9, 2
    $region48: #{stem_fwd.5} parent=5 // pred_fallthru
      _
  $region6: #{stem_fwd.5} parent=0 // loop_footer
    %s13 = sadd.s32 1, %s9
  $region7: #{stem_fwd.5} parent=0 // loop_footer_branch
    %8 = sbr.rel target = $region3
  $region8: #{stem_fwd.5} parent=0 // loop_exit
    _

// kernel: stem_fwd.4
$region0: #{stem_fwd.4}
  #allocation0 [shape = 'u32[]', space=smem, size = 0x4, offset = 0x4, fixed_abs, tag = 'smem constant byte address 0x4 - core index']
  #allocation1 [shape = 'u32[144,128]{1,0:T(1,128)}', space=vmem, size = 0x12000, scoped, tag = 'internal scratch']
  %s0 = inlined_call_operand.vmem [shape: bf16[2048,256], index: 0, kind: input, shape index: {}]
  %s1 = inlined_call_operand.vmem [shape: bf16[256,128], index: 1, kind: input, shape index: {}]
  %s2 = inlined_call_operand.vmem [shape: f32[1,128], index: 2, kind: input, shape index: {}]
  %s3 = inlined_call_operand.vmem [shape: bf16[2048,128], index: 3, kind: output, shape index: {}]
  %s4 = sld [smem:[#allocation0]]
  $region45: #{stem_fwd.4} parent=0
    _
  %s6 = ssub.s32 1, %s4
  %s7 = scalar_select 0, %s6, %s4
  loop: start=0, step=1, limit=6
  $region2: #{stem_fwd.4} parent=0 // loop_pre_header
    _
  $region3: #{stem_fwd.4} parent=0 // loop_header
    %s9 = sphi 0, %s13
    %p10 = scmp.ge.s32.totalorder %s9, 6
    %s16 = sphi 0, %s28
    %s17 = sphi 0, %s24
    %s18 = sphi 0, %s16
    %s19 = sphi 0, %s17
    %s20 = sphi 0, %s18
    %s21 = sphi 0, %s19
    %s31 = sphi 0, %s33
    %s34 = sphi 0, %s31
    %s35 = sphi 0, %s34
    %s51 = sphi 0, %s35
    %s57 = sphi 0, %s59
    %s60 = sphi 0, %s57
    %s61 = sphi 0, %s60
    %s77 = sphi 0, %s61
    %s83 = sphi 0, %s85
    %s86 = sphi 0, %s83
    %s87 = sphi 0, %s86
    %s103 = sphi 0, %s87
    %s111 = sphi 0, %s113
    %s114 = sphi 0, %s111
    %s115 = sphi 0, %s114
    %s131 = sphi 0, %s115
  $region4: #{stem_fwd.4} parent=0 // loop_header_branch
    %12 = sbr.rel (%p10) target = $region8
  $region5: #{stem_fwd.4} parent=0 // loop_body
    %s14 = ssub.s32 %s9, 1
    %s15 = ssub.s32 %s9, 2
    %s22 = sadd.s32 1, %s17
    %p23 = scmp.ge.s32.totalorder %s22, 1
    %s24 = scalar_select %p23, 0, %s22
    %s25 = sadd.s32 1, %s16
    %s26 = scalar_select %p23, %s25, %s16
    %p27 = scmp.ge.s32.totalorder %s26, 4
    %s28 = scalar_select %p27, 0, %s26
    %s29 = ssub.s32 %s16, %s28
    %p30 = scmp.eq.s32.totalorder %s29, 0
    %s32 = sadd.s32 %s31, 1
    %s33 = scalar_select %p30, %s31, %s32
    %p36 = pneg %p30
    %p37 = scmp.eq.s32.totalorder %s9, 3
    %p38 = por %p36, %p37
    %p39 = scmp.ne.s32.totalorder %s31, %s34
    %p40 = scmp.eq.s32.totalorder %s9, 0
    %p41 = por %p39, %p40
    %p42 = scmp.ne.s32.totalorder %s31, %s34
    %p43 = scmp.eq.s32.totalorder %s14, 3
    %p44 = por %p42, %p43
    %p45 = scmp.ne.s32.totalorder %s34, %s35
    %p46 = scmp.eq.s32.totalorder %s14, 0
    %p47 = por %p45, %p46
    %p48 = scmp.ne.s32.totalorder %s34, %s35
    %p49 = scmp.eq.s32.totalorder %s15, 3
    %p50 = por %p48, %p49
    %p52 = scmp.ne.s32.totalorder %s35, %s51
    %p53 = scmp.eq.s32.totalorder %s15, 0
    %p54 = por %p52, %p53
    %s55 = ssub.s32 %s17, %s24
    %p56 = scmp.eq.s32.totalorder %s55, 0
    %s58 = sadd.s32 %s57, 1
    %s59 = scalar_select %p56, %s57, %s58
    %p62 = pneg %p56
    %p63 = scmp.eq.s32.totalorder %s9, 3
    %p64 = por %p62, %p63
    %p65 = scmp.ne.s32.totalorder %s57, %s60
    %p66 = scmp.eq.s32.totalorder %s9, 0
    %p67 = por %p65, %p66
    %p68 = scmp.ne.s32.totalorder %s57, %s60
    %p69 = scmp.eq.s32.totalorder %s14, 3
    %p70 = por %p68, %p69
    %p71 = scmp.ne.s32.totalorder %s60, %s61
    %p72 = scmp.eq.s32.totalorder %s14, 0
    %p73 = por %p71, %p72
    %p74 = scmp.ne.s32.totalorder %s60, %s61
    %p75 = scmp.eq.s32.totalorder %s15, 3
    %p76 = por %p74, %p75
    %p78 = scmp.ne.s32.totalorder %s61, %s77
    %p79 = scmp.eq.s32.totalorder %s15, 0
    %p80 = por %p78, %p79
    %s81 = ssub.s32 %s17, %s24
    %p82 = scmp.eq.s32.totalorder %s81, 0
    %s84 = sadd.s32 %s83, 1
    %s85 = scalar_select %p82, %s83, %s84
    %p88 = pneg %p82
    %p89 = scmp.eq.s32.totalorder %s9, 3
    %p90 = por %p88, %p89
    %p91 = scmp.ne.s32.totalorder %s83, %s86
    %p92 = scmp.eq.s32.totalorder %s9, 0
    %p93 = por %p91, %p92
    %p94 = scmp.ne.s32.totalorder %s83, %s86
    %p95 = scmp.eq.s32.totalorder %s14, 3
    %p96 = por %p94, %p95
    %p97 = scmp.ne.s32.totalorder %s86, %s87
    %p98 = scmp.eq.s32.totalorder %s14, 0
    %p99 = por %p97, %p98
    %p100 = scmp.ne.s32.totalorder %s86, %s87
    %p101 = scmp.eq.s32.totalorder %s15, 3
    %p102 = por %p100, %p101
    %p104 = scmp.ne.s32.totalorder %s87, %s103
    %p105 = scmp.eq.s32.totalorder %s15, 0
    %p106 = por %p104, %p105
    %s107 = ssub.s32 %s16, %s28
    %s108 = ssub.s32 %s17, %s24
    %s109 = sor.u32 %s107, %s108
    %p110 = scmp.eq.s32.totalorder %s109, 0
    %s112 = sadd.s32 %s111, 1
    %s113 = scalar_select %p110, %s111, %s112
    %p116 = pneg %p110
    %p117 = scmp.eq.s32.totalorder %s9, 3
    %p118 = por %p116, %p117
    %p119 = scmp.ne.s32.totalorder %s111, %s114
    %p120 = scmp.eq.s32.totalorder %s9, 0
    %p121 = por %p119, %p120
    %p122 = scmp.ne.s32.totalorder %s111, %s114
    %p123 = scmp.eq.s32.totalorder %s14, 3
    %p124 = por %p122, %p123
    %p125 = scmp.ne.s32.totalorder %s114, %s115
    %p126 = scmp.eq.s32.totalorder %s14, 0
    %p127 = por %p125, %p126
    %p128 = scmp.ne.s32.totalorder %s114, %s115
    %p129 = scmp.eq.s32.totalorder %s15, 3
    %p130 = por %p128, %p129
    %p132 = scmp.ne.s32.totalorder %s115, %s131
    %p133 = scmp.eq.s32.totalorder %s15, 0
    %p134 = por %p132, %p133
    %p135 = scmp.le.s32.totalorder 1, %s9
    %p136 = scmp.lt.s32.totalorder %s9, 5
    %p137 = pnand %p135, %p136
    %p138 = pneg %p137
    // Predicated region
    $region9: #{stem_fwd.4} parent=5 // pred_check
      _
    $region10: #{stem_fwd.4} parent=5 // pred_check_branch
      %140 = sbr.rel (%p137) target = $region12
    $region11: #{stem_fwd.4} parent=5 // pred_region
      %s141 = ssub.s32 %s9, 1
      // Predicated region
      $region13: #{stem_fwd.4} parent=11 // pred_check
        %p142 = pneg %p73
      $region14: #{stem_fwd.4} parent=11 // pred_check_branch
        %144 = sbr.rel (%p142) target = $region16
      $region15: #{stem_fwd.4} parent=11 // pred_region
        %p145 = scmp.lt.s32.totalorder %s19, 0
        %s146 = scalar_select %p145, %s19, 0
        %s147 = smul.addr %s146, 4
        %s148 = scalar_lea.vmem %s1, %s147
      $region16: #{stem_fwd.4} parent=11 // pred_fallthru
        _
      // Predicated region
      $region17: #{stem_fwd.4} parent=11 // pred_check
        %p149 = pneg %p99
      $region18: #{stem_fwd.4} parent=11 // pred_check_branch
        %151 = sbr.rel (%p149) target = $region20
      $region19: #{stem_fwd.4} parent=11 // pred_region
        %p152 = scmp.lt.s32.totalorder %s19, 0
        %s153 = scalar_select %p152, %s19, 0
        %s154 = scalar_lea.vmem %s2, %s153
      $region20: #{stem_fwd.4} parent=11 // pred_fallthru
        _
    $region12: #{stem_fwd.4} parent=5 // pred_fallthru
      _
    %p155 = scmp.lt.s32.totalorder %s9, 4
    // Predicated region
    $region21: #{stem_fwd.4} parent=5 // pred_check
      %p156 = pneg %p155
    $region22: #{stem_fwd.4} parent=5 // pred_check_branch
      %158 = sbr.rel (%p156) target = $region24
    $region23: #{stem_fwd.4} parent=5 // pred_region
      // Predicated region
      $region25: #{stem_fwd.4} parent=23 // pred_check
        %p159 = pneg %p41
      $region26: #{stem_fwd.4} parent=23 // pred_check_branch
        %161 = sbr.rel (%p159) target = $region28
      $region27: #{stem_fwd.4} parent=23 // pred_region
        %s162 = smul.u32 64, %s16
        %p163 = scmp.lt.s32.totalorder %s162, 255
        %s164 = scalar_select %p163, %s162, 255
        %s165 = smul.addr %s164, 2
        %s166 = smul.addr %s165, 4
        %s167 = scalar_lea.vmem %s0, %s166
        %s168 = smul.u32 64, %s16
      $region28: #{stem_fwd.4} parent=23 // pred_fallthru
        _
    $region24: #{stem_fwd.4} parent=5 // pred_fallthru
      _
    %p169 = scmp.le.s32.totalorder 1, %s9
    %p170 = scmp.lt.s32.totalorder %s9, 5
    %p171 = pnand %p169, %p170
    %p172 = pneg %p171
    // Predicated region
    $region29: #{stem_fwd.4} parent=5 // pred_check
      _
    $region30: #{stem_fwd.4} parent=5 // pred_check_branch
      %174 = sbr.rel (%p171) target = $region32
    $region31: #{stem_fwd.4} parent=5 // pred_region
      %s175 = ssub.s32 %s9, 1
      %s176 = smul.u32 64, %s18
      %p177 = scmp.lt.s32.totalorder %s176, 255
      %s178 = scalar_select %p177, %s176, 255
      %s179 = smul.addr %s178, 2
      %s180 = smul.addr %s179, 4
      %s181 = scalar_lea.vmem %s0, %s180
      %p182 = pneg %p47
      %p183 = pneg %p44
      %p184 = scmp.lt.s32.totalorder %s19, 0
      %s185 = scalar_select %p184, %s19, 0
      %s186 = smul.addr %s185, 4
      %s187 = scalar_lea.vmem %s1, %s186
      %p188 = pneg %p73
      %p189 = pneg %p70
      %p190 = scmp.lt.s32.totalorder %s19, 0
      %s191 = scalar_select %p190, %s19, 0
      %s192 = scalar_lea.vmem %s2, %s191
      %p193 = pneg %p99
      %p194 = pneg %p96
      %p195 = pneg %p127
      %p196 = pneg %p124
      %s197 = smul.u32 64, %s18
      %p198 = scmp.lt.s32.totalorder %s197, 255
      %s199 = scalar_select %p198, %s197, 255
      %p200 = scmp.lt.s32.totalorder %s19, 0
      %s201 = scalar_select %p200, %s19, 0
      %s202 = sadd.s32 %s201, %s199
      %s203 = smul.addr %s202, 4
      %s204 = scalar_lea.vmem %s3, %s203
      %s205 = smul.u32 64, %s18
      %p206 = scmp.lt.s32.totalorder %s205, 255
      %s207 = scalar_select %p206, %s205, 255
      %s208 = smul.addr %s207, 2
      %s209 = smul.addr %s208, 4
      %s210 = scalar_lea.vmem %s0, %s209
      %s211 = smul.u32 64, %s18
      %p212 = scmp.lt.s32.totalorder %s19, 0
      %s213 = scalar_select %p212, %s19, 0
      %s214 = smul.addr %s213, 4
      %s215 = scalar_lea.vmem %s1, %s214
      %p216 = scmp.lt.s32.totalorder %s19, 0
      %s217 = scalar_select %p216, %s19, 0
      %s218 = scalar_lea.vmem %s2, %s217
      %s219 = smul.u32 64, %s18
      %p220 = scmp.lt.s32.totalorder %s219, 255
      %s221 = scalar_select %p220, %s219, 255
      %p222 = scmp.lt.s32.totalorder %s19, 0
      %s223 = scalar_select %p222, %s19, 0
      %s224 = sadd.s32 %s223, %s221
      %s225 = smul.addr %s224, 4
      %s226 = scalar_lea.vmem %s3, %s225
      %s227 = smul.u32 64, %s18
      %v229 = vld [vmem:[%s210] sm:$0xff]
      %v230 = vld [vmem:[%s210 + $0x8] sm:$0xff]
      %v231 = vld [vmem:[%s210 + $0x10] sm:$0xff]
      %v232 = vld [vmem:[%s210 + $0x18] sm:$0xff]
      %v233 = vld [vmem:[%s210 + $0x20] sm:$0xff]
      %v234 = vld [vmem:[%s210 + $0x28] sm:$0xff]
      %v235 = vld [vmem:[%s210 + $0x30] sm:$0xff]
      %v236 = vld [vmem:[%s210 + $0x38] sm:$0xff]
      %v237 = vld [vmem:[%s210 + $0x40] sm:$0xff]
      %v238 = vld [vmem:[%s210 + $0x48] sm:$0xff]
      %v239 = vld [vmem:[%s210 + $0x50] sm:$0xff]
      %v240 = vld [vmem:[%s210 + $0x58] sm:$0xff]
      %v241 = vld [vmem:[%s210 + $0x60] sm:$0xff]
      %v242 = vld [vmem:[%s210 + $0x68] sm:$0xff]
      %v243 = vld [vmem:[%s210 + $0x70] sm:$0xff]
      %v244 = vld [vmem:[%s210 + $0x78] sm:$0xff]
      %v245 = vld [vmem:[%s210 + $0x80] sm:$0xff]
      %v246 = vld [vmem:[%s210 + $0x88] sm:$0xff]
      %v247 = vld [vmem:[%s210 + $0x90] sm:$0xff]
      %v248 = vld [vmem:[%s210 + $0x98] sm:$0xff]
      %v249 = vld [vmem:[%s210 + $0xa0] sm:$0xff]
      %v250 = vld [vmem:[%s210 + $0xa8] sm:$0xff]
      %v251 = vld [vmem:[%s210 + $0xb0] sm:$0xff]
      %v252 = vld [vmem:[%s210 + $0xb8] sm:$0xff]
      %v253 = vld [vmem:[%s210 + $0xc0] sm:$0xff]
      %v254 = vld [vmem:[%s210 + $0xc8] sm:$0xff]
      %v255 = vld [vmem:[%s210 + $0xd0] sm:$0xff]
      %v256 = vld [vmem:[%s210 + $0xd8] sm:$0xff]
      %v257 = vld [vmem:[%s210 + $0xe0] sm:$0xff]
      %v258 = vld [vmem:[%s210 + $0xe8] sm:$0xff]
      %v259 = vld [vmem:[%s210 + $0xf0] sm:$0xff]
      %v260 = vld [vmem:[%s210 + $0xf8] sm:$0xff]
      %v261 = vld [vmem:[%s210 + $0x100] sm:$0xff]
      %v262 = vld [vmem:[%s210 + $0x108] sm:$0xff]
      %v263 = vld [vmem:[%s210 + $0x110] sm:$0xff]
      %v264 = vld [vmem:[%s210 + $0x118] sm:$0xff]
      %v265 = vld [vmem:[%s210 + $0x120] sm:$0xff]
      %v266 = vld [vmem:[%s210 + $0x128] sm:$0xff]
      %v267 = vld [vmem:[%s210 + $0x130] sm:$0xff]
      %v268 = vld [vmem:[%s210 + $0x138] sm:$0xff]
      %v269 = vld [vmem:[%s210 + $0x140] sm:$0xff]
      %v270 = vld [vmem:[%s210 + $0x148] sm:$0xff]
      %v271 = vld [vmem:[%s210 + $0x150] sm:$0xff]
      %v272 = vld [vmem:[%s210 + $0x158] sm:$0xff]
      %v273 = vld [vmem:[%s210 + $0x160] sm:$0xff]
      %v274 = vld [vmem:[%s210 + $0x168] sm:$0xff]
      %v275 = vld [vmem:[%s210 + $0x170] sm:$0xff]
      %v276 = vld [vmem:[%s210 + $0x178] sm:$0xff]
      %v277 = vld [vmem:[%s210 + $0x180] sm:$0xff]
      %v278 = vld [vmem:[%s210 + $0x188] sm:$0xff]
      %v279 = vld [vmem:[%s210 + $0x190] sm:$0xff]
      %v280 = vld [vmem:[%s210 + $0x198] sm:$0xff]
      %v281 = vld [vmem:[%s210 + $0x1a0] sm:$0xff]
      %v282 = vld [vmem:[%s210 + $0x1a8] sm:$0xff]
      %v283 = vld [vmem:[%s210 + $0x1b0] sm:$0xff]
      %v284 = vld [vmem:[%s210 + $0x1b8] sm:$0xff]
      %v285 = vld [vmem:[%s210 + $0x1c0] sm:$0xff]
      %v286 = vld [vmem:[%s210 + $0x1c8] sm:$0xff]
      %v287 = vld [vmem:[%s210 + $0x1d0] sm:$0xff]
      %v288 = vld [vmem:[%s210 + $0x1d8] sm:$0xff]
      %v289 = vld [vmem:[%s210 + $0x1e0] sm:$0xff]
      %v290 = vld [vmem:[%s210 + $0x1e8] sm:$0xff]
      %v291 = vld [vmem:[%s210 + $0x1f0] sm:$0xff]
      %v292 = vld [vmem:[%s210 + $0x1f8] sm:$0xff]
      %v293 = vld [vmem:[%s215] sm:$0xf]
      %v294 = vld [vmem:[%s215 + $0x4] sm:$0xf]
      %v295 = vld [vmem:[%s215 + $0x8] sm:$0xf]
      %v296 = vld [vmem:[%s215 + $0xc] sm:$0xf]
      %v297 = vld [vmem:[%s215 + $0x10] sm:$0xf]
      %v298 = vld [vmem:[%s215 + $0x14] sm:$0xf]
      %v299 = vld [vmem:[%s215 + $0x18] sm:$0xf]
      %v300 = vld [vmem:[%s215 + $0x1c] sm:$0xf]
      %v301 = vld [vmem:[%s215 + $0x20] sm:$0xf]
      %v302 = vld [vmem:[%s215 + $0x24] sm:$0xf]
      %v303 = vld [vmem:[%s215 + $0x28] sm:$0xf]
      %v304 = vld [vmem:[%s215 + $0x2c] sm:$0xf]
      %v305 = vld [vmem:[%s215 + $0x30] sm:$0xf]
      %v306 = vld [vmem:[%s215 + $0x34] sm:$0xf]
      %v307 = vld [vmem:[%s215 + $0x38] sm:$0xf]
      %v308 = vld [vmem:[%s215 + $0x3c] sm:$0xf]
      %v309 = vld [vmem:[%s215 + $0x40] sm:$0xf]
      %v310 = vld [vmem:[%s215 + $0x44] sm:$0xf]
      %v311 = vld [vmem:[%s215 + $0x48] sm:$0xf]
      %v312 = vld [vmem:[%s215 + $0x4c] sm:$0xf]
      %v313 = vld [vmem:[%s215 + $0x50] sm:$0xf]
      %v314 = vld [vmem:[%s215 + $0x54] sm:$0xf]
      %v315 = vld [vmem:[%s215 + $0x58] sm:$0xf]
      %v316 = vld [vmem:[%s215 + $0x5c] sm:$0xf]
      %v317 = vld [vmem:[%s215 + $0x60] sm:$0xf]
      %v318 = vld [vmem:[%s215 + $0x64] sm:$0xf]
      %v319 = vld [vmem:[%s215 + $0x68] sm:$0xf]
      %v320 = vld [vmem:[%s215 + $0x6c] sm:$0xf]
      %v321 = vld [vmem:[%s215 + $0x70] sm:$0xf]
      %v322 = vld [vmem:[%s215 + $0x74] sm:$0xf]
      %v323 = vld [vmem:[%s215 + $0x78] sm:$0xf]
      %v324 = vld [vmem:[%s215 + $0x7c] sm:$0xf]
      %v325 = vld [vmem:[%s218] sm:$0x1]
      %v327 = vlaneseq
      %v328 = vshrl.u32 %v327, 7
      %v329 = vsub.s32 0, %v328
      %v330 = vrot.slane %v325, %v329
      %v396 = vunpack.c.l.b16 %v229
      %v397 = vunpack.c.h.b16 %v229
      %v398 = vunpack.c.l.b16 %v230
      %v399 = vunpack.c.h.b16 %v230
      %v400 = vunpack.c.l.b16 %v231
      %v401 = vunpack.c.h.b16 %v231
      %v402 = vunpack.c.l.b16 %v232
      %v403 = vunpack.c.h.b16 %v232
      %v404 = vunpack.c.l.b16 %v233
      %v405 = vunpack.c.h.b16 %v233
      %v406 = vunpack.c.l.b16 %v234
      %v407 = vunpack.c.h.b16 %v234
      %v408 = vunpack.c.l.b16 %v235
      %v409 = vunpack.c.h.b16 %v235
      %v410 = vunpack.c.l.b16 %v236
      %v411 = vunpack.c.h.b16 %v236
      %v412 = vunpack.c.l.b16 %v237
      %v413 = vunpack.c.h.b16 %v237
      %v414 = vunpack.c.l.b16 %v238
      %v415 = vunpack.c.h.b16 %v238
      %v416 = vunpack.c.l.b16 %v239
      %v417 = vunpack.c.h.b16 %v239
      %v418 = vunpack.c.l.b16 %v240
      %v419 = vunpack.c.h.b16 %v240
      %v420 = vunpack.c.l.b16 %v241
      %v421 = vunpack.c.h.b16 %v241
      %v422 = vunpack.c.l.b16 %v242
      %v423 = vunpack.c.h.b16 %v242
      %v424 = vunpack.c.l.b16 %v243
      %v425 = vunpack.c.h.b16 %v243
      %v426 = vunpack.c.l.b16 %v244
      %v427 = vunpack.c.h.b16 %v244
      %v428 = vunpack.c.l.b16 %v245
      %v429 = vunpack.c.h.b16 %v245
      %v430 = vunpack.c.l.b16 %v246
      %v431 = vunpack.c.h.b16 %v246
      %v432 = vunpack.c.l.b16 %v247
      %v433 = vunpack.c.h.b16 %v247
      %v434 = vunpack.c.l.b16 %v248
      %v435 = vunpack.c.h.b16 %v248
      %v436 = vunpack.c.l.b16 %v249
      %v437 = vunpack.c.h.b16 %v249
      %v438 = vunpack.c.l.b16 %v250
      %v439 = vunpack.c.h.b16 %v250
      %v440 = vunpack.c.l.b16 %v251
      %v441 = vunpack.c.h.b16 %v251
      %v442 = vunpack.c.l.b16 %v252
      %v443 = vunpack.c.h.b16 %v252
      %v444 = vunpack.c.l.b16 %v253
      %v445 = vunpack.c.h.b16 %v253
      %v446 = vunpack.c.l.b16 %v254
      %v447 = vunpack.c.h.b16 %v254
      %v448 = vunpack.c.l.b16 %v255
      %v449 = vunpack.c.h.b16 %v255
      %v450 = vunpack.c.l.b16 %v256
      %v451 = vunpack.c.h.b16 %v256
      %v452 = vunpack.c.l.b16 %v257
      %v453 = vunpack.c.h.b16 %v257
      %v454 = vunpack.c.l.b16 %v258
      %v455 = vunpack.c.h.b16 %v258
      %v456 = vunpack.c.l.b16 %v259
      %v457 = vunpack.c.h.b16 %v259
      %v458 = vunpack.c.l.b16 %v260
      %v459 = vunpack.c.h.b16 %v260
      %v460 = vunpack.c.l.b16 %v261
      %v461 = vunpack.c.h.b16 %v261
      %v462 = vunpack.c.l.b16 %v262
      %v463 = vunpack.c.h.b16 %v262
      %v464 = vunpack.c.l.b16 %v263
      %v465 = vunpack.c.h.b16 %v263
      %v466 = vunpack.c.l.b16 %v264
      %v467 = vunpack.c.h.b16 %v264
      %v468 = vunpack.c.l.b16 %v265
      %v469 = vunpack.c.h.b16 %v265
      %v470 = vunpack.c.l.b16 %v266
      %v471 = vunpack.c.h.b16 %v266
      %v472 = vunpack.c.l.b16 %v267
      %v473 = vunpack.c.h.b16 %v267
      %v474 = vunpack.c.l.b16 %v268
      %v475 = vunpack.c.h.b16 %v268
      %v476 = vunpack.c.l.b16 %v269
      %v477 = vunpack.c.h.b16 %v269
      %v478 = vunpack.c.l.b16 %v270
      %v479 = vunpack.c.h.b16 %v270
      %v480 = vunpack.c.l.b16 %v271
      %v481 = vunpack.c.h.b16 %v271
      %v482 = vunpack.c.l.b16 %v272
      %v483 = vunpack.c.h.b16 %v272
      %v484 = vunpack.c.l.b16 %v273
      %v485 = vunpack.c.h.b16 %v273
      %v486 = vunpack.c.l.b16 %v274
      %v487 = vunpack.c.h.b16 %v274
      %v488 = vunpack.c.l.b16 %v275
      %v489 = vunpack.c.h.b16 %v275
      %v490 = vunpack.c.l.b16 %v276
      %v491 = vunpack.c.h.b16 %v276
      %v492 = vunpack.c.l.b16 %v277
      %v493 = vunpack.c.h.b16 %v277
      %v494 = vunpack.c.l.b16 %v278
      %v495 = vunpack.c.h.b16 %v278
      %v496 = vunpack.c.l.b16 %v279
      %v497 = vunpack.c.h.b16 %v279
      %v498 = vunpack.c.l.b16 %v280
      %v499 = vunpack.c.h.b16 %v280
      %v500 = vunpack.c.l.b16 %v281
      %v501 = vunpack.c.h.b16 %v281
      %v502 = vunpack.c.l.b16 %v282
      %v503 = vunpack.c.h.b16 %v282
      %v504 = vunpack.c.l.b16 %v283
      %v505 = vunpack.c.h.b16 %v283
      %v506 = vunpack.c.l.b16 %v284
      %v507 = vunpack.c.h.b16 %v284
      %v508 = vunpack.c.l.b16 %v285
      %v509 = vunpack.c.h.b16 %v285
      %v510 = vunpack.c.l.b16 %v286
      %v511 = vunpack.c.h.b16 %v286
      %v512 = vunpack.c.l.b16 %v287
      %v513 = vunpack.c.h.b16 %v287
      %v514 = vunpack.c.l.b16 %v288
      %v515 = vunpack.c.h.b16 %v288
      %v516 = vunpack.c.l.b16 %v289
      %v517 = vunpack.c.h.b16 %v289
      %v518 = vunpack.c.l.b16 %v290
      %v519 = vunpack.c.h.b16 %v290
      %v520 = vunpack.c.l.b16 %v291
      %v521 = vunpack.c.h.b16 %v291
      %v522 = vunpack.c.l.b16 %v292
      %v523 = vunpack.c.h.b16 %v292
      %v524 = vpack.c.b16 %v398, %v396
      %v525 = vpack.c.b16 %v399, %v397
      %v526 = vpack.c.b16 %v402, %v400
      %v527 = vpack.c.b16 %v403, %v401
      %v528 = vpack.c.b16 %v406, %v404
      %v529 = vpack.c.b16 %v407, %v405
      %v530 = vpack.c.b16 %v410, %v408
      %v531 = vpack.c.b16 %v411, %v409
      %v532 = vpack.c.b16 %v414, %v412
      %v533 = vpack.c.b16 %v415, %v413
      %v534 = vpack.c.b16 %v418, %v416
      %v535 = vpack.c.b16 %v419, %v417
      %v536 = vpack.c.b16 %v422, %v420
      %v537 = vpack.c.b16 %v423, %v421
      %v538 = vpack.c.b16 %v426, %v424
      %v539 = vpack.c.b16 %v427, %v425
      %v540 = vpack.c.b16 %v430, %v428
      %v541 = vpack.c.b16 %v431, %v429
      %v542 = vpack.c.b16 %v434, %v432
      %v543 = vpack.c.b16 %v435, %v433
      %v544 = vpack.c.b16 %v438, %v436
      %v545 = vpack.c.b16 %v439, %v437
      %v546 = vpack.c.b16 %v442, %v440
      %v547 = vpack.c.b16 %v443, %v441
      %v548 = vpack.c.b16 %v446, %v444
      %v549 = vpack.c.b16 %v447, %v445
      %v550 = vpack.c.b16 %v450, %v448
      %v551 = vpack.c.b16 %v451, %v449
      %v552 = vpack.c.b16 %v454, %v452
      %v553 = vpack.c.b16 %v455, %v453
      %v554 = vpack.c.b16 %v458, %v456
      %v555 = vpack.c.b16 %v459, %v457
      %v556 = vpack.c.b16 %v462, %v460
      %v557 = vpack.c.b16 %v463, %v461
      %v558 = vpack.c.b16 %v466, %v464
      %v559 = vpack.c.b16 %v467, %v465
      %v560 = vpack.c.b16 %v470, %v468
      %v561 = vpack.c.b16 %v471, %v469
      %v562 = vpack.c.b16 %v474, %v472
      %v563 = vpack.c.b16 %v475, %v473
      %v564 = vpack.c.b16 %v478, %v476
      %v565 = vpack.c.b16 %v479, %v477
      %v566 = vpack.c.b16 %v482, %v480
      %v567 = vpack.c.b16 %v483, %v481
      %v568 = vpack.c.b16 %v486, %v484
      %v569 = vpack.c.b16 %v487, %v485
      %v570 = vpack.c.b16 %v490, %v488
      %v571 = vpack.c.b16 %v491, %v489
      %v572 = vpack.c.b16 %v494, %v492
      %v573 = vpack.c.b16 %v495, %v493
      %v574 = vpack.c.b16 %v498, %v496
      %v575 = vpack.c.b16 %v499, %v497
      %v576 = vpack.c.b16 %v502, %v500
      %v577 = vpack.c.b16 %v503, %v501
      %v578 = vpack.c.b16 %v506, %v504
      %v579 = vpack.c.b16 %v507, %v505
      %v580 = vpack.c.b16 %v510, %v508
      %v581 = vpack.c.b16 %v511, %v509
      %v582 = vpack.c.b16 %v514, %v512
      %v583 = vpack.c.b16 %v515, %v513
      %v584 = vpack.c.b16 %v518, %v516
      %v585 = vpack.c.b16 %v519, %v517
      %v586 = vpack.c.b16 %v522, %v520
      %v587 = vpack.c.b16 %v523, %v521
      %v684 = vunpack.c.l.b16 %v293
      %v685 = vunpack.c.l.b16 %v294
      %v686 = vunpack.c.l.b16 %v295
      %v687 = vunpack.c.l.b16 %v296
      %v688 = vunpack.c.l.b16 %v297
      %v689 = vunpack.c.l.b16 %v298
      %v690 = vunpack.c.l.b16 %v299
      %v691 = vunpack.c.l.b16 %v300
      %v692 = vunpack.c.l.b16 %v301
      %v693 = vunpack.c.l.b16 %v302
      %v694 = vunpack.c.l.b16 %v303
      %v695 = vunpack.c.l.b16 %v304
      %v696 = vunpack.c.l.b16 %v305
      %v697 = vunpack.c.l.b16 %v306
      %v698 = vunpack.c.l.b16 %v307
      %v699 = vunpack.c.l.b16 %v308
      %v700 = vunpack.c.l.b16 %v309
      %v701 = vunpack.c.l.b16 %v310
      %v702 = vunpack.c.l.b16 %v311
      %v703 = vunpack.c.l.b16 %v312
      %v704 = vunpack.c.l.b16 %v313
      %v705 = vunpack.c.l.b16 %v314
      %v706 = vunpack.c.l.b16 %v315
      %v707 = vunpack.c.l.b16 %v316
      %v708 = vunpack.c.l.b16 %v317
      %v709 = vunpack.c.l.b16 %v318
      %v710 = vunpack.c.l.b16 %v319
      %v711 = vunpack.c.l.b16 %v320
      %v712 = vunpack.c.l.b16 %v321
      %v713 = vunpack.c.l.b16 %v322
      %v714 = vunpack.c.l.b16 %v323
      %v715 = vunpack.c.l.b16 %v324
      %v716 = vpack.c.b16 %v685, %v684
      %v717 = vpack.c.b16 %v687, %v686
      %v718 = vpack.c.b16 %v689, %v688
      %v719 = vpack.c.b16 %v691, %v690
      %v720 = vpack.c.b16 %v693, %v692
      %v721 = vpack.c.b16 %v695, %v694
      %v722 = vpack.c.b16 %v697, %v696
      %v723 = vpack.c.b16 %v699, %v698
      %v724 = vpack.c.b16 %v701, %v700
      %v725 = vpack.c.b16 %v703, %v702
      %v726 = vpack.c.b16 %v705, %v704
      %v727 = vpack.c.b16 %v707, %v706
      %v728 = vpack.c.b16 %v709, %v708
      %v729 = vpack.c.b16 %v711, %v710
      %v730 = vpack.c.b16 %v713, %v712
      %v731 = vpack.c.b16 %v715, %v714
      %748 = vmatprep.subr.bf16.mxu0 0
      %749 = vmatpush1.bf16.msra.mxu0 %v716
      %750 = vmatprep.subr.bf16.mxu0 0
      %751 = vmatpush1.bf16.msra.mxu0 %v717
      %752 = vmatprep.subr.bf16.mxu0 0
      %753 = vmatpush1.bf16.msra.mxu0 %v718
      %754 = vmatprep.subr.bf16.mxu0 0
      %755 = vmatpush1.bf16.msra.mxu0 %v719
      %756 = vmatprep.subr.bf16.mxu0 0
      %757 = vmatpush1.bf16.msra.mxu0 %v720
      %758 = vmatprep.subr.bf16.mxu0 0
      %759 = vmatpush1.bf16.msra.mxu0 %v721
      %760 = vmatprep.subr.bf16.mxu0 0
      %761 = vmatpush1.bf16.msra.mxu0 %v722
      %762 = vmatprep.subr.bf16.mxu0 0
      %763 = vmatpush1.bf16.msra.mxu0 %v723
      %764 = vmatprep.subr.bf16.mxu0 0
      %765 = vmatpush1.bf16.msra.mxu0 %v724
      %766 = vmatprep.subr.bf16.mxu0 0
      %767 = vmatpush1.bf16.msra.mxu0 %v725
      %768 = vmatprep.subr.bf16.mxu0 0
      %769 = vmatpush1.bf16.msra.mxu0 %v726
      %770 = vmatprep.subr.bf16.mxu0 0
      %771 = vmatpush1.bf16.msra.mxu0 %v727
      %772 = vmatprep.subr.bf16.mxu0 0
      %773 = vmatpush1.bf16.msra.mxu0 %v728
      %774 = vmatprep.subr.bf16.mxu0 0
      %775 = vmatpush1.bf16.msra.mxu0 %v729
      %776 = vmatprep.subr.bf16.mxu0 0
      %777 = vmatpush1.bf16.msra.mxu0 %v730
      %778 = vmatprep.subr.bf16.mxu0 0
      %779 = vmatpush1.bf16.msra.mxu0 %v731
      %780 = vmatprep.mubr.bf16.mxu0 %v525
      %781 = vmatmul.mubr.bf16.gmra.mrb[0].mxu0 %v524
      %v782 = vpop.f32.mrb[0].mxu0
      %v783 = vadd.f32 %v330, %v782
      %v784 = vpop.f32.mrb[0].mxu0
      %v785 = vpop.f32.mrb[0].mxu0
      %v786 = vadd.f32 %v330, %v785
      %v787 = vpop.f32.mrb[0].mxu0
      %788 = vmatprep.mubr.bf16.mxu0 %v527
      %789 = vmatmul.mubr.bf16.gmra.mrb[0].mxu0 %v526
      %v790 = vpop.f32.mrb[0].mxu0
      %v791 = vadd.f32 %v330, %v790
      %v792 = vpop.f32.mrb[0].mxu0
      %v793 = vpop.f32.mrb[0].mxu0
      %v794 = vadd.f32 %v330, %v793
      %v795 = vpop.f32.mrb[0].mxu0
      %796 = vmatprep.mubr.bf16.mxu0 %v529
      %797 = vmatmul.mubr.bf16.gmra.mrb[0].mxu0 %v528
      %v798 = vpop.f32.mrb[0].mxu0
      %v799 = vadd.f32 %v330, %v798
      %v800 = vpop.f32.mrb[0].mxu0
      %v801 = vpop.f32.mrb[0].mxu0
      %v802 = vadd.f32 %v330, %v801
      %v803 = vpop.f32.mrb[0].mxu0
      %804 = vmatprep.mubr.bf16.mxu0 %v531
      %805 = vmatmul.mubr.bf16.gmra.mrb[0].mxu0 %v530
      %v806 = vpop.f32.mrb[0].mxu0
      %v807 = vadd.f32 %v330, %v806
      %v808 = vpop.f32.mrb[0].mxu0
      %v809 = vpop.f32.mrb[0].mxu0
      %v810 = vadd.f32 %v330, %v809
      %v811 = vpop.f32.mrb[0].mxu0
      %812 = vmatprep.mubr.bf16.mxu0 %v533
      %813 = vmatmul.mubr.bf16.gmra.mrb[0].mxu0 %v532
      %v814 = vpop.f32.mrb[0].mxu0
      %v815 = vadd.f32 %v330, %v814
      %v816 = vpop.f32.mrb[0].mxu0
      %v817 = vpop.f32.mrb[0].mxu0
      %v818 = vadd.f32 %v330, %v817
      %v819 = vpop.f32.mrb[0].mxu0
      %820 = vmatprep.mubr.bf16.mxu0 %v535
      %821 = vmatmul.mubr.bf16.gmra.mrb[0].mxu0 %v534
      %v822 = vpop.f32.mrb[0].mxu0
      %v823 = vadd.f32 %v330, %v822
      %v824 = vpop.f32.mrb[0].mxu0
      %v825 = vpop.f32.mrb[0].mxu0
      %v826 = vadd.f32 %v330, %v825
      %v827 = vpop.f32.mrb[0].mxu0
      %828 = vmatprep.mubr.bf16.mxu0 %v537
      %829 = vmatmul.mubr.bf16.gmra.mrb[0].mxu0 %v536
      %v830 = vpop.f32.mrb[0].mxu0
      %v831 = vadd.f32 %v330, %v830
      %v832 = vpop.f32.mrb[0].mxu0
      %v833 = vpop.f32.mrb[0].mxu0
      %v834 = vadd.f32 %v330, %v833
      %v835 = vpop.f32.mrb[0].mxu0
      %836 = vmatprep.mubr.bf16.mxu0 %v539
      %837 = vmatmul.mubr.bf16.gmra.mrb[0].mxu0 %v538
      %v838 = vpop.f32.mrb[0].mxu0
      %v839 = vadd.f32 %v330, %v838
      %v840 = vpop.f32.mrb[0].mxu0
      %v841 = vpop.f32.mrb[0].mxu0
      %v842 = vadd.f32 %v330, %v841
      %v843 = vpop.f32.mrb[0].mxu0
      %844 = vmatprep.mubr.bf16.mxu0 %v541
      %845 = vmatmul.mubr.bf16.gmra.mrb[0].mxu0 %v540
      %v846 = vpop.f32.mrb[0].mxu0
      %v847 = vadd.f32 %v330, %v846
      %v848 = vpop.f32.mrb[0].mxu0
      %v849 = vpop.f32.mrb[0].mxu0
      %v850 = vadd.f32 %v330, %v849
      %v851 = vpop.f32.mrb[0].mxu0
      %852 = vmatprep.mubr.bf16.mxu0 %v543
      %853 = vmatmul.mubr.bf16.gmra.mrb[0].mxu0 %v542
      %v854 = vpop.f32.mrb[0].mxu0
      %v855 = vadd.f32 %v330, %v854
      %v856 = vpop.f32.mrb[0].mxu0
      %v857 = vpop.f32.mrb[0].mxu0
      %v858 = vadd.f32 %v330, %v857
      %v859 = vpop.f32.mrb[0].mxu0
      %860 = vmatprep.mubr.bf16.mxu0 %v545
      %861 = vmatmul.mubr.bf16.gmra.mrb[0].mxu0 %v544
      %v862 = vpop.f32.mrb[0].mxu0
      %v863 = vadd.f32 %v330, %v862
      %v864 = vpop.f32.mrb[0].mxu0
      %v865 = vpop.f32.mrb[0].mxu0
      %v866 = vadd.f32 %v330, %v865
      %v867 = vpop.f32.mrb[0].mxu0
      %868 = vmatprep.mubr.bf16.mxu0 %v547
      %869 = vmatmul.mubr.bf16.gmra.mrb[0].mxu0 %v546
      %v870 = vpop.f32.mrb[0].mxu0
      %v871 = vadd.f32 %v330, %v870
      %v872 = vpop.f32.mrb[0].mxu0
      %v873 = vpop.f32.mrb[0].mxu0
      %v874 = vadd.f32 %v330, %v873
      %v875 = vpop.f32.mrb[0].mxu0
      %876 = vmatprep.mubr.bf16.mxu0 %v549
      %877 = vmatmul.mubr.bf16.gmra.mrb[0].mxu0 %v548
      %v878 = vpop.f32.mrb[0].mxu0
      %v879 = vadd.f32 %v330, %v878
      %v880 = vpop.f32.mrb[0].mxu0
      %v881 = vpop.f32.mrb[0].mxu0
      %v882 = vadd.f32 %v330, %v881
      %v883 = vpop.f32.mrb[0].mxu0
      %884 = vmatprep.mubr.bf16.mxu0 %v551
      %885 = vmatmul.mubr.bf16.gmra.mrb[0].mxu0 %v550
      %v886 = vpop.f32.mrb[0].mxu0
      %v887 = vadd.f32 %v330, %v886
      %v888 = vpop.f32.mrb[0].mxu0
      %v889 = vpop.f32.mrb[0].mxu0
      %v890 = vadd.f32 %v330, %v889
      %v891 = vpop.f32.mrb[0].mxu0
      %892 = vmatprep.mubr.bf16.mxu0 %v553
      %893 = vmatmul.mubr.bf16.gmra.mrb[0].mxu0 %v552
      %v894 = vpop.f32.mrb[0].mxu0
      %v895 = vadd.f32 %v330, %v894
      %v896 = vpop.f32.mrb[0].mxu0
      %v897 = vpop.f32.mrb[0].mxu0
      %v898 = vadd.f32 %v330, %v897
      %v899 = vpop.f32.mrb[0].mxu0
      %900 = vmatprep.mubr.bf16.mxu0 %v555
      %901 = vmatmul.mubr.bf16.gmra.mrb[0].mxu0 %v554
      %v902 = vpop.f32.mrb[0].mxu0
      %v903 = vadd.f32 %v330, %v902
      %v904 = vpop.f32.mrb[0].mxu0
      %v905 = vpop.f32.mrb[0].mxu0
      %v906 = vadd.f32 %v330, %v905
      %v907 = vpop.f32.mrb[0].mxu0
      %908 = vmatprep.mubr.bf16.mxu0 %v557
      %909 = vmatmul.mubr.bf16.gmra.mrb[0].mxu0 %v556
      %v910 = vpop.f32.mrb[0].mxu0
      %v911 = vadd.f32 %v330, %v910
      %v912 = vpop.f32.mrb[0].mxu0
      %v913 = vpop.f32.mrb[0].mxu0
      %v914 = vadd.f32 %v330, %v913
      %v915 = vpop.f32.mrb[0].mxu0
      %916 = vmatprep.mubr.bf16.mxu0 %v559
      %917 = vmatmul.mubr.bf16.gmra.mrb[0].mxu0 %v558
      %v918 = vpop.f32.mrb[0].mxu0
      %v919 = vadd.f32 %v330, %v918
      %v920 = vpop.f32.mrb[0].mxu0
      %v921 = vpop.f32.mrb[0].mxu0
      %v922 = vadd.f32 %v330, %v921
      %v923 = vpop.f32.mrb[0].mxu0
      %924 = vmatprep.mubr.bf16.mxu0 %v561
      %925 = vmatmul.mubr.bf16.gmra.mrb[0].mxu0 %v560
      %v926 = vpop.f32.mrb[0].mxu0
      %v927 = vadd.f32 %v330, %v926
      %v928 = vpop.f32.mrb[0].mxu0
      %v929 = vpop.f32.mrb[0].mxu0
      %v930 = vadd.f32 %v330, %v929
      %v931 = vpop.f32.mrb[0].mxu0
      %932 = vmatprep.mubr.bf16.mxu0 %v563
      %933 = vmatmul.mubr.bf16.gmra.mrb[0].mxu0 %v562
      %v934 = vpop.f32.mrb[0].mxu0
      %v935 = vadd.f32 %v330, %v934
      %v936 = vpop.f32.mrb[0].mxu0
      %v937 = vpop.f32.mrb[0].mxu0
      %v938 = vadd.f32 %v330, %v937
      %v939 = vpop.f32.mrb[0].mxu0
      %940 = vmatprep.mubr.bf16.mxu0 %v565
      %941 = vmatmul.mubr.bf16.gmra.mrb[0].mxu0 %v564
      %v942 = vpop.f32.mrb[0].mxu0
      %v943 = vadd.f32 %v330, %v942
      %v944 = vpop.f32.mrb[0].mxu0
      %v945 = vpop.f32.mrb[0].mxu0
      %v946 = vadd.f32 %v330, %v945
      %v947 = vpop.f32.mrb[0].mxu0
      %948 = vmatprep.mubr.bf16.mxu0 %v567
      %949 = vmatmul.mubr.bf16.gmra.mrb[0].mxu0 %v566
      %v950 = vpop.f32.mrb[0].mxu0
      %v951 = vadd.f32 %v330, %v950
      %v952 = vpop.f32.mrb[0].mxu0
      %v953 = vpop.f32.mrb[0].mxu0
      %v954 = vadd.f32 %v330, %v953
      %v955 = vpop.f32.mrb[0].mxu0
      %956 = vmatprep.mubr.bf16.mxu0 %v569
      %957 = vmatmul.mubr.bf16.gmra.mrb[0].mxu0 %v568
      %v958 = vpop.f32.mrb[0].mxu0
      %v959 = vadd.f32 %v330, %v958
      %v960 = vpop.f32.mrb[0].mxu0
      %v961 = vpop.f32.mrb[0].mxu0
      %v962 = vadd.f32 %v330, %v961
      %v963 = vpop.f32.mrb[0].mxu0
      %964 = vmatprep.mubr.bf16.mxu0 %v571
      %965 = vmatmul.mubr.bf16.gmra.mrb[0].mxu0 %v570
      %v966 = vpop.f32.mrb[0].mxu0
      %v967 = vadd.f32 %v330, %v966
      %v968 = vpop.f32.mrb[0].mxu0
      %v969 = vpop.f32.mrb[0].mxu0
      %v970 = vadd.f32 %v330, %v969
      %v971 = vpop.f32.mrb[0].mxu0
      %972 = vmatprep.mubr.bf16.mxu0 %v573
      %973 = vmatmul.mubr.bf16.gmra.mrb[0].mxu0 %v572
      %v974 = vpop.f32.mrb[0].mxu0
      %v975 = vadd.f32 %v330, %v974
      %v976 = vpop.f32.mrb[0].mxu0
      %v977 = vpop.f32.mrb[0].mxu0
      %v978 = vadd.f32 %v330, %v977
      %v979 = vpop.f32.mrb[0].mxu0
      %980 = vmatprep.mubr.bf16.mxu0 %v575
      %981 = vmatmul.mubr.bf16.gmra.mrb[0].mxu0 %v574
      %v982 = vpop.f32.mrb[0].mxu0
      %v983 = vadd.f32 %v330, %v982
      %v984 = vpop.f32.mrb[0].mxu0
      %v985 = vpop.f32.mrb[0].mxu0
      %v986 = vadd.f32 %v330, %v985
      %v987 = vpop.f32.mrb[0].mxu0
      %988 = vmatprep.mubr.bf16.mxu0 %v577
      %989 = vmatmul.mubr.bf16.gmra.mrb[0].mxu0 %v576
      %v990 = vpop.f32.mrb[0].mxu0
      %v991 = vadd.f32 %v330, %v990
      %v992 = vpop.f32.mrb[0].mxu0
      %v993 = vpop.f32.mrb[0].mxu0
      %v994 = vadd.f32 %v330, %v993
      %v995 = vpop.f32.mrb[0].mxu0
      %996 = vmatprep.mubr.bf16.mxu0 %v579
      %997 = vmatmul.mubr.bf16.gmra.mrb[0].mxu0 %v578
      %v998 = vpop.f32.mrb[0].mxu0
      %v999 = vadd.f32 %v330, %v998
      %v1000 = vpop.f32.mrb[0].mxu0
      %v1001 = vpop.f32.mrb[0].mxu0
      %v1002 = vadd.f32 %v330, %v1001
      %v1003 = vpop.f32.mrb[0].mxu0
      %1004 = vmatprep.mubr.bf16.mxu0 %v581
      %1005 = vmatmul.mubr.bf16.gmra.mrb[0].mxu0 %v580
      %v1006 = vpop.f32.mrb[0].mxu0
      %v1007 = vadd.f32 %v330, %v1006
      %v1008 = vpop.f32.mrb[0].mxu0
      %v1009 = vpop.f32.mrb[0].mxu0
      %v1010 = vadd.f32 %v330, %v1009
      %v1011 = vpop.f32.mrb[0].mxu0
      %1012 = vmatprep.mubr.bf16.mxu0 %v583
      %1013 = vmatmul.mubr.bf16.gmra.mrb[0].mxu0 %v582
      %v1014 = vpop.f32.mrb[0].mxu0
      %v1015 = vadd.f32 %v330, %v1014
      %v1016 = vpop.f32.mrb[0].mxu0
      %v1017 = vpop.f32.mrb[0].mxu0
      %v1018 = vadd.f32 %v330, %v1017
      %v1019 = vpop.f32.mrb[0].mxu0
      %1020 = vmatprep.mubr.bf16.mxu0 %v585
      %1021 = vmatmul.mubr.bf16.gmra.mrb[0].mxu0 %v584
      %v1022 = vpop.f32.mrb[0].mxu0
      %v1023 = vadd.f32 %v330, %v1022
      %v1024 = vpop.f32.mrb[0].mxu0
      %v1025 = vpop.f32.mrb[0].mxu0
      %v1026 = vadd.f32 %v330, %v1025
      %v1027 = vpop.f32.mrb[0].mxu0
      %1028 = vmatprep.mubr.bf16.mxu0 %v587
      %1029 = vmatmul.mubr.bf16.gmra.mrb[0].mxu0 %v586
      %v1030 = vpop.f32.mrb[0].mxu0
      %v1031 = vadd.f32 %v330, %v1030
      %v1032 = vpop.f32.mrb[0].mxu0
      %v1033 = vpop.f32.mrb[0].mxu0
      %v1034 = vadd.f32 %v330, %v1033
      %v1035 = vpop.f32.mrb[0].mxu0
      %1036 = vdwg.mxu0
      %v1037 = vpack.c.bf16 %v786, %v783
      %v1038 = vpack.c.bf16 %v794, %v791
      %v1039 = vpack.c.bf16 %v802, %v799
      %v1040 = vpack.c.bf16 %v810, %v807
      %v1041 = vpack.c.bf16 %v818, %v815
      %v1042 = vpack.c.bf16 %v826, %v823
      %v1043 = vpack.c.bf16 %v834, %v831
      %v1044 = vpack.c.bf16 %v842, %v839
      %v1045 = vpack.c.bf16 %v850, %v847
      %v1046 = vpack.c.bf16 %v858, %v855
      %v1047 = vpack.c.bf16 %v866, %v863
      %v1048 = vpack.c.bf16 %v874, %v871
      %v1049 = vpack.c.bf16 %v882, %v879
      %v1050 = vpack.c.bf16 %v890, %v887
      %v1051 = vpack.c.bf16 %v898, %v895
      %v1052 = vpack.c.bf16 %v906, %v903
      %v1053 = vpack.c.bf16 %v914, %v911
      %v1054 = vpack.c.bf16 %v922, %v919
      %v1055 = vpack.c.bf16 %v930, %v927
      %v1056 = vpack.c.bf16 %v938, %v935
      %v1057 = vpack.c.bf16 %v946, %v943
      %v1058 = vpack.c.bf16 %v954, %v951
      %v1059 = vpack.c.bf16 %v962, %v959
      %v1060 = vpack.c.bf16 %v970, %v967
      %v1061 = vpack.c.bf16 %v978, %v975
      %v1062 = vpack.c.bf16 %v986, %v983
      %v1063 = vpack.c.bf16 %v994, %v991
      %v1064 = vpack.c.bf16 %v1002, %v999
      %v1065 = vpack.c.bf16 %v1010, %v1007
      %v1066 = vpack.c.bf16 %v1018, %v1015
      %v1067 = vpack.c.bf16 %v1026, %v1023
      %v1068 = vpack.c.bf16 %v1034, %v1031
      %v1101 = vunpack.c.l.b16 %v1037
      %v1102 = vunpack.c.h.b16 %v1037
      %v1103 = vunpack.c.l.b16 %v1038
      %v1104 = vunpack.c.h.b16 %v1038
      %v1105 = vunpack.c.l.b16 %v1039
      %v1106 = vunpack.c.h.b16 %v1039
      %v1107 = vunpack.c.l.b16 %v1040
      %v1108 = vunpack.c.h.b16 %v1040
      %v1109 = vunpack.c.l.b16 %v1041
      %v1110 = vunpack.c.h.b16 %v1041
      %v1111 = vunpack.c.l.b16 %v1042
      %v1112 = vunpack.c.h.b16 %v1042
      %v1113 = vunpack.c.l.b16 %v1043
      %v1114 = vunpack.c.h.b16 %v1043
      %v1115 = vunpack.c.l.b16 %v1044
      %v1116 = vunpack.c.h.b16 %v1044
      %v1117 = vunpack.c.l.b16 %v1045
      %v1118 = vunpack.c.h.b16 %v1045
      %v1119 = vunpack.c.l.b16 %v1046
      %v1120 = vunpack.c.h.b16 %v1046
      %v1121 = vunpack.c.l.b16 %v1047
      %v1122 = vunpack.c.h.b16 %v1047
      %v1123 = vunpack.c.l.b16 %v1048
      %v1124 = vunpack.c.h.b16 %v1048
      %v1125 = vunpack.c.l.b16 %v1049
      %v1126 = vunpack.c.h.b16 %v1049
      %v1127 = vunpack.c.l.b16 %v1050
      %v1128 = vunpack.c.h.b16 %v1050
      %v1129 = vunpack.c.l.b16 %v1051
      %v1130 = vunpack.c.h.b16 %v1051
      %v1131 = vunpack.c.l.b16 %v1052
      %v1132 = vunpack.c.h.b16 %v1052
      %v1133 = vunpack.c.l.b16 %v1053
      %v1134 = vunpack.c.h.b16 %v1053
      %v1135 = vunpack.c.l.b16 %v1054
      %v1136 = vunpack.c.h.b16 %v1054
      %v1137 = vunpack.c.l.b16 %v1055
      %v1138 = vunpack.c.h.b16 %v1055
      %v1139 = vunpack.c.l.b16 %v1056
      %v1140 = vunpack.c.h.b16 %v1056
      %v1141 = vunpack.c.l.b16 %v1057
      %v1142 = vunpack.c.h.b16 %v1057
      %v1143 = vunpack.c.l.b16 %v1058
      %v1144 = vunpack.c.h.b16 %v1058
      %v1145 = vunpack.c.l.b16 %v1059
      %v1146 = vunpack.c.h.b16 %v1059
      %v1147 = vunpack.c.l.b16 %v1060
      %v1148 = vunpack.c.h.b16 %v1060
      %v1149 = vunpack.c.l.b16 %v1061
      %v1150 = vunpack.c.h.b16 %v1061
      %v1151 = vunpack.c.l.b16 %v1062
      %v1152 = vunpack.c.h.b16 %v1062
      %v1153 = vunpack.c.l.b16 %v1063
      %v1154 = vunpack.c.h.b16 %v1063
      %v1155 = vunpack.c.l.b16 %v1064
      %v1156 = vunpack.c.h.b16 %v1064
      %v1157 = vunpack.c.l.b16 %v1065
      %v1158 = vunpack.c.h.b16 %v1065
      %v1159 = vunpack.c.l.b16 %v1066
      %v1160 = vunpack.c.h.b16 %v1066
      %v1161 = vunpack.c.l.b16 %v1067
      %v1162 = vunpack.c.h.b16 %v1067
      %v1163 = vunpack.c.l.b16 %v1068
      %v1164 = vunpack.c.h.b16 %v1068
      %v1165 = vpack.c.b16 %v1101, %v1101
      %v1166 = vpack.c.b16 %v1102, %v1102
      %v1167 = vpack.c.b16 %v1103, %v1103
      %v1168 = vpack.c.b16 %v1104, %v1104
      %v1169 = vpack.c.b16 %v1105, %v1105
      %v1170 = vpack.c.b16 %v1106, %v1106
      %v1171 = vpack.c.b16 %v1107, %v1107
      %v1172 = vpack.c.b16 %v1108, %v1108
      %v1173 = vpack.c.b16 %v1109, %v1109
      %v1174 = vpack.c.b16 %v1110, %v1110
      %v1175 = vpack.c.b16 %v1111, %v1111
      %v1176 = vpack.c.b16 %v1112, %v1112
      %v1177 = vpack.c.b16 %v1113, %v1113
      %v1178 = vpack.c.b16 %v1114, %v1114
      %v1179 = vpack.c.b16 %v1115, %v1115
      %v1180 = vpack.c.b16 %v1116, %v1116
      %v1181 = vpack.c.b16 %v1117, %v1117
      %v1182 = vpack.c.b16 %v1118, %v1118
      %v1183 = vpack.c.b16 %v1119, %v1119
      %v1184 = vpack.c.b16 %v1120, %v1120
      %v1185 = vpack.c.b16 %v1121, %v1121
      %v1186 = vpack.c.b16 %v1122, %v1122
      %v1187 = vpack.c.b16 %v1123, %v1123
      %v1188 = vpack.c.b16 %v1124, %v1124
      %v1189 = vpack.c.b16 %v1125, %v1125
      %v1190 = vpack.c.b16 %v1126, %v1126
      %v1191 = vpack.c.b16 %v1127, %v1127
      %v1192 = vpack.c.b16 %v1128, %v1128
      %v1193 = vpack.c.b16 %v1129, %v1129
      %v1194 = vpack.c.b16 %v1130, %v1130
      %v1195 = vpack.c.b16 %v1131, %v1131
      %v1196 = vpack.c.b16 %v1132, %v1132
      %v1197 = vpack.c.b16 %v1133, %v1133
      %v1198 = vpack.c.b16 %v1134, %v1134
      %v1199 = vpack.c.b16 %v1135, %v1135
      %v1200 = vpack.c.b16 %v1136, %v1136
      %v1201 = vpack.c.b16 %v1137, %v1137
      %v1202 = vpack.c.b16 %v1138, %v1138
      %v1203 = vpack.c.b16 %v1139, %v1139
      %v1204 = vpack.c.b16 %v1140, %v1140
      %v1205 = vpack.c.b16 %v1141, %v1141
      %v1206 = vpack.c.b16 %v1142, %v1142
      %v1207 = vpack.c.b16 %v1143, %v1143
      %v1208 = vpack.c.b16 %v1144, %v1144
      %v1209 = vpack.c.b16 %v1145, %v1145
      %v1210 = vpack.c.b16 %v1146, %v1146
      %v1211 = vpack.c.b16 %v1147, %v1147
      %v1212 = vpack.c.b16 %v1148, %v1148
      %v1213 = vpack.c.b16 %v1149, %v1149
      %v1214 = vpack.c.b16 %v1150, %v1150
      %v1215 = vpack.c.b16 %v1151, %v1151
      %v1216 = vpack.c.b16 %v1152, %v1152
      %v1217 = vpack.c.b16 %v1153, %v1153
      %v1218 = vpack.c.b16 %v1154, %v1154
      %v1219 = vpack.c.b16 %v1155, %v1155
      %v1220 = vpack.c.b16 %v1156, %v1156
      %v1221 = vpack.c.b16 %v1157, %v1157
      %v1222 = vpack.c.b16 %v1158, %v1158
      %v1223 = vpack.c.b16 %v1159, %v1159
      %v1224 = vpack.c.b16 %v1160, %v1160
      %v1225 = vpack.c.b16 %v1161, %v1161
      %v1226 = vpack.c.b16 %v1162, %v1162
      %v1227 = vpack.c.b16 %v1163, %v1163
      %v1228 = vpack.c.b16 %v1164, %v1164
      %1293 = vst [vmem:[%s226] sm:$0xf] %v1165
      %1294 = vst [vmem:[%s226 + $0x4] sm:$0xf] %v1166
      %1295 = vst [vmem:[%s226 + $0x8] sm:$0xf] %v1167
      %1296 = vst [vmem:[%s226 + $0xc] sm:$0xf] %v1168
      %1297 = vst [vmem:[%s226 + $0x10] sm:$0xf] %v1169
      %1298 = vst [vmem:[%s226 + $0x14] sm:$0xf] %v1170
      %1299 = vst [vmem:[%s226 + $0x18] sm:$0xf] %v1171
      %1300 = vst [vmem:[%s226 + $0x1c] sm:$0xf] %v1172
      %1301 = vst [vmem:[%s226 + $0x20] sm:$0xf] %v1173
      %1302 = vst [vmem:[%s226 + $0x24] sm:$0xf] %v1174
      %1303 = vst [vmem:[%s226 + $0x28] sm:$0xf] %v1175
      %1304 = vst [vmem:[%s226 + $0x2c] sm:$0xf] %v1176
      %1305 = vst [vmem:[%s226 + $0x30] sm:$0xf] %v1177
      %1306 = vst [vmem:[%s226 + $0x34] sm:$0xf] %v1178
      %1307 = vst [vmem:[%s226 + $0x38] sm:$0xf] %v1179
      %1308 = vst [vmem:[%s226 + $0x3c] sm:$0xf] %v1180
      %1309 = vst [vmem:[%s226 + $0x40] sm:$0xf] %v1181
      %1310 = vst [vmem:[%s226 + $0x44] sm:$0xf] %v1182
      %1311 = vst [vmem:[%s226 + $0x48] sm:$0xf] %v1183
      %1312 = vst [vmem:[%s226 + $0x4c] sm:$0xf] %v1184
      %1313 = vst [vmem:[%s226 + $0x50] sm:$0xf] %v1185
      %1314 = vst [vmem:[%s226 + $0x54] sm:$0xf] %v1186
      %1315 = vst [vmem:[%s226 + $0x58] sm:$0xf] %v1187
      %1316 = vst [vmem:[%s226 + $0x5c] sm:$0xf] %v1188
      %1317 = vst [vmem:[%s226 + $0x60] sm:$0xf] %v1189
      %1318 = vst [vmem:[%s226 + $0x64] sm:$0xf] %v1190
      %1319 = vst [vmem:[%s226 + $0x68] sm:$0xf] %v1191
      %1320 = vst [vmem:[%s226 + $0x6c] sm:$0xf] %v1192
      %1321 = vst [vmem:[%s226 + $0x70] sm:$0xf] %v1193
      %1322 = vst [vmem:[%s226 + $0x74] sm:$0xf] %v1194
      %1323 = vst [vmem:[%s226 + $0x78] sm:$0xf] %v1195
      %1324 = vst [vmem:[%s226 + $0x7c] sm:$0xf] %v1196
      %1325 = vst [vmem:[%s226 + $0x80] sm:$0xf] %v1197
      %1326 = vst [vmem:[%s226 + $0x84] sm:$0xf] %v1198
      %1327 = vst [vmem:[%s226 + $0x88] sm:$0xf] %v1199
      %1328 = vst [vmem:[%s226 + $0x8c] sm:$0xf] %v1200
      %1329 = vst [vmem:[%s226 + $0x90] sm:$0xf] %v1201
      %1330 = vst [vmem:[%s226 + $0x94] sm:$0xf] %v1202
      %1331 = vst [vmem:[%s226 + $0x98] sm:$0xf] %v1203
      %1332 = vst [vmem:[%s226 + $0x9c] sm:$0xf] %v1204
      %1333 = vst [vmem:[%s226 + $0xa0] sm:$0xf] %v1205
      %1334 = vst [vmem:[%s226 + $0xa4] sm:$0xf] %v1206
      %1335 = vst [vmem:[%s226 + $0xa8] sm:$0xf] %v1207
      %1336 = vst [vmem:[%s226 + $0xac] sm:$0xf] %v1208
      %1337 = vst [vmem:[%s226 + $0xb0] sm:$0xf] %v1209
      %1338 = vst [vmem:[%s226 + $0xb4] sm:$0xf] %v1210
      %1339 = vst [vmem:[%s226 + $0xb8] sm:$0xf] %v1211
      %1340 = vst [vmem:[%s226 + $0xbc] sm:$0xf] %v1212
      %1341 = vst [vmem:[%s226 + $0xc0] sm:$0xf] %v1213
      %1342 = vst [vmem:[%s226 + $0xc4] sm:$0xf] %v1214
      %1343 = vst [vmem:[%s226 + $0xc8] sm:$0xf] %v1215
      %1344 = vst [vmem:[%s226 + $0xcc] sm:$0xf] %v1216
      %1345 = vst [vmem:[%s226 + $0xd0] sm:$0xf] %v1217
      %1346 = vst [vmem:[%s226 + $0xd4] sm:$0xf] %v1218
      %1347 = vst [vmem:[%s226 + $0xd8] sm:$0xf] %v1219
      %1348 = vst [vmem:[%s226 + $0xdc] sm:$0xf] %v1220
      %1349 = vst [vmem:[%s226 + $0xe0] sm:$0xf] %v1221
      %1350 = vst [vmem:[%s226 + $0xe4] sm:$0xf] %v1222
      %1351 = vst [vmem:[%s226 + $0xe8] sm:$0xf] %v1223
      %1352 = vst [vmem:[%s226 + $0xec] sm:$0xf] %v1224
      %1353 = vst [vmem:[%s226 + $0xf0] sm:$0xf] %v1225
      %1354 = vst [vmem:[%s226 + $0xf4] sm:$0xf] %v1226
      %1355 = vst [vmem:[%s226 + $0xf8] sm:$0xf] %v1227
      %1356 = vst [vmem:[%s226 + $0xfc] sm:$0xf] %v1228
      %s1357 = smul.u32 64, %s18
      %p1358 = scmp.lt.s32.totalorder %s1357, 255
      %s1359 = scalar_select %p1358, %s1357, 255
      %p1360 = scmp.lt.s32.totalorder %s19, 0
      %s1361 = scalar_select %p1360, %s19, 0
      %s1362 = sadd.s32 %s1361, %s1359
      %s1363 = smul.addr %s1362, 4
      %s1364 = scalar_lea.vmem %s3, %s1363
      // Predicated region
      $region33: #{stem_fwd.4} parent=31 // pred_check
        %p1365 = pneg %p124
      $region34: #{stem_fwd.4} parent=31 // pred_check_branch
        %1367 = sbr.rel (%p1365) target = $region36
      $region35: #{stem_fwd.4} parent=31 // pred_region
        %s1368 = smul.u32 64, %s18
      $region36: #{stem_fwd.4} parent=31 // pred_fallthru
        _
    $region32: #{stem_fwd.4} parent=5 // pred_fallthru
      _
    %p1369 = scmp.le.s32.totalorder 2, %s9
    // Predicated region
    $region37: #{stem_fwd.4} parent=5 // pred_check
      %p1370 = pneg %p1369
    $region38: #{stem_fwd.4} parent=5 // pred_check_branch
      %1372 = sbr.rel (%p1370) target = $region40
    $region39: #{stem_fwd.4} parent=5 // pred_region
      %s1373 = ssub.s32 %s9, 2
      // Predicated region
      $region41: #{stem_fwd.4} parent=39 // pred_check
        %p1374 = pneg %p130
      $region42: #{stem_fwd.4} parent=39 // pred_check_branch
        %1376 = sbr.rel (%p1374) target = $region44
      $region43: #{stem_fwd.4} parent=39 // pred_region
        %s1377 = smul.u32 64, %s20
        %p1378 = scmp.lt.s32.totalorder %s1377, 255
        %s1379 = scalar_select %p1378, %s1377, 255
        %p1380 = scmp.lt.s32.totalorder %s21, 0
        %s1381 = scalar_select %p1380, %s21, 0
        %s1382 = sadd.s32 %s1381, %s1379
        %s1383 = smul.addr %s1382, 4
        %s1384 = scalar_lea.vmem %s3, %s1383
      $region44: #{stem_fwd.4} parent=39 // pred_fallthru
        _
    $region40: #{stem_fwd.4} parent=5 // pred_fallthru
      _
  $region6: #{stem_fwd.4} parent=0 // loop_footer
    %s13 = sadd.s32 1, %s9
  $region7: #{stem_fwd.4} parent=0 // loop_footer_branch
    %8 = sbr.rel target = $region3
  $region8: #{stem_fwd.4} parent=0 // loop_exit
    _

// kernel: stem_fwd.7
$region0: #{stem_fwd.7}
  #allocation0 [shape = 'u32[]', space=smem, size = 0x4, offset = 0x4, fixed_abs, tag = 'smem constant byte address 0x4 - core index']
  #allocation1 [shape = 'u32[144,128]{1,0:T(1,128)}', space=vmem, size = 0x12000, scoped, tag = 'internal scratch']
  %s0 = inlined_call_operand.vmem [shape: bf16[512,128], index: 0, kind: input, shape index: {}]
  %s1 = inlined_call_operand.hbm [shape: f32[1,128], index: 1, kind: output, shape index: {0}]
  %s2 = inlined_call_operand.hbm [shape: f32[1,128], index: 2, kind: output, shape index: {1}]
  %3 = xla_tuple %s1, %s2
  %s4 = sld [smem:[#allocation0]]
  $region26: #{stem_fwd.7} parent=0
    _
  %s6 = ssub.s32 1, %s4
  %s7 = scalar_select 0, %s6, %s4
  $region1: #{stem_fwd.7} parent=0
    #allocation2 [shape = 'u8[512]{0}', space=vmem, size = 0x400, scoped, tag = 'output window, operand 0, single buffered']
    #allocation3 [shape = 's32[1]{0}', space=sflag, size = 0x4, scoped, tag = 'scoped memory for stem_fwd.7']
    #allocation4 [shape = 'u8[512]{0}', space=vmem, size = 0x400, scoped, tag = 'output window, operand 1, single buffered']
    #allocation5 [shape = 's32[1]{0}', space=sflag, size = 0x4, scoped, tag = 'scoped memory for stem_fwd.7']
    %8 = vsyncpa [#allocation3], 0
    %9 = vsyncpa [#allocation5], 0
    // Predicated region
    $region2: #{stem_fwd.7} parent=1 // pred_check
      _
    $region3: #{stem_fwd.7} parent=1 // pred_check_branch
      %11 = sbr.rel (0) target = $region5
    $region4: #{stem_fwd.7} parent=1 // pred_region
      _
    $region5: #{stem_fwd.7} parent=1 // pred_fallthru
      _
    %p12 = scmp.eq.s32.totalorder 0, 0
    // Predicated region
    $region6: #{stem_fwd.7} parent=1 // pred_check
      %p13 = pneg %p12
    $region7: #{stem_fwd.7} parent=1 // pred_check_branch
      %15 = sbr.rel (%p13) target = $region9
    $region8: #{stem_fwd.7} parent=1 // pred_region
      %16 = vst [vmem:[#allocation2] sm:$0x1] 0.0
      %17 = vst [vmem:[#allocation4] sm:$0x1] 0.0
    $region9: #{stem_fwd.7} parent=1 // pred_fallthru
      _
    %v18 = vld [vmem:[%s0] sm:$0xf]
    %v19 = vld [vmem:[%s0 + $0x4] sm:$0xf]
    %v20 = vld [vmem:[%s0 + $0x8] sm:$0xf]
    %v21 = vld [vmem:[%s0 + $0xc] sm:$0xf]
    %v22 = vld [vmem:[%s0 + $0x10] sm:$0xf]
    %v23 = vld [vmem:[%s0 + $0x14] sm:$0xf]
    %v24 = vld [vmem:[%s0 + $0x18] sm:$0xf]
    %v25 = vld [vmem:[%s0 + $0x1c] sm:$0xf]
    %v26 = vld [vmem:[%s0 + $0x20] sm:$0xf]
    %v27 = vld [vmem:[%s0 + $0x24] sm:$0xf]
    %v28 = vld [vmem:[%s0 + $0x28] sm:$0xf]
    %v29 = vld [vmem:[%s0 + $0x2c] sm:$0xf]
    %v30 = vld [vmem:[%s0 + $0x30] sm:$0xf]
    %v31 = vld [vmem:[%s0 + $0x34] sm:$0xf]
    %v32 = vld [vmem:[%s0 + $0x38] sm:$0xf]
    %v33 = vld [vmem:[%s0 + $0x3c] sm:$0xf]
    %v34 = vld [vmem:[%s0 + $0x40] sm:$0xf]
    %v35 = vld [vmem:[%s0 + $0x44] sm:$0xf]
    %v36 = vld [vmem:[%s0 + $0x48] sm:$0xf]
    %v37 = vld [vmem:[%s0 + $0x4c] sm:$0xf]
    %v38 = vld [vmem:[%s0 + $0x50] sm:$0xf]
    %v39 = vld [vmem:[%s0 + $0x54] sm:$0xf]
    %v40 = vld [vmem:[%s0 + $0x58] sm:$0xf]
    %v41 = vld [vmem:[%s0 + $0x5c] sm:$0xf]
    %v42 = vld [vmem:[%s0 + $0x60] sm:$0xf]
    %v43 = vld [vmem:[%s0 + $0x64] sm:$0xf]
    %v44 = vld [vmem:[%s0 + $0x68] sm:$0xf]
    %v45 = vld [vmem:[%s0 + $0x6c] sm:$0xf]
    %v46 = vld [vmem:[%s0 + $0x70] sm:$0xf]
    %v47 = vld [vmem:[%s0 + $0x74] sm:$0xf]
    %v48 = vld [vmem:[%s0 + $0x78] sm:$0xf]
    %v49 = vld [vmem:[%s0 + $0x7c] sm:$0xf]
    %v50 = vld [vmem:[%s0 + $0x80] sm:$0xf]
    %v51 = vld [vmem:[%s0 + $0x84] sm:$0xf]
    %v52 = vld [vmem:[%s0 + $0x88] sm:$0xf]
    %v53 = vld [vmem:[%s0 + $0x8c] sm:$0xf]
    %v54 = vld [vmem:[%s0 + $0x90] sm:$0xf]
    %v55 = vld [vmem:[%s0 + $0x94] sm:$0xf]
    %v56 = vld [vmem:[%s0 + $0x98] sm:$0xf]
    %v57 = vld [vmem:[%s0 + $0x9c] sm:$0xf]
    %v58 = vld [vmem:[%s0 + $0xa0] sm:$0xf]
    %v59 = vld [vmem:[%s0 + $0xa4] sm:$0xf]
    %v60 = vld [vmem:[%s0 + $0xa8] sm:$0xf]
    %v61 = vld [vmem:[%s0 + $0xac] sm:$0xf]
    %v62 = vld [vmem:[%s0 + $0xb0] sm:$0xf]
    %v63 = vld [vmem:[%s0 + $0xb4] sm:$0xf]
    %v64 = vld [vmem:[%s0 + $0xb8] sm:$0xf]
    %v65 = vld [vmem:[%s0 + $0xbc] sm:$0xf]
    %v66 = vld [vmem:[%s0 + $0xc0] sm:$0xf]
    %v67 = vld [vmem:[%s0 + $0xc4] sm:$0xf]
    %v68 = vld [vmem:[%s0 + $0xc8] sm:$0xf]
    %v69 = vld [vmem:[%s0 + $0xcc] sm:$0xf]
    %v70 = vld [vmem:[%s0 + $0xd0] sm:$0xf]
    %v71 = vld [vmem:[%s0 + $0xd4] sm:$0xf]
    %v72 = vld [vmem:[%s0 + $0xd8] sm:$0xf]
    %v73 = vld [vmem:[%s0 + $0xdc] sm:$0xf]
    %v74 = vld [vmem:[%s0 + $0xe0] sm:$0xf]
    %v75 = vld [vmem:[%s0 + $0xe4] sm:$0xf]
    %v76 = vld [vmem:[%s0 + $0xe8] sm:$0xf]
    %v77 = vld [vmem:[%s0 + $0xec] sm:$0xf]
    %v78 = vld [vmem:[%s0 + $0xf0] sm:$0xf]
    %v79 = vld [vmem:[%s0 + $0xf4] sm:$0xf]
    %v80 = vld [vmem:[%s0 + $0xf8] sm:$0xf]
    %v81 = vld [vmem:[%s0 + $0xfc] sm:$0xf]
    %v82 = vunpack.c.l.bf16 %v18
    %v83 = vunpack.c.l.bf16 %v19
    %v84 = vunpack.c.l.bf16 %v20
    %v85 = vunpack.c.l.bf16 %v21
    %v86 = vunpack.c.l.bf16 %v22
    %v87 = vunpack.c.l.bf16 %v23
    %v88 = vunpack.c.l.bf16 %v24
    %v89 = vunpack.c.l.bf16 %v25
    %v90 = vunpack.c.l.bf16 %v26
    %v91 = vunpack.c.l.bf16 %v27
    %v92 = vunpack.c.l.bf16 %v28
    %v93 = vunpack.c.l.bf16 %v29
    %v94 = vunpack.c.l.bf16 %v30
    %v95 = vunpack.c.l.bf16 %v31
    %v96 = vunpack.c.l.bf16 %v32
    %v97 = vunpack.c.l.bf16 %v33
    %v98 = vunpack.c.l.bf16 %v34
    %v99 = vunpack.c.l.bf16 %v35
    %v100 = vunpack.c.l.bf16 %v36
    %v101 = vunpack.c.l.bf16 %v37
    %v102 = vunpack.c.l.bf16 %v38
    %v103 = vunpack.c.l.bf16 %v39
    %v104 = vunpack.c.l.bf16 %v40
    %v105 = vunpack.c.l.bf16 %v41
    %v106 = vunpack.c.l.bf16 %v42
    %v107 = vunpack.c.l.bf16 %v43
    %v108 = vunpack.c.l.bf16 %v44
    %v109 = vunpack.c.l.bf16 %v45
    %v110 = vunpack.c.l.bf16 %v46
    %v111 = vunpack.c.l.bf16 %v47
    %v112 = vunpack.c.l.bf16 %v48
    %v113 = vunpack.c.l.bf16 %v49
    %v114 = vunpack.c.l.bf16 %v50
    %v115 = vunpack.c.l.bf16 %v51
    %v116 = vunpack.c.l.bf16 %v52
    %v117 = vunpack.c.l.bf16 %v53
    %v118 = vunpack.c.l.bf16 %v54
    %v119 = vunpack.c.l.bf16 %v55
    %v120 = vunpack.c.l.bf16 %v56
    %v121 = vunpack.c.l.bf16 %v57
    %v122 = vunpack.c.l.bf16 %v58
    %v123 = vunpack.c.l.bf16 %v59
    %v124 = vunpack.c.l.bf16 %v60
    %v125 = vunpack.c.l.bf16 %v61
    %v126 = vunpack.c.l.bf16 %v62
    %v127 = vunpack.c.l.bf16 %v63
    %v128 = vunpack.c.l.bf16 %v64
    %v129 = vunpack.c.l.bf16 %v65
    %v130 = vunpack.c.l.bf16 %v66
    %v131 = vunpack.c.l.bf16 %v67
    %v132 = vunpack.c.l.bf16 %v68
    %v133 = vunpack.c.l.bf16 %v69
    %v134 = vunpack.c.l.bf16 %v70
    %v135 = vunpack.c.l.bf16 %v71
    %v136 = vunpack.c.l.bf16 %v72
    %v137 = vunpack.c.l.bf16 %v73
    %v138 = vunpack.c.l.bf16 %v74
    %v139 = vunpack.c.l.bf16 %v75
    %v140 = vunpack.c.l.bf16 %v76
    %v141 = vunpack.c.l.bf16 %v77
    %v142 = vunpack.c.l.bf16 %v78
    %v143 = vunpack.c.l.bf16 %v79
    %v144 = vunpack.c.l.bf16 %v80
    %v145 = vunpack.c.l.bf16 %v81
    %v146 = vld [vmem:[#allocation2] sm:$0x1]
    %v147 = vadd.f32 %v82, %v83
    %v148 = vadd.f32 %v147, %v84
    %v149 = vadd.f32 %v148, %v85
    %v150 = vadd.f32 %v149, %v86
    %v151 = vadd.f32 %v150, %v87
    %v152 = vadd.f32 %v151, %v88
    %v153 = vadd.f32 %v152, %v89
    %v154 = vadd.f32 %v153, %v90
    %v155 = vadd.f32 %v154, %v91
    %v156 = vadd.f32 %v155, %v92
    %v157 = vadd.f32 %v156, %v93
    %v158 = vadd.f32 %v157, %v94
    %v159 = vadd.f32 %v158, %v95
    %v160 = vadd.f32 %v159, %v96
    %v161 = vadd.f32 %v160, %v97
    %v162 = vadd.f32 %v161, %v98
    %v163 = vadd.f32 %v162, %v99
    %v164 = vadd.f32 %v163, %v100
    %v165 = vadd.f32 %v164, %v101
    %v166 = vadd.f32 %v165, %v102
    %v167 = vadd.f32 %v166, %v103
    %v168 = vadd.f32 %v167, %v104
    %v169 = vadd.f32 %v168, %v105
    %v170 = vadd.f32 %v169, %v106
    %v171 = vadd.f32 %v170, %v107
    %v172 = vadd.f32 %v171, %v108
    %v173 = vadd.f32 %v172, %v109
    %v174 = vadd.f32 %v173, %v110
    %v175 = vadd.f32 %v174, %v111
    %v176 = vadd.f32 %v175, %v112
    %v177 = vadd.f32 %v176, %v113
    %v178 = vadd.f32 %v177, %v114
    %v179 = vadd.f32 %v178, %v115
    %v180 = vadd.f32 %v179, %v116
    %v181 = vadd.f32 %v180, %v117
    %v182 = vadd.f32 %v181, %v118
    %v183 = vadd.f32 %v182, %v119
    %v184 = vadd.f32 %v183, %v120
    %v185 = vadd.f32 %v184, %v121
    %v186 = vadd.f32 %v185, %v122
    %v187 = vadd.f32 %v186, %v123
    %v188 = vadd.f32 %v187, %v124
    %v189 = vadd.f32 %v188, %v125
    %v190 = vadd.f32 %v189, %v126
    %v191 = vadd.f32 %v190, %v127
    %v192 = vadd.f32 %v191, %v128
    %v193 = vadd.f32 %v192, %v129
    %v194 = vadd.f32 %v193, %v130
    %v195 = vadd.f32 %v194, %v131
    %v196 = vadd.f32 %v195, %v132
    %v197 = vadd.f32 %v196, %v133
    %v198 = vadd.f32 %v197, %v134
    %v199 = vadd.f32 %v198, %v135
    %v200 = vadd.f32 %v199, %v136
    %v201 = vadd.f32 %v200, %v137
    %v202 = vadd.f32 %v201, %v138
    %v203 = vadd.f32 %v202, %v139
    %v204 = vadd.f32 %v203, %v140
    %v205 = vadd.f32 %v204, %v141
    %v206 = vadd.f32 %v205, %v142
    %v207 = vadd.f32 %v206, %v143
    %v208 = vadd.f32 %v207, %v144
    %v209 = vadd.f32 %v208, %v145
    %v210 = vrot.slane %v209, 4
    %v211 = vadd.f32 %v209, %v210
    %v212 = vrot.slane %v211, 2
    %v213 = vadd.f32 %v211, %v212
    %v214 = vrot.slane %v213, 1
    %v215 = vadd.f32 %v213, %v214
    %v216 = vadd.f32 %v146, %v215
    %217 = vst [vmem:[#allocation2] sm:$0x1] %v216
    %v218 = vld [vmem:[#allocation4] sm:$0x1]
    %v219 = vmul.f32 %v82, %v82
    %v220 = vmul.f32 %v83, %v83
    %v221 = vmul.f32 %v84, %v84
    %v222 = vmul.f32 %v85, %v85
    %v223 = vmul.f32 %v86, %v86
    %v224 = vmul.f32 %v87, %v87
    %v225 = vmul.f32 %v88, %v88
    %v226 = vmul.f32 %v89, %v89
    %v227 = vmul.f32 %v90, %v90
    %v228 = vmul.f32 %v91, %v91
    %v229 = vmul.f32 %v92, %v92
    %v230 = vmul.f32 %v93, %v93
    %v231 = vmul.f32 %v94, %v94
    %v232 = vmul.f32 %v95, %v95
    %v233 = vmul.f32 %v96, %v96
    %v234 = vmul.f32 %v97, %v97
    %v235 = vmul.f32 %v98, %v98
    %v236 = vmul.f32 %v99, %v99
    %v237 = vmul.f32 %v100, %v100
    %v238 = vmul.f32 %v101, %v101
    %v239 = vmul.f32 %v102, %v102
    %v240 = vmul.f32 %v103, %v103
    %v241 = vmul.f32 %v104, %v104
    %v242 = vmul.f32 %v105, %v105
    %v243 = vmul.f32 %v106, %v106
    %v244 = vmul.f32 %v107, %v107
    %v245 = vmul.f32 %v108, %v108
    %v246 = vmul.f32 %v109, %v109
    %v247 = vmul.f32 %v110, %v110
    %v248 = vmul.f32 %v111, %v111
    %v249 = vmul.f32 %v112, %v112
    %v250 = vmul.f32 %v113, %v113
    %v251 = vmul.f32 %v114, %v114
    %v252 = vmul.f32 %v115, %v115
    %v253 = vmul.f32 %v116, %v116
    %v254 = vmul.f32 %v117, %v117
    %v255 = vmul.f32 %v118, %v118
    %v256 = vmul.f32 %v119, %v119
    %v257 = vmul.f32 %v120, %v120
    %v258 = vmul.f32 %v121, %v121
    %v259 = vmul.f32 %v122, %v122
    %v260 = vmul.f32 %v123, %v123
    %v261 = vmul.f32 %v124, %v124
    %v262 = vmul.f32 %v125, %v125
    %v263 = vmul.f32 %v126, %v126
    %v264 = vmul.f32 %v127, %v127
    %v265 = vmul.f32 %v128, %v128
    %v266 = vmul.f32 %v129, %v129
    %v267 = vmul.f32 %v130, %v130
    %v268 = vmul.f32 %v131, %v131
    %v269 = vmul.f32 %v132, %v132
    %v270 = vmul.f32 %v133, %v133
    %v271 = vmul.f32 %v134, %v134
    %v272 = vmul.f32 %v135, %v135
    %v273 = vmul.f32 %v136, %v136
    %v274 = vmul.f32 %v137, %v137
    %v275 = vmul.f32 %v138, %v138
    %v276 = vmul.f32 %v139, %v139
    %v277 = vmul.f32 %v140, %v140
    %v278 = vmul.f32 %v141, %v141
    %v279 = vmul.f32 %v142, %v142
    %v280 = vmul.f32 %v143, %v143
    %v281 = vmul.f32 %v144, %v144
    %v282 = vmul.f32 %v145, %v145
    %v283 = vadd.f32 %v219, %v220
    %v284 = vadd.f32 %v283, %v221
    %v285 = vadd.f32 %v284, %v222
    %v286 = vadd.f32 %v285, %v223
    %v287 = vadd.f32 %v286, %v224
    %v288 = vadd.f32 %v287, %v225
    %v289 = vadd.f32 %v288, %v226
    %v290 = vadd.f32 %v289, %v227
    %v291 = vadd.f32 %v290, %v228
    %v292 = vadd.f32 %v291, %v229
    %v293 = vadd.f32 %v292, %v230
    %v294 = vadd.f32 %v293, %v231
    %v295 = vadd.f32 %v294, %v232
    %v296 = vadd.f32 %v295, %v233
    %v297 = vadd.f32 %v296, %v234
    %v298 = vadd.f32 %v297, %v235
    %v299 = vadd.f32 %v298, %v236
    %v300 = vadd.f32 %v299, %v237
    %v301 = vadd.f32 %v300, %v238
    %v302 = vadd.f32 %v301, %v239
    %v303 = vadd.f32 %v302, %v240
    %v304 = vadd.f32 %v303, %v241
    %v305 = vadd.f32 %v304, %v242
    %v306 = vadd.f32 %v305, %v243
    %v307 = vadd.f32 %v306, %v244
    %v308 = vadd.f32 %v307, %v245
    %v309 = vadd.f32 %v308, %v246
    %v310 = vadd.f32 %v309, %v247
    %v311 = vadd.f32 %v310, %v248
    %v312 = vadd.f32 %v311, %v249
    %v313 = vadd.f32 %v312, %v250
    %v314 = vadd.f32 %v313, %v251
    %v315 = vadd.f32 %v314, %v252
    %v316 = vadd.f32 %v315, %v253
    %v317 = vadd.f32 %v316, %v254
    %v318 = vadd.f32 %v317, %v255
    %v319 = vadd.f32 %v318, %v256
    %v320 = vadd.f32 %v319, %v257
    %v321 = vadd.f32 %v320, %v258
    %v322 = vadd.f32 %v321, %v259
    %v323 = vadd.f32 %v322, %v260
    %v324 = vadd.f32 %v323, %v261
    %v325 = vadd.f32 %v324, %v262
    %v326 = vadd.f32 %v325, %v263
    %v327 = vadd.f32 %v326, %v264
    %v328 = vadd.f32 %v327, %v265
    %v329 = vadd.f32 %v328, %v266
    %v330 = vadd.f32 %v329, %v267
    %v331 = vadd.f32 %v330, %v268
    %v332 = vadd.f32 %v331, %v269
    %v333 = vadd.f32 %v332, %v270
    %v334 = vadd.f32 %v333, %v271
    %v335 = vadd.f32 %v334, %v272
    %v336 = vadd.f32 %v335, %v273
    %v337 = vadd.f32 %v336, %v274
    %v338 = vadd.f32 %v337, %v275
    %v339 = vadd.f32 %v338, %v276
    %v340 = vadd.f32 %v339, %v277
    %v341 = vadd.f32 %v340, %v278
    %v342 = vadd.f32 %v341, %v279
    %v343 = vadd.f32 %v342, %v280
    %v344 = vadd.f32 %v343, %v281
    %v345 = vadd.f32 %v344, %v282
    %v346 = vrot.slane %v345, 4
    %v347 = vadd.f32 %v345, %v346
    %v348 = vrot.slane %v347, 2
    %v349 = vadd.f32 %v347, %v348
    %v350 = vrot.slane %v349, 1
    %v351 = vadd.f32 %v349, %v350
    %v352 = vadd.f32 %v218, %v351
    %353 = vst [vmem:[#allocation4] sm:$0x1] %v352
    // Predicated region
    $region10: #{stem_fwd.7} parent=1 // pred_check
      _
    $region11: #{stem_fwd.7} parent=1 // pred_check_branch
      %355 = sbr.rel (0) target = $region13
    $region12: #{stem_fwd.7} parent=1 // pred_region
      %s357 = ssub.s32 16, 16
      %358 = vsyncadd [#allocation3], %s357
      %s360 = sshll.u32 [#allocation2], 4
      %s361 = int_to_ptr.vmem [resolvable:$true] %s360
      %363 = dma.vmem_to_hbm [thread:$0]  %s361, 16, %s1, [#allocation3]
    $region13: #{stem_fwd.7} parent=1 // pred_fallthru
      _
    // Predicated region
    $region14: #{stem_fwd.7} parent=1 // pred_check
      _
    $region15: #{stem_fwd.7} parent=1 // pred_check_branch
      %365 = sbr.rel (0) target = $region17
    $region16: #{stem_fwd.7} parent=1 // pred_region
      %s367 = ssub.s32 16, 16
      %368 = vsyncadd [#allocation5], %s367
      %s370 = sshll.u32 [#allocation4], 4
      %s371 = int_to_ptr.vmem [resolvable:$true] %s370
      %373 = dma.vmem_to_hbm [thread:$0]  %s371, 16, %s2, [#allocation5]
    $region17: #{stem_fwd.7} parent=1 // pred_fallthru
      _
    // Predicated region
    $region18: #{stem_fwd.7} parent=1 // pred_check
      _
    $region19: #{stem_fwd.7} parent=1 // pred_check_branch
      %375 = sbr.rel (0) target = $region21
    $region20: #{stem_fwd.7} parent=1 // pred_region
      %376 = dma.done [#allocation3], 16
    $region21: #{stem_fwd.7} parent=1 // pred_fallthru
      _
    // Predicated region
    $region22: #{stem_fwd.7} parent=1 // pred_check
      _
    $region23: #{stem_fwd.7} parent=1 // pred_check_branch
      %378 = sbr.rel (0) target = $region25
    $region24: #{stem_fwd.7} parent=1 // pred_region
      %379 = dma.done [#allocation5], 16
    $region25: #{stem_fwd.7} parent=1 // pred_fallthru
      _
    %380 = vsyncpa [#allocation3], 1
    %381 = vsyncpa [#allocation5], 1

// kernel: stem_fwd.6
$region0: #{stem_fwd.6}
  #allocation0 [shape = 'u32[]', space=smem, size = 0x4, offset = 0x4, fixed_abs, tag = 'smem constant byte address 0x4 - core index']
  #allocation1 [shape = 'u32[144,128]{1,0:T(1,128)}', space=vmem, size = 0x12000, scoped, tag = 'internal scratch']
  #allocation2 [shape = 'f32[34,34,128]{2,1,0:T(8,128)}', space=vmem, size = 0xaa000, scoped, tag = 'scratch operand']
  %s0 = inlined_call_operand.vmem [shape: bf16[2,32,32,128], index: 0, kind: input, shape index: {}]
  %s1 = inlined_call_operand.vmem [shape: f32[1,128], index: 1, kind: input, shape index: {}]
  %s2 = inlined_call_operand.vmem [shape: f32[1,128], index: 2, kind: input, shape index: {}]
  %s3 = inlined_call_operand.vmem [shape: bf16[2,32,32,128], index: 3, kind: output, shape index: {}]
  %s4 = sld [smem:[#allocation0]]
  $region45: #{stem_fwd.6} parent=0
    _
  %s6 = ssub.s32 1, %s4
  %s7 = scalar_select 0, %s6, %s4
  loop: start=0, step=1, limit=4
  $region2: #{stem_fwd.6} parent=0 // loop_pre_header
    _
  $region3: #{stem_fwd.6} parent=0 // loop_header
    %s9 = sphi 0, %s13
    %p10 = scmp.ge.s32.totalorder %s9, 4
    %s19 = sphi 0, %s21
    %s22 = sphi 0, %s19
    %s23 = sphi 0, %s22
    %s39 = sphi 0, %s23
    %s43 = sphi 0, %s43
    %s45 = sphi 0, %s43
    %s46 = sphi 0, %s45
    %s60 = sphi 0, %s46
    %s64 = sphi 0, %s64
    %s66 = sphi 0, %s64
    %s67 = sphi 0, %s66
    %s81 = sphi 0, %s67
    %s87 = sphi 0, %s89
    %s90 = sphi 0, %s87
    %s91 = sphi 0, %s90
    %s107 = sphi 0, %s91
  $region4: #{stem_fwd.6} parent=0 // loop_header_branch
    %12 = sbr.rel (%p10) target = $region8
  $region5: #{stem_fwd.6} parent=0 // loop_body
    %s14 = ssub.s32 %s9, 1
    %s15 = ssub.s32 %s9, 2
    %s16 = sadd.s32 %s9, 1
    %s17 = ssub.s32 %s9, %s16
    %p18 = scmp.eq.s32.totalorder %s17, 0
    %s20 = sadd.s32 %s19, 1
    %s21 = scalar_select %p18, %s19, %s20
    %p24 = pneg %p18
    %p25 = scmp.eq.s32.totalorder %s9, 1
    %p26 = por %p24, %p25
    %p27 = scmp.ne.s32.totalorder %s19, %s22
    %p28 = scmp.eq.s32.totalorder %s9, 0
    %p29 = por %p27, %p28
    %p30 = scmp.ne.s32.totalorder %s19, %s22
    %p31 = scmp.eq.s32.totalorder %s14, 1
    %p32 = por %p30, %p31
    %p33 = scmp.ne.s32.totalorder %s22, %s23
    %p34 = scmp.eq.s32.totalorder %s14, 0
    %p35 = por %p33, %p34
    %p36 = scmp.ne.s32.totalorder %s22, %s23
    %p37 = scmp.eq.s32.totalorder %s15, 1
    %p38 = por %p36, %p37
    %p40 = scmp.ne.s32.totalorder %s23, %s39
    %p41 = scmp.eq.s32.totalorder %s15, 0
    %p42 = por %p40, %p41
    %s44 = sadd.s32 %s43, 1
    %p47 = scmp.eq.s32.totalorder %s9, 1
    %p48 = scmp.ne.s32.totalorder %s43, %s45
    %p49 = scmp.eq.s32.totalorder %s9, 0
    %p50 = por %p48, %p49
    %p51 = scmp.ne.s32.totalorder %s43, %s45
    %p52 = scmp.eq.s32.totalorder %s14, 1
    %p53 = por %p51, %p52
    %p54 = scmp.ne.s32.totalorder %s45, %s46
    %p55 = scmp.eq.s32.totalorder %s14, 0
    %p56 = por %p54, %p55
    %p57 = scmp.ne.s32.totalorder %s45, %s46
    %p58 = scmp.eq.s32.totalorder %s15, 1
    %p59 = por %p57, %p58
    %p61 = scmp.ne.s32.totalorder %s46, %s60
    %p62 = scmp.eq.s32.totalorder %s15, 0
    %p63 = por %p61, %p62
    %s65 = sadd.s32 %s64, 1
    %p68 = scmp.eq.s32.totalorder %s9, 1
    %p69 = scmp.ne.s32.totalorder %s64, %s66
    %p70 = scmp.eq.s32.totalorder %s9, 0
    %p71 = por %p69, %p70
    %p72 = scmp.ne.s32.totalorder %s64, %s66
    %p73 = scmp.eq.s32.totalorder %s14, 1
    %p74 = por %p72, %p73
    %p75 = scmp.ne.s32.totalorder %s66, %s67
    %p76 = scmp.eq.s32.totalorder %s14, 0
    %p77 = por %p75, %p76
    %p78 = scmp.ne.s32.totalorder %s66, %s67
    %p79 = scmp.eq.s32.totalorder %s15, 1
    %p80 = por %p78, %p79
    %p82 = scmp.ne.s32.totalorder %s67, %s81
    %p83 = scmp.eq.s32.totalorder %s15, 0
    %p84 = por %p82, %p83
    %s85 = ssub.s32 %s9, %s16
    %p86 = scmp.eq.s32.totalorder %s85, 0
    %s88 = sadd.s32 %s87, 1
    %s89 = scalar_select %p86, %s87, %s88
    %p92 = pneg %p86
    %p93 = scmp.eq.s32.totalorder %s9, 1
    %p94 = por %p92, %p93
    %p95 = scmp.ne.s32.totalorder %s87, %s90
    %p96 = scmp.eq.s32.totalorder %s9, 0
    %p97 = por %p95, %p96
    %p98 = scmp.ne.s32.totalorder %s87, %s90
    %p99 = scmp.eq.s32.totalorder %s14, 1
    %p100 = por %p98, %p99
    %p101 = scmp.ne.s32.totalorder %s90, %s91
    %p102 = scmp.eq.s32.totalorder %s14, 0
    %p103 = por %p101, %p102
    %p104 = scmp.ne.s32.totalorder %s90, %s91
    %p105 = scmp.eq.s32.totalorder %s15, 1
    %p106 = por %p104, %p105
    %p108 = scmp.ne.s32.totalorder %s91, %s107
    %p109 = scmp.eq.s32.totalorder %s15, 0
    %p110 = por %p108, %p109
    %p111 = scmp.le.s32.totalorder 1, %s9
    %p112 = scmp.lt.s32.totalorder %s9, 3
    %p113 = pnand %p111, %p112
    %p114 = pneg %p113
    // Predicated region
    $region9: #{stem_fwd.6} parent=5 // pred_check
      _
    $region10: #{stem_fwd.6} parent=5 // pred_check_branch
      %116 = sbr.rel (%p113) target = $region12
    $region11: #{stem_fwd.6} parent=5 // pred_region
      %s117 = ssub.s32 %s9, 1
      // Predicated region
      $region13: #{stem_fwd.6} parent=11 // pred_check
        %p118 = pneg %p56
      $region14: #{stem_fwd.6} parent=11 // pred_check_branch
        %120 = sbr.rel (%p118) target = $region16
      $region15: #{stem_fwd.6} parent=11 // pred_region
        _
      $region16: #{stem_fwd.6} parent=11 // pred_fallthru
        _
      // Predicated region
      $region17: #{stem_fwd.6} parent=11 // pred_check
        %p121 = pneg %p77
      $region18: #{stem_fwd.6} parent=11 // pred_check_branch
        %123 = sbr.rel (%p121) target = $region20
      $region19: #{stem_fwd.6} parent=11 // pred_region
        _
      $region20: #{stem_fwd.6} parent=11 // pred_fallthru
        _
    $region12: #{stem_fwd.6} parent=5 // pred_fallthru
      _
    %p124 = scmp.lt.s32.totalorder %s9, 2
    // Predicated region
    $region21: #{stem_fwd.6} parent=5 // pred_check
      %p125 = pneg %p124
    $region22: #{stem_fwd.6} parent=5 // pred_check_branch
      %127 = sbr.rel (%p125) target = $region24
    $region23: #{stem_fwd.6} parent=5 // pred_region
      // Predicated region
      $region25: #{stem_fwd.6} parent=23 // pred_check
        %p128 = pneg %p29
      $region26: #{stem_fwd.6} parent=23 // pred_check_branch
        %130 = sbr.rel (%p128) target = $region28
      $region27: #{stem_fwd.6} parent=23 // pred_region
        %p131 = scmp.lt.s32.totalorder %s9, 1
        %s132 = scalar_select %p131, %s9, 1
        %s133 = smul.addr %s132, 128
        %s134 = smul.addr %s133, 4
        %s135 = scalar_lea.vmem %s0, %s134
      $region28: #{stem_fwd.6} parent=23 // pred_fallthru
        _
    $region24: #{stem_fwd.6} parent=5 // pred_fallthru
      _
    %p136 = scmp.le.s32.totalorder 1, %s9
    %p137 = scmp.lt.s32.totalorder %s9, 3
    %p138 = pnand %p136, %p137
    %p139 = pneg %p138
    // Predicated region
    $region29: #{stem_fwd.6} parent=5 // pred_check
      _
    $region30: #{stem_fwd.6} parent=5 // pred_check_branch
      %141 = sbr.rel (%p138) target = $region32
    $region31: #{stem_fwd.6} parent=5 // pred_region
      %s142 = ssub.s32 %s9, 1
      %p143 = scmp.lt.s32.totalorder %s14, 1
      %s144 = scalar_select %p143, %s14, 1
      %s145 = smul.addr %s144, 128
      %s146 = smul.addr %s145, 4
      %s147 = scalar_lea.vmem %s0, %s146
      %p148 = pneg %p35
      %p149 = pneg %p32
      %p150 = pneg %p56
      %p151 = pneg %p53
      %p152 = pneg %p77
      %p153 = pneg %p74
      %p154 = pneg %p103
      %p155 = pneg %p100
      %p156 = scmp.lt.s32.totalorder %s14, 1
      %s157 = scalar_select %p156, %s14, 1
      %s158 = smul.addr %s157, 128
      %s159 = smul.addr %s158, 4
      %s160 = scalar_lea.vmem %s3, %s159
      %p161 = scmp.lt.s32.totalorder %s14, 1
      %s162 = scalar_select %p161, %s14, 1
      %s163 = smul.addr %s162, 128
      %s164 = smul.addr %s163, 4
      %s165 = scalar_lea.vmem %s0, %s164
      %p166 = scmp.lt.s32.totalorder %s14, 1
      %s167 = scalar_select %p166, %s14, 1
      %s168 = smul.addr %s167, 128
      %s169 = smul.addr %s168, 4
      %s170 = scalar_lea.vmem %s3, %s169
      %171 = vst [vmem:[#allocation2] sm:$0xff] 0.0
      %172 = vst [vmem:[#allocation2 + $0x8] sm:$0xff] 0.0
      %173 = vst [vmem:[#allocation2 + $0x10] sm:$0xff] 0.0
      %174 = vst [vmem:[#allocation2 + $0x18] sm:$0xff] 0.0
      %175 = vst [vmem:[#allocation2 + $0x20] sm:$0x3] 0.0
      %176 = vst [vmem:[#allocation2 + $0x28] sm:$0xff] 0.0
      %177 = vst [vmem:[#allocation2 + $0x30] sm:$0xff] 0.0
      %178 = vst [vmem:[#allocation2 + $0x38] sm:$0xff] 0.0
      %179 = vst [vmem:[#allocation2 + $0x40] sm:$0xff] 0.0
      %180 = vst [vmem:[#allocation2 + $0x48] sm:$0x3] 0.0
      %181 = vst [vmem:[#allocation2 + $0x50] sm:$0xff] 0.0
      %182 = vst [vmem:[#allocation2 + $0x58] sm:$0xff] 0.0
      %183 = vst [vmem:[#allocation2 + $0x60] sm:$0xff] 0.0
      %184 = vst [vmem:[#allocation2 + $0x68] sm:$0xff] 0.0
      %185 = vst [vmem:[#allocation2 + $0x70] sm:$0x3] 0.0
      %186 = vst [vmem:[#allocation2 + $0x78] sm:$0xff] 0.0
      %187 = vst [vmem:[#allocation2 + $0x80] sm:$0xff] 0.0
      %188 = vst [vmem:[#allocation2 + $0x88] sm:$0xff] 0.0
      %189 = vst [vmem:[#allocation2 + $0x90] sm:$0xff] 0.0
      %190 = vst [vmem:[#allocation2 + $0x98] sm:$0x3] 0.0
      %191 = vst [vmem:[#allocation2 + $0xa0] sm:$0xff] 0.0
      %192 = vst [vmem:[#allocation2 + $0xa8] sm:$0xff] 0.0
      %193 = vst [vmem:[#allocation2 + $0xb0] sm:$0xff] 0.0
      %194 = vst [vmem:[#allocation2 + $0xb8] sm:$0xff] 0.0
      %195 = vst [vmem:[#allocation2 + $0xc0] sm:$0x3] 0.0
      %196 = vst [vmem:[#allocation2 + $0xc8] sm:$0xff] 0.0
      %197 = vst [vmem:[#allocation2 + $0xd0] sm:$0xff] 0.0
      %198 = vst [vmem:[#allocation2 + $0xd8] sm:$0xff] 0.0
      %199 = vst [vmem:[#allocation2 + $0xe0] sm:$0xff] 0.0
      %200 = vst [vmem:[#allocation2 + $0xe8] sm:$0x3] 0.0
      %201 = vst [vmem:[#allocation2 + $0xf0] sm:$0xff] 0.0
      %202 = vst [vmem:[#allocation2 + $0xf8] sm:$0xff] 0.0
      %203 = vst [vmem:[#allocation2 + $0x100] sm:$0xff] 0.0
      %204 = vst [vmem:[#allocation2 + $0x108] sm:$0xff] 0.0
      %205 = vst [vmem:[#allocation2 + $0x110] sm:$0x3] 0.0
      %206 = vst [vmem:[#allocation2 + $0x118] sm:$0xff] 0.0
      %207 = vst [vmem:[#allocation2 + $0x120] sm:$0xff] 0.0
      %208 = vst [vmem:[#allocation2 + $0x128] sm:$0xff] 0.0
      %209 = vst [vmem:[#allocation2 + $0x130] sm:$0xff] 0.0
      %210 = vst [vmem:[#allocation2 + $0x138] sm:$0x3] 0.0
      %211 = vst [vmem:[#allocation2 + $0x140] sm:$0xff] 0.0
      %212 = vst [vmem:[#allocation2 + $0x148] sm:$0xff] 0.0
      %213 = vst [vmem:[#allocation2 + $0x150] sm:$0xff] 0.0
      %214 = vst [vmem:[#allocation2 + $0x158] sm:$0xff] 0.0
      %215 = vst [vmem:[#allocation2 + $0x160] sm:$0x3] 0.0
      %216 = vst [vmem:[#allocation2 + $0x168] sm:$0xff] 0.0
      %217 = vst [vmem:[#allocation2 + $0x170] sm:$0xff] 0.0
      %218 = vst [vmem:[#allocation2 + $0x178] sm:$0xff] 0.0
      %219 = vst [vmem:[#allocation2 + $0x180] sm:$0xff] 0.0
      %220 = vst [vmem:[#allocation2 + $0x188] sm:$0x3] 0.0
      %221 = vst [vmem:[#allocation2 + $0x190] sm:$0xff] 0.0
      %222 = vst [vmem:[#allocation2 + $0x198] sm:$0xff] 0.0
      %223 = vst [vmem:[#allocation2 + $0x1a0] sm:$0xff] 0.0
      %224 = vst [vmem:[#allocation2 + $0x1a8] sm:$0xff] 0.0
      %225 = vst [vmem:[#allocation2 + $0x1b0] sm:$0x3] 0.0
      %226 = vst [vmem:[#allocation2 + $0x1b8] sm:$0xff] 0.0
      %227 = vst [vmem:[#allocation2 + $0x1c0] sm:$0xff] 0.0
      %228 = vst [vmem:[#allocation2 + $0x1c8] sm:$0xff] 0.0
      %229 = vst [vmem:[#allocation2 + $0x1d0] sm:$0xff] 0.0
      %230 = vst [vmem:[#allocation2 + $0x1d8] sm:$0x3] 0.0
      %231 = vst [vmem:[#allocation2 + $0x1e0] sm:$0xff] 0.0
      %232 = vst [vmem:[#allocation2 + $0x1e8] sm:$0xff] 0.0
      %233 = vst [vmem:[#allocation2 + $0x1f0] sm:$0xff] 0.0
      %234 = vst [vmem:[#allocation2 + $0x1f8] sm:$0xff] 0.0
      %235 = vst [vmem:[#allocation2 + $0x200] sm:$0x3] 0.0
      %236 = vst [vmem:[#allocation2 + $0x208] sm:$0xff] 0.0
      %237 = vst [vmem:[#allocation2 + $0x210] sm:$0xff] 0.0
      %238 = vst [vmem:[#allocation2 + $0x218] sm:$0xff] 0.0
      %239 = vst [vmem:[#allocation2 + $0x220] sm:$0xff] 0.0
      %240 = vst [vmem:[#allocation2 + $0x228] sm:$0x3] 0.0
      %241 = vst [vmem:[#allocation2 + $0x230] sm:$0xff] 0.0
      %242 = vst [vmem:[#allocation2 + $0x238] sm:$0xff] 0.0
      %243 = vst [vmem:[#allocation2 + $0x240] sm:$0xff] 0.0
      %244 = vst [vmem:[#allocation2 + $0x248] sm:$0xff] 0.0
      %245 = vst [vmem:[#allocation2 + $0x250] sm:$0x3] 0.0
      %246 = vst [vmem:[#allocation2 + $0x258] sm:$0xff] 0.0
      %247 = vst [vmem:[#allocation2 + $0x260] sm:$0xff] 0.0
      %248 = vst [vmem:[#allocation2 + $0x268] sm:$0xff] 0.0
      %249 = vst [vmem:[#allocation2 + $0x270] sm:$0xff] 0.0
      %250 = vst [vmem:[#allocation2 + $0x278] sm:$0x3] 0.0
      %251 = vst [vmem:[#allocation2 + $0x280] sm:$0xff] 0.0
      %252 = vst [vmem:[#allocation2 + $0x288] sm:$0xff] 0.0
      %253 = vst [vmem:[#allocation2 + $0x290] sm:$0xff] 0.0
      %254 = vst [vmem:[#allocation2 + $0x298] sm:$0xff] 0.0
      %255 = vst [vmem:[#allocation2 + $0x2a0] sm:$0x3] 0.0
      %256 = vst [vmem:[#allocation2 + $0x2a8] sm:$0xff] 0.0
      %257 = vst [vmem:[#allocation2 + $0x2b0] sm:$0xff] 0.0
      %258 = vst [vmem:[#allocation2 + $0x2b8] sm:$0xff] 0.0
      %259 = vst [vmem:[#allocation2 + $0x2c0] sm:$0xff] 0.0
      %260 = vst [vmem:[#allocation2 + $0x2c8] sm:$0x3] 0.0
      %261 = vst [vmem:[#allocation2 + $0x2d0] sm:$0xff] 0.0
      %262 = vst [vmem:[#allocation2 + $0x2d8] sm:$0xff] 0.0
      %263 = vst [vmem:[#allocation2 + $0x2e0] sm:$0xff] 0.0
      %264 = vst [vmem:[#allocation2 + $0x2e8] sm:$0xff] 0.0
      %265 = vst [vmem:[#allocation2 + $0x2f0] sm:$0x3] 0.0
      %266 = vst [vmem:[#allocation2 + $0x2f8] sm:$0xff] 0.0
      %267 = vst [vmem:[#allocation2 + $0x300] sm:$0xff] 0.0
      %268 = vst [vmem:[#allocation2 + $0x308] sm:$0xff] 0.0
      %269 = vst [vmem:[#allocation2 + $0x310] sm:$0xff] 0.0
      %270 = vst [vmem:[#allocation2 + $0x318] sm:$0x3] 0.0
      %271 = vst [vmem:[#allocation2 + $0x320] sm:$0xff] 0.0
      %272 = vst [vmem:[#allocation2 + $0x328] sm:$0xff] 0.0
      %273 = vst [vmem:[#allocation2 + $0x330] sm:$0xff] 0.0
      %274 = vst [vmem:[#allocation2 + $0x338] sm:$0xff] 0.0
      %275 = vst [vmem:[#allocation2 + $0x340] sm:$0x3] 0.0
      %276 = vst [vmem:[#allocation2 + $0x348] sm:$0xff] 0.0
      %277 = vst [vmem:[#allocation2 + $0x350] sm:$0xff] 0.0
      %278 = vst [vmem:[#allocation2 + $0x358] sm:$0xff] 0.0
      %279 = vst [vmem:[#allocation2 + $0x360] sm:$0xff] 0.0
      %280 = vst [vmem:[#allocation2 + $0x368] sm:$0x3] 0.0
      %281 = vst [vmem:[#allocation2 + $0x370] sm:$0xff] 0.0
      %282 = vst [vmem:[#allocation2 + $0x378] sm:$0xff] 0.0
      %283 = vst [vmem:[#allocation2 + $0x380] sm:$0xff] 0.0
      %284 = vst [vmem:[#allocation2 + $0x388] sm:$0xff] 0.0
      %285 = vst [vmem:[#allocation2 + $0x390] sm:$0x3] 0.0
      %286 = vst [vmem:[#allocation2 + $0x398] sm:$0xff] 0.0
      %287 = vst [vmem:[#allocation2 + $0x3a0] sm:$0xff] 0.0
      %288 = vst [vmem:[#allocation2 + $0x3a8] sm:$0xff] 0.0
      %289 = vst [vmem:[#allocation2 + $0x3b0] sm:$0xff] 0.0
      %290 = vst [vmem:[#allocation2 + $0x3b8] sm:$0x3] 0.0
      %291 = vst [vmem:[#allocation2 + $0x3c0] sm:$0xff] 0.0
      %292 = vst [vmem:[#allocation2 + $0x3c8] sm:$0xff] 0.0
      %293 = vst [vmem:[#allocation2 + $0x3d0] sm:$0xff] 0.0
      %294 = vst [vmem:[#allocation2 + $0x3d8] sm:$0xff] 0.0
      %295 = vst [vmem:[#allocation2 + $0x3e0] sm:$0x3] 0.0
      %296 = vst [vmem:[#allocation2 + $0x3e8] sm:$0xff] 0.0
      %297 = vst [vmem:[#allocation2 + $0x3f0] sm:$0xff] 0.0
      %298 = vst [vmem:[#allocation2 + $0x3f8] sm:$0xff] 0.0
      %299 = vst [vmem:[#allocation2 + $0x400] sm:$0xff] 0.0
      %300 = vst [vmem:[#allocation2 + $0x408] sm:$0x3] 0.0
      %301 = vst [vmem:[#allocation2 + $0x410] sm:$0xff] 0.0
      %302 = vst [vmem:[#allocation2 + $0x418] sm:$0xff] 0.0
      %303 = vst [vmem:[#allocation2 + $0x420] sm:$0xff] 0.0
      %304 = vst [vmem:[#allocation2 + $0x428] sm:$0xff] 0.0
      %305 = vst [vmem:[#allocation2 + $0x430] sm:$0x3] 0.0
      %306 = vst [vmem:[#allocation2 + $0x438] sm:$0xff] 0.0
      %307 = vst [vmem:[#allocation2 + $0x440] sm:$0xff] 0.0
      %308 = vst [vmem:[#allocation2 + $0x448] sm:$0xff] 0.0
      %309 = vst [vmem:[#allocation2 + $0x450] sm:$0xff] 0.0
      %310 = vst [vmem:[#allocation2 + $0x458] sm:$0x3] 0.0
      %311 = vst [vmem:[#allocation2 + $0x460] sm:$0xff] 0.0
      %312 = vst [vmem:[#allocation2 + $0x468] sm:$0xff] 0.0
      %313 = vst [vmem:[#allocation2 + $0x470] sm:$0xff] 0.0
      %314 = vst [vmem:[#allocation2 + $0x478] sm:$0xff] 0.0
      %315 = vst [vmem:[#allocation2 + $0x480] sm:$0x3] 0.0
      %316 = vst [vmem:[#allocation2 + $0x488] sm:$0xff] 0.0
      %317 = vst [vmem:[#allocation2 + $0x490] sm:$0xff] 0.0
      %318 = vst [vmem:[#allocation2 + $0x498] sm:$0xff] 0.0
      %319 = vst [vmem:[#allocation2 + $0x4a0] sm:$0xff] 0.0
      %320 = vst [vmem:[#allocation2 + $0x4a8] sm:$0x3] 0.0
      %321 = vst [vmem:[#allocation2 + $0x4b0] sm:$0xff] 0.0
      %322 = vst [vmem:[#allocation2 + $0x4b8] sm:$0xff] 0.0
      %323 = vst [vmem:[#allocation2 + $0x4c0] sm:$0xff] 0.0
      %324 = vst [vmem:[#allocation2 + $0x4c8] sm:$0xff] 0.0
      %325 = vst [vmem:[#allocation2 + $0x4d0] sm:$0x3] 0.0
      %326 = vst [vmem:[#allocation2 + $0x4d8] sm:$0xff] 0.0
      %327 = vst [vmem:[#allocation2 + $0x4e0] sm:$0xff] 0.0
      %328 = vst [vmem:[#allocation2 + $0x4e8] sm:$0xff] 0.0
      %329 = vst [vmem:[#allocation2 + $0x4f0] sm:$0xff] 0.0
      %330 = vst [vmem:[#allocation2 + $0x4f8] sm:$0x3] 0.0
      %331 = vst [vmem:[#allocation2 + $0x500] sm:$0xff] 0.0
      %332 = vst [vmem:[#allocation2 + $0x508] sm:$0xff] 0.0
      %333 = vst [vmem:[#allocation2 + $0x510] sm:$0xff] 0.0
      %334 = vst [vmem:[#allocation2 + $0x518] sm:$0xff] 0.0
      %335 = vst [vmem:[#allocation2 + $0x520] sm:$0x3] 0.0
      %336 = vst [vmem:[#allocation2 + $0x528] sm:$0xff] 0.0
      %337 = vst [vmem:[#allocation2 + $0x530] sm:$0xff] 0.0
      %338 = vst [vmem:[#allocation2 + $0x538] sm:$0xff] 0.0
      %339 = vst [vmem:[#allocation2 + $0x540] sm:$0xff] 0.0
      %340 = vst [vmem:[#allocation2 + $0x548] sm:$0x3] 0.0
      %v341 = vld [vmem:[%s165] sm:$0xf]
      %v342 = vld [vmem:[%s165 + $0x4] sm:$0xf]
      %v343 = vld [vmem:[%s165 + $0x8] sm:$0xf]
      %v344 = vld [vmem:[%s165 + $0xc] sm:$0xf]
      %v345 = vld [vmem:[%s165 + $0x10] sm:$0xf]
      %v346 = vld [vmem:[%s165 + $0x14] sm:$0xf]
      %v347 = vld [vmem:[%s165 + $0x18] sm:$0xf]
      %v348 = vld [vmem:[%s165 + $0x1c] sm:$0xf]
      %v349 = vld [vmem:[%s165 + $0x20] sm:$0xf]
      %v350 = vld [vmem:[%s165 + $0x24] sm:$0xf]
      %v351 = vld [vmem:[%s165 + $0x28] sm:$0xf]
      %v352 = vld [vmem:[%s165 + $0x2c] sm:$0xf]
      %v353 = vld [vmem:[%s165 + $0x30] sm:$0xf]
      %v354 = vld [vmem:[%s165 + $0x34] sm:$0xf]
      %v355 = vld [vmem:[%s165 + $0x38] sm:$0xf]
      %v356 = vld [vmem:[%s165 + $0x3c] sm:$0xf]
      %v357 = vld [vmem:[%s165 + $0x40] sm:$0xf]
      %v358 = vld [vmem:[%s165 + $0x44] sm:$0xf]
      %v359 = vld [vmem:[%s165 + $0x48] sm:$0xf]
      %v360 = vld [vmem:[%s165 + $0x4c] sm:$0xf]
      %v361 = vld [vmem:[%s165 + $0x50] sm:$0xf]
      %v362 = vld [vmem:[%s165 + $0x54] sm:$0xf]
      %v363 = vld [vmem:[%s165 + $0x58] sm:$0xf]
      %v364 = vld [vmem:[%s165 + $0x5c] sm:$0xf]
      %v365 = vld [vmem:[%s165 + $0x60] sm:$0xf]
      %v366 = vld [vmem:[%s165 + $0x64] sm:$0xf]
      %v367 = vld [vmem:[%s165 + $0x68] sm:$0xf]
      %v368 = vld [vmem:[%s165 + $0x6c] sm:$0xf]
      %v369 = vld [vmem:[%s165 + $0x70] sm:$0xf]
      %v370 = vld [vmem:[%s165 + $0x74] sm:$0xf]
      %v371 = vld [vmem:[%s165 + $0x78] sm:$0xf]
      %v372 = vld [vmem:[%s165 + $0x7c] sm:$0xf]
      %v373 = vunpack.c.l.bf16 %v341
      %v374 = vunpack.c.l.bf16 %v342
      %v375 = vunpack.c.l.bf16 %v343
      %v376 = vunpack.c.l.bf16 %v344
      %v377 = vunpack.c.l.bf16 %v345
      %v378 = vunpack.c.l.bf16 %v346
      %v379 = vunpack.c.l.bf16 %v347
      %v380 = vunpack.c.l.bf16 %v348
      %v381 = vunpack.c.l.bf16 %v349
      %v382 = vunpack.c.l.bf16 %v350
      %v383 = vunpack.c.l.bf16 %v351
      %v384 = vunpack.c.l.bf16 %v352
      %v385 = vunpack.c.l.bf16 %v353
      %v386 = vunpack.c.l.bf16 %v354
      %v387 = vunpack.c.l.bf16 %v355
      %v388 = vunpack.c.l.bf16 %v356
      %v389 = vunpack.c.l.bf16 %v357
      %v390 = vunpack.c.l.bf16 %v358
      %v391 = vunpack.c.l.bf16 %v359
      %v392 = vunpack.c.l.bf16 %v360
      %v393 = vunpack.c.l.bf16 %v361
      %v394 = vunpack.c.l.bf16 %v362
      %v395 = vunpack.c.l.bf16 %v363
      %v396 = vunpack.c.l.bf16 %v364
      %v397 = vunpack.c.l.bf16 %v365
      %v398 = vunpack.c.l.bf16 %v366
      %v399 = vunpack.c.l.bf16 %v367
      %v400 = vunpack.c.l.bf16 %v368
      %v401 = vunpack.c.l.bf16 %v369
      %v402 = vunpack.c.l.bf16 %v370
      %v403 = vunpack.c.l.bf16 %v371
      %v404 = vunpack.c.l.bf16 %v372
      %v405 = vld [vmem:[%s1] sm:$0x1]
      %v407 = vlaneseq
      %v408 = vshrl.u32 %v407, 7
      %v409 = vsub.s32 0, %v408
      %v410 = vrot.slane %v405, %v409
      %v412 = vmul.f32 %v373, %v410
      %v413 = vmul.f32 %v374, %v410
      %v414 = vmul.f32 %v375, %v410
      %v415 = vmul.f32 %v376, %v410
      %v416 = vmul.f32 %v377, %v410
      %v417 = vmul.f32 %v378, %v410
      %v418 = vmul.f32 %v379, %v410
      %v419 = vmul.f32 %v380, %v410
      %v420 = vmul.f32 %v381, %v410
      %v421 = vmul.f32 %v382, %v410
      %v422 = vmul.f32 %v383, %v410
      %v423 = vmul.f32 %v384, %v410
      %v424 = vmul.f32 %v385, %v410
      %v425 = vmul.f32 %v386, %v410
      %v426 = vmul.f32 %v387, %v410
      %v427 = vmul.f32 %v388, %v410
      %v428 = vmul.f32 %v389, %v410
      %v429 = vmul.f32 %v390, %v410
      %v430 = vmul.f32 %v391, %v410
      %v431 = vmul.f32 %v392, %v410
      %v432 = vmul.f32 %v393, %v410
      %v433 = vmul.f32 %v394, %v410
      %v434 = vmul.f32 %v395, %v410
      %v435 = vmul.f32 %v396, %v410
      %v436 = vmul.f32 %v397, %v410
      %v437 = vmul.f32 %v398, %v410
      %v438 = vmul.f32 %v399, %v410
      %v439 = vmul.f32 %v400, %v410
      %v440 = vmul.f32 %v401, %v410
      %v441 = vmul.f32 %v402, %v410
      %v442 = vmul.f32 %v403, %v410
      %v443 = vmul.f32 %v404, %v410
      %v444 = vld [vmem:[%s2] sm:$0x1]
      %v446 = vlaneseq
      %v447 = vshrl.u32 %v446, 7
      %v448 = vsub.s32 0, %v447
      %v449 = vrot.slane %v444, %v448
      %v451 = vadd.f32 %v412, %v449
      %v452 = vadd.f32 %v413, %v449
      %v453 = vadd.f32 %v414, %v449
      %v454 = vadd.f32 %v415, %v449
      %v455 = vadd.f32 %v416, %v449
      %v456 = vadd.f32 %v417, %v449
      %v457 = vadd.f32 %v418, %v449
      %v458 = vadd.f32 %v419, %v449
      %v459 = vadd.f32 %v420, %v449
      %v460 = vadd.f32 %v421, %v449
      %v461 = vadd.f32 %v422, %v449
      %v462 = vadd.f32 %v423, %v449
      %v463 = vadd.f32 %v424, %v449
      %v464 = vadd.f32 %v425, %v449
      %v465 = vadd.f32 %v426, %v449
      %v466 = vadd.f32 %v427, %v449
      %v467 = vadd.f32 %v428, %v449
      %v468 = vadd.f32 %v429, %v449
      %v469 = vadd.f32 %v430, %v449
      %v470 = vadd.f32 %v431, %v449
      %v471 = vadd.f32 %v432, %v449
      %v472 = vadd.f32 %v433, %v449
      %v473 = vadd.f32 %v434, %v449
      %v474 = vadd.f32 %v435, %v449
      %v475 = vadd.f32 %v436, %v449
      %v476 = vadd.f32 %v437, %v449
      %v477 = vadd.f32 %v438, %v449
      %v478 = vadd.f32 %v439, %v449
      %v479 = vadd.f32 %v440, %v449
      %v480 = vadd.f32 %v441, %v449
      %v481 = vadd.f32 %v442, %v449
      %v482 = vadd.f32 %v443, %v449
      %v483 = vmax.f32 %v451, 0.0
      %v484 = vmax.f32 %v452, 0.0
      %v485 = vmax.f32 %v453, 0.0
      %v486 = vmax.f32 %v454, 0.0
      %v487 = vmax.f32 %v455, 0.0
      %v488 = vmax.f32 %v456, 0.0
      %v489 = vmax.f32 %v457, 0.0
      %v490 = vmax.f32 %v458, 0.0
      %v491 = vmax.f32 %v459, 0.0
      %v492 = vmax.f32 %v460, 0.0
      %v493 = vmax.f32 %v461, 0.0
      %v494 = vmax.f32 %v462, 0.0
      %v495 = vmax.f32 %v463, 0.0
      %v496 = vmax.f32 %v464, 0.0
      %v497 = vmax.f32 %v465, 0.0
      %v498 = vmax.f32 %v466, 0.0
      %v499 = vmax.f32 %v467, 0.0
      %v500 = vmax.f32 %v468, 0.0
      %v501 = vmax.f32 %v469, 0.0
      %v502 = vmax.f32 %v470, 0.0
      %v503 = vmax.f32 %v471, 0.0
      %v504 = vmax.f32 %v472, 0.0
      %v505 = vmax.f32 %v473, 0.0
      %v506 = vmax.f32 %v474, 0.0
      %v507 = vmax.f32 %v475, 0.0
      %v508 = vmax.f32 %v476, 0.0
      %v509 = vmax.f32 %v477, 0.0
      %v510 = vmax.f32 %v478, 0.0
      %v511 = vmax.f32 %v479, 0.0
      %v512 = vmax.f32 %v480, 0.0
      %v513 = vmax.f32 %v481, 0.0
      %v514 = vmax.f32 %v482, 0.0
      %515 = vst [vmem:[#allocation2] sm:$0xff] %v483
      %516 = vst [vmem:[#allocation2 + $0x8] sm:$0xff] %v484
      %517 = vst [vmem:[#allocation2 + $0x10] sm:$0xff] %v485
      %518 = vst [vmem:[#allocation2 + $0x18] sm:$0xff] %v486
      %519 = vst [vmem:[#allocation2 + $0x28] sm:$0xff] %v487
      %520 = vst [vmem:[#allocation2 + $0x30] sm:$0xff] %v488
      %521 = vst [vmem:[#allocation2 + $0x38] sm:$0xff] %v489
      %522 = vst [vmem:[#allocation2 + $0x40] sm:$0xff] %v490
      %523 = vst [vmem:[#allocation2 + $0x50] sm:$0xff] %v491
      %524 = vst [vmem:[#allocation2 + $0x58] sm:$0xff] %v492
      %525 = vst [vmem:[#allocation2 + $0x60] sm:$0xff] %v493
      %526 = vst [vmem:[#allocation2 + $0x68] sm:$0xff] %v494
      %527 = vst [vmem:[#allocation2 + $0x78] sm:$0xff] %v495
      %528 = vst [vmem:[#allocation2 + $0x80] sm:$0xff] %v496
      %529 = vst [vmem:[#allocation2 + $0x88] sm:$0xff] %v497
      %530 = vst [vmem:[#allocation2 + $0x90] sm:$0xff] %v498
      %531 = vst [vmem:[#allocation2 + $0xa0] sm:$0xff] %v499
      %532 = vst [vmem:[#allocation2 + $0xa8] sm:$0xff] %v500
      %533 = vst [vmem:[#allocation2 + $0xb0] sm:$0xff] %v501
      %534 = vst [vmem:[#allocation2 + $0xb8] sm:$0xff] %v502
      %535 = vst [vmem:[#allocation2 + $0xc8] sm:$0xff] %v503
      %536 = vst [vmem:[#allocation2 + $0xd0] sm:$0xff] %v504
      %537 = vst [vmem:[#allocation2 + $0xd8] sm:$0xff] %v505
      %538 = vst [vmem:[#allocation2 + $0xe0] sm:$0xff] %v506
      %539 = vst [vmem:[#allocation2 + $0xf0] sm:$0xff] %v507
      %540 = vst [vmem:[#allocation2 + $0xf8] sm:$0xff] %v508
      %541 = vst [vmem:[#allocation2 + $0x100] sm:$0xff] %v509
      %542 = vst [vmem:[#allocation2 + $0x108] sm:$0xff] %v510
      %543 = vst [vmem:[#allocation2 + $0x118] sm:$0xff] %v511
      %544 = vst [vmem:[#allocation2 + $0x120] sm:$0xff] %v512
      %545 = vst [vmem:[#allocation2 + $0x128] sm:$0xff] %v513
      %546 = vst [vmem:[#allocation2 + $0x130] sm:$0xff] %v514
      %s547 = scalar_lea.vmem %s165, 128
      %v548 = vld [vmem:[%s547] sm:$0xf]
      %v549 = vld [vmem:[%s547 + $0x4] sm:$0xf]
      %v550 = vld [vmem:[%s547 + $0x8] sm:$0xf]
      %v551 = vld [vmem:[%s547 + $0xc] sm:$0xf]
      %v552 = vld [vmem:[%s547 + $0x10] sm:$0xf]
      %v553 = vld [vmem:[%s547 + $0x14] sm:$0xf]
      %v554 = vld [vmem:[%s547 + $0x18] sm:$0xf]
      %v555 = vld [vmem:[%s547 + $0x1c] sm:$0xf]
      %v556 = vld [vmem:[%s547 + $0x20] sm:$0xf]
      %v557 = vld [vmem:[%s547 + $0x24] sm:$0xf]
      %v558 = vld [vmem:[%s547 + $0x28] sm:$0xf]
      %v559 = vld [vmem:[%s547 + $0x2c] sm:$0xf]
      %v560 = vld [vmem:[%s547 + $0x30] sm:$0xf]
      %v561 = vld [vmem:[%s547 + $0x34] sm:$0xf]
      %v562 = vld [vmem:[%s547 + $0x38] sm:$0xf]
      %v563 = vld [vmem:[%s547 + $0x3c] sm:$0xf]
      %v564 = vld [vmem:[%s547 + $0x40] sm:$0xf]
      %v565 = vld [vmem:[%s547 + $0x44] sm:$0xf]
      %v566 = vld [vmem:[%s547 + $0x48] sm:$0xf]
      %v567 = vld [vmem:[%s547 + $0x4c] sm:$0xf]
      %v568 = vld [vmem:[%s547 + $0x50] sm:$0xf]
      %v569 = vld [vmem:[%s547 + $0x54] sm:$0xf]
      %v570 = vld [vmem:[%s547 + $0x58] sm:$0xf]
      %v571 = vld [vmem:[%s547 + $0x5c] sm:$0xf]
      %v572 = vld [vmem:[%s547 + $0x60] sm:$0xf]
      %v573 = vld [vmem:[%s547 + $0x64] sm:$0xf]
      %v574 = vld [vmem:[%s547 + $0x68] sm:$0xf]
      %v575 = vld [vmem:[%s547 + $0x6c] sm:$0xf]
      %v576 = vld [vmem:[%s547 + $0x70] sm:$0xf]
      %v577 = vld [vmem:[%s547 + $0x74] sm:$0xf]
      %v578 = vld [vmem:[%s547 + $0x78] sm:$0xf]
      %v579 = vld [vmem:[%s547 + $0x7c] sm:$0xf]
      %v580 = vunpack.c.l.bf16 %v548
      %v581 = vunpack.c.l.bf16 %v549
      %v582 = vunpack.c.l.bf16 %v550
      %v583 = vunpack.c.l.bf16 %v551
      %v584 = vunpack.c.l.bf16 %v552
      %v585 = vunpack.c.l.bf16 %v553
      %v586 = vunpack.c.l.bf16 %v554
      %v587 = vunpack.c.l.bf16 %v555
      %v588 = vunpack.c.l.bf16 %v556
      %v589 = vunpack.c.l.bf16 %v557
      %v590 = vunpack.c.l.bf16 %v558
      %v591 = vunpack.c.l.bf16 %v559
      %v592 = vunpack.c.l.bf16 %v560
      %v593 = vunpack.c.l.bf16 %v561
      %v594 = vunpack.c.l.bf16 %v562
      %v595 = vunpack.c.l.bf16 %v563
      %v596 = vunpack.c.l.bf16 %v564
      %v597 = vunpack.c.l.bf16 %v565
      %v598 = vunpack.c.l.bf16 %v566
      %v599 = vunpack.c.l.bf16 %v567
      %v600 = vunpack.c.l.bf16 %v568
      %v601 = vunpack.c.l.bf16 %v569
      %v602 = vunpack.c.l.bf16 %v570
      %v603 = vunpack.c.l.bf16 %v571
      %v604 = vunpack.c.l.bf16 %v572
      %v605 = vunpack.c.l.bf16 %v573
      %v606 = vunpack.c.l.bf16 %v574
      %v607 = vunpack.c.l.bf16 %v575
      %v608 = vunpack.c.l.bf16 %v576
      %v609 = vunpack.c.l.bf16 %v577
      %v610 = vunpack.c.l.bf16 %v578
      %v611 = vunpack.c.l.bf16 %v579
      %v612 = vld [vmem:[%s1] sm:$0x1]
      %v614 = vlaneseq
      %v615 = vshrl.u32 %v614, 7
      %v616 = vsub.s32 0, %v615
      %v617 = vrot.slane %v612, %v616
      %v619 = vmul.f32 %v580, %v617
      %v620 = vmul.f32 %v581, %v617
      %v621 = vmul.f32 %v582, %v617
      %v622 = vmul.f32 %v583, %v617
      %v623 = vmul.f32 %v584, %v617
      %v624 = vmul.f32 %v585, %v617
      %v625 = vmul.f32 %v586, %v617
      %v626 = vmul.f32 %v587, %v617
      %v627 = vmul.f32 %v588, %v617
      %v628 = vmul.f32 %v589, %v617
      %v629 = vmul.f32 %v590, %v617
      %v630 = vmul.f32 %v591, %v617
      %v631 = vmul.f32 %v592, %v617
      %v632 = vmul.f32 %v593, %v617
      %v633 = vmul.f32 %v594, %v617
      %v634 = vmul.f32 %v595, %v617
      %v635 = vmul.f32 %v596, %v617
      %v636 = vmul.f32 %v597, %v617
      %v637 = vmul.f32 %v598, %v617
      %v638 = vmul.f32 %v599, %v617
      %v639 = vmul.f32 %v600, %v617
      %v640 = vmul.f32 %v601, %v617
      %v641 = vmul.f32 %v602, %v617
      %v642 = vmul.f32 %v603, %v617
      %v643 = vmul.f32 %v604, %v617
      %v644 = vmul.f32 %v605, %v617
      %v645 = vmul.f32 %v606, %v617
      %v646 = vmul.f32 %v607, %v617
      %v647 = vmul.f32 %v608, %v617
      %v648 = vmul.f32 %v609, %v617
      %v649 = vmul.f32 %v610, %v617
      %v650 = vmul.f32 %v611, %v617
      %v651 = vld [vmem:[%s2] sm:$0x1]
      %v653 = vlaneseq
      %v654 = vshrl.u32 %v653, 7
      %v655 = vsub.s32 0, %v654
      %v656 = vrot.slane %v651, %v655
      %v658 = vadd.f32 %v619, %v656
      %v659 = vadd.f32 %v620, %v656
      %v660 = vadd.f32 %v621, %v656
      %v661 = vadd.f32 %v622, %v656
      %v662 = vadd.f32 %v623, %v656
      %v663 = vadd.f32 %v624, %v656
      %v664 = vadd.f32 %v625, %v656
      %v665 = vadd.f32 %v626, %v656
      %v666 = vadd.f32 %v627, %v656
      %v667 = vadd.f32 %v628, %v656
      %v668 = vadd.f32 %v629, %v656
      %v669 = vadd.f32 %v630, %v656
      %v670 = vadd.f32 %v631, %v656
      %v671 = vadd.f32 %v632, %v656
      %v672 = vadd.f32 %v633, %v656
      %v673 = vadd.f32 %v634, %v656
      %v674 = vadd.f32 %v635, %v656
      %v675 = vadd.f32 %v636, %v656
      %v676 = vadd.f32 %v637, %v656
      %v677 = vadd.f32 %v638, %v656
      %v678 = vadd.f32 %v639, %v656
      %v679 = vadd.f32 %v640, %v656
      %v680 = vadd.f32 %v641, %v656
      %v681 = vadd.f32 %v642, %v656
      %v682 = vadd.f32 %v643, %v656
      %v683 = vadd.f32 %v644, %v656
      %v684 = vadd.f32 %v645, %v656
      %v685 = vadd.f32 %v646, %v656
      %v686 = vadd.f32 %v647, %v656
      %v687 = vadd.f32 %v648, %v656
      %v688 = vadd.f32 %v649, %v656
      %v689 = vadd.f32 %v650, %v656
      %v690 = vmax.f32 %v658, 0.0
      %v691 = vmax.f32 %v659, 0.0
      %v692 = vmax.f32 %v660, 0.0
      %v693 = vmax.f32 %v661, 0.0
      %v694 = vmax.f32 %v662, 0.0
      %v695 = vmax.f32 %v663, 0.0
      %v696 = vmax.f32 %v664, 0.0
      %v697 = vmax.f32 %v665, 0.0
      %v698 = vmax.f32 %v666, 0.0
      %v699 = vmax.f32 %v667, 0.0
      %v700 = vmax.f32 %v668, 0.0
      %v701 = vmax.f32 %v669, 0.0
      %v702 = vmax.f32 %v670, 0.0
      %v703 = vmax.f32 %v671, 0.0
      %v704 = vmax.f32 %v672, 0.0
      %v705 = vmax.f32 %v673, 0.0
      %v706 = vmax.f32 %v674, 0.0
      %v707 = vmax.f32 %v675, 0.0
      %v708 = vmax.f32 %v676, 0.0
      %v709 = vmax.f32 %v677, 0.0
      %v710 = vmax.f32 %v678, 0.0
      %v711 = vmax.f32 %v679, 0.0
      %v712 = vmax.f32 %v680, 0.0
      %v713 = vmax.f32 %v681, 0.0
      %v714 = vmax.f32 %v682, 0.0
      %v715 = vmax.f32 %v683, 0.0
      %v716 = vmax.f32 %v684, 0.0
      %v717 = vmax.f32 %v685, 0.0
      %v718 = vmax.f32 %v686, 0.0
      %v719 = vmax.f32 %v687, 0.0
      %v720 = vmax.f32 %v688, 0.0
      %v721 = vmax.f32 %v689, 0.0
      %s722 = scalar_lea.vmem [#allocation2], 320
      %723 = vst [vmem:[%s722] sm:$0xff] %v690
      %724 = vst [vmem:[%s722 + $0x8] sm:$0xff] %v691
      %725 = vst [vmem:[%s722 + $0x10] sm:$0xff] %v692
      %726 = vst [vmem:[%s722 + $0x18] sm:$0xff] %v693
      %727 = vst [vmem:[%s722 + $0x28] sm:$0xff] %v694
      %728 = vst [vmem:[%s722 + $0x30] sm:$0xff] %v695
      %729 = vst [vmem:[%s722 + $0x38] sm:$0xff] %v696
      %730 = vst [vmem:[%s722 + $0x40] sm:$0xff] %v697
      %731 = vst [vmem:[%s722 + $0x50] sm:$0xff] %v698
      %732 = vst [vmem:[%s722 + $0x58] sm:$0xff] %v699
      %733 = vst [vmem:[%s722 + $0x60] sm:$0xff] %v700
      %734 = vst [vmem:[%s722 + $0x68] sm:$0xff] %v701
      %735 = vst [vmem:[%s722 + $0x78] sm:$0xff] %v702
      %736 = vst [vmem:[%s722 + $0x80] sm:$0xff] %v703
      %737 = vst [vmem:[%s722 + $0x88] sm:$0xff] %v704
      %738 = vst [vmem:[%s722 + $0x90] sm:$0xff] %v705
      %739 = vst [vmem:[%s722 + $0xa0] sm:$0xff] %v706
      %740 = vst [vmem:[%s722 + $0xa8] sm:$0xff] %v707
      %741 = vst [vmem:[%s722 + $0xb0] sm:$0xff] %v708
      %742 = vst [vmem:[%s722 + $0xb8] sm:$0xff] %v709
      %743 = vst [vmem:[%s722 + $0xc8] sm:$0xff] %v710
      %744 = vst [vmem:[%s722 + $0xd0] sm:$0xff] %v711
      %745 = vst [vmem:[%s722 + $0xd8] sm:$0xff] %v712
      %746 = vst [vmem:[%s722 + $0xe0] sm:$0xff] %v713
      %747 = vst [vmem:[%s722 + $0xf0] sm:$0xff] %v714
      %748 = vst [vmem:[%s722 + $0xf8] sm:$0xff] %v715
      %749 = vst [vmem:[%s722 + $0x100] sm:$0xff] %v716
      %750 = vst [vmem:[%s722 + $0x108] sm:$0xff] %v717
      %751 = vst [vmem:[%s722 + $0x118] sm:$0xff] %v718
      %752 = vst [vmem:[%s722 + $0x120] sm:$0xff] %v719
      %753 = vst [vmem:[%s722 + $0x128] sm:$0xff] %v720
      %754 = vst [vmem:[%s722 + $0x130] sm:$0xff] %v721
      %s755 = scalar_lea.vmem %s165, 256
      %v756 = vld [vmem:[%s755] sm:$0xf]
      %v757 = vld [vmem:[%s755 + $0x4] sm:$0xf]
      %v758 = vld [vmem:[%s755 + $0x8] sm:$0xf]
      %v759 = vld [vmem:[%s755 + $0xc] sm:$0xf]
      %v760 = vld [vmem:[%s755 + $0x10] sm:$0xf]
      %v761 = vld [vmem:[%s755 + $0x14] sm:$0xf]
      %v762 = vld [vmem:[%s755 + $0x18] sm:$0xf]
      %v763 = vld [vmem:[%s755 + $0x1c] sm:$0xf]
      %v764 = vld [vmem:[%s755 + $0x20] sm:$0xf]
      %v765 = vld [vmem:[%s755 + $0x24] sm:$0xf]
      %v766 = vld [vmem:[%s755 + $0x28] sm:$0xf]
      %v767 = vld [vmem:[%s755 + $0x2c] sm:$0xf]
      %v768 = vld [vmem:[%s755 + $0x30] sm:$0xf]
      %v769 = vld [vmem:[%s755 + $0x34] sm:$0xf]
      %v770 = vld [vmem:[%s755 + $0x38] sm:$0xf]
      %v771 = vld [vmem:[%s755 + $0x3c] sm:$0xf]
      %v772 = vld [vmem:[%s755 + $0x40] sm:$0xf]
      %v773 = vld [vmem:[%s755 + $0x44] sm:$0xf]
      %v774 = vld [vmem:[%s755 + $0x48] sm:$0xf]
      %v775 = vld [vmem:[%s755 + $0x4c] sm:$0xf]
      %v776 = vld [vmem:[%s755 + $0x50] sm:$0xf]
      %v777 = vld [vmem:[%s755 + $0x54] sm:$0xf]
      %v778 = vld [vmem:[%s755 + $0x58] sm:$0xf]
      %v779 = vld [vmem:[%s755 + $0x5c] sm:$0xf]
      %v780 = vld [vmem:[%s755 + $0x60] sm:$0xf]
      %v781 = vld [vmem:[%s755 + $0x64] sm:$0xf]
      %v782 = vld [vmem:[%s755 + $0x68] sm:$0xf]
      %v783 = vld [vmem:[%s755 + $0x6c] sm:$0xf]
      %v784 = vld [vmem:[%s755 + $0x70] sm:$0xf]
      %v785 = vld [vmem:[%s755 + $0x74] sm:$0xf]
      %v786 = vld [vmem:[%s755 + $0x78] sm:$0xf]
      %v787 = vld [vmem:[%s755 + $0x7c] sm:$0xf]
      %v788 = vunpack.c.l.bf16 %v756
      %v789 = vunpack.c.l.bf16 %v757
      %v790 = vunpack.c.l.bf16 %v758
      %v791 = vunpack.c.l.bf16 %v759
      %v792 = vunpack.c.l.bf16 %v760
      %v793 = vunpack.c.l.bf16 %v761
      %v794 = vunpack.c.l.bf16 %v762
      %v795 = vunpack.c.l.bf16 %v763
      %v796 = vunpack.c.l.bf16 %v764
      %v797 = vunpack.c.l.bf16 %v765
      %v798 = vunpack.c.l.bf16 %v766
      %v799 = vunpack.c.l.bf16 %v767
      %v800 = vunpack.c.l.bf16 %v768
      %v801 = vunpack.c.l.bf16 %v769
      %v802 = vunpack.c.l.bf16 %v770
      %v803 = vunpack.c.l.bf16 %v771
      %v804 = vunpack.c.l.bf16 %v772
      %v805 = vunpack.c.l.bf16 %v773
      %v806 = vunpack.c.l.bf16 %v774
      %v807 = vunpack.c.l.bf16 %v775
      %v808 = vunpack.c.l.bf16 %v776
      %v809 = vunpack.c.l.bf16 %v777
      %v810 = vunpack.c.l.bf16 %v778
      %v811 = vunpack.c.l.bf16 %v779
      %v812 = vunpack.c.l.bf16 %v780
      %v813 = vunpack.c.l.bf16 %v781
      %v814 = vunpack.c.l.bf16 %v782
      %v815 = vunpack.c.l.bf16 %v783
      %v816 = vunpack.c.l.bf16 %v784
      %v817 = vunpack.c.l.bf16 %v785
      %v818 = vunpack.c.l.bf16 %v786
      %v819 = vunpack.c.l.bf16 %v787
      %v820 = vld [vmem:[%s1] sm:$0x1]
      %v822 = vlaneseq
      %v823 = vshrl.u32 %v822, 7
      %v824 = vsub.s32 0, %v823
      %v825 = vrot.slane %v820, %v824
      %v827 = vmul.f32 %v788, %v825
      %v828 = vmul.f32 %v789, %v825
      %v829 = vmul.f32 %v790, %v825
      %v830 = vmul.f32 %v791, %v825
      %v831 = vmul.f32 %v792, %v825
      %v832 = vmul.f32 %v793, %v825
      %v833 = vmul.f32 %v794, %v825
      %v834 = vmul.f32 %v795, %v825
      %v835 = vmul.f32 %v796, %v825
      %v836 = vmul.f32 %v797, %v825
      %v837 = vmul.f32 %v798, %v825
      %v838 = vmul.f32 %v799, %v825
      %v839 = vmul.f32 %v800, %v825
      %v840 = vmul.f32 %v801, %v825
      %v841 = vmul.f32 %v802, %v825
      %v842 = vmul.f32 %v803, %v825
      %v843 = vmul.f32 %v804, %v825
      %v844 = vmul.f32 %v805, %v825
      %v845 = vmul.f32 %v806, %v825
      %v846 = vmul.f32 %v807, %v825
      %v847 = vmul.f32 %v808, %v825
      %v848 = vmul.f32 %v809, %v825
      %v849 = vmul.f32 %v810, %v825
      %v850 = vmul.f32 %v811, %v825
      %v851 = vmul.f32 %v812, %v825
      %v852 = vmul.f32 %v813, %v825
      %v853 = vmul.f32 %v814, %v825
      %v854 = vmul.f32 %v815, %v825
      %v855 = vmul.f32 %v816, %v825
      %v856 = vmul.f32 %v817, %v825
      %v857 = vmul.f32 %v818, %v825
      %v858 = vmul.f32 %v819, %v825
      %v859 = vld [vmem:[%s2] sm:$0x1]
      %v861 = vlaneseq
      %v862 = vshrl.u32 %v861, 7
      %v863 = vsub.s32 0, %v862
      %v864 = vrot.slane %v859, %v863
      %v866 = vadd.f32 %v827, %v864
      %v867 = vadd.f32 %v828, %v864
      %v868 = vadd.f32 %v829, %v864
      %v869 = vadd.f32 %v830, %v864
      %v870 = vadd.f32 %v831, %v864
      %v871 = vadd.f32 %v832, %v864
      %v872 = vadd.f32 %v833, %v864
      %v873 = vadd.f32 %v834, %v864
      %v874 = vadd.f32 %v835, %v864
      %v875 = vadd.f32 %v836, %v864
      %v876 = vadd.f32 %v837, %v864
      %v877 = vadd.f32 %v838, %v864
      %v878 = vadd.f32 %v839, %v864
      %v879 = vadd.f32 %v840, %v864
      %v880 = vadd.f32 %v841, %v864
      %v881 = vadd.f32 %v842, %v864
      %v882 = vadd.f32 %v843, %v864
      %v883 = vadd.f32 %v844, %v864
      %v884 = vadd.f32 %v845, %v864
      %v885 = vadd.f32 %v846, %v864
      %v886 = vadd.f32 %v847, %v864
      %v887 = vadd.f32 %v848, %v864
      %v888 = vadd.f32 %v849, %v864
      %v889 = vadd.f32 %v850, %v864
      %v890 = vadd.f32 %v851, %v864
      %v891 = vadd.f32 %v852, %v864
      %v892 = vadd.f32 %v853, %v864
      %v893 = vadd.f32 %v854, %v864
      %v894 = vadd.f32 %v855, %v864
      %v895 = vadd.f32 %v856, %v864
      %v896 = vadd.f32 %v857, %v864
      %v897 = vadd.f32 %v858, %v864
      %v898 = vmax.f32 %v866, 0.0
      %v899 = vmax.f32 %v867, 0.0
      %v900 = vmax.f32 %v868, 0.0
      %v901 = vmax.f32 %v869, 0.0
      %v902 = vmax.f32 %v870, 0.0
      %v903 = vmax.f32 %v871, 0.0
      %v904 = vmax.f32 %v872, 0.0
      %v905 = vmax.f32 %v873, 0.0
      %v906 = vmax.f32 %v874, 0.0
      %v907 = vmax.f32 %v875, 0.0
      %v908 = vmax.f32 %v876, 0.0
      %v909 = vmax.f32 %v877, 0.0
      %v910 = vmax.f32 %v878, 0.0
      %v911 = vmax.f32 %v879, 0.0
      %v912 = vmax.f32 %v880, 0.0
      %v913 = vmax.f32 %v881, 0.0
      %v914 = vmax.f32 %v882, 0.0
      %v915 = vmax.f32 %v883, 0.0
      %v916 = vmax.f32 %v884, 0.0
      %v917 = vmax.f32 %v885, 0.0
      %v918 = vmax.f32 %v886, 0.0
      %v919 = vmax.f32 %v887, 0.0
      %v920 = vmax.f32 %v888, 0.0
      %v921 = vmax.f32 %v889, 0.0
      %v922 = vmax.f32 %v890, 0.0
      %v923 = vmax.f32 %v891, 0.0
      %v924 = vmax.f32 %v892, 0.0
      %v925 = vmax.f32 %v893, 0.0
      %v926 = vmax.f32 %v894, 0.0
      %v927 = vmax.f32 %v895, 0.0
      %v928 = vmax.f32 %v896, 0.0
      %v929 = vmax.f32 %v897, 0.0
      %s930 = scalar_lea.vmem [#allocation2], 640
      %931 = vst [vmem:[%s930] sm:$0xff] %v898
      %932 = vst [vmem:[%s930 + $0x8] sm:$0xff] %v899
      %933 = vst [vmem:[%s930 + $0x10] sm:$0xff] %v900
      %934 = vst [vmem:[%s930 + $0x18] sm:$0xff] %v901
      %935 = vst [vmem:[%s930 + $0x28] sm:$0xff] %v902
      %936 = vst [vmem:[%s930 + $0x30] sm:$0xff] %v903
      %937 = vst [vmem:[%s930 + $0x38] sm:$0xff] %v904
      %938 = vst [vmem:[%s930 + $0x40] sm:$0xff] %v905
      %939 = vst [vmem:[%s930 + $0x50] sm:$0xff] %v906
      %940 = vst [vmem:[%s930 + $0x58] sm:$0xff] %v907
      %941 = vst [vmem:[%s930 + $0x60] sm:$0xff] %v908
      %942 = vst [vmem:[%s930 + $0x68] sm:$0xff] %v909
      %943 = vst [vmem:[%s930 + $0x78] sm:$0xff] %v910
      %944 = vst [vmem:[%s930 + $0x80] sm:$0xff] %v911
      %945 = vst [vmem:[%s930 + $0x88] sm:$0xff] %v912
      %946 = vst [vmem:[%s930 + $0x90] sm:$0xff] %v913
      %947 = vst [vmem:[%s930 + $0xa0] sm:$0xff] %v914
      %948 = vst [vmem:[%s930 + $0xa8] sm:$0xff] %v915
      %949 = vst [vmem:[%s930 + $0xb0] sm:$0xff] %v916
      %950 = vst [vmem:[%s930 + $0xb8] sm:$0xff] %v917
      %951 = vst [vmem:[%s930 + $0xc8] sm:$0xff] %v918
      %952 = vst [vmem:[%s930 + $0xd0] sm:$0xff] %v919
      %953 = vst [vmem:[%s930 + $0xd8] sm:$0xff] %v920
      %954 = vst [vmem:[%s930 + $0xe0] sm:$0xff] %v921
      %955 = vst [vmem:[%s930 + $0xf0] sm:$0xff] %v922
      %956 = vst [vmem:[%s930 + $0xf8] sm:$0xff] %v923
      %957 = vst [vmem:[%s930 + $0x100] sm:$0xff] %v924
      %958 = vst [vmem:[%s930 + $0x108] sm:$0xff] %v925
      %959 = vst [vmem:[%s930 + $0x118] sm:$0xff] %v926
      %960 = vst [vmem:[%s930 + $0x120] sm:$0xff] %v927
      %961 = vst [vmem:[%s930 + $0x128] sm:$0xff] %v928
      %962 = vst [vmem:[%s930 + $0x130] sm:$0xff] %v929
      %s963 = scalar_lea.vmem %s165, 384
      %v964 = vld [vmem:[%s963] sm:$0xf]
      %v965 = vld [vmem:[%s963 + $0x4] sm:$0xf]
      %v966 = vld [vmem:[%s963 + $0x8] sm:$0xf]
      %v967 = vld [vmem:[%s963 + $0xc] sm:$0xf]
      %v968 = vld [vmem:[%s963 + $0x10] sm:$0xf]
      %v969 = vld [vmem:[%s963 + $0x14] sm:$0xf]
      %v970 = vld [vmem:[%s963 + $0x18] sm:$0xf]
      %v971 = vld [vmem:[%s963 + $0x1c] sm:$0xf]
      %v972 = vld [vmem:[%s963 + $0x20] sm:$0xf]
      %v973 = vld [vmem:[%s963 + $0x24] sm:$0xf]
      %v974 = vld [vmem:[%s963 + $0x28] sm:$0xf]
      %v975 = vld [vmem:[%s963 + $0x2c] sm:$0xf]
      %v976 = vld [vmem:[%s963 + $0x30] sm:$0xf]
      %v977 = vld [vmem:[%s963 + $0x34] sm:$0xf]
      %v978 = vld [vmem:[%s963 + $0x38] sm:$0xf]
      %v979 = vld [vmem:[%s963 + $0x3c] sm:$0xf]
      %v980 = vld [vmem:[%s963 + $0x40] sm:$0xf]
      %v981 = vld [vmem:[%s963 + $0x44] sm:$0xf]
      %v982 = vld [vmem:[%s963 + $0x48] sm:$0xf]
      %v983 = vld [vmem:[%s963 + $0x4c] sm:$0xf]
      %v984 = vld [vmem:[%s963 + $0x50] sm:$0xf]
      %v985 = vld [vmem:[%s963 + $0x54] sm:$0xf]
      %v986 = vld [vmem:[%s963 + $0x58] sm:$0xf]
      %v987 = vld [vmem:[%s963 + $0x5c] sm:$0xf]
      %v988 = vld [vmem:[%s963 + $0x60] sm:$0xf]
      %v989 = vld [vmem:[%s963 + $0x64] sm:$0xf]
      %v990 = vld [vmem:[%s963 + $0x68] sm:$0xf]
      %v991 = vld [vmem:[%s963 + $0x6c] sm:$0xf]
      %v992 = vld [vmem:[%s963 + $0x70] sm:$0xf]
      %v993 = vld [vmem:[%s963 + $0x74] sm:$0xf]
      %v994 = vld [vmem:[%s963 + $0x78] sm:$0xf]
      %v995 = vld [vmem:[%s963 + $0x7c] sm:$0xf]
      %v996 = vunpack.c.l.bf16 %v964
      %v997 = vunpack.c.l.bf16 %v965
      %v998 = vunpack.c.l.bf16 %v966
      %v999 = vunpack.c.l.bf16 %v967
      %v1000 = vunpack.c.l.bf16 %v968
      %v1001 = vunpack.c.l.bf16 %v969
      %v1002 = vunpack.c.l.bf16 %v970
      %v1003 = vunpack.c.l.bf16 %v971
      %v1004 = vunpack.c.l.bf16 %v972
      %v1005 = vunpack.c.l.bf16 %v973
      %v1006 = vunpack.c.l.bf16 %v974
      %v1007 = vunpack.c.l.bf16 %v975
      %v1008 = vunpack.c.l.bf16 %v976
      %v1009 = vunpack.c.l.bf16 %v977
      %v1010 = vunpack.c.l.bf16 %v978
      %v1011 = vunpack.c.l.bf16 %v979
      %v1012 = vunpack.c.l.bf16 %v980
      %v1013 = vunpack.c.l.bf16 %v981
      %v1014 = vunpack.c.l.bf16 %v982
      %v1015 = vunpack.c.l.bf16 %v983
      %v1016 = vunpack.c.l.bf16 %v984
      %v1017 = vunpack.c.l.bf16 %v985
      %v1018 = vunpack.c.l.bf16 %v986
      %v1019 = vunpack.c.l.bf16 %v987
      %v1020 = vunpack.c.l.bf16 %v988
      %v1021 = vunpack.c.l.bf16 %v989
      %v1022 = vunpack.c.l.bf16 %v990
      %v1023 = vunpack.c.l.bf16 %v991
      %v1024 = vunpack.c.l.bf16 %v992
      %v1025 = vunpack.c.l.bf16 %v993
      %v1026 = vunpack.c.l.bf16 %v994
      %v1027 = vunpack.c.l.bf16 %v995
      %v1028 = vld [vmem:[%s1] sm:$0x1]
      %v1030 = vlaneseq
      %v1031 = vshrl.u32 %v1030, 7
      %v1032 = vsub.s32 0, %v1031
      %v1033 = vrot.slane %v1028, %v1032
      %v1035 = vmul.f32 %v996, %v1033
      %v1036 = vmul.f32 %v997, %v1033
      %v1037 = vmul.f32 %v998, %v1033
      %v1038 = vmul.f32 %v999, %v1033
      %v1039 = vmul.f32 %v1000, %v1033
      %v1040 = vmul.f32 %v1001, %v1033
      %v1041 = vmul.f32 %v1002, %v1033
      %v1042 = vmul.f32 %v1003, %v1033
      %v1043 = vmul.f32 %v1004, %v1033
      %v1044 = vmul.f32 %v1005, %v1033
      %v1045 = vmul.f32 %v1006, %v1033
      %v1046 = vmul.f32 %v1007, %v1033
      %v1047 = vmul.f32 %v1008, %v1033
      %v1048 = vmul.f32 %v1009, %v1033
      %v1049 = vmul.f32 %v1010, %v1033
      %v1050 = vmul.f32 %v1011, %v1033
      %v1051 = vmul.f32 %v1012, %v1033
      %v1052 = vmul.f32 %v1013, %v1033
      %v1053 = vmul.f32 %v1014, %v1033
      %v1054 = vmul.f32 %v1015, %v1033
      %v1055 = vmul.f32 %v1016, %v1033
      %v1056 = vmul.f32 %v1017, %v1033
      %v1057 = vmul.f32 %v1018, %v1033
      %v1058 = vmul.f32 %v1019, %v1033
      %v1059 = vmul.f32 %v1020, %v1033
      %v1060 = vmul.f32 %v1021, %v1033
      %v1061 = vmul.f32 %v1022, %v1033
      %v1062 = vmul.f32 %v1023, %v1033
      %v1063 = vmul.f32 %v1024, %v1033
      %v1064 = vmul.f32 %v1025, %v1033
      %v1065 = vmul.f32 %v1026, %v1033
      %v1066 = vmul.f32 %v1027, %v1033
      %v1067 = vld [vmem:[%s2] sm:$0x1]
      %v1069 = vlaneseq
      %v1070 = vshrl.u32 %v1069, 7
      %v1071 = vsub.s32 0, %v1070
      %v1072 = vrot.slane %v1067, %v1071
      %v1074 = vadd.f32 %v1035, %v1072
      %v1075 = vadd.f32 %v1036, %v1072
      %v1076 = vadd.f32 %v1037, %v1072
      %v1077 = vadd.f32 %v1038, %v1072
      %v1078 = vadd.f32 %v1039, %v1072
      %v1079 = vadd.f32 %v1040, %v1072
      %v1080 = vadd.f32 %v1041, %v1072
      %v1081 = vadd.f32 %v1042, %v1072
      %v1082 = vadd.f32 %v1043, %v1072
      %v1083 = vadd.f32 %v1044, %v1072
      %v1084 = vadd.f32 %v1045, %v1072
      %v1085 = vadd.f32 %v1046, %v1072
      %v1086 = vadd.f32 %v1047, %v1072
      %v1087 = vadd.f32 %v1048, %v1072
      %v1088 = vadd.f32 %v1049, %v1072
      %v1089 = vadd.f32 %v1050, %v1072
      %v1090 = vadd.f32 %v1051, %v1072
      %v1091 = vadd.f32 %v1052, %v1072
      %v1092 = vadd.f32 %v1053, %v1072
      %v1093 = vadd.f32 %v1054, %v1072
      %v1094 = vadd.f32 %v1055, %v1072
      %v1095 = vadd.f32 %v1056, %v1072
      %v1096 = vadd.f32 %v1057, %v1072
      %v1097 = vadd.f32 %v1058, %v1072
      %v1098 = vadd.f32 %v1059, %v1072
      %v1099 = vadd.f32 %v1060, %v1072
      %v1100 = vadd.f32 %v1061, %v1072
      %v1101 = vadd.f32 %v1062, %v1072
      %v1102 = vadd.f32 %v1063, %v1072
      %v1103 = vadd.f32 %v1064, %v1072
      %v1104 = vadd.f32 %v1065, %v1072
      %v1105 = vadd.f32 %v1066, %v1072
      %v1106 = vmax.f32 %v1074, 0.0
      %v1107 = vmax.f32 %v1075, 0.0
      %v1108 = vmax.f32 %v1076, 0.0
      %v1109 = vmax.f32 %v1077, 0.0
      %v1110 = vmax.f32 %v1078, 0.0
      %v1111 = vmax.f32 %v1079, 0.0
      %v1112 = vmax.f32 %v1080, 0.0
      %v1113 = vmax.f32 %v1081, 0.0
      %v1114 = vmax.f32 %v1082, 0.0
      %v1115 = vmax.f32 %v1083, 0.0
      %v1116 = vmax.f32 %v1084, 0.0
      %v1117 = vmax.f32 %v1085, 0.0
      %v1118 = vmax.f32 %v1086, 0.0
      %v1119 = vmax.f32 %v1087, 0.0
      %v1120 = vmax.f32 %v1088, 0.0
      %v1121 = vmax.f32 %v1089, 0.0
      %v1122 = vmax.f32 %v1090, 0.0
      %v1123 = vmax.f32 %v1091, 0.0
      %v1124 = vmax.f32 %v1092, 0.0
      %v1125 = vmax.f32 %v1093, 0.0
      %v1126 = vmax.f32 %v1094, 0.0
      %v1127 = vmax.f32 %v1095, 0.0
      %v1128 = vmax.f32 %v1096, 0.0
      %v1129 = vmax.f32 %v1097, 0.0
      %v1130 = vmax.f32 %v1098, 0.0
      %v1131 = vmax.f32 %v1099, 0.0
      %v1132 = vmax.f32 %v1100, 0.0
      %v1133 = vmax.f32 %v1101, 0.0
      %v1134 = vmax.f32 %v1102, 0.0
      %v1135 = vmax.f32 %v1103, 0.0
      %v1136 = vmax.f32 %v1104, 0.0
      %v1137 = vmax.f32 %v1105, 0.0
      %s1138 = scalar_lea.vmem [#allocation2], 960
      %1139 = vst [vmem:[%s1138] sm:$0xff] %v1106
      %1140 = vst [vmem:[%s1138 + $0x8] sm:$0xff] %v1107
      %1141 = vst [vmem:[%s1138 + $0x10] sm:$0xff] %v1108
      %1142 = vst [vmem:[%s1138 + $0x18] sm:$0xff] %v1109
      %1143 = vst [vmem:[%s1138 + $0x28] sm:$0xff] %v1110
      %1144 = vst [vmem:[%s1138 + $0x30] sm:$0xff] %v1111
      %1145 = vst [vmem:[%s1138 + $0x38] sm:$0xff] %v1112
      %1146 = vst [vmem:[%s1138 + $0x40] sm:$0xff] %v1113
      %1147 = vst [vmem:[%s1138 + $0x50] sm:$0xff] %v1114
      %1148 = vst [vmem:[%s1138 + $0x58] sm:$0xff] %v1115
      %1149 = vst [vmem:[%s1138 + $0x60] sm:$0xff] %v1116
      %1150 = vst [vmem:[%s1138 + $0x68] sm:$0xff] %v1117
      %1151 = vst [vmem:[%s1138 + $0x78] sm:$0xff] %v1118
      %1152 = vst [vmem:[%s1138 + $0x80] sm:$0xff] %v1119
      %1153 = vst [vmem:[%s1138 + $0x88] sm:$0xff] %v1120
      %1154 = vst [vmem:[%s1138 + $0x90] sm:$0xff] %v1121
      %1155 = vst [vmem:[%s1138 + $0xa0] sm:$0xff] %v1122
      %1156 = vst [vmem:[%s1138 + $0xa8] sm:$0xff] %v1123
      %1157 = vst [vmem:[%s1138 + $0xb0] sm:$0xff] %v1124
      %1158 = vst [vmem:[%s1138 + $0xb8] sm:$0xff] %v1125
      %1159 = vst [vmem:[%s1138 + $0xc8] sm:$0xff] %v1126
      %1160 = vst [vmem:[%s1138 + $0xd0] sm:$0xff] %v1127
      %1161 = vst [vmem:[%s1138 + $0xd8] sm:$0xff] %v1128
      %1162 = vst [vmem:[%s1138 + $0xe0] sm:$0xff] %v1129
      %1163 = vst [vmem:[%s1138 + $0xf0] sm:$0xff] %v1130
      %1164 = vst [vmem:[%s1138 + $0xf8] sm:$0xff] %v1131
      %1165 = vst [vmem:[%s1138 + $0x100] sm:$0xff] %v1132
      %1166 = vst [vmem:[%s1138 + $0x108] sm:$0xff] %v1133
      %1167 = vst [vmem:[%s1138 + $0x118] sm:$0xff] %v1134
      %1168 = vst [vmem:[%s1138 + $0x120] sm:$0xff] %v1135
      %1169 = vst [vmem:[%s1138 + $0x128] sm:$0xff] %v1136
      %1170 = vst [vmem:[%s1138 + $0x130] sm:$0xff] %v1137
      %v1171 = vld [vmem:[#allocation2] sm:$0xff]
      %v1172 = vld [vmem:[#allocation2 + $0x8] sm:$0xff]
      %v1173 = vld [vmem:[#allocation2 + $0x10] sm:$0xff]
      %v1174 = vld [vmem:[#allocation2 + $0x18] sm:$0xff]
      %v1175 = vld [vmem:[#allocation2 + $0x28] sm:$0xff]
      %v1176 = vld [vmem:[#allocation2 + $0x30] sm:$0xff]
      %v1177 = vld [vmem:[#allocation2 + $0x38] sm:$0xff]
      %v1178 = vld [vmem:[#allocation2 + $0x40] sm:$0xff]
      %v1179 = vld [vmem:[#allocation2 + $0x50] sm:$0xff]
      %v1180 = vld [vmem:[#allocation2 + $0x58] sm:$0xff]
      %v1181 = vld [vmem:[#allocation2 + $0x60] sm:$0xff]
      %v1182 = vld [vmem:[#allocation2 + $0x68] sm:$0xff]
      %v1183 = vld [vmem:[#allocation2 + $0x78] sm:$0xff]
      %v1184 = vld [vmem:[#allocation2 + $0x80] sm:$0xff]
      %v1185 = vld [vmem:[#allocation2 + $0x88] sm:$0xff]
      %v1186 = vld [vmem:[#allocation2 + $0x90] sm:$0xff]
      %v1187 = vld [vmem:[#allocation2 + $0xa0] sm:$0xff]
      %v1188 = vld [vmem:[#allocation2 + $0xa8] sm:$0xff]
      %v1189 = vld [vmem:[#allocation2 + $0xb0] sm:$0xff]
      %v1190 = vld [vmem:[#allocation2 + $0xb8] sm:$0xff]
      %v1191 = vld [vmem:[#allocation2 + $0xc8] sm:$0xff]
      %v1192 = vld [vmem:[#allocation2 + $0xd0] sm:$0xff]
      %v1193 = vld [vmem:[#allocation2 + $0xd8] sm:$0xff]
      %v1194 = vld [vmem:[#allocation2 + $0xe0] sm:$0xff]
      %v1195 = vld [vmem:[#allocation2 + $0xf0] sm:$0xff]
      %v1196 = vld [vmem:[#allocation2 + $0xf8] sm:$0xff]
      %v1197 = vld [vmem:[#allocation2 + $0x100] sm:$0xff]
      %v1198 = vld [vmem:[#allocation2 + $0x108] sm:$0xff]
      %v1199 = vld [vmem:[#allocation2 + $0x118] sm:$0xff]
      %v1200 = vld [vmem:[#allocation2 + $0x120] sm:$0xff]
      %v1201 = vld [vmem:[#allocation2 + $0x128] sm:$0xff]
      %v1202 = vld [vmem:[#allocation2 + $0x130] sm:$0xff]
      %v1203 = vld [vmem:[#allocation2 + $0x1] sm:$0xff]
      %v1204 = vld [vmem:[#allocation2 + $0x9] sm:$0xff]
      %v1205 = vld [vmem:[#allocation2 + $0x11] sm:$0xff]
      %v1206 = vld [vmem:[#allocation2 + $0x19] sm:$0xff]
      %v1207 = vld [vmem:[#allocation2 + $0x29] sm:$0xff]
      %v1208 = vld [vmem:[#allocation2 + $0x31] sm:$0xff]
      %v1209 = vld [vmem:[#allocation2 + $0x39] sm:$0xff]
      %v1210 = vld [vmem:[#allocation2 + $0x41] sm:$0xff]
      %v1211 = vld [vmem:[#allocation2 + $0x51] sm:$0xff]
      %v1212 = vld [vmem:[#allocation2 + $0x59] sm:$0xff]
      %v1213 = vld [vmem:[#allocation2 + $0x61] sm:$0xff]
      %v1214 = vld [vmem:[#allocation2 + $0x69] sm:$0xff]
      %v1215 = vld [vmem:[#allocation2 + $0x79] sm:$0xff]
      %v1216 = vld [vmem:[#allocation2 + $0x81] sm:$0xff]
      %v1217 = vld [vmem:[#allocation2 + $0x89] sm:$0xff]
      %v1218 = vld [vmem:[#allocation2 + $0x91] sm:$0xff]
      %v1219 = vld [vmem:[#allocation2 + $0xa1] sm:$0xff]
      %v1220 = vld [vmem:[#allocation2 + $0xa9] sm:$0xff]
      %v1221 = vld [vmem:[#allocation2 + $0xb1] sm:$0xff]
      %v1222 = vld [vmem:[#allocation2 + $0xb9] sm:$0xff]
      %v1223 = vld [vmem:[#allocation2 + $0xc9] sm:$0xff]
      %v1224 = vld [vmem:[#allocation2 + $0xd1] sm:$0xff]
      %v1225 = vld [vmem:[#allocation2 + $0xd9] sm:$0xff]
      %v1226 = vld [vmem:[#allocation2 + $0xe1] sm:$0xff]
      %v1227 = vld [vmem:[#allocation2 + $0xf1] sm:$0xff]
      %v1228 = vld [vmem:[#allocation2 + $0xf9] sm:$0xff]
      %v1229 = vld [vmem:[#allocation2 + $0x101] sm:$0xff]
      %v1230 = vld [vmem:[#allocation2 + $0x109] sm:$0xff]
      %v1231 = vld [vmem:[#allocation2 + $0x119] sm:$0xff]
      %v1232 = vld [vmem:[#allocation2 + $0x121] sm:$0xff]
      %v1233 = vld [vmem:[#allocation2 + $0x129] sm:$0xff]
      %v1234 = vld [vmem:[#allocation2 + $0x131] sm:$0xff]
      %v1235 = vmax.f32 %v1171, %v1203
      %v1236 = vmax.f32 %v1172, %v1204
      %v1237 = vmax.f32 %v1173, %v1205
      %v1238 = vmax.f32 %v1174, %v1206
      %v1239 = vmax.f32 %v1175, %v1207
      %v1240 = vmax.f32 %v1176, %v1208
      %v1241 = vmax.f32 %v1177, %v1209
      %v1242 = vmax.f32 %v1178, %v1210
      %v1243 = vmax.f32 %v1179, %v1211
      %v1244 = vmax.f32 %v1180, %v1212
      %v1245 = vmax.f32 %v1181, %v1213
      %v1246 = vmax.f32 %v1182, %v1214
      %v1247 = vmax.f32 %v1183, %v1215
      %v1248 = vmax.f32 %v1184, %v1216
      %v1249 = vmax.f32 %v1185, %v1217
      %v1250 = vmax.f32 %v1186, %v1218
      %v1251 = vmax.f32 %v1187, %v1219
      %v1252 = vmax.f32 %v1188, %v1220
      %v1253 = vmax.f32 %v1189, %v1221
      %v1254 = vmax.f32 %v1190, %v1222
      %v1255 = vmax.f32 %v1191, %v1223
      %v1256 = vmax.f32 %v1192, %v1224
      %v1257 = vmax.f32 %v1193, %v1225
      %v1258 = vmax.f32 %v1194, %v1226
      %v1259 = vmax.f32 %v1195, %v1227
      %v1260 = vmax.f32 %v1196, %v1228
      %v1261 = vmax.f32 %v1197, %v1229
      %v1262 = vmax.f32 %v1198, %v1230
      %v1263 = vmax.f32 %v1199, %v1231
      %v1264 = vmax.f32 %v1200, %v1232
      %v1265 = vmax.f32 %v1201, %v1233
      %v1266 = vmax.f32 %v1202, %v1234
      %v1267 = vld [vmem:[#allocation2 + $0x2] sm:$0xff]
      %v1268 = vld [vmem:[#allocation2 + $0xa] sm:$0xff]
      %v1269 = vld [vmem:[#allocation2 + $0x12] sm:$0xff]
      %v1270 = vld [vmem:[#allocation2 + $0x1a] sm:$0xff]
      %v1271 = vld [vmem:[#allocation2 + $0x2a] sm:$0xff]
      %v1272 = vld [vmem:[#allocation2 + $0x32] sm:$0xff]
      %v1273 = vld [vmem:[#allocation2 + $0x3a] sm:$0xff]
      %v1274 = vld [vmem:[#allocation2 + $0x42] sm:$0xff]
      %v1275 = vld [vmem:[#allocation2 + $0x52] sm:$0xff]
      %v1276 = vld [vmem:[#allocation2 + $0x5a] sm:$0xff]
      %v1277 = vld [vmem:[#allocation2 + $0x62] sm:$0xff]
      %v1278 = vld [vmem:[#allocation2 + $0x6a] sm:$0xff]
      %v1279 = vld [vmem:[#allocation2 + $0x7a] sm:$0xff]
      %v1280 = vld [vmem:[#allocation2 + $0x82] sm:$0xff]
      %v1281 = vld [vmem:[#allocation2 + $0x8a] sm:$0xff]
      %v1282 = vld [vmem:[#allocation2 + $0x92] sm:$0xff]
      %v1283 = vld [vmem:[#allocation2 + $0xa2] sm:$0xff]
      %v1284 = vld [vmem:[#allocation2 + $0xaa] sm:$0xff]
      %v1285 = vld [vmem:[#allocation2 + $0xb2] sm:$0xff]
      %v1286 = vld [vmem:[#allocation2 + $0xba] sm:$0xff]
      %v1287 = vld [vmem:[#allocation2 + $0xca] sm:$0xff]
      %v1288 = vld [vmem:[#allocation2 + $0xd2] sm:$0xff]
      %v1289 = vld [vmem:[#allocation2 + $0xda] sm:$0xff]
      %v1290 = vld [vmem:[#allocation2 + $0xe2] sm:$0xff]
      %v1291 = vld [vmem:[#allocation2 + $0xf2] sm:$0xff]
      %v1292 = vld [vmem:[#allocation2 + $0xfa] sm:$0xff]
      %v1293 = vld [vmem:[#allocation2 + $0x102] sm:$0xff]
      %v1294 = vld [vmem:[#allocation2 + $0x10a] sm:$0xff]
      %v1295 = vld [vmem:[#allocation2 + $0x11a] sm:$0xff]
      %v1296 = vld [vmem:[#allocation2 + $0x122] sm:$0xff]
      %v1297 = vld [vmem:[#allocation2 + $0x12a] sm:$0xff]
      %v1298 = vld [vmem:[#allocation2 + $0x132] sm:$0xff]
      %v1299 = vmax.f32 %v1235, %v1267
      %v1300 = vmax.f32 %v1236, %v1268
      %v1301 = vmax.f32 %v1237, %v1269
      %v1302 = vmax.f32 %v1238, %v1270
      %v1303 = vmax.f32 %v1239, %v1271
      %v1304 = vmax.f32 %v1240, %v1272
      %v1305 = vmax.f32 %v1241, %v1273
      %v1306 = vmax.f32 %v1242, %v1274
      %v1307 = vmax.f32 %v1243, %v1275
      %v1308 = vmax.f32 %v1244, %v1276
      %v1309 = vmax.f32 %v1245, %v1277
      %v1310 = vmax.f32 %v1246, %v1278
      %v1311 = vmax.f32 %v1247, %v1279
      %v1312 = vmax.f32 %v1248, %v1280
      %v1313 = vmax.f32 %v1249, %v1281
      %v1314 = vmax.f32 %v1250, %v1282
      %v1315 = vmax.f32 %v1251, %v1283
      %v1316 = vmax.f32 %v1252, %v1284
      %v1317 = vmax.f32 %v1253, %v1285
      %v1318 = vmax.f32 %v1254, %v1286
      %v1319 = vmax.f32 %v1255, %v1287
      %v1320 = vmax.f32 %v1256, %v1288
      %v1321 = vmax.f32 %v1257, %v1289
      %v1322 = vmax.f32 %v1258, %v1290
      %v1323 = vmax.f32 %v1259, %v1291
      %v1324 = vmax.f32 %v1260, %v1292
      %v1325 = vmax.f32 %v1261, %v1293
      %v1326 = vmax.f32 %v1262, %v1294
      %v1327 = vmax.f32 %v1263, %v1295
      %v1328 = vmax.f32 %v1264, %v1296
      %v1329 = vmax.f32 %v1265, %v1297
      %v1330 = vmax.f32 %v1266, %v1298
      %s1331 = scalar_lea.vmem [#allocation2], 40
      %v1332 = vld [vmem:[%s1331] sm:$0xff]
      %v1333 = vld [vmem:[%s1331 + $0x8] sm:$0xff]
      %v1334 = vld [vmem:[%s1331 + $0x10] sm:$0xff]
      %v1335 = vld [vmem:[%s1331 + $0x18] sm:$0xff]
      %v1336 = vld [vmem:[%s1331 + $0x28] sm:$0xff]
      %v1337 = vld [vmem:[%s1331 + $0x30] sm:$0xff]
      %v1338 = vld [vmem:[%s1331 + $0x38] sm:$0xff]
      %v1339 = vld [vmem:[%s1331 + $0x40] sm:$0xff]
      %v1340 = vld [vmem:[%s1331 + $0x50] sm:$0xff]
      %v1341 = vld [vmem:[%s1331 + $0x58] sm:$0xff]
      %v1342 = vld [vmem:[%s1331 + $0x60] sm:$0xff]
      %v1343 = vld [vmem:[%s1331 + $0x68] sm:$0xff]
      %v1344 = vld [vmem:[%s1331 + $0x78] sm:$0xff]
      %v1345 = vld [vmem:[%s1331 + $0x80] sm:$0xff]
      %v1346 = vld [vmem:[%s1331 + $0x88] sm:$0xff]
      %v1347 = vld [vmem:[%s1331 + $0x90] sm:$0xff]
      %v1348 = vld [vmem:[%s1331 + $0xa0] sm:$0xff]
      %v1349 = vld [vmem:[%s1331 + $0xa8] sm:$0xff]
      %v1350 = vld [vmem:[%s1331 + $0xb0] sm:$0xff]
      %v1351 = vld [vmem:[%s1331 + $0xb8] sm:$0xff]
      %v1352 = vld [vmem:[%s1331 + $0xc8] sm:$0xff]
      %v1353 = vld [vmem:[%s1331 + $0xd0] sm:$0xff]
      %v1354 = vld [vmem:[%s1331 + $0xd8] sm:$0xff]
      %v1355 = vld [vmem:[%s1331 + $0xe0] sm:$0xff]
      %v1356 = vld [vmem:[%s1331 + $0xf0] sm:$0xff]
      %v1357 = vld [vmem:[%s1331 + $0xf8] sm:$0xff]
      %v1358 = vld [vmem:[%s1331 + $0x100] sm:$0xff]
      %v1359 = vld [vmem:[%s1331 + $0x108] sm:$0xff]
      %v1360 = vld [vmem:[%s1331 + $0x118] sm:$0xff]
      %v1361 = vld [vmem:[%s1331 + $0x120] sm:$0xff]
      %v1362 = vld [vmem:[%s1331 + $0x128] sm:$0xff]
      %v1363 = vld [vmem:[%s1331 + $0x130] sm:$0xff]
      %v1364 = vmax.f32 %v1299, %v1332
      %v1365 = vmax.f32 %v1300, %v1333
      %v1366 = vmax.f32 %v1301, %v1334
      %v1367 = vmax.f32 %v1302, %v1335
      %v1368 = vmax.f32 %v1303, %v1336
      %v1369 = vmax.f32 %v1304, %v1337
      %v1370 = vmax.f32 %v1305, %v1338
      %v1371 = vmax.f32 %v1306, %v1339
      %v1372 = vmax.f32 %v1307, %v1340
      %v1373 = vmax.f32 %v1308, %v1341
      %v1374 = vmax.f32 %v1309, %v1342
      %v1375 = vmax.f32 %v1310, %v1343
      %v1376 = vmax.f32 %v1311, %v1344
      %v1377 = vmax.f32 %v1312, %v1345
      %v1378 = vmax.f32 %v1313, %v1346
      %v1379 = vmax.f32 %v1314, %v1347
      %v1380 = vmax.f32 %v1315, %v1348
      %v1381 = vmax.f32 %v1316, %v1349
      %v1382 = vmax.f32 %v1317, %v1350
      %v1383 = vmax.f32 %v1318, %v1351
      %v1384 = vmax.f32 %v1319, %v1352
      %v1385 = vmax.f32 %v1320, %v1353
      %v1386 = vmax.f32 %v1321, %v1354
      %v1387 = vmax.f32 %v1322, %v1355
      %v1388 = vmax.f32 %v1323, %v1356
      %v1389 = vmax.f32 %v1324, %v1357
      %v1390 = vmax.f32 %v1325, %v1358
      %v1391 = vmax.f32 %v1326, %v1359
      %v1392 = vmax.f32 %v1327, %v1360
      %v1393 = vmax.f32 %v1328, %v1361
      %v1394 = vmax.f32 %v1329, %v1362
      %v1395 = vmax.f32 %v1330, %v1363
      %v1396 = vld [vmem:[%s1331 + $0x1] sm:$0xff]
      %v1397 = vld [vmem:[%s1331 + $0x9] sm:$0xff]
      %v1398 = vld [vmem:[%s1331 + $0x11] sm:$0xff]
      %v1399 = vld [vmem:[%s1331 + $0x19] sm:$0xff]
      %v1400 = vld [vmem:[%s1331 + $0x29] sm:$0xff]
      %v1401 = vld [vmem:[%s1331 + $0x31] sm:$0xff]
      %v1402 = vld [vmem:[%s1331 + $0x39] sm:$0xff]
      %v1403 = vld [vmem:[%s1331 + $0x41] sm:$0xff]
      %v1404 = vld [vmem:[%s1331 + $0x51] sm:$0xff]
      %v1405 = vld [vmem:[%s1331 + $0x59] sm:$0xff]
      %v1406 = vld [vmem:[%s1331 + $0x61] sm:$0xff]
      %v1407 = vld [vmem:[%s1331 + $0x69] sm:$0xff]
      %v1408 = vld [vmem:[%s1331 + $0x79] sm:$0xff]
      %v1409 = vld [vmem:[%s1331 + $0x81] sm:$0xff]
      %v1410 = vld [vmem:[%s1331 + $0x89] sm:$0xff]
      %v1411 = vld [vmem:[%s1331 + $0x91] sm:$0xff]
      %v1412 = vld [vmem:[%s1331 + $0xa1] sm:$0xff]
      %v1413 = vld [vmem:[%s1331 + $0xa9] sm:$0xff]
      %v1414 = vld [vmem:[%s1331 + $0xb1] sm:$0xff]
      %v1415 = vld [vmem:[%s1331 + $0xb9] sm:$0xff]
      %v1416 = vld [vmem:[%s1331 + $0xc9] sm:$0xff]
      %v1417 = vld [vmem:[%s1331 + $0xd1] sm:$0xff]
      %v1418 = vld [vmem:[%s1331 + $0xd9] sm:$0xff]
      %v1419 = vld [vmem:[%s1331 + $0xe1] sm:$0xff]
      %v1420 = vld [vmem:[%s1331 + $0xf1] sm:$0xff]
      %v1421 = vld [vmem:[%s1331 + $0xf9] sm:$0xff]
      %v1422 = vld [vmem:[%s1331 + $0x101] sm:$0xff]
      %v1423 = vld [vmem:[%s1331 + $0x109] sm:$0xff]
      %v1424 = vld [vmem:[%s1331 + $0x119] sm:$0xff]
      %v1425 = vld [vmem:[%s1331 + $0x121] sm:$0xff]
      %v1426 = vld [vmem:[%s1331 + $0x129] sm:$0xff]
      %v1427 = vld [vmem:[%s1331 + $0x131] sm:$0xff]
      %v1428 = vmax.f32 %v1364, %v1396
      %v1429 = vmax.f32 %v1365, %v1397
      %v1430 = vmax.f32 %v1366, %v1398
      %v1431 = vmax.f32 %v1367, %v1399
      %v1432 = vmax.f32 %v1368, %v1400
      %v1433 = vmax.f32 %v1369, %v1401
      %v1434 = vmax.f32 %v1370, %v1402
      %v1435 = vmax.f32 %v1371, %v1403
      %v1436 = vmax.f32 %v1372, %v1404
      %v1437 = vmax.f32 %v1373, %v1405
      %v1438 = vmax.f32 %v1374, %v1406
      %v1439 = vmax.f32 %v1375, %v1407
      %v1440 = vmax.f32 %v1376, %v1408
      %v1441 = vmax.f32 %v1377, %v1409
      %v1442 = vmax.f32 %v1378, %v1410
      %v1443 = vmax.f32 %v1379, %v1411
      %v1444 = vmax.f32 %v1380, %v1412
      %v1445 = vmax.f32 %v1381, %v1413
      %v1446 = vmax.f32 %v1382, %v1414
      %v1447 = vmax.f32 %v1383, %v1415
      %v1448 = vmax.f32 %v1384, %v1416
      %v1449 = vmax.f32 %v1385, %v1417
      %v1450 = vmax.f32 %v1386, %v1418
      %v1451 = vmax.f32 %v1387, %v1419
      %v1452 = vmax.f32 %v1388, %v1420
      %v1453 = vmax.f32 %v1389, %v1421
      %v1454 = vmax.f32 %v1390, %v1422
      %v1455 = vmax.f32 %v1391, %v1423
      %v1456 = vmax.f32 %v1392, %v1424
      %v1457 = vmax.f32 %v1393, %v1425
      %v1458 = vmax.f32 %v1394, %v1426
      %v1459 = vmax.f32 %v1395, %v1427
      %v1460 = vld [vmem:[%s1331 + $0x2] sm:$0xff]
      %v1461 = vld [vmem:[%s1331 + $0xa] sm:$0xff]
      %v1462 = vld [vmem:[%s1331 + $0x12] sm:$0xff]
      %v1463 = vld [vmem:[%s1331 + $0x1a] sm:$0xff]
      %v1464 = vld [vmem:[%s1331 + $0x2a] sm:$0xff]
      %v1465 = vld [vmem:[%s1331 + $0x32] sm:$0xff]
      %v1466 = vld [vmem:[%s1331 + $0x3a] sm:$0xff]
      %v1467 = vld [vmem:[%s1331 + $0x42] sm:$0xff]
      %v1468 = vld [vmem:[%s1331 + $0x52] sm:$0xff]
      %v1469 = vld [vmem:[%s1331 + $0x5a] sm:$0xff]
      %v1470 = vld [vmem:[%s1331 + $0x62] sm:$0xff]
      %v1471 = vld [vmem:[%s1331 + $0x6a] sm:$0xff]
      %v1472 = vld [vmem:[%s1331 + $0x7a] sm:$0xff]
      %v1473 = vld [vmem:[%s1331 + $0x82] sm:$0xff]
      %v1474 = vld [vmem:[%s1331 + $0x8a] sm:$0xff]
      %v1475 = vld [vmem:[%s1331 + $0x92] sm:$0xff]
      %v1476 = vld [vmem:[%s1331 + $0xa2] sm:$0xff]
      %v1477 = vld [vmem:[%s1331 + $0xaa] sm:$0xff]
      %v1478 = vld [vmem:[%s1331 + $0xb2] sm:$0xff]
      %v1479 = vld [vmem:[%s1331 + $0xba] sm:$0xff]
      %v1480 = vld [vmem:[%s1331 + $0xca] sm:$0xff]
      %v1481 = vld [vmem:[%s1331 + $0xd2] sm:$0xff]
      %v1482 = vld [vmem:[%s1331 + $0xda] sm:$0xff]
      %v1483 = vld [vmem:[%s1331 + $0xe2] sm:$0xff]
      %v1484 = vld [vmem:[%s1331 + $0xf2] sm:$0xff]
      %v1485 = vld [vmem:[%s1331 + $0xfa] sm:$0xff]
      %v1486 = vld [vmem:[%s1331 + $0x102] sm:$0xff]
      %v1487 = vld [vmem:[%s1331 + $0x10a] sm:$0xff]
      %v1488 = vld [vmem:[%s1331 + $0x11a] sm:$0xff]
      %v1489 = vld [vmem:[%s1331 + $0x122] sm:$0xff]
      %v1490 = vld [vmem:[%s1331 + $0x12a] sm:$0xff]
      %v1491 = vld [vmem:[%s1331 + $0x132] sm:$0xff]
      %v1492 = vmax.f32 %v1428, %v1460
      %v1493 = vmax.f32 %v1429, %v1461
      %v1494 = vmax.f32 %v1430, %v1462
      %v1495 = vmax.f32 %v1431, %v1463
      %v1496 = vmax.f32 %v1432, %v1464
      %v1497 = vmax.f32 %v1433, %v1465
      %v1498 = vmax.f32 %v1434, %v1466
      %v1499 = vmax.f32 %v1435, %v1467
      %v1500 = vmax.f32 %v1436, %v1468
      %v1501 = vmax.f32 %v1437, %v1469
      %v1502 = vmax.f32 %v1438, %v1470
      %v1503 = vmax.f32 %v1439, %v1471
      %v1504 = vmax.f32 %v1440, %v1472
      %v1505 = vmax.f32 %v1441, %v1473
      %v1506 = vmax.f32 %v1442, %v1474
      %v1507 = vmax.f32 %v1443, %v1475
      %v1508 = vmax.f32 %v1444, %v1476
      %v1509 = vmax.f32 %v1445, %v1477
      %v1510 = vmax.f32 %v1446, %v1478
      %v1511 = vmax.f32 %v1447, %v1479
      %v1512 = vmax.f32 %v1448, %v1480
      %v1513 = vmax.f32 %v1449, %v1481
      %v1514 = vmax.f32 %v1450, %v1482
      %v1515 = vmax.f32 %v1451, %v1483
      %v1516 = vmax.f32 %v1452, %v1484
      %v1517 = vmax.f32 %v1453, %v1485
      %v1518 = vmax.f32 %v1454, %v1486
      %v1519 = vmax.f32 %v1455, %v1487
      %v1520 = vmax.f32 %v1456, %v1488
      %v1521 = vmax.f32 %v1457, %v1489
      %v1522 = vmax.f32 %v1458, %v1490
      %v1523 = vmax.f32 %v1459, %v1491
      %s1524 = scalar_lea.vmem [#allocation2], 80
      %v1525 = vld [vmem:[%s1524] sm:$0xff]
      %v1526 = vld [vmem:[%s1524 + $0x8] sm:$0xff]
      %v1527 = vld [vmem:[%s1524 + $0x10] sm:$0xff]
      %v1528 = vld [vmem:[%s1524 + $0x18] sm:$0xff]
      %v1529 = vld [vmem:[%s1524 + $0x28] sm:$0xff]
      %v1530 = vld [vmem:[%s1524 + $0x30] sm:$0xff]
      %v1531 = vld [vmem:[%s1524 + $0x38] sm:$0xff]
      %v1532 = vld [vmem:[%s1524 + $0x40] sm:$0xff]
      %v1533 = vld [vmem:[%s1524 + $0x50] sm:$0xff]
      %v1534 = vld [vmem:[%s1524 + $0x58] sm:$0xff]
      %v1535 = vld [vmem:[%s1524 + $0x60] sm:$0xff]
      %v1536 = vld [vmem:[%s1524 + $0x68] sm:$0xff]
      %v1537 = vld [vmem:[%s1524 + $0x78] sm:$0xff]
      %v1538 = vld [vmem:[%s1524 + $0x80] sm:$0xff]
      %v1539 = vld [vmem:[%s1524 + $0x88] sm:$0xff]
      %v1540 = vld [vmem:[%s1524 + $0x90] sm:$0xff]
      %v1541 = vld [vmem:[%s1524 + $0xa0] sm:$0xff]
      %v1542 = vld [vmem:[%s1524 + $0xa8] sm:$0xff]
      %v1543 = vld [vmem:[%s1524 + $0xb0] sm:$0xff]
      %v1544 = vld [vmem:[%s1524 + $0xb8] sm:$0xff]
      %v1545 = vld [vmem:[%s1524 + $0xc8] sm:$0xff]
      %v1546 = vld [vmem:[%s1524 + $0xd0] sm:$0xff]
      %v1547 = vld [vmem:[%s1524 + $0xd8] sm:$0xff]
      %v1548 = vld [vmem:[%s1524 + $0xe0] sm:$0xff]
      %v1549 = vld [vmem:[%s1524 + $0xf0] sm:$0xff]
      %v1550 = vld [vmem:[%s1524 + $0xf8] sm:$0xff]
      %v1551 = vld [vmem:[%s1524 + $0x100] sm:$0xff]
      %v1552 = vld [vmem:[%s1524 + $0x108] sm:$0xff]
      %v1553 = vld [vmem:[%s1524 + $0x118] sm:$0xff]
      %v1554 = vld [vmem:[%s1524 + $0x120] sm:$0xff]
      %v1555 = vld [vmem:[%s1524 + $0x128] sm:$0xff]
      %v1556 = vld [vmem:[%s1524 + $0x130] sm:$0xff]
      %v1557 = vmax.f32 %v1492, %v1525
      %v1558 = vmax.f32 %v1493, %v1526
      %v1559 = vmax.f32 %v1494, %v1527
      %v1560 = vmax.f32 %v1495, %v1528
      %v1561 = vmax.f32 %v1496, %v1529
      %v1562 = vmax.f32 %v1497, %v1530
      %v1563 = vmax.f32 %v1498, %v1531
      %v1564 = vmax.f32 %v1499, %v1532
      %v1565 = vmax.f32 %v1500, %v1533
      %v1566 = vmax.f32 %v1501, %v1534
      %v1567 = vmax.f32 %v1502, %v1535
      %v1568 = vmax.f32 %v1503, %v1536
      %v1569 = vmax.f32 %v1504, %v1537
      %v1570 = vmax.f32 %v1505, %v1538
      %v1571 = vmax.f32 %v1506, %v1539
      %v1572 = vmax.f32 %v1507, %v1540
      %v1573 = vmax.f32 %v1508, %v1541
      %v1574 = vmax.f32 %v1509, %v1542
      %v1575 = vmax.f32 %v1510, %v1543
      %v1576 = vmax.f32 %v1511, %v1544
      %v1577 = vmax.f32 %v1512, %v1545
      %v1578 = vmax.f32 %v1513, %v1546
      %v1579 = vmax.f32 %v1514, %v1547
      %v1580 = vmax.f32 %v1515, %v1548
      %v1581 = vmax.f32 %v1516, %v1549
      %v1582 = vmax.f32 %v1517, %v1550
      %v1583 = vmax.f32 %v1518, %v1551
      %v1584 = vmax.f32 %v1519, %v1552
      %v1585 = vmax.f32 %v1520, %v1553
      %v1586 = vmax.f32 %v1521, %v1554
      %v1587 = vmax.f32 %v1522, %v1555
      %v1588 = vmax.f32 %v1523, %v1556
      %v1589 = vld [vmem:[%s1524 + $0x1] sm:$0xff]
      %v1590 = vld [vmem:[%s1524 + $0x9] sm:$0xff]
      %v1591 = vld [vmem:[%s1524 + $0x11] sm:$0xff]
      %v1592 = vld [vmem:[%s1524 + $0x19] sm:$0xff]
      %v1593 = vld [vmem:[%s1524 + $0x29] sm:$0xff]
      %v1594 = vld [vmem:[%s1524 + $0x31] sm:$0xff]
      %v1595 = vld [vmem:[%s1524 + $0x39] sm:$0xff]
      %v1596 = vld [vmem:[%s1524 + $0x41] sm:$0xff]
      %v1597 = vld [vmem:[%s1524 + $0x51] sm:$0xff]
      %v1598 = vld [vmem:[%s1524 + $0x59] sm:$0xff]
      %v1599 = vld [vmem:[%s1524 + $0x61] sm:$0xff]
      %v1600 = vld [vmem:[%s1524 + $0x69] sm:$0xff]
      %v1601 = vld [vmem:[%s1524 + $0x79] sm:$0xff]
      %v1602 = vld [vmem:[%s1524 + $0x81] sm:$0xff]
      %v1603 = vld [vmem:[%s1524 + $0x89] sm:$0xff]
      %v1604 = vld [vmem:[%s1524 + $0x91] sm:$0xff]
      %v1605 = vld [vmem:[%s1524 + $0xa1] sm:$0xff]
      %v1606 = vld [vmem:[%s1524 + $0xa9] sm:$0xff]
      %v1607 = vld [vmem:[%s1524 + $0xb1] sm:$0xff]
      %v1608 = vld [vmem:[%s1524 + $0xb9] sm:$0xff]
      %v1609 = vld [vmem:[%s1524 + $0xc9] sm:$0xff]
      %v1610 = vld [vmem:[%s1524 + $0xd1] sm:$0xff]
      %v1611 = vld [vmem:[%s1524 + $0xd9] sm:$0xff]
      %v1612 = vld [vmem:[%s1524 + $0xe1] sm:$0xff]
      %v1613 = vld [vmem:[%s1524 + $0xf1] sm:$0xff]
      %v1614 = vld [vmem:[%s1524 + $0xf9] sm:$0xff]
      %v1615 = vld [vmem:[%s1524 + $0x101] sm:$0xff]
      %v1616 = vld [vmem:[%s1524 + $0x109] sm:$0xff]
      %v1617 = vld [vmem:[%s1524 + $0x119] sm:$0xff]
      %v1618 = vld [vmem:[%s1524 + $0x121] sm:$0xff]
      %v1619 = vld [vmem:[%s1524 + $0x129] sm:$0xff]
      %v1620 = vld [vmem:[%s1524 + $0x131] sm:$0xff]
      %v1621 = vmax.f32 %v1557, %v1589
      %v1622 = vmax.f32 %v1558, %v1590
      %v1623 = vmax.f32 %v1559, %v1591
      %v1624 = vmax.f32 %v1560, %v1592
      %v1625 = vmax.f32 %v1561, %v1593
      %v1626 = vmax.f32 %v1562, %v1594
      %v1627 = vmax.f32 %v1563, %v1595
      %v1628 = vmax.f32 %v1564, %v1596
      %v1629 = vmax.f32 %v1565, %v1597
      %v1630 = vmax.f32 %v1566, %v1598
      %v1631 = vmax.f32 %v1567, %v1599
      %v1632 = vmax.f32 %v1568, %v1600
      %v1633 = vmax.f32 %v1569, %v1601
      %v1634 = vmax.f32 %v1570, %v1602
      %v1635 = vmax.f32 %v1571, %v1603
      %v1636 = vmax.f32 %v1572, %v1604
      %v1637 = vmax.f32 %v1573, %v1605
      %v1638 = vmax.f32 %v1574, %v1606
      %v1639 = vmax.f32 %v1575, %v1607
      %v1640 = vmax.f32 %v1576, %v1608
      %v1641 = vmax.f32 %v1577, %v1609
      %v1642 = vmax.f32 %v1578, %v1610
      %v1643 = vmax.f32 %v1579, %v1611
      %v1644 = vmax.f32 %v1580, %v1612
      %v1645 = vmax.f32 %v1581, %v1613
      %v1646 = vmax.f32 %v1582, %v1614
      %v1647 = vmax.f32 %v1583, %v1615
      %v1648 = vmax.f32 %v1584, %v1616
      %v1649 = vmax.f32 %v1585, %v1617
      %v1650 = vmax.f32 %v1586, %v1618
      %v1651 = vmax.f32 %v1587, %v1619
      %v1652 = vmax.f32 %v1588, %v1620
      %v1653 = vld [vmem:[%s1524 + $0x2] sm:$0xff]
      %v1654 = vld [vmem:[%s1524 + $0xa] sm:$0xff]
      %v1655 = vld [vmem:[%s1524 + $0x12] sm:$0xff]
      %v1656 = vld [vmem:[%s1524 + $0x1a] sm:$0xff]
      %v1657 = vld [vmem:[%s1524 + $0x2a] sm:$0xff]
      %v1658 = vld [vmem:[%s1524 + $0x32] sm:$0xff]
      %v1659 = vld [vmem:[%s1524 + $0x3a] sm:$0xff]
      %v1660 = vld [vmem:[%s1524 + $0x42] sm:$0xff]
      %v1661 = vld [vmem:[%s1524 + $0x52] sm:$0xff]
      %v1662 = vld [vmem:[%s1524 + $0x5a] sm:$0xff]
      %v1663 = vld [vmem:[%s1524 + $0x62] sm:$0xff]
      %v1664 = vld [vmem:[%s1524 + $0x6a] sm:$0xff]
      %v1665 = vld [vmem:[%s1524 + $0x7a] sm:$0xff]
      %v1666 = vld [vmem:[%s1524 + $0x82] sm:$0xff]
      %v1667 = vld [vmem:[%s1524 + $0x8a] sm:$0xff]
      %v1668 = vld [vmem:[%s1524 + $0x92] sm:$0xff]
      %v1669 = vld [vmem:[%s1524 + $0xa2] sm:$0xff]
      %v1670 = vld [vmem:[%s1524 + $0xaa] sm:$0xff]
      %v1671 = vld [vmem:[%s1524 + $0xb2] sm:$0xff]
      %v1672 = vld [vmem:[%s1524 + $0xba] sm:$0xff]
      %v1673 = vld [vmem:[%s1524 + $0xca] sm:$0xff]
      %v1674 = vld [vmem:[%s1524 + $0xd2] sm:$0xff]
      %v1675 = vld [vmem:[%s1524 + $0xda] sm:$0xff]
      %v1676 = vld [vmem:[%s1524 + $0xe2] sm:$0xff]
      %v1677 = vld [vmem:[%s1524 + $0xf2] sm:$0xff]
      %v1678 = vld [vmem:[%s1524 + $0xfa] sm:$0xff]
      %v1679 = vld [vmem:[%s1524 + $0x102] sm:$0xff]
      %v1680 = vld [vmem:[%s1524 + $0x10a] sm:$0xff]
      %v1681 = vld [vmem:[%s1524 + $0x11a] sm:$0xff]
      %v1682 = vld [vmem:[%s1524 + $0x122] sm:$0xff]
      %v1683 = vld [vmem:[%s1524 + $0x12a] sm:$0xff]
      %v1684 = vld [vmem:[%s1524 + $0x132] sm:$0xff]
      %v1685 = vmax.f32 %v1621, %v1653
      %v1686 = vmax.f32 %v1622, %v1654
      %v1687 = vmax.f32 %v1623, %v1655
      %v1688 = vmax.f32 %v1624, %v1656
      %v1689 = vmax.f32 %v1625, %v1657
      %v1690 = vmax.f32 %v1626, %v1658
      %v1691 = vmax.f32 %v1627, %v1659
      %v1692 = vmax.f32 %v1628, %v1660
      %v1693 = vmax.f32 %v1629, %v1661
      %v1694 = vmax.f32 %v1630, %v1662
      %v1695 = vmax.f32 %v1631, %v1663
      %v1696 = vmax.f32 %v1632, %v1664
      %v1697 = vmax.f32 %v1633, %v1665
      %v1698 = vmax.f32 %v1634, %v1666
      %v1699 = vmax.f32 %v1635, %v1667
      %v1700 = vmax.f32 %v1636, %v1668
      %v1701 = vmax.f32 %v1637, %v1669
      %v1702 = vmax.f32 %v1638, %v1670
      %v1703 = vmax.f32 %v1639, %v1671
      %v1704 = vmax.f32 %v1640, %v1672
      %v1705 = vmax.f32 %v1641, %v1673
      %v1706 = vmax.f32 %v1642, %v1674
      %v1707 = vmax.f32 %v1643, %v1675
      %v1708 = vmax.f32 %v1644, %v1676
      %v1709 = vmax.f32 %v1645, %v1677
      %v1710 = vmax.f32 %v1646, %v1678
      %v1711 = vmax.f32 %v1647, %v1679
      %v1712 = vmax.f32 %v1648, %v1680
      %v1713 = vmax.f32 %v1649, %v1681
      %v1714 = vmax.f32 %v1650, %v1682
      %v1715 = vmax.f32 %v1651, %v1683
      %v1716 = vmax.f32 %v1652, %v1684
      %v1717 = vpack.c.bf16 %v1686, %v1685
      %v1718 = vpack.c.bf16 %v1688, %v1687
      %v1719 = vpack.c.bf16 %v1690, %v1689
      %v1720 = vpack.c.bf16 %v1692, %v1691
      %v1721 = vpack.c.bf16 %v1694, %v1693
      %v1722 = vpack.c.bf16 %v1696, %v1695
      %v1723 = vpack.c.bf16 %v1698, %v1697
      %v1724 = vpack.c.bf16 %v1700, %v1699
      %v1725 = vpack.c.bf16 %v1702, %v1701
      %v1726 = vpack.c.bf16 %v1704, %v1703
      %v1727 = vpack.c.bf16 %v1706, %v1705
      %v1728 = vpack.c.bf16 %v1708, %v1707
      %v1729 = vpack.c.bf16 %v1710, %v1709
      %v1730 = vpack.c.bf16 %v1712, %v1711
      %v1731 = vpack.c.bf16 %v1714, %v1713
      %v1732 = vpack.c.bf16 %v1716, %v1715
      %v1749 = vunpack.c.l.b16 %v1717
      %v1750 = vunpack.c.h.b16 %v1717
      %v1751 = vunpack.c.l.b16 %v1718
      %v1752 = vunpack.c.h.b16 %v1718
      %v1753 = vunpack.c.l.b16 %v1719
      %v1754 = vunpack.c.h.b16 %v1719
      %v1755 = vunpack.c.l.b16 %v1720
      %v1756 = vunpack.c.h.b16 %v1720
      %v1757 = vunpack.c.l.b16 %v1721
      %v1758 = vunpack.c.h.b16 %v1721
      %v1759 = vunpack.c.l.b16 %v1722
      %v1760 = vunpack.c.h.b16 %v1722
      %v1761 = vunpack.c.l.b16 %v1723
      %v1762 = vunpack.c.h.b16 %v1723
      %v1763 = vunpack.c.l.b16 %v1724
      %v1764 = vunpack.c.h.b16 %v1724
      %v1765 = vunpack.c.l.b16 %v1725
      %v1766 = vunpack.c.h.b16 %v1725
      %v1767 = vunpack.c.l.b16 %v1726
      %v1768 = vunpack.c.h.b16 %v1726
      %v1769 = vunpack.c.l.b16 %v1727
      %v1770 = vunpack.c.h.b16 %v1727
      %v1771 = vunpack.c.l.b16 %v1728
      %v1772 = vunpack.c.h.b16 %v1728
      %v1773 = vunpack.c.l.b16 %v1729
      %v1774 = vunpack.c.h.b16 %v1729
      %v1775 = vunpack.c.l.b16 %v1730
      %v1776 = vunpack.c.h.b16 %v1730
      %v1777 = vunpack.c.l.b16 %v1731
      %v1778 = vunpack.c.h.b16 %v1731
      %v1779 = vunpack.c.l.b16 %v1732
      %v1780 = vunpack.c.h.b16 %v1732
      %v1781 = vpack.c.b16 %v1749, %v1749
      %v1782 = vpack.c.b16 %v1750, %v1750
      %v1783 = vpack.c.b16 %v1751, %v1751
      %v1784 = vpack.c.b16 %v1752, %v1752
      %v1785 = vpack.c.b16 %v1753, %v1753
      %v1786 = vpack.c.b16 %v1754, %v1754
      %v1787 = vpack.c.b16 %v1755, %v1755
      %v1788 = vpack.c.b16 %v1756, %v1756
      %v1789 = vpack.c.b16 %v1757, %v1757
      %v1790 = vpack.c.b16 %v1758, %v1758
      %v1791 = vpack.c.b16 %v1759, %v1759
      %v1792 = vpack.c.b16 %v1760, %v1760
      %v1793 = vpack.c.b16 %v1761, %v1761
      %v1794 = vpack.c.b16 %v1762, %v1762
      %v1795 = vpack.c.b16 %v1763, %v1763
      %v1796 = vpack.c.b16 %v1764, %v1764
      %v1797 = vpack.c.b16 %v1765, %v1765
      %v1798 = vpack.c.b16 %v1766, %v1766
      %v1799 = vpack.c.b16 %v1767, %v1767
      %v1800 = vpack.c.b16 %v1768, %v1768
      %v1801 = vpack.c.b16 %v1769, %v1769
      %v1802 = vpack.c.b16 %v1770, %v1770
      %v1803 = vpack.c.b16 %v1771, %v1771
      %v1804 = vpack.c.b16 %v1772, %v1772
      %v1805 = vpack.c.b16 %v1773, %v1773
      %v1806 = vpack.c.b16 %v1774, %v1774
      %v1807 = vpack.c.b16 %v1775, %v1775
      %v1808 = vpack.c.b16 %v1776, %v1776
      %v1809 = vpack.c.b16 %v1777, %v1777
      %v1810 = vpack.c.b16 %v1778, %v1778
      %v1811 = vpack.c.b16 %v1779, %v1779
      %v1812 = vpack.c.b16 %v1780, %v1780
      %1845 = vst [vmem:[%s170] sm:$0xf] %v1781
      %1846 = vst [vmem:[%s170 + $0x4] sm:$0xf] %v1782
      %1847 = vst [vmem:[%s170 + $0x8] sm:$0xf] %v1783
      %1848 = vst [vmem:[%s170 + $0xc] sm:$0xf] %v1784
      %1849 = vst [vmem:[%s170 + $0x10] sm:$0xf] %v1785
      %1850 = vst [vmem:[%s170 + $0x14] sm:$0xf] %v1786
      %1851 = vst [vmem:[%s170 + $0x18] sm:$0xf] %v1787
      %1852 = vst [vmem:[%s170 + $0x1c] sm:$0xf] %v1788
      %1853 = vst [vmem:[%s170 + $0x20] sm:$0xf] %v1789
      %1854 = vst [vmem:[%s170 + $0x24] sm:$0xf] %v1790
      %1855 = vst [vmem:[%s170 + $0x28] sm:$0xf] %v1791
      %1856 = vst [vmem:[%s170 + $0x2c] sm:$0xf] %v1792
      %1857 = vst [vmem:[%s170 + $0x30] sm:$0xf] %v1793
      %1858 = vst [vmem:[%s170 + $0x34] sm:$0xf] %v1794
      %1859 = vst [vmem:[%s170 + $0x38] sm:$0xf] %v1795
      %1860 = vst [vmem:[%s170 + $0x3c] sm:$0xf] %v1796
      %1861 = vst [vmem:[%s170 + $0x40] sm:$0xf] %v1797
      %1862 = vst [vmem:[%s170 + $0x44] sm:$0xf] %v1798
      %1863 = vst [vmem:[%s170 + $0x48] sm:$0xf] %v1799
      %1864 = vst [vmem:[%s170 + $0x4c] sm:$0xf] %v1800
      %1865 = vst [vmem:[%s170 + $0x50] sm:$0xf] %v1801
      %1866 = vst [vmem:[%s170 + $0x54] sm:$0xf] %v1802
      %1867 = vst [vmem:[%s170 + $0x58] sm:$0xf] %v1803
      %1868 = vst [vmem:[%s170 + $0x5c] sm:$0xf] %v1804
      %1869 = vst [vmem:[%s170 + $0x60] sm:$0xf] %v1805
      %1870 = vst [vmem:[%s170 + $0x64] sm:$0xf] %v1806
      %1871 = vst [vmem:[%s170 + $0x68] sm:$0xf] %v1807
      %1872 = vst [vmem:[%s170 + $0x6c] sm:$0xf] %v1808
      %1873 = vst [vmem:[%s170 + $0x70] sm:$0xf] %v1809
      %1874 = vst [vmem:[%s170 + $0x74] sm:$0xf] %v1810
      %1875 = vst [vmem:[%s170 + $0x78] sm:$0xf] %v1811
      %1876 = vst [vmem:[%s170 + $0x7c] sm:$0xf] %v1812
      %v1877 = vld [vmem:[%s722] sm:$0xff]
      %v1878 = vld [vmem:[%s722 + $0x8] sm:$0xff]
      %v1879 = vld [vmem:[%s722 + $0x10] sm:$0xff]
      %v1880 = vld [vmem:[%s722 + $0x18] sm:$0xff]
      %v1881 = vld [vmem:[%s722 + $0x28] sm:$0xff]
      %v1882 = vld [vmem:[%s722 + $0x30] sm:$0xff]
      %v1883 = vld [vmem:[%s722 + $0x38] sm:$0xff]
      %v1884 = vld [vmem:[%s722 + $0x40] sm:$0xff]
      %v1885 = vld [vmem:[%s722 + $0x50] sm:$0xff]
      %v1886 = vld [vmem:[%s722 + $0x58] sm:$0xff]
      %v1887 = vld [vmem:[%s722 + $0x60] sm:$0xff]
      %v1888 = vld [vmem:[%s722 + $0x68] sm:$0xff]
      %v1889 = vld [vmem:[%s722 + $0x78] sm:$0xff]
      %v1890 = vld [vmem:[%s722 + $0x80] sm:$0xff]
      %v1891 = vld [vmem:[%s722 + $0x88] sm:$0xff]
      %v1892 = vld [vmem:[%s722 + $0x90] sm:$0xff]
      %v1893 = vld [vmem:[%s722 + $0xa0] sm:$0xff]
      %v1894 = vld [vmem:[%s722 + $0xa8] sm:$0xff]
      %v1895 = vld [vmem:[%s722 + $0xb0] sm:$0xff]
      %v1896 = vld [vmem:[%s722 + $0xb8] sm:$0xff]
      %v1897 = vld [vmem:[%s722 + $0xc8] sm:$0xff]
      %v1898 = vld [vmem:[%s722 + $0xd0] sm:$0xff]
      %v1899 = vld [vmem:[%s722 + $0xd8] sm:$0xff]
      %v1900 = vld [vmem:[%s722 + $0xe0] sm:$0xff]
      %v1901 = vld [vmem:[%s722 + $0xf0] sm:$0xff]
      %v1902 = vld [vmem:[%s722 + $0xf8] sm:$0xff]
      %v1903 = vld [vmem:[%s722 + $0x100] sm:$0xff]
      %v1904 = vld [vmem:[%s722 + $0x108] sm:$0xff]
      %v1905 = vld [vmem:[%s722 + $0x118] sm:$0xff]
      %v1906 = vld [vmem:[%s722 + $0x120] sm:$0xff]
      %v1907 = vld [vmem:[%s722 + $0x128] sm:$0xff]
      %v1908 = vld [vmem:[%s722 + $0x130] sm:$0xff]
      %v1909 = vld [vmem:[%s722 + $0x1] sm:$0xff]
      %v1910 = vld [vmem:[%s722 + $0x9] sm:$0xff]
      %v1911 = vld [vmem:[%s722 + $0x11] sm:$0xff]
      %v1912 = vld [vmem:[%s722 + $0x19] sm:$0xff]
      %v1913 = vld [vmem:[%s722 + $0x29] sm:$0xff]
      %v1914 = vld [vmem:[%s722 + $0x31] sm:$0xff]
      %v1915 = vld [vmem:[%s722 + $0x39] sm:$0xff]
      %v1916 = vld [vmem:[%s722 + $0x41] sm:$0xff]
      %v1917 = vld [vmem:[%s722 + $0x51] sm:$0xff]
      %v1918 = vld [vmem:[%s722 + $0x59] sm:$0xff]
      %v1919 = vld [vmem:[%s722 + $0x61] sm:$0xff]
      %v1920 = vld [vmem:[%s722 + $0x69] sm:$0xff]
      %v1921 = vld [vmem:[%s722 + $0x79] sm:$0xff]
      %v1922 = vld [vmem:[%s722 + $0x81] sm:$0xff]
      %v1923 = vld [vmem:[%s722 + $0x89] sm:$0xff]
      %v1924 = vld [vmem:[%s722 + $0x91] sm:$0xff]
      %v1925 = vld [vmem:[%s722 + $0xa1] sm:$0xff]
      %v1926 = vld [vmem:[%s722 + $0xa9] sm:$0xff]
      %v1927 = vld [vmem:[%s722 + $0xb1] sm:$0xff]
      %v1928 = vld [vmem:[%s722 + $0xb9] sm:$0xff]
      %v1929 = vld [vmem:[%s722 + $0xc9] sm:$0xff]
      %v1930 = vld [vmem:[%s722 + $0xd1] sm:$0xff]
      %v1931 = vld [vmem:[%s722 + $0xd9] sm:$0xff]
      %v1932 = vld [vmem:[%s722 + $0xe1] sm:$0xff]
      %v1933 = vld [vmem:[%s722 + $0xf1] sm:$0xff]
      %v1934 = vld [vmem:[%s722 + $0xf9] sm:$0xff]
      %v1935 = vld [vmem:[%s722 + $0x101] sm:$0xff]
      %v1936 = vld [vmem:[%s722 + $0x109] sm:$0xff]
      %v1937 = vld [vmem:[%s722 + $0x119] sm:$0xff]
      %v1938 = vld [vmem:[%s722 + $0x121] sm:$0xff]
      %v1939 = vld [vmem:[%s722 + $0x129] sm:$0xff]
      %v1940 = vld [vmem:[%s722 + $0x131] sm:$0xff]
      %v1941 = vmax.f32 %v1877, %v1909
      %v1942 = vmax.f32 %v1878, %v1910
      %v1943 = vmax.f32 %v1879, %v1911
      %v1944 = vmax.f32 %v1880, %v1912
      %v1945 = vmax.f32 %v1881, %v1913
      %v1946 = vmax.f32 %v1882, %v1914
      %v1947 = vmax.f32 %v1883, %v1915
      %v1948 = vmax.f32 %v1884, %v1916
      %v1949 = vmax.f32 %v1885, %v1917
      %v1950 = vmax.f32 %v1886, %v1918
      %v1951 = vmax.f32 %v1887, %v1919
      %v1952 = vmax.f32 %v1888, %v1920
      %v1953 = vmax.f32 %v1889, %v1921
      %v1954 = vmax.f32 %v1890, %v1922
      %v1955 = vmax.f32 %v1891, %v1923
      %v1956 = vmax.f32 %v1892, %v1924
      %v1957 = vmax.f32 %v1893, %v1925
      %v1958 = vmax.f32 %v1894, %v1926
      %v1959 = vmax.f32 %v1895, %v1927
      %v1960 = vmax.f32 %v1896, %v1928
      %v1961 = vmax.f32 %v1897, %v1929
      %v1962 = vmax.f32 %v1898, %v1930
      %v1963 = vmax.f32 %v1899, %v1931
      %v1964 = vmax.f32 %v1900, %v1932
      %v1965 = vmax.f32 %v1901, %v1933
      %v1966 = vmax.f32 %v1902, %v1934
      %v1967 = vmax.f32 %v1903, %v1935
      %v1968 = vmax.f32 %v1904, %v1936
      %v1969 = vmax.f32 %v1905, %v1937
      %v1970 = vmax.f32 %v1906, %v1938
      %v1971 = vmax.f32 %v1907, %v1939
      %v1972 = vmax.f32 %v1908, %v1940
      %v1973 = vld [vmem:[%s722 + $0x2] sm:$0xff]
      %v1974 = vld [vmem:[%s722 + $0xa] sm:$0xff]
      %v1975 = vld [vmem:[%s722 + $0x12] sm:$0xff]
      %v1976 = vld [vmem:[%s722 + $0x1a] sm:$0xff]
      %v1977 = vld [vmem:[%s722 + $0x2a] sm:$0xff]
      %v1978 = vld [vmem:[%s722 + $0x32] sm:$0xff]
      %v1979 = vld [vmem:[%s722 + $0x3a] sm:$0xff]
      %v1980 = vld [vmem:[%s722 + $0x42] sm:$0xff]
      %v1981 = vld [vmem:[%s722 + $0x52] sm:$0xff]
      %v1982 = vld [vmem:[%s722 + $0x5a] sm:$0xff]
      %v1983 = vld [vmem:[%s722 + $0x62] sm:$0xff]
      %v1984 = vld [vmem:[%s722 + $0x6a] sm:$0xff]
      %v1985 = vld [vmem:[%s722 + $0x7a] sm:$0xff]
      %v1986 = vld [vmem:[%s722 + $0x82] sm:$0xff]
      %v1987 = vld [vmem:[%s722 + $0x8a] sm:$0xff]
      %v1988 = vld [vmem:[%s722 + $0x92] sm:$0xff]
      %v1989 = vld [vmem:[%s722 + $0xa2] sm:$0xff]
      %v1990 = vld [vmem:[%s722 + $0xaa] sm:$0xff]
      %v1991 = vld [vmem:[%s722 + $0xb2] sm:$0xff]
      %v1992 = vld [vmem:[%s722 + $0xba] sm:$0xff]
      %v1993 = vld [vmem:[%s722 + $0xca] sm:$0xff]
      %v1994 = vld [vmem:[%s722 + $0xd2] sm:$0xff]
      %v1995 = vld [vmem:[%s722 + $0xda] sm:$0xff]
      %v1996 = vld [vmem:[%s722 + $0xe2] sm:$0xff]
      %v1997 = vld [vmem:[%s722 + $0xf2] sm:$0xff]
      %v1998 = vld [vmem:[%s722 + $0xfa] sm:$0xff]
      %v1999 = vld [vmem:[%s722 + $0x102] sm:$0xff]
      %v2000 = vld [vmem:[%s722 + $0x10a] sm:$0xff]
      %v2001 = vld [vmem:[%s722 + $0x11a] sm:$0xff]
      %v2002 = vld [vmem:[%s722 + $0x122] sm:$0xff]
      %v2003 = vld [vmem:[%s722 + $0x12a] sm:$0xff]
      %v2004 = vld [vmem:[%s722 + $0x132] sm:$0xff]
      %v2005 = vmax.f32 %v1941, %v1973
      %v2006 = vmax.f32 %v1942, %v1974
      %v2007 = vmax.f32 %v1943, %v1975
      %v2008 = vmax.f32 %v1944, %v1976
      %v2009 = vmax.f32 %v1945, %v1977
      %v2010 = vmax.f32 %v1946, %v1978
      %v2011 = vmax.f32 %v1947, %v1979
      %v2012 = vmax.f32 %v1948, %v1980
      %v2013 = vmax.f32 %v1949, %v1981
      %v2014 = vmax.f32 %v1950, %v1982
      %v2015 = vmax.f32 %v1951, %v1983
      %v2016 = vmax.f32 %v1952, %v1984
      %v2017 = vmax.f32 %v1953, %v1985
      %v2018 = vmax.f32 %v1954, %v1986
      %v2019 = vmax.f32 %v1955, %v1987
      %v2020 = vmax.f32 %v1956, %v1988
      %v2021 = vmax.f32 %v1957, %v1989
      %v2022 = vmax.f32 %v1958, %v1990
      %v2023 = vmax.f32 %v1959, %v1991
      %v2024 = vmax.f32 %v1960, %v1992
      %v2025 = vmax.f32 %v1961, %v1993
      %v2026 = vmax.f32 %v1962, %v1994
      %v2027 = vmax.f32 %v1963, %v1995
      %v2028 = vmax.f32 %v1964, %v1996
      %v2029 = vmax.f32 %v1965, %v1997
      %v2030 = vmax.f32 %v1966, %v1998
      %v2031 = vmax.f32 %v1967, %v1999
      %v2032 = vmax.f32 %v1968, %v2000
      %v2033 = vmax.f32 %v1969, %v2001
      %v2034 = vmax.f32 %v1970, %v2002
      %v2035 = vmax.f32 %v1971, %v2003
      %v2036 = vmax.f32 %v1972, %v2004
      %s2037 = scalar_lea.vmem [#allocation2], 360
      %v2038 = vld [vmem:[%s2037] sm:$0xff]
      %v2039 = vld [vmem:[%s2037 + $0x8] sm:$0xff]
      %v2040 = vld [vmem:[%s2037 + $0x10] sm:$0xff]
      %v2041 = vld [vmem:[%s2037 + $0x18] sm:$0xff]
      %v2042 = vld [vmem:[%s2037 + $0x28] sm:$0xff]
      %v2043 = vld [vmem:[%s2037 + $0x30] sm:$0xff]
      %v2044 = vld [vmem:[%s2037 + $0x38] sm:$0xff]
      %v2045 = vld [vmem:[%s2037 + $0x40] sm:$0xff]
      %v2046 = vld [vmem:[%s2037 + $0x50] sm:$0xff]
      %v2047 = vld [vmem:[%s2037 + $0x58] sm:$0xff]
      %v2048 = vld [vmem:[%s2037 + $0x60] sm:$0xff]
      %v2049 = vld [vmem:[%s2037 + $0x68] sm:$0xff]
      %v2050 = vld [vmem:[%s2037 + $0x78] sm:$0xff]
      %v2051 = vld [vmem:[%s2037 + $0x80] sm:$0xff]
      %v2052 = vld [vmem:[%s2037 + $0x88] sm:$0xff]
      %v2053 = vld [vmem:[%s2037 + $0x90] sm:$0xff]
      %v2054 = vld [vmem:[%s2037 + $0xa0] sm:$0xff]
      %v2055 = vld [vmem:[%s2037 + $0xa8] sm:$0xff]
      %v2056 = vld [vmem:[%s2037 + $0xb0] sm:$0xff]
      %v2057 = vld [vmem:[%s2037 + $0xb8] sm:$0xff]
      %v2058 = vld [vmem:[%s2037 + $0xc8] sm:$0xff]
      %v2059 = vld [vmem:[%s2037 + $0xd0] sm:$0xff]
      %v2060 = vld [vmem:[%s2037 + $0xd8] sm:$0xff]
      %v2061 = vld [vmem:[%s2037 + $0xe0] sm:$0xff]
      %v2062 = vld [vmem:[%s2037 + $0xf0] sm:$0xff]
      %v2063 = vld [vmem:[%s2037 + $0xf8] sm:$0xff]
      %v2064 = vld [vmem:[%s2037 + $0x100] sm:$0xff]
      %v2065 = vld [vmem:[%s2037 + $0x108] sm:$0xff]
      %v2066 = vld [vmem:[%s2037 + $0x118] sm:$0xff]
      %v2067 = vld [vmem:[%s2037 + $0x120] sm:$0xff]
      %v2068 = vld [vmem:[%s2037 + $0x128] sm:$0xff]
      %v2069 = vld [vmem:[%s2037 + $0x130] sm:$0xff]
      %v2070 = vmax.f32 %v2005, %v2038
      %v2071 = vmax.f32 %v2006, %v2039
      %v2072 = vmax.f32 %v2007, %v2040
      %v2073 = vmax.f32 %v2008, %v2041
      %v2074 = vmax.f32 %v2009, %v2042
      %v2075 = vmax.f32 %v2010, %v2043
      %v2076 = vmax.f32 %v2011, %v2044
      %v2077 = vmax.f32 %v2012, %v2045
      %v2078 = vmax.f32 %v2013, %v2046
      %v2079 = vmax.f32 %v2014, %v2047
      %v2080 = vmax.f32 %v2015, %v2048
      %v2081 = vmax.f32 %v2016, %v2049
      %v2082 = vmax.f32 %v2017, %v2050
      %v2083 = vmax.f32 %v2018, %v2051
      %v2084 = vmax.f32 %v2019, %v2052
      %v2085 = vmax.f32 %v2020, %v2053
      %v2086 = vmax.f32 %v2021, %v2054
      %v2087 = vmax.f32 %v2022, %v2055
      %v2088 = vmax.f32 %v2023, %v2056
      %v2089 = vmax.f32 %v2024, %v2057
      %v2090 = vmax.f32 %v2025, %v2058
      %v2091 = vmax.f32 %v2026, %v2059
      %v2092 = vmax.f32 %v2027, %v2060
      %v2093 = vmax.f32 %v2028, %v2061
      %v2094 = vmax.f32 %v2029, %v2062
      %v2095 = vmax.f32 %v2030, %v2063
      %v2096 = vmax.f32 %v2031, %v2064
      %v2097 = vmax.f32 %v2032, %v2065
      %v2098 = vmax.f32 %v2033, %v2066
      %v2099 = vmax.f32 %v2034, %v2067
      %v2100 = vmax.f32 %v2035, %v2068
      %v2101 = vmax.f32 %v2036, %v2069
      %v2102 = vld [vmem:[%s2037 + $0x1] sm:$0xff]
      %v2103 = vld [vmem:[%s2037 + $0x9] sm:$0xff]
      %v2104 = vld [vmem:[%s2037 + $0x11] sm:$0xff]
      %v2105 = vld [vmem:[%s2037 + $0x19] sm:$0xff]
      %v2106 = vld [vmem:[%s2037 + $0x29] sm:$0xff]
      %v2107 = vld [vmem:[%s2037 + $0x31] sm:$0xff]
      %v2108 = vld [vmem:[%s2037 + $0x39] sm:$0xff]
      %v2109 = vld [vmem:[%s2037 + $0x41] sm:$0xff]
      %v2110 = vld [vmem:[%s2037 + $0x51] sm:$0xff]
      %v2111 = vld [vmem:[%s2037 + $0x59] sm:$0xff]
      %v2112 = vld [vmem:[%s2037 + $0x61] sm:$0xff]
      %v2113 = vld [vmem:[%s2037 + $0x69] sm:$0xff]
      %v2114 = vld [vmem:[%s2037 + $0x79] sm:$0xff]
      %v2115 = vld [vmem:[%s2037 + $0x81] sm:$0xff]
      %v2116 = vld [vmem:[%s2037 + $0x89] sm:$0xff]
      %v2117 = vld [vmem:[%s2037 + $0x91] sm:$0xff]
      %v2118 = vld [vmem:[%s2037 + $0xa1] sm:$0xff]
      %v2119 = vld [vmem:[%s2037 + $0xa9] sm:$0xff]
      %v2120 = vld [vmem:[%s2037 + $0xb1] sm:$0xff]
      %v2121 = vld [vmem:[%s2037 + $0xb9] sm:$0xff]
      %v2122 = vld [vmem:[%s2037 + $0xc9] sm:$0xff]
      %v2123 = vld [vmem:[%s2037 + $0xd1] sm:$0xff]
      %v2124 = vld [vmem:[%s2037 + $0xd9] sm:$0xff]
      %v2125 = vld [vmem:[%s2037 + $0xe1] sm:$0xff]
      %v2126 = vld [vmem:[%s2037 + $0xf1] sm:$0xff]
      %v2127 = vld [vmem:[%s2037 + $0xf9] sm:$0xff]
      %v2128 = vld [vmem:[%s2037 + $0x101] sm:$0xff]
      %v2129 = vld [vmem:[%s2037 + $0x109] sm:$0xff]
      %v2130 = vld [vmem:[%s2037 + $0x119] sm:$0xff]
      %v2131 = vld [vmem:[%s2037 + $0x121] sm:$0xff]
      %v2132 = vld [vmem:[%s2037 + $0x129] sm:$0xff]
      %v2133 = vld [vmem:[%s2037 + $0x131] sm:$0xff]
      %v2134 = vmax.f32 %v2070, %v2102
      %v2135 = vmax.f32 %v2071, %v2103
      %v2136 = vmax.f32 %v2072, %v2104
      %v2137 = vmax.f32 %v2073, %v2105
      %v2138 = vmax.f32 %v2074, %v2106
      %v2139 = vmax.f32 %v2075, %v2107
      %v2140 = vmax.f32 %v2076, %v2108
      %v2141 = vmax.f32 %v2077, %v2109
      %v2142 = vmax.f32 %v2078, %v2110
      %v2143 = vmax.f32 %v2079, %v2111
      %v2144 = vmax.f32 %v2080, %v2112
      %v2145 = vmax.f32 %v2081, %v2113
      %v2146 = vmax.f32 %v2082, %v2114
      %v2147 = vmax.f32 %v2083, %v2115
      %v2148 = vmax.f32 %v2084, %v2116
      %v2149 = vmax.f32 %v2085, %v2117
      %v2150 = vmax.f32 %v2086, %v2118
      %v2151 = vmax.f32 %v2087, %v2119
      %v2152 = vmax.f32 %v2088, %v2120
      %v2153 = vmax.f32 %v2089, %v2121
      %v2154 = vmax.f32 %v2090, %v2122
      %v2155 = vmax.f32 %v2091, %v2123
      %v2156 = vmax.f32 %v2092, %v2124
      %v2157 = vmax.f32 %v2093, %v2125
      %v2158 = vmax.f32 %v2094, %v2126
      %v2159 = vmax.f32 %v2095, %v2127
      %v2160 = vmax.f32 %v2096, %v2128
      %v2161 = vmax.f32 %v2097, %v2129
      %v2162 = vmax.f32 %v2098, %v2130
      %v2163 = vmax.f32 %v2099, %v2131
      %v2164 = vmax.f32 %v2100, %v2132
      %v2165 = vmax.f32 %v2101, %v2133
      %v2166 = vld [vmem:[%s2037 + $0x2] sm:$0xff]
      %v2167 = vld [vmem:[%s2037 + $0xa] sm:$0xff]
      %v2168 = vld [vmem:[%s2037 + $0x12] sm:$0xff]
      %v2169 = vld [vmem:[%s2037 + $0x1a] sm:$0xff]
      %v2170 = vld [vmem:[%s2037 + $0x2a] sm:$0xff]
      %v2171 = vld [vmem:[%s2037 + $0x32] sm:$0xff]
      %v2172 = vld [vmem:[%s2037 + $0x3a] sm:$0xff]
      %v2173 = vld [vmem:[%s2037 + $0x42] sm:$0xff]
      %v2174 = vld [vmem:[%s2037 + $0x52] sm:$0xff]
      %v2175 = vld [vmem:[%s2037 + $0x5a] sm:$0xff]
      %v2176 = vld [vmem:[%s2037 + $0x62] sm:$0xff]
      %v2177 = vld [vmem:[%s2037 + $0x6a] sm:$0xff]
      %v2178 = vld [vmem:[%s2037 + $0x7a] sm:$0xff]
      %v2179 = vld [vmem:[%s2037 + $0x82] sm:$0xff]
      %v2180 = vld [vmem:[%s2037 + $0x8a] sm:$0xff]
      %v2181 = vld [vmem:[%s2037 + $0x92] sm:$0xff]
      %v2182 = vld [vmem:[%s2037 + $0xa2] sm:$0xff]
      %v2183 = vld [vmem:[%s2037 + $0xaa] sm:$0xff]
      %v2184 = vld [vmem:[%s2037 + $0xb2] sm:$0xff]
      %v2185 = vld [vmem:[%s2037 + $0xba] sm:$0xff]
      %v2186 = vld [vmem:[%s2037 + $0xca] sm:$0xff]
      %v2187 = vld [vmem:[%s2037 + $0xd2] sm:$0xff]
      %v2188 = vld [vmem:[%s2037 + $0xda] sm:$0xff]
      %v2189 = vld [vmem:[%s2037 + $0xe2] sm:$0xff]
      %v2190 = vld [vmem:[%s2037 + $0xf2] sm:$0xff]
      %v2191 = vld [vmem:[%s2037 + $0xfa] sm:$0xff]
      %v2192 = vld [vmem:[%s2037 + $0x102] sm:$0xff]
      %v2193 = vld [vmem:[%s2037 + $0x10a] sm:$0xff]
      %v2194 = vld [vmem:[%s2037 + $0x11a] sm:$0xff]
      %v2195 = vld [vmem:[%s2037 + $0x122] sm:$0xff]
      %v2196 = vld [vmem:[%s2037 + $0x12a] sm:$0xff]
      %v2197 = vld [vmem:[%s2037 + $0x132] sm:$0xff]
      %v2198 = vmax.f32 %v2134, %v2166
      %v2199 = vmax.f32 %v2135, %v2167
      %v2200 = vmax.f32 %v2136, %v2168
      %v2201 = vmax.f32 %v2137, %v2169
      %v2202 = vmax.f32 %v2138, %v2170
      %v2203 = vmax.f32 %v2139, %v2171
      %v2204 = vmax.f32 %v2140, %v2172
      %v2205 = vmax.f32 %v2141, %v2173
      %v2206 = vmax.f32 %v2142, %v2174
      %v2207 = vmax.f32 %v2143, %v2175
      %v2208 = vmax.f32 %v2144, %v2176
      %v2209 = vmax.f32 %v2145, %v2177
      %v2210 = vmax.f32 %v2146, %v2178
      %v2211 = vmax.f32 %v2147, %v2179
      %v2212 = vmax.f32 %v2148, %v2180
      %v2213 = vmax.f32 %v2149, %v2181
      %v2214 = vmax.f32 %v2150, %v2182
      %v2215 = vmax.f32 %v2151, %v2183
      %v2216 = vmax.f32 %v2152, %v2184
      %v2217 = vmax.f32 %v2153, %v2185
      %v2218 = vmax.f32 %v2154, %v2186
      %v2219 = vmax.f32 %v2155, %v2187
      %v2220 = vmax.f32 %v2156, %v2188
      %v2221 = vmax.f32 %v2157, %v2189
      %v2222 = vmax.f32 %v2158, %v2190
      %v2223 = vmax.f32 %v2159, %v2191
      %v2224 = vmax.f32 %v2160, %v2192
      %v2225 = vmax.f32 %v2161, %v2193
      %v2226 = vmax.f32 %v2162, %v2194
      %v2227 = vmax.f32 %v2163, %v2195
      %v2228 = vmax.f32 %v2164, %v2196
      %v2229 = vmax.f32 %v2165, %v2197
      %s2230 = scalar_lea.vmem [#allocation2], 400
      %v2231 = vld [vmem:[%s2230] sm:$0xff]
      %v2232 = vld [vmem:[%s2230 + $0x8] sm:$0xff]
      %v2233 = vld [vmem:[%s2230 + $0x10] sm:$0xff]
      %v2234 = vld [vmem:[%s2230 + $0x18] sm:$0xff]
      %v2235 = vld [vmem:[%s2230 + $0x28] sm:$0xff]
      %v2236 = vld [vmem:[%s2230 + $0x30] sm:$0xff]
      %v2237 = vld [vmem:[%s2230 + $0x38] sm:$0xff]
      %v2238 = vld [vmem:[%s2230 + $0x40] sm:$0xff]
      %v2239 = vld [vmem:[%s2230 + $0x50] sm:$0xff]
      %v2240 = vld [vmem:[%s2230 + $0x58] sm:$0xff]
      %v2241 = vld [vmem:[%s2230 + $0x60] sm:$0xff]
      %v2242 = vld [vmem:[%s2230 + $0x68] sm:$0xff]
      %v2243 = vld [vmem:[%s2230 + $0x78] sm:$0xff]
      %v2244 = vld [vmem:[%s2230 + $0x80] sm:$0xff]
      %v2245 = vld [vmem:[%s2230 + $0x88] sm:$0xff]
      %v2246 = vld [vmem:[%s2230 + $0x90] sm:$0xff]
      %v2247 = vld [vmem:[%s2230 + $0xa0] sm:$0xff]
      %v2248 = vld [vmem:[%s2230 + $0xa8] sm:$0xff]
      %v2249 = vld [vmem:[%s2230 + $0xb0] sm:$0xff]
      %v2250 = vld [vmem:[%s2230 + $0xb8] sm:$0xff]
      %v2251 = vld [vmem:[%s2230 + $0xc8] sm:$0xff]
      %v2252 = vld [vmem:[%s2230 + $0xd0] sm:$0xff]
      %v2253 = vld [vmem:[%s2230 + $0xd8] sm:$0xff]
      %v2254 = vld [vmem:[%s2230 + $0xe0] sm:$0xff]
      %v2255 = vld [vmem:[%s2230 + $0xf0] sm:$0xff]
      %v2256 = vld [vmem:[%s2230 + $0xf8] sm:$0xff]
      %v2257 = vld [vmem:[%s2230 + $0x100] sm:$0xff]
      %v2258 = vld [vmem:[%s2230 + $0x108] sm:$0xff]
      %v2259 = vld [vmem:[%s2230 + $0x118] sm:$0xff]
      %v2260 = vld [vmem:[%s2230 + $0x120] sm:$0xff]
      %v2261 = vld [vmem:[%s2230 + $0x128] sm:$0xff]
      %v2262 = vld [vmem:[%s2230 + $0x130] sm:$0xff]
      %v2263 = vmax.f32 %v2198, %v2231
      %v2264 = vmax.f32 %v2199, %v2232
      %v2265 = vmax.f32 %v2200, %v2233
      %v2266 = vmax.f32 %v2201, %v2234
      %v2267 = vmax.f32 %v2202, %v2235
      %v2268 = vmax.f32 %v2203, %v2236
      %v2269 = vmax.f32 %v2204, %v2237
      %v2270 = vmax.f32 %v2205, %v2238
      %v2271 = vmax.f32 %v2206, %v2239
      %v2272 = vmax.f32 %v2207, %v2240
      %v2273 = vmax.f32 %v2208, %v2241
      %v2274 = vmax.f32 %v2209, %v2242
      %v2275 = vmax.f32 %v2210, %v2243
      %v2276 = vmax.f32 %v2211, %v2244
      %v2277 = vmax.f32 %v2212, %v2245
      %v2278 = vmax.f32 %v2213, %v2246
      %v2279 = vmax.f32 %v2214, %v2247
      %v2280 = vmax.f32 %v2215, %v2248
      %v2281 = vmax.f32 %v2216, %v2249
      %v2282 = vmax.f32 %v2217, %v2250
      %v2283 = vmax.f32 %v2218, %v2251
      %v2284 = vmax.f32 %v2219, %v2252
      %v2285 = vmax.f32 %v2220, %v2253
      %v2286 = vmax.f32 %v2221, %v2254
      %v2287 = vmax.f32 %v2222, %v2255
      %v2288 = vmax.f32 %v2223, %v2256
      %v2289 = vmax.f32 %v2224, %v2257
      %v2290 = vmax.f32 %v2225, %v2258
      %v2291 = vmax.f32 %v2226, %v2259
      %v2292 = vmax.f32 %v2227, %v2260
      %v2293 = vmax.f32 %v2228, %v2261
      %v2294 = vmax.f32 %v2229, %v2262
      %v2295 = vld [vmem:[%s2230 + $0x1] sm:$0xff]
      %v2296 = vld [vmem:[%s2230 + $0x9] sm:$0xff]
      %v2297 = vld [vmem:[%s2230 + $0x11] sm:$0xff]
      %v2298 = vld [vmem:[%s2230 + $0x19] sm:$0xff]
      %v2299 = vld [vmem:[%s2230 + $0x29] sm:$0xff]
      %v2300 = vld [vmem:[%s2230 + $0x31] sm:$0xff]
      %v2301 = vld [vmem:[%s2230 + $0x39] sm:$0xff]
      %v2302 = vld [vmem:[%s2230 + $0x41] sm:$0xff]
      %v2303 = vld [vmem:[%s2230 + $0x51] sm:$0xff]
      %v2304 = vld [vmem:[%s2230 + $0x59] sm:$0xff]
      %v2305 = vld [vmem:[%s2230 + $0x61] sm:$0xff]
      %v2306 = vld [vmem:[%s2230 + $0x69] sm:$0xff]
      %v2307 = vld [vmem:[%s2230 + $0x79] sm:$0xff]
      %v2308 = vld [vmem:[%s2230 + $0x81] sm:$0xff]
      %v2309 = vld [vmem:[%s2230 + $0x89] sm:$0xff]
      %v2310 = vld [vmem:[%s2230 + $0x91] sm:$0xff]
      %v2311 = vld [vmem:[%s2230 + $0xa1] sm:$0xff]
      %v2312 = vld [vmem:[%s2230 + $0xa9] sm:$0xff]
      %v2313 = vld [vmem:[%s2230 + $0xb1] sm:$0xff]
      %v2314 = vld [vmem:[%s2230 + $0xb9] sm:$0xff]
      %v2315 = vld [vmem:[%s2230 + $0xc9] sm:$0xff]
      %v2316 = vld [vmem:[%s2230 + $0xd1] sm:$0xff]
      %v2317 = vld [vmem:[%s2230 + $0xd9] sm:$0xff]
      %v2318 = vld [vmem:[%s2230 + $0xe1] sm:$0xff]
      %v2319 = vld [vmem:[%s2230 + $0xf1] sm:$0xff]
      %v2320 = vld [vmem:[%s2230 + $0xf9] sm:$0xff]
      %v2321 = vld [vmem:[%s2230 + $0x101] sm:$0xff]
      %v2322 = vld [vmem:[%s2230 + $0x109] sm:$0xff]
      %v2323 = vld [vmem:[%s2230 + $0x119] sm:$0xff]
      %v2324 = vld [vmem:[%s2230 + $0x121] sm:$0xff]
      %v2325 = vld [vmem:[%s2230 + $0x129] sm:$0xff]
      %v2326 = vld [vmem:[%s2230 + $0x131] sm:$0xff]
      %v2327 = vmax.f32 %v2263, %v2295
      %v2328 = vmax.f32 %v2264, %v2296
      %v2329 = vmax.f32 %v2265, %v2297
      %v2330 = vmax.f32 %v2266, %v2298
      %v2331 = vmax.f32 %v2267, %v2299
      %v2332 = vmax.f32 %v2268, %v2300
      %v2333 = vmax.f32 %v2269, %v2301
      %v2334 = vmax.f32 %v2270, %v2302
      %v2335 = vmax.f32 %v2271, %v2303
      %v2336 = vmax.f32 %v2272, %v2304
      %v2337 = vmax.f32 %v2273, %v2305
      %v2338 = vmax.f32 %v2274, %v2306
      %v2339 = vmax.f32 %v2275, %v2307
      %v2340 = vmax.f32 %v2276, %v2308
      %v2341 = vmax.f32 %v2277, %v2309
      %v2342 = vmax.f32 %v2278, %v2310
      %v2343 = vmax.f32 %v2279, %v2311
      %v2344 = vmax.f32 %v2280, %v2312
      %v2345 = vmax.f32 %v2281, %v2313
      %v2346 = vmax.f32 %v2282, %v2314
      %v2347 = vmax.f32 %v2283, %v2315
      %v2348 = vmax.f32 %v2284, %v2316
      %v2349 = vmax.f32 %v2285, %v2317
      %v2350 = vmax.f32 %v2286, %v2318
      %v2351 = vmax.f32 %v2287, %v2319
      %v2352 = vmax.f32 %v2288, %v2320
      %v2353 = vmax.f32 %v2289, %v2321
      %v2354 = vmax.f32 %v2290, %v2322
      %v2355 = vmax.f32 %v2291, %v2323
      %v2356 = vmax.f32 %v2292, %v2324
      %v2357 = vmax.f32 %v2293, %v2325
      %v2358 = vmax.f32 %v2294, %v2326
      %v2359 = vld [vmem:[%s2230 + $0x2] sm:$0xff]
      %v2360 = vld [vmem:[%s2230 + $0xa] sm:$0xff]
      %v2361 = vld [vmem:[%s2230 + $0x12] sm:$0xff]
      %v2362 = vld [vmem:[%s2230 + $0x1a] sm:$0xff]
      %v2363 = vld [vmem:[%s2230 + $0x2a] sm:$0xff]
      %v2364 = vld [vmem:[%s2230 + $0x32] sm:$0xff]
      %v2365 = vld [vmem:[%s2230 + $0x3a] sm:$0xff]
      %v2366 = vld [vmem:[%s2230 + $0x42] sm:$0xff]
      %v2367 = vld [vmem:[%s2230 + $0x52] sm:$0xff]
      %v2368 = vld [vmem:[%s2230 + $0x5a] sm:$0xff]
      %v2369 = vld [vmem:[%s2230 + $0x62] sm:$0xff]
      %v2370 = vld [vmem:[%s2230 + $0x6a] sm:$0xff]
      %v2371 = vld [vmem:[%s2230 + $0x7a] sm:$0xff]
      %v2372 = vld [vmem:[%s2230 + $0x82] sm:$0xff]
      %v2373 = vld [vmem:[%s2230 + $0x8a] sm:$0xff]
      %v2374 = vld [vmem:[%s2230 + $0x92] sm:$0xff]
      %v2375 = vld [vmem:[%s2230 + $0xa2] sm:$0xff]
      %v2376 = vld [vmem:[%s2230 + $0xaa] sm:$0xff]
      %v2377 = vld [vmem:[%s2230 + $0xb2] sm:$0xff]
      %v2378 = vld [vmem:[%s2230 + $0xba] sm:$0xff]
      %v2379 = vld [vmem:[%s2230 + $0xca] sm:$0xff]
      %v2380 = vld [vmem:[%s2230 + $0xd2] sm:$0xff]
      %v2381 = vld [vmem:[%s2230 + $0xda] sm:$0xff]
      %v2382 = vld [vmem:[%s2230 + $0xe2] sm:$0xff]
      %v2383 = vld [vmem:[%s2230 + $0xf2] sm:$0xff]
      %v2384 = vld [vmem:[%s2230 + $0xfa] sm:$0xff]
      %v2385 = vld [vmem:[%s2230 + $0x102] sm:$0xff]
      %v2386 = vld [vmem:[%s2230 + $0x10a] sm:$0xff]
      %v2387 = vld [vmem:[%s2230 + $0x11a] sm:$0xff]
      %v2388 = vld [vmem:[%s2230 + $0x122] sm:$0xff]
      %v2389 = vld [vmem:[%s2230 + $0x12a] sm:$0xff]
      %v2390 = vld [vmem:[%s2230 + $0x132] sm:$0xff]
      %v2391 = vmax.f32 %v2327, %v2359
      %v2392 = vmax.f32 %v2328, %v2360
      %v2393 = vmax.f32 %v2329, %v2361
      %v2394 = vmax.f32 %v2330, %v2362
      %v2395 = vmax.f32 %v2331, %v2363
      %v2396 = vmax.f32 %v2332, %v2364
      %v2397 = vmax.f32 %v2333, %v2365
      %v2398 = vmax.f32 %v2334, %v2366
      %v2399 = vmax.f32 %v2335, %v2367
      %v2400 = vmax.f32 %v2336, %v2368
      %v2401 = vmax.f32 %v2337, %v2369
      %v2402 = vmax.f32 %v2338, %v2370
      %v2403 = vmax.f32 %v2339, %v2371
      %v2404 = vmax.f32 %v2340, %v2372
      %v2405 = vmax.f32 %v2341, %v2373
      %v2406 = vmax.f32 %v2342, %v2374
      %v2407 = vmax.f32 %v2343, %v2375
      %v2408 = vmax.f32 %v2344, %v2376
      %v2409 = vmax.f32 %v2345, %v2377
      %v2410 = vmax.f32 %v2346, %v2378
      %v2411 = vmax.f32 %v2347, %v2379
      %v2412 = vmax.f32 %v2348, %v2380
      %v2413 = vmax.f32 %v2349, %v2381
      %v2414 = vmax.f32 %v2350, %v2382
      %v2415 = vmax.f32 %v2351, %v2383
      %v2416 = vmax.f32 %v2352, %v2384
      %v2417 = vmax.f32 %v2353, %v2385
      %v2418 = vmax.f32 %v2354, %v2386
      %v2419 = vmax.f32 %v2355, %v2387
      %v2420 = vmax.f32 %v2356, %v2388
      %v2421 = vmax.f32 %v2357, %v2389
      %v2422 = vmax.f32 %v2358, %v2390
      %v2423 = vpack.c.bf16 %v2392, %v2391
      %v2424 = vpack.c.bf16 %v2394, %v2393
      %v2425 = vpack.c.bf16 %v2396, %v2395
      %v2426 = vpack.c.bf16 %v2398, %v2397
      %v2427 = vpack.c.bf16 %v2400, %v2399
      %v2428 = vpack.c.bf16 %v2402, %v2401
      %v2429 = vpack.c.bf16 %v2404, %v2403
      %v2430 = vpack.c.bf16 %v2406, %v2405
      %v2431 = vpack.c.bf16 %v2408, %v2407
      %v2432 = vpack.c.bf16 %v2410, %v2409
      %v2433 = vpack.c.bf16 %v2412, %v2411
      %v2434 = vpack.c.bf16 %v2414, %v2413
      %v2435 = vpack.c.bf16 %v2416, %v2415
      %v2436 = vpack.c.bf16 %v2418, %v2417
      %v2437 = vpack.c.bf16 %v2420, %v2419
      %v2438 = vpack.c.bf16 %v2422, %v2421
      %v2455 = vunpack.c.l.b16 %v2423
      %v2456 = vunpack.c.h.b16 %v2423
      %v2457 = vunpack.c.l.b16 %v2424
      %v2458 = vunpack.c.h.b16 %v2424
      %v2459 = vunpack.c.l.b16 %v2425
      %v2460 = vunpack.c.h.b16 %v2425
      %v2461 = vunpack.c.l.b16 %v2426
      %v2462 = vunpack.c.h.b16 %v2426
      %v2463 = vunpack.c.l.b16 %v2427
      %v2464 = vunpack.c.h.b16 %v2427
      %v2465 = vunpack.c.l.b16 %v2428
      %v2466 = vunpack.c.h.b16 %v2428
      %v2467 = vunpack.c.l.b16 %v2429
      %v2468 = vunpack.c.h.b16 %v2429
      %v2469 = vunpack.c.l.b16 %v2430
      %v2470 = vunpack.c.h.b16 %v2430
      %v2471 = vunpack.c.l.b16 %v2431
      %v2472 = vunpack.c.h.b16 %v2431
      %v2473 = vunpack.c.l.b16 %v2432
      %v2474 = vunpack.c.h.b16 %v2432
      %v2475 = vunpack.c.l.b16 %v2433
      %v2476 = vunpack.c.h.b16 %v2433
      %v2477 = vunpack.c.l.b16 %v2434
      %v2478 = vunpack.c.h.b16 %v2434
      %v2479 = vunpack.c.l.b16 %v2435
      %v2480 = vunpack.c.h.b16 %v2435
      %v2481 = vunpack.c.l.b16 %v2436
      %v2482 = vunpack.c.h.b16 %v2436
      %v2483 = vunpack.c.l.b16 %v2437
      %v2484 = vunpack.c.h.b16 %v2437
      %v2485 = vunpack.c.l.b16 %v2438
      %v2486 = vunpack.c.h.b16 %v2438
      %v2487 = vpack.c.b16 %v2455, %v2455
      %v2488 = vpack.c.b16 %v2456, %v2456
      %v2489 = vpack.c.b16 %v2457, %v2457
      %v2490 = vpack.c.b16 %v2458, %v2458
      %v2491 = vpack.c.b16 %v2459, %v2459
      %v2492 = vpack.c.b16 %v2460, %v2460
      %v2493 = vpack.c.b16 %v2461, %v2461
      %v2494 = vpack.c.b16 %v2462, %v2462
      %v2495 = vpack.c.b16 %v2463, %v2463
      %v2496 = vpack.c.b16 %v2464, %v2464
      %v2497 = vpack.c.b16 %v2465, %v2465
      %v2498 = vpack.c.b16 %v2466, %v2466
      %v2499 = vpack.c.b16 %v2467, %v2467
      %v2500 = vpack.c.b16 %v2468, %v2468
      %v2501 = vpack.c.b16 %v2469, %v2469
      %v2502 = vpack.c.b16 %v2470, %v2470
      %v2503 = vpack.c.b16 %v2471, %v2471
      %v2504 = vpack.c.b16 %v2472, %v2472
      %v2505 = vpack.c.b16 %v2473, %v2473
      %v2506 = vpack.c.b16 %v2474, %v2474
      %v2507 = vpack.c.b16 %v2475, %v2475
      %v2508 = vpack.c.b16 %v2476, %v2476
      %v2509 = vpack.c.b16 %v2477, %v2477
      %v2510 = vpack.c.b16 %v2478, %v2478
      %v2511 = vpack.c.b16 %v2479, %v2479
      %v2512 = vpack.c.b16 %v2480, %v2480
      %v2513 = vpack.c.b16 %v2481, %v2481
      %v2514 = vpack.c.b16 %v2482, %v2482
      %v2515 = vpack.c.b16 %v2483, %v2483
      %v2516 = vpack.c.b16 %v2484, %v2484
      %v2517 = vpack.c.b16 %v2485, %v2485
      %v2518 = vpack.c.b16 %v2486, %v2486
      %s2551 = scalar_lea.vmem %s170, 128
      %2552 = vst [vmem:[%s2551] sm:$0xf] %v2487
      %2553 = vst [vmem:[%s2551 + $0x4] sm:$0xf] %v2488
      %2554 = vst [vmem:[%s2551 + $0x8] sm:$0xf] %v2489
      %2555 = vst [vmem:[%s2551 + $0xc] sm:$0xf] %v2490
      %2556 = vst [vmem:[%s2551 + $0x10] sm:$0xf] %v2491
      %2557 = vst [vmem:[%s2551 + $0x14] sm:$0xf] %v2492
      %2558 = vst [vmem:[%s2551 + $0x18] sm:$0xf] %v2493
      %2559 = vst [vmem:[%s2551 + $0x1c] sm:$0xf] %v2494
      %2560 = vst [vmem:[%s2551 + $0x20] sm:$0xf] %v2495
      %2561 = vst [vmem:[%s2551 + $0x24] sm:$0xf] %v2496
      %2562 = vst [vmem:[%s2551 + $0x28] sm:$0xf] %v2497
      %2563 = vst [vmem:[%s2551 + $0x2c] sm:$0xf] %v2498
      %2564 = vst [vmem:[%s2551 + $0x30] sm:$0xf] %v2499
      %2565 = vst [vmem:[%s2551 + $0x34] sm:$0xf] %v2500
      %2566 = vst [vmem:[%s2551 + $0x38] sm:$0xf] %v2501
      %2567 = vst [vmem:[%s2551 + $0x3c] sm:$0xf] %v2502
      %2568 = vst [vmem:[%s2551 + $0x40] sm:$0xf] %v2503
      %2569 = vst [vmem:[%s2551 + $0x44] sm:$0xf] %v2504
      %2570 = vst [vmem:[%s2551 + $0x48] sm:$0xf] %v2505
      %2571 = vst [vmem:[%s2551 + $0x4c] sm:$0xf] %v2506
      %2572 = vst [vmem:[%s2551 + $0x50] sm:$0xf] %v2507
      %2573 = vst [vmem:[%s2551 + $0x54] sm:$0xf] %v2508
      %2574 = vst [vmem:[%s2551 + $0x58] sm:$0xf] %v2509
      %2575 = vst [vmem:[%s2551 + $0x5c] sm:$0xf] %v2510
      %2576 = vst [vmem:[%s2551 + $0x60] sm:$0xf] %v2511
      %2577 = vst [vmem:[%s2551 + $0x64] sm:$0xf] %v2512
      %2578 = vst [vmem:[%s2551 + $0x68] sm:$0xf] %v2513
      %2579 = vst [vmem:[%s2551 + $0x6c] sm:$0xf] %v2514
      %2580 = vst [vmem:[%s2551 + $0x70] sm:$0xf] %v2515
      %2581 = vst [vmem:[%s2551 + $0x74] sm:$0xf] %v2516
      %2582 = vst [vmem:[%s2551 + $0x78] sm:$0xf] %v2517
      %2583 = vst [vmem:[%s2551 + $0x7c] sm:$0xf] %v2518
      %v2584 = vld [vmem:[%s930] sm:$0xff]
      %v2585 = vld [vmem:[%s930 + $0x8] sm:$0xff]
      %v2586 = vld [vmem:[%s930 + $0x10] sm:$0xff]
      %v2587 = vld [vmem:[%s930 + $0x18] sm:$0xff]
      %v2588 = vld [vmem:[%s930 + $0x28] sm:$0xff]
      %v2589 = vld [vmem:[%s930 + $0x30] sm:$0xff]
      %v2590 = vld [vmem:[%s930 + $0x38] sm:$0xff]
      %v2591 = vld [vmem:[%s930 + $0x40] sm:$0xff]
      %v2592 = vld [vmem:[%s930 + $0x50] sm:$0xff]
      %v2593 = vld [vmem:[%s930 + $0x58] sm:$0xff]
      %v2594 = vld [vmem:[%s930 + $0x60] sm:$0xff]
      %v2595 = vld [vmem:[%s930 + $0x68] sm:$0xff]
      %v2596 = vld [vmem:[%s930 + $0x78] sm:$0xff]
      %v2597 = vld [vmem:[%s930 + $0x80] sm:$0xff]
      %v2598 = vld [vmem:[%s930 + $0x88] sm:$0xff]
      %v2599 = vld [vmem:[%s930 + $0x90] sm:$0xff]
      %v2600 = vld [vmem:[%s930 + $0xa0] sm:$0xff]
      %v2601 = vld [vmem:[%s930 + $0xa8] sm:$0xff]
      %v2602 = vld [vmem:[%s930 + $0xb0] sm:$0xff]
      %v2603 = vld [vmem:[%s930 + $0xb8] sm:$0xff]
      %v2604 = vld [vmem:[%s930 + $0xc8] sm:$0xff]
      %v2605 = vld [vmem:[%s930 + $0xd0] sm:$0xff]
      %v2606 = vld [vmem:[%s930 + $0xd8] sm:$0xff]
      %v2607 = vld [vmem:[%s930 + $0xe0] sm:$0xff]
      %v2608 = vld [vmem:[%s930 + $0xf0] sm:$0xff]
      %v2609 = vld [vmem:[%s930 + $0xf8] sm:$0xff]
      %v2610 = vld [vmem:[%s930 + $0x100] sm:$0xff]
      %v2611 = vld [vmem:[%s930 + $0x108] sm:$0xff]
      %v2612 = vld [vmem:[%s930 + $0x118] sm:$0xff]
      %v2613 = vld [vmem:[%s930 + $0x120] sm:$0xff]
      %v2614 = vld [vmem:[%s930 + $0x128] sm:$0xff]
      %v2615 = vld [vmem:[%s930 + $0x130] sm:$0xff]
      %v2616 = vld [vmem:[%s930 + $0x1] sm:$0xff]
      %v2617 = vld [vmem:[%s930 + $0x9] sm:$0xff]
      %v2618 = vld [vmem:[%s930 + $0x11] sm:$0xff]
      %v2619 = vld [vmem:[%s930 + $0x19] sm:$0xff]
      %v2620 = vld [vmem:[%s930 + $0x29] sm:$0xff]
      %v2621 = vld [vmem:[%s930 + $0x31] sm:$0xff]
      %v2622 = vld [vmem:[%s930 + $0x39] sm:$0xff]
      %v2623 = vld [vmem:[%s930 + $0x41] sm:$0xff]
      %v2624 = vld [vmem:[%s930 + $0x51] sm:$0xff]
      %v2625 = vld [vmem:[%s930 + $0x59] sm:$0xff]
      %v2626 = vld [vmem:[%s930 + $0x61] sm:$0xff]
      %v2627 = vld [vmem:[%s930 + $0x69] sm:$0xff]
      %v2628 = vld [vmem:[%s930 + $0x79] sm:$0xff]
      %v2629 = vld [vmem:[%s930 + $0x81] sm:$0xff]
      %v2630 = vld [vmem:[%s930 + $0x89] sm:$0xff]
      %v2631 = vld [vmem:[%s930 + $0x91] sm:$0xff]
      %v2632 = vld [vmem:[%s930 + $0xa1] sm:$0xff]
      %v2633 = vld [vmem:[%s930 + $0xa9] sm:$0xff]
      %v2634 = vld [vmem:[%s930 + $0xb1] sm:$0xff]
      %v2635 = vld [vmem:[%s930 + $0xb9] sm:$0xff]
      %v2636 = vld [vmem:[%s930 + $0xc9] sm:$0xff]
      %v2637 = vld [vmem:[%s930 + $0xd1] sm:$0xff]
      %v2638 = vld [vmem:[%s930 + $0xd9] sm:$0xff]
      %v2639 = vld [vmem:[%s930 + $0xe1] sm:$0xff]
      %v2640 = vld [vmem:[%s930 + $0xf1] sm:$0xff]
      %v2641 = vld [vmem:[%s930 + $0xf9] sm:$0xff]
      %v2642 = vld [vmem:[%s930 + $0x101] sm:$0xff]
      %v2643 = vld [vmem:[%s930 + $0x109] sm:$0xff]
      %v2644 = vld [vmem:[%s930 + $0x119] sm:$0xff]
      %v2645 = vld [vmem:[%s930 + $0x121] sm:$0xff]
      %v2646 = vld [vmem:[%s930 + $0x129] sm:$0xff]
      %v2647 = vld [vmem:[%s930 + $0x131] sm:$0xff]
      %v2648 = vmax.f32 %v2584, %v2616
      %v2649 = vmax.f32 %v2585, %v2617
      %v2650 = vmax.f32 %v2586, %v2618
      %v2651 = vmax.f32 %v2587, %v2619
      %v2652 = vmax.f32 %v2588, %v2620
      %v2653 = vmax.f32 %v2589, %v2621
      %v2654 = vmax.f32 %v2590, %v2622
      %v2655 = vmax.f32 %v2591, %v2623
      %v2656 = vmax.f32 %v2592, %v2624
      %v2657 = vmax.f32 %v2593, %v2625
      %v2658 = vmax.f32 %v2594, %v2626
      %v2659 = vmax.f32 %v2595, %v2627
      %v2660 = vmax.f32 %v2596, %v2628
      %v2661 = vmax.f32 %v2597, %v2629
      %v2662 = vmax.f32 %v2598, %v2630
      %v2663 = vmax.f32 %v2599, %v2631
      %v2664 = vmax.f32 %v2600, %v2632
      %v2665 = vmax.f32 %v2601, %v2633
      %v2666 = vmax.f32 %v2602, %v2634
      %v2667 = vmax.f32 %v2603, %v2635
      %v2668 = vmax.f32 %v2604, %v2636
      %v2669 = vmax.f32 %v2605, %v2637
      %v2670 = vmax.f32 %v2606, %v2638
      %v2671 = vmax.f32 %v2607, %v2639
      %v2672 = vmax.f32 %v2608, %v2640
      %v2673 = vmax.f32 %v2609, %v2641
      %v2674 = vmax.f32 %v2610, %v2642
      %v2675 = vmax.f32 %v2611, %v2643
      %v2676 = vmax.f32 %v2612, %v2644
      %v2677 = vmax.f32 %v2613, %v2645
      %v2678 = vmax.f32 %v2614, %v2646
      %v2679 = vmax.f32 %v2615, %v2647
      %v2680 = vld [vmem:[%s930 + $0x2] sm:$0xff]
      %v2681 = vld [vmem:[%s930 + $0xa] sm:$0xff]
      %v2682 = vld [vmem:[%s930 + $0x12] sm:$0xff]
      %v2683 = vld [vmem:[%s930 + $0x1a] sm:$0xff]
      %v2684 = vld [vmem:[%s930 + $0x2a] sm:$0xff]
      %v2685 = vld [vmem:[%s930 + $0x32] sm:$0xff]
      %v2686 = vld [vmem:[%s930 + $0x3a] sm:$0xff]
      %v2687 = vld [vmem:[%s930 + $0x42] sm:$0xff]
      %v2688 = vld [vmem:[%s930 + $0x52] sm:$0xff]
      %v2689 = vld [vmem:[%s930 + $0x5a] sm:$0xff]
      %v2690 = vld [vmem:[%s930 + $0x62] sm:$0xff]
      %v2691 = vld [vmem:[%s930 + $0x6a] sm:$0xff]
      %v2692 = vld [vmem:[%s930 + $0x7a] sm:$0xff]
      %v2693 = vld [vmem:[%s930 + $0x82] sm:$0xff]
      %v2694 = vld [vmem:[%s930 + $0x8a] sm:$0xff]
      %v2695 = vld [vmem:[%s930 + $0x92] sm:$0xff]
      %v2696 = vld [vmem:[%s930 + $0xa2] sm:$0xff]
      %v2697 = vld [vmem:[%s930 + $0xaa] sm:$0xff]
      %v2698 = vld [vmem:[%s930 + $0xb2] sm:$0xff]
      %v2699 = vld [vmem:[%s930 + $0xba] sm:$0xff]
      %v2700 = vld [vmem:[%s930 + $0xca] sm:$0xff]
      %v2701 = vld [vmem:[%s930 + $0xd2] sm:$0xff]
      %v2702 = vld [vmem:[%s930 + $0xda] sm:$0xff]
      %v2703 = vld [vmem:[%s930 + $0xe2] sm:$0xff]
      %v2704 = vld [vmem:[%s930 + $0xf2] sm:$0xff]
      %v2705 = vld [vmem:[%s930 + $0xfa] sm:$0xff]
      %v2706 = vld [vmem:[%s930 + $0x102] sm:$0xff]
      %v2707 = vld [vmem:[%s930 + $0x10a] sm:$0xff]
      %v2708 = vld [vmem:[%s930 + $0x11a] sm:$0xff]
      %v2709 = vld [vmem:[%s930 + $0x122] sm:$0xff]
      %v2710 = vld [vmem:[%s930 + $0x12a] sm:$0xff]
      %v2711 = vld [vmem:[%s930 + $0x132] sm:$0xff]
      %v2712 = vmax.f32 %v2648, %v2680
      %v2713 = vmax.f32 %v2649, %v2681
      %v2714 = vmax.f32 %v2650, %v2682
      %v2715 = vmax.f32 %v2651, %v2683
      %v2716 = vmax.f32 %v2652, %v2684
      %v2717 = vmax.f32 %v2653, %v2685
      %v2718 = vmax.f32 %v2654, %v2686
      %v2719 = vmax.f32 %v2655, %v2687
      %v2720 = vmax.f32 %v2656, %v2688
      %v2721 = vmax.f32 %v2657, %v2689
      %v2722 = vmax.f32 %v2658, %v2690
      %v2723 = vmax.f32 %v2659, %v2691
      %v2724 = vmax.f32 %v2660, %v2692
      %v2725 = vmax.f32 %v2661, %v2693
      %v2726 = vmax.f32 %v2662, %v2694
      %v2727 = vmax.f32 %v2663, %v2695
      %v2728 = vmax.f32 %v2664, %v2696
      %v2729 = vmax.f32 %v2665, %v2697
      %v2730 = vmax.f32 %v2666, %v2698
      %v2731 = vmax.f32 %v2667, %v2699
      %v2732 = vmax.f32 %v2668, %v2700
      %v2733 = vmax.f32 %v2669, %v2701
      %v2734 = vmax.f32 %v2670, %v2702
      %v2735 = vmax.f32 %v2671, %v2703
      %v2736 = vmax.f32 %v2672, %v2704
      %v2737 = vmax.f32 %v2673, %v2705
      %v2738 = vmax.f32 %v2674, %v2706
      %v2739 = vmax.f32 %v2675, %v2707
      %v2740 = vmax.f32 %v2676, %v2708
      %v2741 = vmax.f32 %v2677, %v2709
      %v2742 = vmax.f32 %v2678, %v2710
      %v2743 = vmax.f32 %v2679, %v2711
      %s2744 = scalar_lea.vmem [#allocation2], 680
      %v2745 = vld [vmem:[%s2744] sm:$0xff]
      %v2746 = vld [vmem:[%s2744 + $0x8] sm:$0xff]
      %v2747 = vld [vmem:[%s2744 + $0x10] sm:$0xff]
      %v2748 = vld [vmem:[%s2744 + $0x18] sm:$0xff]
      %v2749 = vld [vmem:[%s2744 + $0x28] sm:$0xff]
      %v2750 = vld [vmem:[%s2744 + $0x30] sm:$0xff]
      %v2751 = vld [vmem:[%s2744 + $0x38] sm:$0xff]
      %v2752 = vld [vmem:[%s2744 + $0x40] sm:$0xff]
      %v2753 = vld [vmem:[%s2744 + $0x50] sm:$0xff]
      %v2754 = vld [vmem:[%s2744 + $0x58] sm:$0xff]
      %v2755 = vld [vmem:[%s2744 + $0x60] sm:$0xff]
      %v2756 = vld [vmem:[%s2744 + $0x68] sm:$0xff]
      %v2757 = vld [vmem:[%s2744 + $0x78] sm:$0xff]
      %v2758 = vld [vmem:[%s2744 + $0x80] sm:$0xff]
      %v2759 = vld [vmem:[%s2744 + $0x88] sm:$0xff]
      %v2760 = vld [vmem:[%s2744 + $0x90] sm:$0xff]
      %v2761 = vld [vmem:[%s2744 + $0xa0] sm:$0xff]
      %v2762 = vld [vmem:[%s2744 + $0xa8] sm:$0xff]
      %v2763 = vld [vmem:[%s2744 + $0xb0] sm:$0xff]
      %v2764 = vld [vmem:[%s2744 + $0xb8] sm:$0xff]
      %v2765 = vld [vmem:[%s2744 + $0xc8] sm:$0xff]
      %v2766 = vld [vmem:[%s2744 + $0xd0] sm:$0xff]
      %v2767 = vld [vmem:[%s2744 + $0xd8] sm:$0xff]
      %v2768 = vld [vmem:[%s2744 + $0xe0] sm:$0xff]
      %v2769 = vld [vmem:[%s2744 + $0xf0] sm:$0xff]
      %v2770 = vld [vmem:[%s2744 + $0xf8] sm:$0xff]
      %v2771 = vld [vmem:[%s2744 + $0x100] sm:$0xff]
      %v2772 = vld [vmem:[%s2744 + $0x108] sm:$0xff]
      %v2773 = vld [vmem:[%s2744 + $0x118] sm:$0xff]
      %v2774 = vld [vmem:[%s2744 + $0x120] sm:$0xff]
      %v2775 = vld [vmem:[%s2744 + $0x128] sm:$0xff]
      %v2776 = vld [vmem:[%s2744 + $0x130] sm:$0xff]
      %v2777 = vmax.f32 %v2712, %v2745
      %v2778 = vmax.f32 %v2713, %v2746
      %v2779 = vmax.f32 %v2714, %v2747
      %v2780 = vmax.f32 %v2715, %v2748
      %v2781 = vmax.f32 %v2716, %v2749
      %v2782 = vmax.f32 %v2717, %v2750
      %v2783 = vmax.f32 %v2718, %v2751
      %v2784 = vmax.f32 %v2719, %v2752
      %v2785 = vmax.f32 %v2720, %v2753
      %v2786 = vmax.f32 %v2721, %v2754
      %v2787 = vmax.f32 %v2722, %v2755
      %v2788 = vmax.f32 %v2723, %v2756
      %v2789 = vmax.f32 %v2724, %v2757
      %v2790 = vmax.f32 %v2725, %v2758
      %v2791 = vmax.f32 %v2726, %v2759
      %v2792 = vmax.f32 %v2727, %v2760
      %v2793 = vmax.f32 %v2728, %v2761
      %v2794 = vmax.f32 %v2729, %v2762
      %v2795 = vmax.f32 %v2730, %v2763
      %v2796 = vmax.f32 %v2731, %v2764
      %v2797 = vmax.f32 %v2732, %v2765
      %v2798 = vmax.f32 %v2733, %v2766
      %v2799 = vmax.f32 %v2734, %v2767
      %v2800 = vmax.f32 %v2735, %v2768
      %v2801 = vmax.f32 %v2736, %v2769
      %v2802 = vmax.f32 %v2737, %v2770
      %v2803 = vmax.f32 %v2738, %v2771
      %v2804 = vmax.f32 %v2739, %v2772
      %v2805 = vmax.f32 %v2740, %v2773
      %v2806 = vmax.f32 %v2741, %v2774
      %v2807 = vmax.f32 %v2742, %v2775
      %v2808 = vmax.f32 %v2743, %v2776
      %v2809 = vld [vmem:[%s2744 + $0x1] sm:$0xff]
      %v2810 = vld [vmem:[%s2744 + $0x9] sm:$0xff]
      %v2811 = vld [vmem:[%s2744 + $0x11] sm:$0xff]
      %v2812 = vld [vmem:[%s2744 + $0x19] sm:$0xff]
      %v2813 = vld [vmem:[%s2744 + $0x29] sm:$0xff]
      %v2814 = vld [vmem:[%s2744 + $0x31] sm:$0xff]
      %v2815 = vld [vmem:[%s2744 + $0x39] sm:$0xff]
      %v2816 = vld [vmem:[%s2744 + $0x41] sm:$0xff]
      %v2817 = vld [vmem:[%s2744 + $0x51] sm:$0xff]
      %v2818 = vld [vmem:[%s2744 + $0x59] sm:$0xff]
      %v2819 = vld [vmem:[%s2744 + $0x61] sm:$0xff]
      %v2820 = vld [vmem:[%s2744 + $0x69] sm:$0xff]
      %v2821 = vld [vmem:[%s2744 + $0x79] sm:$0xff]
      %v2822 = vld [vmem:[%s2744 + $0x81] sm:$0xff]
      %v2823 = vld [vmem:[%s2744 + $0x89] sm:$0xff]
      %v2824 = vld [vmem:[%s2744 + $0x91] sm:$0xff]
      %v2825 = vld [vmem:[%s2744 + $0xa1] sm:$0xff]
      %v2826 = vld [vmem:[%s2744 + $0xa9] sm:$0xff]
      %v2827 = vld [vmem:[%s2744 + $0xb1] sm:$0xff]
      %v2828 = vld [vmem:[%s2744 + $0xb9] sm:$0xff]
      %v2829 = vld [vmem:[%s2744 + $0xc9] sm:$0xff]
      %v2830 = vld [vmem:[%s2744 + $0xd1] sm:$0xff]
      %v2831 = vld [vmem:[%s2744 + $0xd9] sm:$0xff]
      %v2832 = vld [vmem:[%s2744 + $0xe1] sm:$0xff]
      %v2833 = vld [vmem:[%s2744 + $0xf1] sm:$0xff]
      %v2834 = vld [vmem:[%s2744 + $0xf9] sm:$0xff]
      %v2835 = vld [vmem:[%s2744 + $0x101] sm:$0xff]
      %v2836 = vld [vmem:[%s2744 + $0x109] sm:$0xff]
      %v2837 = vld [vmem:[%s2744 + $0x119] sm:$0xff]
      %v2838 = vld [vmem:[%s2744 + $0x121] sm:$0xff]
      %v2839 = vld [vmem:[%s2744 + $0x129] sm:$0xff]
      %v2840 = vld [vmem:[%s2744 + $0x131] sm:$0xff]
      %v2841 = vmax.f32 %v2777, %v2809
      %v2842 = vmax.f32 %v2778, %v2810
      %v2843 = vmax.f32 %v2779, %v2811
      %v2844 = vmax.f32 %v2780, %v2812
      %v2845 = vmax.f32 %v2781, %v2813
      %v2846 = vmax.f32 %v2782, %v2814
      %v2847 = vmax.f32 %v2783, %v2815
      %v2848 = vmax.f32 %v2784, %v2816
      %v2849 = vmax.f32 %v2785, %v2817
      %v2850 = vmax.f32 %v2786, %v2818
      %v2851 = vmax.f32 %v2787, %v2819
      %v2852 = vmax.f32 %v2788, %v2820
      %v2853 = vmax.f32 %v2789, %v2821
      %v2854 = vmax.f32 %v2790, %v2822
      %v2855 = vmax.f32 %v2791, %v2823
      %v2856 = vmax.f32 %v2792, %v2824
      %v2857 = vmax.f32 %v2793, %v2825
      %v2858 = vmax.f32 %v2794, %v2826
      %v2859 = vmax.f32 %v2795, %v2827
      %v2860 = vmax.f32 %v2796, %v2828
      %v2861 = vmax.f32 %v2797, %v2829
      %v2862 = vmax.f32 %v2798, %v2830
      %v2863 = vmax.f32 %v2799, %v2831
      %v2864 = vmax.f32 %v2800, %v2832
      %v2865 = vmax.f32 %v2801, %v2833
      %v2866 = vmax.f32 %v2802, %v2834
      %v2867 = vmax.f32 %v2803, %v2835
      %v2868 = vmax.f32 %v2804, %v2836
      %v2869 = vmax.f32 %v2805, %v2837
      %v2870 = vmax.f32 %v2806, %v2838
      %v2871 = vmax.f32 %v2807, %v2839
      %v2872 = vmax.f32 %v2808, %v2840
      %v2873 = vld [vmem:[%s2744 + $0x2] sm:$0xff]
      %v2874 = vld [vmem:[%s2744 + $0xa] sm:$0xff]
      %v2875 = vld [vmem:[%s2744 + $0x12] sm:$0xff]
      %v2876 = vld [vmem:[%s2744 + $0x1a] sm:$0xff]
      %v2877 = vld [vmem:[%s2744 + $0x2a] sm:$0xff]
      %v2878 = vld [vmem:[%s2744 + $0x32] sm:$0xff]
      %v2879 = vld [vmem:[%s2744 + $0x3a] sm:$0xff]
      %v2880 = vld [vmem:[%s2744 + $0x42] sm:$0xff]
      %v2881 = vld [vmem:[%s2744 + $0x52] sm:$0xff]
      %v2882 = vld [vmem:[%s2744 + $0x5a] sm:$0xff]
      %v2883 = vld [vmem:[%s2744 + $0x62] sm:$0xff]
      %v2884 = vld [vmem:[%s2744 + $0x6a] sm:$0xff]
      %v2885 = vld [vmem:[%s2744 + $0x7a] sm:$0xff]
      %v2886 = vld [vmem:[%s2744 + $0x82] sm:$0xff]
      %v2887 = vld [vmem:[%s2744 + $0x8a] sm:$0xff]
      %v2888 = vld [vmem:[%s2744 + $0x92] sm:$0xff]
      %v2889 = vld [vmem:[%s2744 + $0xa2] sm:$0xff]
      %v2890 = vld [vmem:[%s2744 + $0xaa] sm:$0xff]
      %v2891 = vld [vmem:[%s2744 + $0xb2] sm:$0xff]
      %v2892 = vld [vmem:[%s2744 + $0xba] sm:$0xff]
      %v2893 = vld [vmem:[%s2744 + $0xca] sm:$0xff]
      %v2894 = vld [vmem:[%s2744 + $0xd2] sm:$0xff]
      %v2895 = vld [vmem:[%s2744 + $0xda] sm:$0xff]
      %v2896 = vld [vmem:[%s2744 + $0xe2] sm:$0xff]
      %v2897 = vld [vmem:[%s2744 + $0xf2] sm:$0xff]
      %v2898 = vld [vmem:[%s2744 + $0xfa] sm:$0xff]
      %v2899 = vld [vmem:[%s2744 + $0x102] sm:$0xff]
      %v2900 = vld [vmem:[%s2744 + $0x10a] sm:$0xff]
      %v2901 = vld [vmem:[%s2744 + $0x11a] sm:$0xff]
      %v2902 = vld [vmem:[%s2744 + $0x122] sm:$0xff]
      %v2903 = vld [vmem:[%s2744 + $0x12a] sm:$0xff]
      %v2904 = vld [vmem:[%s2744 + $0x132] sm:$0xff]
      %v2905 = vmax.f32 %v2841, %v2873
      %v2906 = vmax.f32 %v2842, %v2874
      %v2907 = vmax.f32 %v2843, %v2875
      %v2908 = vmax.f32 %v2844, %v2876
      %v2909 = vmax.f32 %v2845, %v2877
      %v2910 = vmax.f32 %v2846, %v2878
      %v2911 = vmax.f32 %v2847, %v2879
      %v2912 = vmax.f32 %v2848, %v2880
      %v2913 = vmax.f32 %v2849, %v2881
      %v2914 = vmax.f32 %v2850, %v2882
      %v2915 = vmax.f32 %v2851, %v2883
      %v2916 = vmax.f32 %v2852, %v2884
      %v2917 = vmax.f32 %v2853, %v2885
      %v2918 = vmax.f32 %v2854, %v2886
      %v2919 = vmax.f32 %v2855, %v2887
      %v2920 = vmax.f32 %v2856, %v2888
      %v2921 = vmax.f32 %v2857, %v2889
      %v2922 = vmax.f32 %v2858, %v2890
      %v2923 = vmax.f32 %v2859, %v2891
      %v2924 = vmax.f32 %v2860, %v2892
      %v2925 = vmax.f32 %v2861, %v2893
      %v2926 = vmax.f32 %v2862, %v2894
      %v2927 = vmax.f32 %v2863, %v2895
      %v2928 = vmax.f32 %v2864, %v2896
      %v2929 = vmax.f32 %v2865, %v2897
      %v2930 = vmax.f32 %v2866, %v2898
      %v2931 = vmax.f32 %v2867, %v2899
      %v2932 = vmax.f32 %v2868, %v2900
      %v2933 = vmax.f32 %v2869, %v2901
      %v2934 = vmax.f32 %v2870, %v2902
      %v2935 = vmax.f32 %v2871, %v2903
      %v2936 = vmax.f32 %v2872, %v2904
      %s2937 = scalar_lea.vmem [#allocation2], 720
      %v2938 = vld [vmem:[%s2937] sm:$0xff]
      %v2939 = vld [vmem:[%s2937 + $0x8] sm:$0xff]
      %v2940 = vld [vmem:[%s2937 + $0x10] sm:$0xff]
      %v2941 = vld [vmem:[%s2937 + $0x18] sm:$0xff]
      %v2942 = vld [vmem:[%s2937 + $0x28] sm:$0xff]
      %v2943 = vld [vmem:[%s2937 + $0x30] sm:$0xff]
      %v2944 = vld [vmem:[%s2937 + $0x38] sm:$0xff]
      %v2945 = vld [vmem:[%s2937 + $0x40] sm:$0xff]
      %v2946 = vld [vmem:[%s2937 + $0x50] sm:$0xff]
      %v2947 = vld [vmem:[%s2937 + $0x58] sm:$0xff]
      %v2948 = vld [vmem:[%s2937 + $0x60] sm:$0xff]
      %v2949 = vld [vmem:[%s2937 + $0x68] sm:$0xff]
      %v2950 = vld [vmem:[%s2937 + $0x78] sm:$0xff]
      %v2951 = vld [vmem:[%s2937 + $0x80] sm:$0xff]
      %v2952 = vld [vmem:[%s2937 + $0x88] sm:$0xff]
      %v2953 = vld [vmem:[%s2937 + $0x90] sm:$0xff]
      %v2954 = vld [vmem:[%s2937 + $0xa0] sm:$0xff]
      %v2955 = vld [vmem:[%s2937 + $0xa8] sm:$0xff]
      %v2956 = vld [vmem:[%s2937 + $0xb0] sm:$0xff]
      %v2957 = vld [vmem:[%s2937 + $0xb8] sm:$0xff]
      %v2958 = vld [vmem:[%s2937 + $0xc8] sm:$0xff]
      %v2959 = vld [vmem:[%s2937 + $0xd0] sm:$0xff]
      %v2960 = vld [vmem:[%s2937 + $0xd8] sm:$0xff]
      %v2961 = vld [vmem:[%s2937 + $0xe0] sm:$0xff]
      %v2962 = vld [vmem:[%s2937 + $0xf0] sm:$0xff]
      %v2963 = vld [vmem:[%s2937 + $0xf8] sm:$0xff]
      %v2964 = vld [vmem:[%s2937 + $0x100] sm:$0xff]
      %v2965 = vld [vmem:[%s2937 + $0x108] sm:$0xff]
      %v2966 = vld [vmem:[%s2937 + $0x118] sm:$0xff]
      %v2967 = vld [vmem:[%s2937 + $0x120] sm:$0xff]
      %v2968 = vld [vmem:[%s2937 + $0x128] sm:$0xff]
      %v2969 = vld [vmem:[%s2937 + $0x130] sm:$0xff]
      %v2970 = vmax.f32 %v2905, %v2938
      %v2971 = vmax.f32 %v2906, %v2939
      %v2972 = vmax.f32 %v2907, %v2940
      %v2973 = vmax.f32 %v2908, %v2941
      %v2974 = vmax.f32 %v2909, %v2942
      %v2975 = vmax.f32 %v2910, %v2943
      %v2976 = vmax.f32 %v2911, %v2944
      %v2977 = vmax.f32 %v2912, %v2945
      %v2978 = vmax.f32 %v2913, %v2946
      %v2979 = vmax.f32 %v2914, %v2947
      %v2980 = vmax.f32 %v2915, %v2948
      %v2981 = vmax.f32 %v2916, %v2949
      %v2982 = vmax.f32 %v2917, %v2950
      %v2983 = vmax.f32 %v2918, %v2951
      %v2984 = vmax.f32 %v2919, %v2952
      %v2985 = vmax.f32 %v2920, %v2953
      %v2986 = vmax.f32 %v2921, %v2954
      %v2987 = vmax.f32 %v2922, %v2955
      %v2988 = vmax.f32 %v2923, %v2956
      %v2989 = vmax.f32 %v2924, %v2957
      %v2990 = vmax.f32 %v2925, %v2958
      %v2991 = vmax.f32 %v2926, %v2959
      %v2992 = vmax.f32 %v2927, %v2960
      %v2993 = vmax.f32 %v2928, %v2961
      %v2994 = vmax.f32 %v2929, %v2962
      %v2995 = vmax.f32 %v2930, %v2963
      %v2996 = vmax.f32 %v2931, %v2964
      %v2997 = vmax.f32 %v2932, %v2965
      %v2998 = vmax.f32 %v2933, %v2966
      %v2999 = vmax.f32 %v2934, %v2967
      %v3000 = vmax.f32 %v2935, %v2968
      %v3001 = vmax.f32 %v2936, %v2969
      %v3002 = vld [vmem:[%s2937 + $0x1] sm:$0xff]
      %v3003 = vld [vmem:[%s2937 + $0x9] sm:$0xff]
      %v3004 = vld [vmem:[%s2937 + $0x11] sm:$0xff]
      %v3005 = vld [vmem:[%s2937 + $0x19] sm:$0xff]
      %v3006 = vld [vmem:[%s2937 + $0x29] sm:$0xff]
      %v3007 = vld [vmem:[%s2937 + $0x31] sm:$0xff]
      %v3008 = vld [vmem:[%s2937 + $0x39] sm:$0xff]
      %v3009 = vld [vmem:[%s2937 + $0x41] sm:$0xff]
      %v3010 = vld [vmem:[%s2937 + $0x51] sm:$0xff]
      %v3011 = vld [vmem:[%s2937 + $0x59] sm:$0xff]
      %v3012 = vld [vmem:[%s2937 + $0x61] sm:$0xff]
      %v3013 = vld [vmem:[%s2937 + $0x69] sm:$0xff]
      %v3014 = vld [vmem:[%s2937 + $0x79] sm:$0xff]
      %v3015 = vld [vmem:[%s2937 + $0x81] sm:$0xff]
      %v3016 = vld [vmem:[%s2937 + $0x89] sm:$0xff]
      %v3017 = vld [vmem:[%s2937 + $0x91] sm:$0xff]
      %v3018 = vld [vmem:[%s2937 + $0xa1] sm:$0xff]
      %v3019 = vld [vmem:[%s2937 + $0xa9] sm:$0xff]
      %v3020 = vld [vmem:[%s2937 + $0xb1] sm:$0xff]
      %v3021 = vld [vmem:[%s2937 + $0xb9] sm:$0xff]
      %v3022 = vld [vmem:[%s2937 + $0xc9] sm:$0xff]
      %v3023 = vld [vmem:[%s2937 + $0xd1] sm:$0xff]
      %v3024 = vld [vmem:[%s2937 + $0xd9] sm:$0xff]
      %v3025 = vld [vmem:[%s2937 + $0xe1] sm:$0xff]
      %v3026 = vld [vmem:[%s2937 + $0xf1] sm:$0xff]
      %v3027 = vld [vmem:[%s2937 + $0xf9] sm:$0xff]
      %v3028 = vld [vmem:[%s2937 + $0x101] sm:$0xff]
      %v3029 = vld [vmem:[%s2937 + $0x109] sm:$0xff]
      %v3030 = vld [vmem:[%s2937 + $0x119] sm:$0xff]
      %v3031 = vld [vmem:[%s2937 + $0x121] sm:$0xff]
      %v3032 = vld [vmem:[%s2937 + $0x129] sm:$0xff]
      %v3033 = vld [vmem:[%s2937 + $0x131] sm:$0xff]
      %v3034 = vmax.f32 %v2970, %v3002
      %v3035 = vmax.f32 %v2971, %v3003
      %v3036 = vmax.f32 %v2972, %v3004
      %v3037 = vmax.f32 %v2973, %v3005
      %v3038 = vmax.f32 %v2974, %v3006
      %v3039 = vmax.f32 %v2975, %v3007
      %v3040 = vmax.f32 %v2976, %v3008
      %v3041 = vmax.f32 %v2977, %v3009
      %v3042 = vmax.f32 %v2978, %v3010
      %v3043 = vmax.f32 %v2979, %v3011
      %v3044 = vmax.f32 %v2980, %v3012
      %v3045 = vmax.f32 %v2981, %v3013
      %v3046 = vmax.f32 %v2982, %v3014
      %v3047 = vmax.f32 %v2983, %v3015
      %v3048 = vmax.f32 %v2984, %v3016
      %v3049 = vmax.f32 %v2985, %v3017
      %v3050 = vmax.f32 %v2986, %v3018
      %v3051 = vmax.f32 %v2987, %v3019
      %v3052 = vmax.f32 %v2988, %v3020
      %v3053 = vmax.f32 %v2989, %v3021
      %v3054 = vmax.f32 %v2990, %v3022
      %v3055 = vmax.f32 %v2991, %v3023
      %v3056 = vmax.f32 %v2992, %v3024
      %v3057 = vmax.f32 %v2993, %v3025
      %v3058 = vmax.f32 %v2994, %v3026
      %v3059 = vmax.f32 %v2995, %v3027
      %v3060 = vmax.f32 %v2996, %v3028
      %v3061 = vmax.f32 %v2997, %v3029
      %v3062 = vmax.f32 %v2998, %v3030
      %v3063 = vmax.f32 %v2999, %v3031
      %v3064 = vmax.f32 %v3000, %v3032
      %v3065 = vmax.f32 %v3001, %v3033
      %v3066 = vld [vmem:[%s2937 + $0x2] sm:$0xff]
      %v3067 = vld [vmem:[%s2937 + $0xa] sm:$0xff]
      %v3068 = vld [vmem:[%s2937 + $0x12] sm:$0xff]
      %v3069 = vld [vmem:[%s2937 + $0x1a] sm:$0xff]
      %v3070 = vld [vmem:[%s2937 + $0x2a] sm:$0xff]
      %v3071 = vld [vmem:[%s2937 + $0x32] sm:$0xff]
      %v3072 = vld [vmem:[%s2937 + $0x3a] sm:$0xff]
      %v3073 = vld [vmem:[%s2937 + $0x42] sm:$0xff]
      %v3074 = vld [vmem:[%s2937 + $0x52] sm:$0xff]
      %v3075 = vld [vmem:[%s2937 + $0x5a] sm:$0xff]
      %v3076 = vld [vmem:[%s2937 + $0x62] sm:$0xff]
      %v3077 = vld [vmem:[%s2937 + $0x6a] sm:$0xff]
      %v3078 = vld [vmem:[%s2937 + $0x7a] sm:$0xff]
      %v3079 = vld [vmem:[%s2937 + $0x82] sm:$0xff]
      %v3080 = vld [vmem:[%s2937 + $0x8a] sm:$0xff]
      %v3081 = vld [vmem:[%s2937 + $0x92] sm:$0xff]
      %v3082 = vld [vmem:[%s2937 + $0xa2] sm:$0xff]
      %v3083 = vld [vmem:[%s2937 + $0xaa] sm:$0xff]
      %v3084 = vld [vmem:[%s2937 + $0xb2] sm:$0xff]
      %v3085 = vld [vmem:[%s2937 + $0xba] sm:$0xff]
      %v3086 = vld [vmem:[%s2937 + $0xca] sm:$0xff]
      %v3087 = vld [vmem:[%s2937 + $0xd2] sm:$0xff]
      %v3088 = vld [vmem:[%s2937 + $0xda] sm:$0xff]
      %v3089 = vld [vmem:[%s2937 + $0xe2] sm:$0xff]
      %v3090 = vld [vmem:[%s2937 + $0xf2] sm:$0xff]
      %v3091 = vld [vmem:[%s2937 + $0xfa] sm:$0xff]
      %v3092 = vld [vmem:[%s2937 + $0x102] sm:$0xff]
      %v3093 = vld [vmem:[%s2937 + $0x10a] sm:$0xff]
      %v3094 = vld [vmem:[%s2937 + $0x11a] sm:$0xff]
      %v3095 = vld [vmem:[%s2937 + $0x122] sm:$0xff]
      %v3096 = vld [vmem:[%s2937 + $0x12a] sm:$0xff]
      %v3097 = vld [vmem:[%s2937 + $0x132] sm:$0xff]
      %v3098 = vmax.f32 %v3034, %v3066
      %v3099 = vmax.f32 %v3035, %v3067
      %v3100 = vmax.f32 %v3036, %v3068
      %v3101 = vmax.f32 %v3037, %v3069
      %v3102 = vmax.f32 %v3038, %v3070
      %v3103 = vmax.f32 %v3039, %v3071
      %v3104 = vmax.f32 %v3040, %v3072
      %v3105 = vmax.f32 %v3041, %v3073
      %v3106 = vmax.f32 %v3042, %v3074
      %v3107 = vmax.f32 %v3043, %v3075
      %v3108 = vmax.f32 %v3044, %v3076
      %v3109 = vmax.f32 %v3045, %v3077
      %v3110 = vmax.f32 %v3046, %v3078
      %v3111 = vmax.f32 %v3047, %v3079
      %v3112 = vmax.f32 %v3048, %v3080
      %v3113 = vmax.f32 %v3049, %v3081
      %v3114 = vmax.f32 %v3050, %v3082
      %v3115 = vmax.f32 %v3051, %v3083
      %v3116 = vmax.f32 %v3052, %v3084
      %v3117 = vmax.f32 %v3053, %v3085
      %v3118 = vmax.f32 %v3054, %v3086
      %v3119 = vmax.f32 %v3055, %v3087
      %v3120 = vmax.f32 %v3056, %v3088
      %v3121 = vmax.f32 %v3057, %v3089
      %v3122 = vmax.f32 %v3058, %v3090
      %v3123 = vmax.f32 %v3059, %v3091
      %v3124 = vmax.f32 %v3060, %v3092
      %v3125 = vmax.f32 %v3061, %v3093
      %v3126 = vmax.f32 %v3062, %v3094
      %v3127 = vmax.f32 %v3063, %v3095
      %v3128 = vmax.f32 %v3064, %v3096
      %v3129 = vmax.f32 %v3065, %v3097
      %v3130 = vpack.c.bf16 %v3099, %v3098
      %v3131 = vpack.c.bf16 %v3101, %v3100
      %v3132 = vpack.c.bf16 %v3103, %v3102
      %v3133 = vpack.c.bf16 %v3105, %v3104
      %v3134 = vpack.c.bf16 %v3107, %v3106
      %v3135 = vpack.c.bf16 %v3109, %v3108
      %v3136 = vpack.c.bf16 %v3111, %v3110
      %v3137 = vpack.c.bf16 %v3113, %v3112
      %v3138 = vpack.c.bf16 %v3115, %v3114
      %v3139 = vpack.c.bf16 %v3117, %v3116
      %v3140 = vpack.c.bf16 %v3119, %v3118
      %v3141 = vpack.c.bf16 %v3121, %v3120
      %v3142 = vpack.c.bf16 %v3123, %v3122
      %v3143 = vpack.c.bf16 %v3125, %v3124
      %v3144 = vpack.c.bf16 %v3127, %v3126
      %v3145 = vpack.c.bf16 %v3129, %v3128
      %v3162 = vunpack.c.l.b16 %v3130
      %v3163 = vunpack.c.h.b16 %v3130
      %v3164 = vunpack.c.l.b16 %v3131
      %v3165 = vunpack.c.h.b16 %v3131
      %v3166 = vunpack.c.l.b16 %v3132
      %v3167 = vunpack.c.h.b16 %v3132
      %v3168 = vunpack.c.l.b16 %v3133
      %v3169 = vunpack.c.h.b16 %v3133
      %v3170 = vunpack.c.l.b16 %v3134
      %v3171 = vunpack.c.h.b16 %v3134
      %v3172 = vunpack.c.l.b16 %v3135
      %v3173 = vunpack.c.h.b16 %v3135
      %v3174 = vunpack.c.l.b16 %v3136
      %v3175 = vunpack.c.h.b16 %v3136
      %v3176 = vunpack.c.l.b16 %v3137
      %v3177 = vunpack.c.h.b16 %v3137
      %v3178 = vunpack.c.l.b16 %v3138
      %v3179 = vunpack.c.h.b16 %v3138
      %v3180 = vunpack.c.l.b16 %v3139
      %v3181 = vunpack.c.h.b16 %v3139
      %v3182 = vunpack.c.l.b16 %v3140
      %v3183 = vunpack.c.h.b16 %v3140
      %v3184 = vunpack.c.l.b16 %v3141
      %v3185 = vunpack.c.h.b16 %v3141
      %v3186 = vunpack.c.l.b16 %v3142
      %v3187 = vunpack.c.h.b16 %v3142
      %v3188 = vunpack.c.l.b16 %v3143
      %v3189 = vunpack.c.h.b16 %v3143
      %v3190 = vunpack.c.l.b16 %v3144
      %v3191 = vunpack.c.h.b16 %v3144
      %v3192 = vunpack.c.l.b16 %v3145
      %v3193 = vunpack.c.h.b16 %v3145
      %v3194 = vpack.c.b16 %v3162, %v3162
      %v3195 = vpack.c.b16 %v3163, %v3163
      %v3196 = vpack.c.b16 %v3164, %v3164
      %v3197 = vpack.c.b16 %v3165, %v3165
      %v3198 = vpack.c.b16 %v3166, %v3166
      %v3199 = vpack.c.b16 %v3167, %v3167
      %v3200 = vpack.c.b16 %v3168, %v3168
      %v3201 = vpack.c.b16 %v3169, %v3169
      %v3202 = vpack.c.b16 %v3170, %v3170
      %v3203 = vpack.c.b16 %v3171, %v3171
      %v3204 = vpack.c.b16 %v3172, %v3172
      %v3205 = vpack.c.b16 %v3173, %v3173
      %v3206 = vpack.c.b16 %v3174, %v3174
      %v3207 = vpack.c.b16 %v3175, %v3175
      %v3208 = vpack.c.b16 %v3176, %v3176
      %v3209 = vpack.c.b16 %v3177, %v3177
      %v3210 = vpack.c.b16 %v3178, %v3178
      %v3211 = vpack.c.b16 %v3179, %v3179
      %v3212 = vpack.c.b16 %v3180, %v3180
      %v3213 = vpack.c.b16 %v3181, %v3181
      %v3214 = vpack.c.b16 %v3182, %v3182
      %v3215 = vpack.c.b16 %v3183, %v3183
      %v3216 = vpack.c.b16 %v3184, %v3184
      %v3217 = vpack.c.b16 %v3185, %v3185
      %v3218 = vpack.c.b16 %v3186, %v3186
      %v3219 = vpack.c.b16 %v3187, %v3187
      %v3220 = vpack.c.b16 %v3188, %v3188
      %v3221 = vpack.c.b16 %v3189, %v3189
      %v3222 = vpack.c.b16 %v3190, %v3190
      %v3223 = vpack.c.b16 %v3191, %v3191
      %v3224 = vpack.c.b16 %v3192, %v3192
      %v3225 = vpack.c.b16 %v3193, %v3193
      %s3258 = scalar_lea.vmem %s170, 256
      %3259 = vst [vmem:[%s3258] sm:$0xf] %v3194
      %3260 = vst [vmem:[%s3258 + $0x4] sm:$0xf] %v3195
      %3261 = vst [vmem:[%s3258 + $0x8] sm:$0xf] %v3196
      %3262 = vst [vmem:[%s3258 + $0xc] sm:$0xf] %v3197
      %3263 = vst [vmem:[%s3258 + $0x10] sm:$0xf] %v3198
      %3264 = vst [vmem:[%s3258 + $0x14] sm:$0xf] %v3199
      %3265 = vst [vmem:[%s3258 + $0x18] sm:$0xf] %v3200
      %3266 = vst [vmem:[%s3258 + $0x1c] sm:$0xf] %v3201
      %3267 = vst [vmem:[%s3258 + $0x20] sm:$0xf] %v3202
      %3268 = vst [vmem:[%s3258 + $0x24] sm:$0xf] %v3203
      %3269 = vst [vmem:[%s3258 + $0x28] sm:$0xf] %v3204
      %3270 = vst [vmem:[%s3258 + $0x2c] sm:$0xf] %v3205
      %3271 = vst [vmem:[%s3258 + $0x30] sm:$0xf] %v3206
      %3272 = vst [vmem:[%s3258 + $0x34] sm:$0xf] %v3207
      %3273 = vst [vmem:[%s3258 + $0x38] sm:$0xf] %v3208
      %3274 = vst [vmem:[%s3258 + $0x3c] sm:$0xf] %v3209
      %3275 = vst [vmem:[%s3258 + $0x40] sm:$0xf] %v3210
      %3276 = vst [vmem:[%s3258 + $0x44] sm:$0xf] %v3211
      %3277 = vst [vmem:[%s3258 + $0x48] sm:$0xf] %v3212
      %3278 = vst [vmem:[%s3258 + $0x4c] sm:$0xf] %v3213
      %3279 = vst [vmem:[%s3258 + $0x50] sm:$0xf] %v3214
      %3280 = vst [vmem:[%s3258 + $0x54] sm:$0xf] %v3215
      %3281 = vst [vmem:[%s3258 + $0x58] sm:$0xf] %v3216
      %3282 = vst [vmem:[%s3258 + $0x5c] sm:$0xf] %v3217
      %3283 = vst [vmem:[%s3258 + $0x60] sm:$0xf] %v3218
      %3284 = vst [vmem:[%s3258 + $0x64] sm:$0xf] %v3219
      %3285 = vst [vmem:[%s3258 + $0x68] sm:$0xf] %v3220
      %3286 = vst [vmem:[%s3258 + $0x6c] sm:$0xf] %v3221
      %3287 = vst [vmem:[%s3258 + $0x70] sm:$0xf] %v3222
      %3288 = vst [vmem:[%s3258 + $0x74] sm:$0xf] %v3223
      %3289 = vst [vmem:[%s3258 + $0x78] sm:$0xf] %v3224
      %3290 = vst [vmem:[%s3258 + $0x7c] sm:$0xf] %v3225
      %v3291 = vld [vmem:[%s1138] sm:$0xff]
      %v3292 = vld [vmem:[%s1138 + $0x8] sm:$0xff]
      %v3293 = vld [vmem:[%s1138 + $0x10] sm:$0xff]
      %v3294 = vld [vmem:[%s1138 + $0x18] sm:$0xff]
      %v3295 = vld [vmem:[%s1138 + $0x28] sm:$0xff]
      %v3296 = vld [vmem:[%s1138 + $0x30] sm:$0xff]
      %v3297 = vld [vmem:[%s1138 + $0x38] sm:$0xff]
      %v3298 = vld [vmem:[%s1138 + $0x40] sm:$0xff]
      %v3299 = vld [vmem:[%s1138 + $0x50] sm:$0xff]
      %v3300 = vld [vmem:[%s1138 + $0x58] sm:$0xff]
      %v3301 = vld [vmem:[%s1138 + $0x60] sm:$0xff]
      %v3302 = vld [vmem:[%s1138 + $0x68] sm:$0xff]
      %v3303 = vld [vmem:[%s1138 + $0x78] sm:$0xff]
      %v3304 = vld [vmem:[%s1138 + $0x80] sm:$0xff]
      %v3305 = vld [vmem:[%s1138 + $0x88] sm:$0xff]
      %v3306 = vld [vmem:[%s1138 + $0x90] sm:$0xff]
      %v3307 = vld [vmem:[%s1138 + $0xa0] sm:$0xff]
      %v3308 = vld [vmem:[%s1138 + $0xa8] sm:$0xff]
      %v3309 = vld [vmem:[%s1138 + $0xb0] sm:$0xff]
      %v3310 = vld [vmem:[%s1138 + $0xb8] sm:$0xff]
      %v3311 = vld [vmem:[%s1138 + $0xc8] sm:$0xff]
      %v3312 = vld [vmem:[%s1138 + $0xd0] sm:$0xff]
      %v3313 = vld [vmem:[%s1138 + $0xd8] sm:$0xff]
      %v3314 = vld [vmem:[%s1138 + $0xe0] sm:$0xff]
      %v3315 = vld [vmem:[%s1138 + $0xf0] sm:$0xff]
      %v3316 = vld [vmem:[%s1138 + $0xf8] sm:$0xff]
      %v3317 = vld [vmem:[%s1138 + $0x100] sm:$0xff]
      %v3318 = vld [vmem:[%s1138 + $0x108] sm:$0xff]
      %v3319 = vld [vmem:[%s1138 + $0x118] sm:$0xff]
      %v3320 = vld [vmem:[%s1138 + $0x120] sm:$0xff]
      %v3321 = vld [vmem:[%s1138 + $0x128] sm:$0xff]
      %v3322 = vld [vmem:[%s1138 + $0x130] sm:$0xff]
      %v3323 = vld [vmem:[%s1138 + $0x1] sm:$0xff]
      %v3324 = vld [vmem:[%s1138 + $0x9] sm:$0xff]
      %v3325 = vld [vmem:[%s1138 + $0x11] sm:$0xff]
      %v3326 = vld [vmem:[%s1138 + $0x19] sm:$0xff]
      %v3327 = vld [vmem:[%s1138 + $0x29] sm:$0xff]
      %v3328 = vld [vmem:[%s1138 + $0x31] sm:$0xff]
      %v3329 = vld [vmem:[%s1138 + $0x39] sm:$0xff]
      %v3330 = vld [vmem:[%s1138 + $0x41] sm:$0xff]
      %v3331 = vld [vmem:[%s1138 + $0x51] sm:$0xff]
      %v3332 = vld [vmem:[%s1138 + $0x59] sm:$0xff]
      %v3333 = vld [vmem:[%s1138 + $0x61] sm:$0xff]
      %v3334 = vld [vmem:[%s1138 + $0x69] sm:$0xff]
      %v3335 = vld [vmem:[%s1138 + $0x79] sm:$0xff]
      %v3336 = vld [vmem:[%s1138 + $0x81] sm:$0xff]
      %v3337 = vld [vmem:[%s1138 + $0x89] sm:$0xff]
      %v3338 = vld [vmem:[%s1138 + $0x91] sm:$0xff]
      %v3339 = vld [vmem:[%s1138 + $0xa1] sm:$0xff]
      %v3340 = vld [vmem:[%s1138 + $0xa9] sm:$0xff]
      %v3341 = vld [vmem:[%s1138 + $0xb1] sm:$0xff]
      %v3342 = vld [vmem:[%s1138 + $0xb9] sm:$0xff]
      %v3343 = vld [vmem:[%s1138 + $0xc9] sm:$0xff]
      %v3344 = vld [vmem:[%s1138 + $0xd1] sm:$0xff]
      %v3345 = vld [vmem:[%s1138 + $0xd9] sm:$0xff]
      %v3346 = vld [vmem:[%s1138 + $0xe1] sm:$0xff]
      %v3347 = vld [vmem:[%s1138 + $0xf1] sm:$0xff]
      %v3348 = vld [vmem:[%s1138 + $0xf9] sm:$0xff]
      %v3349 = vld [vmem:[%s1138 + $0x101] sm:$0xff]
      %v3350 = vld [vmem:[%s1138 + $0x109] sm:$0xff]
      %v3351 = vld [vmem:[%s1138 + $0x119] sm:$0xff]
      %v3352 = vld [vmem:[%s1138 + $0x121] sm:$0xff]
      %v3353 = vld [vmem:[%s1138 + $0x129] sm:$0xff]
      %v3354 = vld [vmem:[%s1138 + $0x131] sm:$0xff]
      %v3355 = vmax.f32 %v3291, %v3323
      %v3356 = vmax.f32 %v3292, %v3324
      %v3357 = vmax.f32 %v3293, %v3325
      %v3358 = vmax.f32 %v3294, %v3326
      %v3359 = vmax.f32 %v3295, %v3327
      %v3360 = vmax.f32 %v3296, %v3328
      %v3361 = vmax.f32 %v3297, %v3329
      %v3362 = vmax.f32 %v3298, %v3330
      %v3363 = vmax.f32 %v3299, %v3331
      %v3364 = vmax.f32 %v3300, %v3332
      %v3365 = vmax.f32 %v3301, %v3333
      %v3366 = vmax.f32 %v3302, %v3334
      %v3367 = vmax.f32 %v3303, %v3335
      %v3368 = vmax.f32 %v3304, %v3336
      %v3369 = vmax.f32 %v3305, %v3337
      %v3370 = vmax.f32 %v3306, %v3338
      %v3371 = vmax.f32 %v3307, %v3339
      %v3372 = vmax.f32 %v3308, %v3340
      %v3373 = vmax.f32 %v3309, %v3341
      %v3374 = vmax.f32 %v3310, %v3342
      %v3375 = vmax.f32 %v3311, %v3343
      %v3376 = vmax.f32 %v3312, %v3344
      %v3377 = vmax.f32 %v3313, %v3345
      %v3378 = vmax.f32 %v3314, %v3346
      %v3379 = vmax.f32 %v3315, %v3347
      %v3380 = vmax.f32 %v3316, %v3348
      %v3381 = vmax.f32 %v3317, %v3349
      %v3382 = vmax.f32 %v3318, %v3350
      %v3383 = vmax.f32 %v3319, %v3351
      %v3384 = vmax.f32 %v3320, %v3352
      %v3385 = vmax.f32 %v3321, %v3353
      %v3386 = vmax.f32 %v3322, %v3354
      %v3387 = vld [vmem:[%s1138 + $0x2] sm:$0xff]
      %v3388 = vld [vmem:[%s1138 + $0xa] sm:$0xff]
      %v3389 = vld [vmem:[%s1138 + $0x12] sm:$0xff]
      %v3390 = vld [vmem:[%s1138 + $0x1a] sm:$0xff]
      %v3391 = vld [vmem:[%s1138 + $0x2a] sm:$0xff]
      %v3392 = vld [vmem:[%s1138 + $0x32] sm:$0xff]
      %v3393 = vld [vmem:[%s1138 + $0x3a] sm:$0xff]
      %v3394 = vld [vmem:[%s1138 + $0x42] sm:$0xff]
      %v3395 = vld [vmem:[%s1138 + $0x52] sm:$0xff]
      %v3396 = vld [vmem:[%s1138 + $0x5a] sm:$0xff]
      %v3397 = vld [vmem:[%s1138 + $0x62] sm:$0xff]
      %v3398 = vld [vmem:[%s1138 + $0x6a] sm:$0xff]
      %v3399 = vld [vmem:[%s1138 + $0x7a] sm:$0xff]
      %v3400 = vld [vmem:[%s1138 + $0x82] sm:$0xff]
      %v3401 = vld [vmem:[%s1138 + $0x8a] sm:$0xff]
      %v3402 = vld [vmem:[%s1138 + $0x92] sm:$0xff]
      %v3403 = vld [vmem:[%s1138 + $0xa2] sm:$0xff]
      %v3404 = vld [vmem:[%s1138 + $0xaa] sm:$0xff]
      %v3405 = vld [vmem:[%s1138 + $0xb2] sm:$0xff]
      %v3406 = vld [vmem:[%s1138 + $0xba] sm:$0xff]
      %v3407 = vld [vmem:[%s1138 + $0xca] sm:$0xff]
      %v3408 = vld [vmem:[%s1138 + $0xd2] sm:$0xff]
      %v3409 = vld [vmem:[%s1138 + $0xda] sm:$0xff]
      %v3410 = vld [vmem:[%s1138 + $0xe2] sm:$0xff]
      %v3411 = vld [vmem:[%s1138 + $0xf2] sm:$0xff]
      %v3412 = vld [vmem:[%s1138 + $0xfa] sm:$0xff]
      %v3413 = vld [vmem:[%s1138 + $0x102] sm:$0xff]
      %v3414 = vld [vmem:[%s1138 + $0x10a] sm:$0xff]
      %v3415 = vld [vmem:[%s1138 + $0x11a] sm:$0xff]
      %v3416 = vld [vmem:[%s1138 + $0x122] sm:$0xff]
      %v3417 = vld [vmem:[%s1138 + $0x12a] sm:$0xff]
      %v3418 = vld [vmem:[%s1138 + $0x132] sm:$0xff]
      %v3419 = vmax.f32 %v3355, %v3387
      %v3420 = vmax.f32 %v3356, %v3388
      %v3421 = vmax.f32 %v3357, %v3389
      %v3422 = vmax.f32 %v3358, %v3390
      %v3423 = vmax.f32 %v3359, %v3391
      %v3424 = vmax.f32 %v3360, %v3392
      %v3425 = vmax.f32 %v3361, %v3393
      %v3426 = vmax.f32 %v3362, %v3394
      %v3427 = vmax.f32 %v3363, %v3395
      %v3428 = vmax.f32 %v3364, %v3396
      %v3429 = vmax.f32 %v3365, %v3397
      %v3430 = vmax.f32 %v3366, %v3398
      %v3431 = vmax.f32 %v3367, %v3399
      %v3432 = vmax.f32 %v3368, %v3400
      %v3433 = vmax.f32 %v3369, %v3401
      %v3434 = vmax.f32 %v3370, %v3402
      %v3435 = vmax.f32 %v3371, %v3403
      %v3436 = vmax.f32 %v3372, %v3404
      %v3437 = vmax.f32 %v3373, %v3405
      %v3438 = vmax.f32 %v3374, %v3406
      %v3439 = vmax.f32 %v3375, %v3407
      %v3440 = vmax.f32 %v3376, %v3408
      %v3441 = vmax.f32 %v3377, %v3409
      %v3442 = vmax.f32 %v3378, %v3410
      %v3443 = vmax.f32 %v3379, %v3411
      %v3444 = vmax.f32 %v3380, %v3412
      %v3445 = vmax.f32 %v3381, %v3413
      %v3446 = vmax.f32 %v3382, %v3414
      %v3447 = vmax.f32 %v3383, %v3415
      %v3448 = vmax.f32 %v3384, %v3416
      %v3449 = vmax.f32 %v3385, %v3417
      %v3450 = vmax.f32 %v3386, %v3418
      %s3451 = scalar_lea.vmem [#allocation2], 1000
      %v3452 = vld [vmem:[%s3451] sm:$0xff]
      %v3453 = vld [vmem:[%s3451 + $0x8] sm:$0xff]
      %v3454 = vld [vmem:[%s3451 + $0x10] sm:$0xff]
      %v3455 = vld [vmem:[%s3451 + $0x18] sm:$0xff]
      %v3456 = vld [vmem:[%s3451 + $0x28] sm:$0xff]
      %v3457 = vld [vmem:[%s3451 + $0x30] sm:$0xff]
      %v3458 = vld [vmem:[%s3451 + $0x38] sm:$0xff]
      %v3459 = vld [vmem:[%s3451 + $0x40] sm:$0xff]
      %v3460 = vld [vmem:[%s3451 + $0x50] sm:$0xff]
      %v3461 = vld [vmem:[%s3451 + $0x58] sm:$0xff]
      %v3462 = vld [vmem:[%s3451 + $0x60] sm:$0xff]
      %v3463 = vld [vmem:[%s3451 + $0x68] sm:$0xff]
      %v3464 = vld [vmem:[%s3451 + $0x78] sm:$0xff]
      %v3465 = vld [vmem:[%s3451 + $0x80] sm:$0xff]
      %v3466 = vld [vmem:[%s3451 + $0x88] sm:$0xff]
      %v3467 = vld [vmem:[%s3451 + $0x90] sm:$0xff]
      %v3468 = vld [vmem:[%s3451 + $0xa0] sm:$0xff]
      %v3469 = vld [vmem:[%s3451 + $0xa8] sm:$0xff]
      %v3470 = vld [vmem:[%s3451 + $0xb0] sm:$0xff]
      %v3471 = vld [vmem:[%s3451 + $0xb8] sm:$0xff]
      %v3472 = vld [vmem:[%s3451 + $0xc8] sm:$0xff]
      %v3473 = vld [vmem:[%s3451 + $0xd0] sm:$0xff]
      %v3474 = vld [vmem:[%s3451 + $0xd8] sm:$0xff]
      %v3475 = vld [vmem:[%s3451 + $0xe0] sm:$0xff]
      %v3476 = vld [vmem:[%s3451 + $0xf0] sm:$0xff]
      %v3477 = vld [vmem:[%s3451 + $0xf8] sm:$0xff]
      %v3478 = vld [vmem:[%s3451 + $0x100] sm:$0xff]
      %v3479 = vld [vmem:[%s3451 + $0x108] sm:$0xff]
      %v3480 = vld [vmem:[%s3451 + $0x118] sm:$0xff]
      %v3481 = vld [vmem:[%s3451 + $0x120] sm:$0xff]
      %v3482 = vld [vmem:[%s3451 + $0x128] sm:$0xff]
      %v3483 = vld [vmem:[%s3451 + $0x130] sm:$0xff]
      %v3484 = vmax.f32 %v3419, %v3452
      %v3485 = vmax.f32 %v3420, %v3453
      %v3486 = vmax.f32 %v3421, %v3454
      %v3487 = vmax.f32 %v3422, %v3455
      %v3488 = vmax.f32 %v3423, %v3456
      %v3489 = vmax.f32 %v3424, %v3457
      %v3490 = vmax.f32 %v3425, %v3458
      %v3491 = vmax.f32 %v3426, %v3459
      %v3492 = vmax.f32 %v3427, %v3460
      %v3493 = vmax.f32 %v3428, %v3461
      %v3494 = vmax.f32 %v3429, %v3462
      %v3495 = vmax.f32 %v3430, %v3463
      %v3496 = vmax.f32 %v3431, %v3464
      %v3497 = vmax.f32 %v3432, %v3465
      %v3498 = vmax.f32 %v3433, %v3466
      %v3499 = vmax.f32 %v3434, %v3467
      %v3500 = vmax.f32 %v3435, %v3468
      %v3501 = vmax.f32 %v3436, %v3469
      %v3502 = vmax.f32 %v3437, %v3470
      %v3503 = vmax.f32 %v3438, %v3471
      %v3504 = vmax.f32 %v3439, %v3472
      %v3505 = vmax.f32 %v3440, %v3473
      %v3506 = vmax.f32 %v3441, %v3474
      %v3507 = vmax.f32 %v3442, %v3475
      %v3508 = vmax.f32 %v3443, %v3476
      %v3509 = vmax.f32 %v3444, %v3477
      %v3510 = vmax.f32 %v3445, %v3478
      %v3511 = vmax.f32 %v3446, %v3479
      %v3512 = vmax.f32 %v3447, %v3480
      %v3513 = vmax.f32 %v3448, %v3481
      %v3514 = vmax.f32 %v3449, %v3482
      %v3515 = vmax.f32 %v3450, %v3483
      %v3516 = vld [vmem:[%s3451 + $0x1] sm:$0xff]
      %v3517 = vld [vmem:[%s3451 + $0x9] sm:$0xff]
      %v3518 = vld [vmem:[%s3451 + $0x11] sm:$0xff]
      %v3519 = vld [vmem:[%s3451 + $0x19] sm:$0xff]
      %v3520 = vld [vmem:[%s3451 + $0x29] sm:$0xff]
      %v3521 = vld [vmem:[%s3451 + $0x31] sm:$0xff]
      %v3522 = vld [vmem:[%s3451 + $0x39] sm:$0xff]
      %v3523 = vld [vmem:[%s3451 + $0x41] sm:$0xff]
      %v3524 = vld [vmem:[%s3451 + $0x51] sm:$0xff]
      %v3525 = vld [vmem:[%s3451 + $0x59] sm:$0xff]
      %v3526 = vld [vmem:[%s3451 + $0x61] sm:$0xff]
      %v3527 = vld [vmem:[%s3451 + $0x69] sm:$0xff]
      %v3528 = vld [vmem:[%s3451 + $0x79] sm:$0xff]
      %v3529 = vld [vmem:[%s3451 + $0x81] sm:$0xff]
      %v3530 = vld [vmem:[%s3451 + $0x89] sm:$0xff]
      %v3531 = vld [vmem:[%s3451 + $0x91] sm:$0xff]
      %v3532 = vld [vmem:[%s3451 + $0xa1] sm:$0xff]
      %v3533 = vld [vmem:[%s3451 + $0xa9] sm:$0xff]
      %v3534 = vld [vmem:[%s3451 + $0xb1] sm:$0xff]
      %v3535 = vld [vmem:[%s3451 + $0xb9] sm:$0xff]
      %v3536 = vld [vmem:[%s3451 + $0xc9] sm:$0xff]
      %v3537 = vld [vmem:[%s3451 + $0xd1] sm:$0xff]
      %v3538 = vld [vmem:[%s3451 + $0xd9] sm:$0xff]
      %v3539 = vld [vmem:[%s3451 + $0xe1] sm:$0xff]
      %v3540 = vld [vmem:[%s3451 + $0xf1] sm:$0xff]
      %v3541 = vld [vmem:[%s3451 + $0xf9] sm:$0xff]
      %v3542 = vld [vmem:[%s3451 + $0x101] sm:$0xff]
      %v3543 = vld [vmem:[%s3451 + $0x109] sm:$0xff]
      %v3544 = vld [vmem:[%s3451 + $0x119] sm:$0xff]
      %v3545 = vld [vmem:[%s3451 + $0x121] sm:$0xff]
      %v3546 = vld [vmem:[%s3451 + $0x129] sm:$0xff]
      %v3547 = vld [vmem:[%s3451 + $0x131] sm:$0xff]
      %v3548 = vmax.f32 %v3484, %v3516
      %v3549 = vmax.f32 %v3485, %v3517
      %v3550 = vmax.f32 %v3486, %v3518
      %v3551 = vmax.f32 %v3487, %v3519
      %v3552 = vmax.f32 %v3488, %v3520
      %v3553 = vmax.f32 %v3489, %v3521
      %v3554 = vmax.f32 %v3490, %v3522
      %v3555 = vmax.f32 %v3491, %v3523
      %v3556 = vmax.f32 %v3492, %v3524
      %v3557 = vmax.f32 %v3493, %v3525
      %v3558 = vmax.f32 %v3494, %v3526
      %v3559 = vmax.f32 %v3495, %v3527
      %v3560 = vmax.f32 %v3496, %v3528
      %v3561 = vmax.f32 %v3497, %v3529
      %v3562 = vmax.f32 %v3498, %v3530
      %v3563 = vmax.f32 %v3499, %v3531
      %v3564 = vmax.f32 %v3500, %v3532
      %v3565 = vmax.f32 %v3501, %v3533
      %v3566 = vmax.f32 %v3502, %v3534
      %v3567 = vmax.f32 %v3503, %v3535
      %v3568 = vmax.f32 %v3504, %v3536
      %v3569 = vmax.f32 %v3505, %v3537
      %v3570 = vmax.f32 %v3506, %v3538
      %v3571 = vmax.f32 %v3507, %v3539
      %v3572 = vmax.f32 %v3508, %v3540
      %v3573 = vmax.f32 %v3509, %v3541
      %v3574 = vmax.f32 %v3510, %v3542
      %v3575 = vmax.f32 %v3511, %v3543
      %v3576 = vmax.f32 %v3512, %v3544
      %v3577 = vmax.f32 %v3513, %v3545
      %v3578 = vmax.f32 %v3514, %v3546
      %v3579 = vmax.f32 %v3515, %v3547
      %v3580 = vld [vmem:[%s3451 + $0x2] sm:$0xff]
      %v3581 = vld [vmem:[%s3451 + $0xa] sm:$0xff]
      %v3582 = vld [vmem:[%s3451 + $0x12] sm:$0xff]
      %v3583 = vld [vmem:[%s3451 + $0x1a] sm:$0xff]
      %v3584 = vld [vmem:[%s3451 + $0x2a] sm:$0xff]
      %v3585 = vld [vmem:[%s3451 + $0x32] sm:$0xff]
      %v3586 = vld [vmem:[%s3451 + $0x3a] sm:$0xff]
      %v3587 = vld [vmem:[%s3451 + $0x42] sm:$0xff]
      %v3588 = vld [vmem:[%s3451 + $0x52] sm:$0xff]
      %v3589 = vld [vmem:[%s3451 + $0x5a] sm:$0xff]
      %v3590 = vld [vmem:[%s3451 + $0x62] sm:$0xff]
      %v3591 = vld [vmem:[%s3451 + $0x6a] sm:$0xff]
      %v3592 = vld [vmem:[%s3451 + $0x7a] sm:$0xff]
      %v3593 = vld [vmem:[%s3451 + $0x82] sm:$0xff]
      %v3594 = vld [vmem:[%s3451 + $0x8a] sm:$0xff]
      %v3595 = vld [vmem:[%s3451 + $0x92] sm:$0xff]
      %v3596 = vld [vmem:[%s3451 + $0xa2] sm:$0xff]
      %v3597 = vld [vmem:[%s3451 + $0xaa] sm:$0xff]
      %v3598 = vld [vmem:[%s3451 + $0xb2] sm:$0xff]
      %v3599 = vld [vmem:[%s3451 + $0xba] sm:$0xff]
      %v3600 = vld [vmem:[%s3451 + $0xca] sm:$0xff]
      %v3601 = vld [vmem:[%s3451 + $0xd2] sm:$0xff]
      %v3602 = vld [vmem:[%s3451 + $0xda] sm:$0xff]
      %v3603 = vld [vmem:[%s3451 + $0xe2] sm:$0xff]
      %v3604 = vld [vmem:[%s3451 + $0xf2] sm:$0xff]
      %v3605 = vld [vmem:[%s3451 + $0xfa] sm:$0xff]
      %v3606 = vld [vmem:[%s3451 + $0x102] sm:$0xff]
      %v3607 = vld [vmem:[%s3451 + $0x10a] sm:$0xff]
      %v3608 = vld [vmem:[%s3451 + $0x11a] sm:$0xff]
      %v3609 = vld [vmem:[%s3451 + $0x122] sm:$0xff]
      %v3610 = vld [vmem:[%s3451 + $0x12a] sm:$0xff]
      %v3611 = vld [vmem:[%s3451 + $0x132] sm:$0xff]
      %v3612 = vmax.f32 %v3548, %v3580
      %v3613 = vmax.f32 %v3549, %v3581
      %v3614 = vmax.f32 %v3550, %v3582
      %v3615 = vmax.f32 %v3551, %v3583
      %v3616 = vmax.f32 %v3552, %v3584
      %v3617 = vmax.f32 %v3553, %v3585
      %v3618 = vmax.f32 %v3554, %v3586
      %v3619 = vmax.f32 %v3555, %v3587
      %v3620 = vmax.f32 %v3556, %v3588
      %v3621 = vmax.f32 %v3557, %v3589
      %v3622 = vmax.f32 %v3558, %v3590
      %v3623 = vmax.f32 %v3559, %v3591
      %v3624 = vmax.f32 %v3560, %v3592
      %v3625 = vmax.f32 %v3561, %v3593
      %v3626 = vmax.f32 %v3562, %v3594
      %v3627 = vmax.f32 %v3563, %v3595
      %v3628 = vmax.f32 %v3564, %v3596
      %v3629 = vmax.f32 %v3565, %v3597
      %v3630 = vmax.f32 %v3566, %v3598
      %v3631 = vmax.f32 %v3567, %v3599
      %v3632 = vmax.f32 %v3568, %v3600
      %v3633 = vmax.f32 %v3569, %v3601
      %v3634 = vmax.f32 %v3570, %v3602
      %v3635 = vmax.f32 %v3571, %v3603
      %v3636 = vmax.f32 %v3572, %v3604
      %v3637 = vmax.f32 %v3573, %v3605
      %v3638 = vmax.f32 %v3574, %v3606
      %v3639 = vmax.f32 %v3575, %v3607
      %v3640 = vmax.f32 %v3576, %v3608
      %v3641 = vmax.f32 %v3577, %v3609
      %v3642 = vmax.f32 %v3578, %v3610
      %v3643 = vmax.f32 %v3579, %v3611
      %s3644 = scalar_lea.vmem [#allocation2], 1040
      %v3645 = vld [vmem:[%s3644] sm:$0xff]
      %v3646 = vld [vmem:[%s3644 + $0x8] sm:$0xff]
      %v3647 = vld [vmem:[%s3644 + $0x10] sm:$0xff]
      %v3648 = vld [vmem:[%s3644 + $0x18] sm:$0xff]
      %v3649 = vld [vmem:[%s3644 + $0x28] sm:$0xff]
      %v3650 = vld [vmem:[%s3644 + $0x30] sm:$0xff]
      %v3651 = vld [vmem:[%s3644 + $0x38] sm:$0xff]
      %v3652 = vld [vmem:[%s3644 + $0x40] sm:$0xff]
      %v3653 = vld [vmem:[%s3644 + $0x50] sm:$0xff]
      %v3654 = vld [vmem:[%s3644 + $0x58] sm:$0xff]
      %v3655 = vld [vmem:[%s3644 + $0x60] sm:$0xff]
      %v3656 = vld [vmem:[%s3644 + $0x68] sm:$0xff]
      %v3657 = vld [vmem:[%s3644 + $0x78] sm:$0xff]
      %v3658 = vld [vmem:[%s3644 + $0x80] sm:$0xff]
      %v3659 = vld [vmem:[%s3644 + $0x88] sm:$0xff]
      %v3660 = vld [vmem:[%s3644 + $0x90] sm:$0xff]
      %v3661 = vld [vmem:[%s3644 + $0xa0] sm:$0xff]
      %v3662 = vld [vmem:[%s3644 + $0xa8] sm:$0xff]
      %v3663 = vld [vmem:[%s3644 + $0xb0] sm:$0xff]
      %v3664 = vld [vmem:[%s3644 + $0xb8] sm:$0xff]
      %v3665 = vld [vmem:[%s3644 + $0xc8] sm:$0xff]
      %v3666 = vld [vmem:[%s3644 + $0xd0] sm:$0xff]
      %v3667 = vld [vmem:[%s3644 + $0xd8] sm:$0xff]
      %v3668 = vld [vmem:[%s3644 + $0xe0] sm:$0xff]
      %v3669 = vld [vmem:[%s3644 + $0xf0] sm:$0xff]
      %v3670 = vld [vmem:[%s3644 + $0xf8] sm:$0xff]
      %v3671 = vld [vmem:[%s3644 + $0x100] sm:$0xff]
      %v3672 = vld [vmem:[%s3644 + $0x108] sm:$0xff]
      %v3673 = vld [vmem:[%s3644 + $0x118] sm:$0xff]
      %v3674 = vld [vmem:[%s3644 + $0x120] sm:$0xff]
      %v3675 = vld [vmem:[%s3644 + $0x128] sm:$0xff]
      %v3676 = vld [vmem:[%s3644 + $0x130] sm:$0xff]
      %v3677 = vmax.f32 %v3612, %v3645
      %v3678 = vmax.f32 %v3613, %v3646
      %v3679 = vmax.f32 %v3614, %v3647
      %v3680 = vmax.f32 %v3615, %v3648
      %v3681 = vmax.f32 %v3616, %v3649
      %v3682 = vmax.f32 %v3617, %v3650
      %v3683 = vmax.f32 %v3618, %v3651
      %v3684 = vmax.f32 %v3619, %v3652
      %v3685 = vmax.f32 %v3620, %v3653
      %v3686 = vmax.f32 %v3621, %v3654
      %v3687 = vmax.f32 %v3622, %v3655
      %v3688 = vmax.f32 %v3623, %v3656
      %v3689 = vmax.f32 %v3624, %v3657
      %v3690 = vmax.f32 %v3625, %v3658
      %v3691 = vmax.f32 %v3626, %v3659
      %v3692 = vmax.f32 %v3627, %v3660
      %v3693 = vmax.f32 %v3628, %v3661
      %v3694 = vmax.f32 %v3629, %v3662
      %v3695 = vmax.f32 %v3630, %v3663
      %v3696 = vmax.f32 %v3631, %v3664
      %v3697 = vmax.f32 %v3632, %v3665
      %v3698 = vmax.f32 %v3633, %v3666
      %v3699 = vmax.f32 %v3634, %v3667
      %v3700 = vmax.f32 %v3635, %v3668
      %v3701 = vmax.f32 %v3636, %v3669
      %v3702 = vmax.f32 %v3637, %v3670
      %v3703 = vmax.f32 %v3638, %v3671
      %v3704 = vmax.f32 %v3639, %v3672
      %v3705 = vmax.f32 %v3640, %v3673
      %v3706 = vmax.f32 %v3641, %v3674
      %v3707 = vmax.f32 %v3642, %v3675
      %v3708 = vmax.f32 %v3643, %v3676
      %v3709 = vld [vmem:[%s3644 + $0x1] sm:$0xff]
      %v3710 = vld [vmem:[%s3644 + $0x9] sm:$0xff]
      %v3711 = vld [vmem:[%s3644 + $0x11] sm:$0xff]
      %v3712 = vld [vmem:[%s3644 + $0x19] sm:$0xff]
      %v3713 = vld [vmem:[%s3644 + $0x29] sm:$0xff]
      %v3714 = vld [vmem:[%s3644 + $0x31] sm:$0xff]
      %v3715 = vld [vmem:[%s3644 + $0x39] sm:$0xff]
      %v3716 = vld [vmem:[%s3644 + $0x41] sm:$0xff]
      %v3717 = vld [vmem:[%s3644 + $0x51] sm:$0xff]
      %v3718 = vld [vmem:[%s3644 + $0x59] sm:$0xff]
      %v3719 = vld [vmem:[%s3644 + $0x61] sm:$0xff]
      %v3720 = vld [vmem:[%s3644 + $0x69] sm:$0xff]
      %v3721 = vld [vmem:[%s3644 + $0x79] sm:$0xff]
      %v3722 = vld [vmem:[%s3644 + $0x81] sm:$0xff]
      %v3723 = vld [vmem:[%s3644 + $0x89] sm:$0xff]
      %v3724 = vld [vmem:[%s3644 + $0x91] sm:$0xff]
      %v3725 = vld [vmem:[%s3644 + $0xa1] sm:$0xff]
      %v3726 = vld [vmem:[%s3644 + $0xa9] sm:$0xff]
      %v3727 = vld [vmem:[%s3644 + $0xb1] sm:$0xff]
      %v3728 = vld [vmem:[%s3644 + $0xb9] sm:$0xff]
      %v3729 = vld [vmem:[%s3644 + $0xc9] sm:$0xff]
      %v3730 = vld [vmem:[%s3644 + $0xd1] sm:$0xff]
      %v3731 = vld [vmem:[%s3644 + $0xd9] sm:$0xff]
      %v3732 = vld [vmem:[%s3644 + $0xe1] sm:$0xff]
      %v3733 = vld [vmem:[%s3644 + $0xf1] sm:$0xff]
      %v3734 = vld [vmem:[%s3644 + $0xf9] sm:$0xff]
      %v3735 = vld [vmem:[%s3644 + $0x101] sm:$0xff]
      %v3736 = vld [vmem:[%s3644 + $0x109] sm:$0xff]
      %v3737 = vld [vmem:[%s3644 + $0x119] sm:$0xff]
      %v3738 = vld [vmem:[%s3644 + $0x121] sm:$0xff]
      %v3739 = vld [vmem:[%s3644 + $0x129] sm:$0xff]
      %v3740 = vld [vmem:[%s3644 + $0x131] sm:$0xff]
      %v3741 = vmax.f32 %v3677, %v3709
      %v3742 = vmax.f32 %v3678, %v3710
      %v3743 = vmax.f32 %v3679, %v3711
      %v3744 = vmax.f32 %v3680, %v3712
      %v3745 = vmax.f32 %v3681, %v3713
      %v3746 = vmax.f32 %v3682, %v3714
      %v3747 = vmax.f32 %v3683, %v3715
      %v3748 = vmax.f32 %v3684, %v3716
      %v3749 = vmax.f32 %v3685, %v3717
      %v3750 = vmax.f32 %v3686, %v3718
      %v3751 = vmax.f32 %v3687, %v3719
      %v3752 = vmax.f32 %v3688, %v3720
      %v3753 = vmax.f32 %v3689, %v3721
      %v3754 = vmax.f32 %v3690, %v3722
      %v3755 = vmax.f32 %v3691, %v3723
      %v3756 = vmax.f32 %v3692, %v3724
      %v3757 = vmax.f32 %v3693, %v3725
      %v3758 = vmax.f32 %v3694, %v3726
      %v3759 = vmax.f32 %v3695, %v3727
      %v3760 = vmax.f32 %v3696, %v3728
      %v3761 = vmax.f32 %v3697, %v3729
      %v3762 = vmax.f32 %v3698, %v3730
      %v3763 = vmax.f32 %v3699, %v3731
      %v3764 = vmax.f32 %v3700, %v3732
      %v3765 = vmax.f32 %v3701, %v3733
      %v3766 = vmax.f32 %v3702, %v3734
      %v3767 = vmax.f32 %v3703, %v3735
      %v3768 = vmax.f32 %v3704, %v3736
      %v3769 = vmax.f32 %v3705, %v3737
      %v3770 = vmax.f32 %v3706, %v3738
      %v3771 = vmax.f32 %v3707, %v3739
      %v3772 = vmax.f32 %v3708, %v3740
      %v3773 = vld [vmem:[%s3644 + $0x2] sm:$0xff]
      %v3774 = vld [vmem:[%s3644 + $0xa] sm:$0xff]
      %v3775 = vld [vmem:[%s3644 + $0x12] sm:$0xff]
      %v3776 = vld [vmem:[%s3644 + $0x1a] sm:$0xff]
      %v3777 = vld [vmem:[%s3644 + $0x2a] sm:$0xff]
      %v3778 = vld [vmem:[%s3644 + $0x32] sm:$0xff]
      %v3779 = vld [vmem:[%s3644 + $0x3a] sm:$0xff]
      %v3780 = vld [vmem:[%s3644 + $0x42] sm:$0xff]
      %v3781 = vld [vmem:[%s3644 + $0x52] sm:$0xff]
      %v3782 = vld [vmem:[%s3644 + $0x5a] sm:$0xff]
      %v3783 = vld [vmem:[%s3644 + $0x62] sm:$0xff]
      %v3784 = vld [vmem:[%s3644 + $0x6a] sm:$0xff]
      %v3785 = vld [vmem:[%s3644 + $0x7a] sm:$0xff]
      %v3786 = vld [vmem:[%s3644 + $0x82] sm:$0xff]
      %v3787 = vld [vmem:[%s3644 + $0x8a] sm:$0xff]
      %v3788 = vld [vmem:[%s3644 + $0x92] sm:$0xff]
      %v3789 = vld [vmem:[%s3644 + $0xa2] sm:$0xff]
      %v3790 = vld [vmem:[%s3644 + $0xaa] sm:$0xff]
      %v3791 = vld [vmem:[%s3644 + $0xb2] sm:$0xff]
      %v3792 = vld [vmem:[%s3644 + $0xba] sm:$0xff]
      %v3793 = vld [vmem:[%s3644 + $0xca] sm:$0xff]
      %v3794 = vld [vmem:[%s3644 + $0xd2] sm:$0xff]
      %v3795 = vld [vmem:[%s3644 + $0xda] sm:$0xff]
      %v3796 = vld [vmem:[%s3644 + $0xe2] sm:$0xff]
      %v3797 = vld [vmem:[%s3644 + $0xf2] sm:$0xff]
      %v3798 = vld [vmem:[%s3644 + $0xfa] sm:$0xff]
      %v3799 = vld [vmem:[%s3644 + $0x102] sm:$0xff]
      %v3800 = vld [vmem:[%s3644 + $0x10a] sm:$0xff]
      %v3801 = vld [vmem:[%s3644 + $0x11a] sm:$0xff]
      %v3802 = vld [vmem:[%s3644 + $0x122] sm:$0xff]
      %v3803 = vld [vmem:[%s3644 + $0x12a] sm:$0xff]
      %v3804 = vld [vmem:[%s3644 + $0x132] sm:$0xff]
      %v3805 = vmax.f32 %v3741, %v3773
      %v3806 = vmax.f32 %v3742, %v3774
      %v3807 = vmax.f32 %v3743, %v3775
      %v3808 = vmax.f32 %v3744, %v3776
      %v3809 = vmax.f32 %v3745, %v3777
      %v3810 = vmax.f32 %v3746, %v3778
      %v3811 = vmax.f32 %v3747, %v3779
      %v3812 = vmax.f32 %v3748, %v3780
      %v3813 = vmax.f32 %v3749, %v3781
      %v3814 = vmax.f32 %v3750, %v3782
      %v3815 = vmax.f32 %v3751, %v3783
      %v3816 = vmax.f32 %v3752, %v3784
      %v3817 = vmax.f32 %v3753, %v3785
      %v3818 = vmax.f32 %v3754, %v3786
      %v3819 = vmax.f32 %v3755, %v3787
      %v3820 = vmax.f32 %v3756, %v3788
      %v3821 = vmax.f32 %v3757, %v3789
      %v3822 = vmax.f32 %v3758, %v3790
      %v3823 = vmax.f32 %v3759, %v3791
      %v3824 = vmax.f32 %v3760, %v3792
      %v3825 = vmax.f32 %v3761, %v3793
      %v3826 = vmax.f32 %v3762, %v3794
      %v3827 = vmax.f32 %v3763, %v3795
      %v3828 = vmax.f32 %v3764, %v3796
      %v3829 = vmax.f32 %v3765, %v3797
      %v3830 = vmax.f32 %v3766, %v3798
      %v3831 = vmax.f32 %v3767, %v3799
      %v3832 = vmax.f32 %v3768, %v3800
      %v3833 = vmax.f32 %v3769, %v3801
      %v3834 = vmax.f32 %v3770, %v3802
      %v3835 = vmax.f32 %v3771, %v3803
      %v3836 = vmax.f32 %v3772, %v3804
      %v3837 = vpack.c.bf16 %v3806, %v3805
      %v3838 = vpack.c.bf16 %v3808, %v3807
      %v3839 = vpack.c.bf16 %v3810, %v3809
      %v3840 = vpack.c.bf16 %v3812, %v3811
      %v3841 = vpack.c.bf16 %v3814, %v3813
      %v3842 = vpack.c.bf16 %v3816, %v3815
      %v3843 = vpack.c.bf16 %v3818, %v3817
      %v3844 = vpack.c.bf16 %v3820, %v3819
      %v3845 = vpack.c.bf16 %v3822, %v3821
      %v3846 = vpack.c.bf16 %v3824, %v3823
      %v3847 = vpack.c.bf16 %v3826, %v3825
      %v3848 = vpack.c.bf16 %v3828, %v3827
      %v3849 = vpack.c.bf16 %v3830, %v3829
      %v3850 = vpack.c.bf16 %v3832, %v3831
      %v3851 = vpack.c.bf16 %v3834, %v3833
      %v3852 = vpack.c.bf16 %v3836, %v3835
      %v3869 = vunpack.c.l.b16 %v3837
      %v3870 = vunpack.c.h.b16 %v3837
      %v3871 = vunpack.c.l.b16 %v3838
      %v3872 = vunpack.c.h.b16 %v3838
      %v3873 = vunpack.c.l.b16 %v3839
      %v3874 = vunpack.c.h.b16 %v3839
      %v3875 = vunpack.c.l.b16 %v3840
      %v3876 = vunpack.c.h.b16 %v3840
      %v3877 = vunpack.c.l.b16 %v3841
      %v3878 = vunpack.c.h.b16 %v3841
      %v3879 = vunpack.c.l.b16 %v3842
      %v3880 = vunpack.c.h.b16 %v3842
      %v3881 = vunpack.c.l.b16 %v3843
      %v3882 = vunpack.c.h.b16 %v3843
      %v3883 = vunpack.c.l.b16 %v3844
      %v3884 = vunpack.c.h.b16 %v3844
      %v3885 = vunpack.c.l.b16 %v3845
      %v3886 = vunpack.c.h.b16 %v3845
      %v3887 = vunpack.c.l.b16 %v3846
      %v3888 = vunpack.c.h.b16 %v3846
      %v3889 = vunpack.c.l.b16 %v3847
      %v3890 = vunpack.c.h.b16 %v3847
      %v3891 = vunpack.c.l.b16 %v3848
      %v3892 = vunpack.c.h.b16 %v3848
      %v3893 = vunpack.c.l.b16 %v3849
      %v3894 = vunpack.c.h.b16 %v3849
      %v3895 = vunpack.c.l.b16 %v3850
      %v3896 = vunpack.c.h.b16 %v3850
      %v3897 = vunpack.c.l.b16 %v3851
      %v3898 = vunpack.c.h.b16 %v3851
      %v3899 = vunpack.c.l.b16 %v3852
      %v3900 = vunpack.c.h.b16 %v3852
      %v3901 = vpack.c.b16 %v3869, %v3869
      %v3902 = vpack.c.b16 %v3870, %v3870
      %v3903 = vpack.c.b16 %v3871, %v3871
      %v3904 = vpack.c.b16 %v3872, %v3872
      %v3905 = vpack.c.b16 %v3873, %v3873
      %v3906 = vpack.c.b16 %v3874, %v3874
      %v3907 = vpack.c.b16 %v3875, %v3875
      %v3908 = vpack.c.b16 %v3876, %v3876
      %v3909 = vpack.c.b16 %v3877, %v3877
      %v3910 = vpack.c.b16 %v3878, %v3878
      %v3911 = vpack.c.b16 %v3879, %v3879
      %v3912 = vpack.c.b16 %v3880, %v3880
      %v3913 = vpack.c.b16 %v3881, %v3881
      %v3914 = vpack.c.b16 %v3882, %v3882
      %v3915 = vpack.c.b16 %v3883, %v3883
      %v3916 = vpack.c.b16 %v3884, %v3884
      %v3917 = vpack.c.b16 %v3885, %v3885
      %v3918 = vpack.c.b16 %v3886, %v3886
      %v3919 = vpack.c.b16 %v3887, %v3887
      %v3920 = vpack.c.b16 %v3888, %v3888
      %v3921 = vpack.c.b16 %v3889, %v3889
      %v3922 = vpack.c.b16 %v3890, %v3890
      %v3923 = vpack.c.b16 %v3891, %v3891
      %v3924 = vpack.c.b16 %v3892, %v3892
      %v3925 = vpack.c.b16 %v3893, %v3893
      %v3926 = vpack.c.b16 %v3894, %v3894
      %v3927 = vpack.c.b16 %v3895, %v3895
      %v3928 = vpack.c.b16 %v3896, %v3896
      %v3929 = vpack.c.b16 %v3897, %v3897
      %v3930 = vpack.c.b16 %v3898, %v3898
      %v3931 = vpack.c.b16 %v3899, %v3899
      %v3932 = vpack.c.b16 %v3900, %v3900
      %s3965 = scalar_lea.vmem %s170, 384
      %3966 = vst [vmem:[%s3965] sm:$0xf] %v3901
      %3967 = vst [vmem:[%s3965 + $0x4] sm:$0xf] %v3902
      %3968 = vst [vmem:[%s3965 + $0x8] sm:$0xf] %v3903
      %3969 = vst [vmem:[%s3965 + $0xc] sm:$0xf] %v3904
      %3970 = vst [vmem:[%s3965 + $0x10] sm:$0xf] %v3905
      %3971 = vst [vmem:[%s3965 + $0x14] sm:$0xf] %v3906
      %3972 = vst [vmem:[%s3965 + $0x18] sm:$0xf] %v3907
      %3973 = vst [vmem:[%s3965 + $0x1c] sm:$0xf] %v3908
      %3974 = vst [vmem:[%s3965 + $0x20] sm:$0xf] %v3909
      %3975 = vst [vmem:[%s3965 + $0x24] sm:$0xf] %v3910
      %3976 = vst [vmem:[%s3965 + $0x28] sm:$0xf] %v3911
      %3977 = vst [vmem:[%s3965 + $0x2c] sm:$0xf] %v3912
      %3978 = vst [vmem:[%s3965 + $0x30] sm:$0xf] %v3913
      %3979 = vst [vmem:[%s3965 + $0x34] sm:$0xf] %v3914
      %3980 = vst [vmem:[%s3965 + $0x38] sm:$0xf] %v3915
      %3981 = vst [vmem:[%s3965 + $0x3c] sm:$0xf] %v3916
      %3982 = vst [vmem:[%s3965 + $0x40] sm:$0xf] %v3917
      %3983 = vst [vmem:[%s3965 + $0x44] sm:$0xf] %v3918
      %3984 = vst [vmem:[%s3965 + $0x48] sm:$0xf] %v3919
      %3985 = vst [vmem:[%s3965 + $0x4c] sm:$0xf] %v3920
      %3986 = vst [vmem:[%s3965 + $0x50] sm:$0xf] %v3921
      %3987 = vst [vmem:[%s3965 + $0x54] sm:$0xf] %v3922
      %3988 = vst [vmem:[%s3965 + $0x58] sm:$0xf] %v3923
      %3989 = vst [vmem:[%s3965 + $0x5c] sm:$0xf] %v3924
      %3990 = vst [vmem:[%s3965 + $0x60] sm:$0xf] %v3925
      %3991 = vst [vmem:[%s3965 + $0x64] sm:$0xf] %v3926
      %3992 = vst [vmem:[%s3965 + $0x68] sm:$0xf] %v3927
      %3993 = vst [vmem:[%s3965 + $0x6c] sm:$0xf] %v3928
      %3994 = vst [vmem:[%s3965 + $0x70] sm:$0xf] %v3929
      %3995 = vst [vmem:[%s3965 + $0x74] sm:$0xf] %v3930
      %3996 = vst [vmem:[%s3965 + $0x78] sm:$0xf] %v3931
      %3997 = vst [vmem:[%s3965 + $0x7c] sm:$0xf] %v3932
      %p3998 = scmp.lt.s32.totalorder %s14, 1
      %s3999 = scalar_select %p3998, %s14, 1
      %s4000 = smul.addr %s3999, 128
      %s4001 = smul.addr %s4000, 4
      %s4002 = scalar_lea.vmem %s3, %s4001
      // Predicated region
      $region33: #{stem_fwd.6} parent=31 // pred_check
        %p4003 = pneg %p100
      $region34: #{stem_fwd.6} parent=31 // pred_check_branch
        %4005 = sbr.rel (%p4003) target = $region36
      $region35: #{stem_fwd.6} parent=31 // pred_region
        _
      $region36: #{stem_fwd.6} parent=31 // pred_fallthru
        _
    $region32: #{stem_fwd.6} parent=5 // pred_fallthru
      _
    %p4006 = scmp.le.s32.totalorder 2, %s9
    // Predicated region
    $region37: #{stem_fwd.6} parent=5 // pred_check
      %p4007 = pneg %p4006
    $region38: #{stem_fwd.6} parent=5 // pred_check_branch
      %4009 = sbr.rel (%p4007) target = $region40
    $region39: #{stem_fwd.6} parent=5 // pred_region
      %s4010 = ssub.s32 %s9, 2
      // Predicated region
      $region41: #{stem_fwd.6} parent=39 // pred_check
        %p4011 = pneg %p106
      $region42: #{stem_fwd.6} parent=39 // pred_check_branch
        %4013 = sbr.rel (%p4011) target = $region44
      $region43: #{stem_fwd.6} parent=39 // pred_region
        %p4014 = scmp.lt.s32.totalorder %s15, 1
        %s4015 = scalar_select %p4014, %s15, 1
        %s4016 = smul.addr %s4015, 128
        %s4017 = smul.addr %s4016, 4
        %s4018 = scalar_lea.vmem %s3, %s4017
      $region44: #{stem_fwd.6} parent=39 // pred_fallthru
        _
    $region40: #{stem_fwd.6} parent=5 // pred_fallthru
      _
  $region6: #{stem_fwd.6} parent=0 // loop_footer
    %s13 = sadd.s32 1, %s9
  $region7: #{stem_fwd.6} parent=0 // loop_footer_branch
    %8 = sbr.rel target = $region3
  $region8: #{stem_fwd.6} parent=0 // loop_exit
    _

</llo_original>
